<compile_context>
chip_gen: v6e
topology: v6e:2x2x1
jax: 0.10.0
libtpu: 0.0.40
codegen_flags: <defaults>
</compile_context>

<pallas_src>
import functools

import jax
import jax.numpy as jnp
from jax.experimental import pallas as pl
from jax.experimental.pallas import tpu as pltpu

EPS = 1e-5  # PyTorch BatchNorm1d default eps


# ---------------------------------------------------------------------------
# Kernel 1: 3x3 conv (per-tap dots) + bias + ReLU + running global-avg-pool,
#           fused with the fc_out Linear on the last row tile of each image.
# ---------------------------------------------------------------------------
def conv_pool_fc_kernel(x_ref, w_ref, cb_ref, fcw_ref, fcb_ref, y_ref, pool_ref,
                        *, tile_h, width, inv_hw):
    # x_ref:   (tile_h+2, width+2, Cp)  padded input row tile (2-row halo)
    # w_ref:   (9, Cp, F)               conv weights, one (Cp, F) slab per tap
    # cb_ref:  (1, F)                   conv bias
    # fcw_ref: (F, E_pad)               fc_out weight (embed padded to 128)
    # fcb_ref: (1, E_pad)               fc_out bias
    # y_ref:   (1, E_pad)               per-image fc output (written last tile)
    # pool_ref:(1, F) f32 scratch       running sum over H*W (per image)
    j = pl.program_id(1)

    @pl.when(j == 0)
    def _init():
        pool_ref[...] = jnp.zeros_like(pool_ref)

    feat = cb_ref.shape[-1]
    bias = cb_ref[...]                                  # hoisted broadcast src

    tile_sum = jnp.zeros((1, feat), jnp.float32)
    # 3x3 conv as per-tap 2-D dots with C on the lane axis (no im2col).
    # Fully unrolled static loops; each dot is (width, Cp) @ (Cp, F) with
    # f32 accumulation on the MXU.
    for r in range(tile_h):
        row_acc = None
        for dy in range(3):
            for dx in range(3):
                tap = x_ref[r + dy, dx:dx + width, :]            # (width, Cp)
                d = jnp.dot(tap, w_ref[dy * 3 + dx],
                            preferred_element_type=jnp.float32)  # (width, F)
                row_acc = d if row_acc is None else row_acc + d
        acts = jnp.maximum(row_acc + bias, 0.0)                  # bias + ReLU
        tile_sum = tile_sum + jnp.sum(acts, axis=0, keepdims=True)
    pool_ref[...] = pool_ref[...] + tile_sum

    @pl.when(j == pl.num_programs(1) - 1)
    def _finalize():
        feats = pool_ref[...] * inv_hw                           # global avg pool
        y_ref[...] = (jnp.dot(feats, fcw_ref[...],
                              preferred_element_type=jnp.float32)
                      + fcb_ref[...])


# ---------------------------------------------------------------------------
# Kernel 2: BatchNorm1d, training-mode batch statistics (biased variance).
#           Whole batch in one block (BN semantics require it); lane-dense I/O.
# ---------------------------------------------------------------------------
def batchnorm_kernel(y_ref, gamma_ref, beta_ref, o_ref):
    y = y_ref[...]
    mu = jnp.mean(y, axis=0, keepdims=True)
    var = jnp.mean((y - mu) ** 2, axis=0, keepdims=True)
    o_ref[...] = (gamma_ref[...] * (y - mu) * jax.lax.rsqrt(var + EPS)
                  + beta_ref[...])


def _round_up(x, m):
    return ((x + m - 1) // m) * m


# ---------------------------------------------------------------------------
# Wrapper: layout plumbing only (NCHW->NHWC, halo'd row tiles, lane padding).
# ---------------------------------------------------------------------------
def encoder_cnn_v2(images, params, *, tile_h=8):
    """images: (N, C, H, W) float32 -> (N, embed_size) float32."""
    n, c, h, w = images.shape
    tile_h = min(tile_h, h)
    assert h % tile_h == 0, "H must be divisible by tile_h"
    n_tiles = h // tile_h
    hw = h * w

    conv_w = params["conv_w"]                     # (3, 3, C, F)
    feat = conv_w.shape[-1]
    embed = params["fc_w"].shape[-1]

    c_pad = _round_up(c, 8)                       # channel (contraction) pad
    e_pad = _round_up(embed, 128)                 # lane-dense output pad

    # NCHW -> NHWC, zero-pad 1 px spatially + channel pad, then cut into row
    # tiles with a 2-row halo so the kernel's BlockSpec stays block-indexed.
    x = jnp.transpose(images, (0, 2, 3, 1))
    xp = jnp.pad(x, ((0, 0), (1, 1), (1, 1), (0, c_pad - c)))
    x_tiles = jnp.stack(
        [xp[:, j * tile_h: j * tile_h + tile_h + 2] for j in range(n_tiles)],
        axis=1)                                   # (N, T, tile_h+2, W+2, Cp)

    w9 = jnp.pad(conv_w, ((0, 0), (0, 0), (0, c_pad - c), (0, 0)))
    w9 = w9.reshape(9, c_pad, feat)               # tap-major (dy*3+dx, Cp, F)
    cb = params["conv_b"].reshape(1, feat)

    fc_w = jnp.pad(params["fc_w"], ((0, 0), (0, e_pad - embed)))
    fc_b = jnp.pad(params["fc_b"].reshape(1, embed),
                   ((0, 0), (0, e_pad - embed)))
    gamma = jnp.pad(params["gamma"].reshape(1, embed),
                    ((0, 0), (0, e_pad - embed)), constant_values=1.0)
    beta = jnp.pad(params["beta"].reshape(1, embed),
                   ((0, 0), (0, e_pad - embed)))

    kernel = functools.partial(conv_pool_fc_kernel, tile_h=tile_h, width=w,
                               inv_hw=1.0 / hw)

    # Blocks here are a few hundred KiB, far inside any VMEM budget (v7x's
    # 64 MiB included); for realistic F/H/W, size tile_h so that
    # 2x(input tile) + params + (1,F) accumulator stays well under the limit.
    y = pl.pallas_call(
        kernel,
        out_shape=jax.ShapeDtypeStruct((n, 1, e_pad), jnp.float32),
        grid_spec=pltpu.PrefetchScalarGridSpec(
            num_scalar_prefetch=0,
            grid=(n, n_tiles),                    # (batch, row tiles)
            in_specs=[
                pl.BlockSpec((None, None, tile_h + 2, w + 2, c_pad),
                             lambda b, j: (b, j, 0, 0, 0)),
                pl.BlockSpec((9, c_pad, feat), lambda b, j: (0, 0, 0)),
                pl.BlockSpec((1, feat), lambda b, j: (0, 0)),
                pl.BlockSpec((feat, e_pad), lambda b, j: (0, 0)),
                pl.BlockSpec((1, e_pad), lambda b, j: (0, 0)),
            ],
            out_specs=pl.BlockSpec((None, 1, e_pad), lambda b, j: (b, 0, 0)),
            scratch_shapes=[pltpu.VMEM((1, feat), jnp.float32)],
        ),
        compiler_params=pltpu.CompilerParams(
            dimension_semantics=("parallel", "arbitrary")),
    )(x_tiles, w9, cb, fc_w, fc_b)

    y = y.reshape(n, e_pad)

    out = pl.pallas_call(
        batchnorm_kernel,
        grid=(1,),
        in_specs=[
            pl.BlockSpec((n, e_pad), lambda i: (0, 0)),
            pl.BlockSpec((1, e_pad), lambda i: (0, 0)),
            pl.BlockSpec((1, e_pad), lambda i: (0, 0)),
        ],
        out_specs=pl.BlockSpec((n, e_pad), lambda i: (0, 0)),
        out_shape=jax.ShapeDtypeStruct((n, e_pad), jnp.float32),
    )(y, gamma, beta)

    return out[:, :embed]


# ---------------------------------------------------------------------------
# Pure-JAX reference of the same forward math (for correctness check).
# ---------------------------------------------------------------------------
def encoder_cnn_v2_ref(images, params):
    n, c, h, w = images.shape
    x = jnp.transpose(images, (0, 2, 3, 1))
    xp = jnp.pad(x, ((0, 0), (1, 1), (1, 1), (0, 0)))
    feat = params["conv_w"].shape[-1]
    acc = jnp.zeros((n, h, w, feat), jnp.float32)
    for dy in range(3):
        for dx in range(3):
            acc = acc + jnp.einsum("nhwc,cf->nhwf",
                                   xp[:, dy:dy + h, dx:dx + w, :],
                                   params["conv_w"][dy, dx])
    acts = jnp.maximum(acc + params["conv_b"], 0.0)
    feats = jnp.mean(acts, axis=(1, 2))                  # (N, F)
    y = feats @ params["fc_w"] + params["fc_b"]
    mu = jnp.mean(y, axis=0, keepdims=True)
    var = jnp.mean((y - mu) ** 2, axis=0, keepdims=True)
    return params["gamma"] * (y - mu) / jnp.sqrt(var + EPS) + params["beta"]


if __name__ == "__main__":
    key = jax.random.PRNGKey(0)
    k_img, k_cw, k_cb, k_fw, k_fb = jax.random.split(key, 5)

    N, C, H, W = 2, 4, 16, 16     # small synthetic image batch
    FEAT = 256                    # stand-in for resnet.fc.in_features (2048)
    EMBED = 32                    # embed_size

    images = jax.random.normal(k_img, (N, C, H, W), jnp.float32)
    params = {
        "conv_w": jax.random.normal(k_cw, (3, 3, C, FEAT), jnp.float32) * 0.1,
        "conv_b": jax.random.normal(k_cb, (FEAT,), jnp.float32) * 0.1,
        "fc_w":   jax.random.normal(k_fw, (FEAT, EMBED), jnp.float32) * 0.05,
        "fc_b":   jax.random.normal(k_fb, (EMBED,), jnp.float32) * 0.05,
        "gamma":  jnp.ones((EMBED,), jnp.float32),   # BatchNorm1d default weight
        "beta":   jnp.zeros((EMBED,), jnp.float32),  # BatchNorm1d default bias
    }

    out = encoder_cnn_v2(images, params)
    out = jax.block_until_ready(out)

    ref = encoder_cnn_v2_ref(images, params)
    assert out.shape == (N, EMBED)
    assert jnp.allclose(out, ref, atol=1e-4, rtol=1e-4), "kernel/reference mismatch"

    print("KERNEL_OK")
</pallas_src>

<mosaic_0001>
module attributes {stable_mosaic.version = 11 : i64} {
  func.func @conv_pool_fc_kernel(%arg0: i32, %arg1: i32, %arg2: memref<1x1x10x18x8xf32, #tpu.memory_space<vmem>>, %arg3: memref<9x8x256xf32, #tpu.memory_space<vmem>>, %arg4: memref<1x256xf32, #tpu.memory_space<vmem>>, %arg5: memref<256x128xf32, #tpu.memory_space<vmem>>, %arg6: memref<1x128xf32, #tpu.memory_space<vmem>>, %arg7: memref<1x1x128xf32, #tpu.memory_space<vmem>>, %arg8: memref<1x256xf32, #tpu.memory_space<vmem>>) attributes {dimension_semantics = [#tpu.dimension_semantics<parallel>, #tpu.dimension_semantics<arbitrary>], iteration_bounds = array<i64: 2, 2>, scalar_prefetch = 0 : i64, scratch_operands = 1 : i64, tpu.core_type = #tpu.core_type<tc>, window_params = [{transform_indices = @transform_0, window_bounds = array<i64: 1, 1, 10, 18, 8>}, {pipeline_mode = #tpu.pipeline_mode<synchronous>, transform_indices = @transform_1, window_bounds = array<i64: 9, 8, 256>}, {pipeline_mode = #tpu.pipeline_mode<synchronous>, transform_indices = @transform_2, window_bounds = array<i64: 1, 256>}, {pipeline_mode = #tpu.pipeline_mode<synchronous>, transform_indices = @transform_3, window_bounds = array<i64: 256, 128>}, {pipeline_mode = #tpu.pipeline_mode<synchronous>, transform_indices = @transform_4, window_bounds = array<i64: 1, 128>}, {transform_indices = @transform_5, window_bounds = array<i64: 1, 1, 128>}]} {
    %c0_i32 = arith.constant 0 : i32
    %0 = arith.cmpi eq, %arg1, %c0_i32 : i32
    %1 = arith.extui %0 : i1 to i32
    %c0_i32_0 = arith.constant 0 : i32
    %2 = arith.cmpi ne, %1, %c0_i32_0 : i32
    scf.if %2 {
      %cst_662 = arith.constant 0.000000e+00 : f32
      %491 = vector.broadcast %cst_662 : f32 to vector<1x256xf32>
      %c0_663 = arith.constant 0 : index
      %c0_664 = arith.constant 0 : index
      %492 = vector.load %arg8[%c0_663, %c0_664] : memref<1x256xf32, #tpu.memory_space<vmem>>, vector<1x256xf32>
      tpu.vector_store %arg8[%c0_663, %c0_664], %491 {strides = array<i32>} : memref<1x256xf32, #tpu.memory_space<vmem>>, vector<1x256xf32>,
    } else {
    }
    %c0 = arith.constant 0 : index
    %c0_1 = arith.constant 0 : index
    %3 = vector.load %arg4[%c0, %c0_1] : memref<1x256xf32, #tpu.memory_space<vmem>>, vector<1x256xf32>
    %cst = arith.constant 0.000000e+00 : f32
    %4 = vector.broadcast %cst : f32 to vector<1x256xf32>
    %c0_2 = arith.constant 0 : index
    %c0_3 = arith.constant 0 : index
    %c0_4 = arith.constant 0 : index
    %c0_5 = arith.constant 0 : index
    %c0_6 = arith.constant 0 : index
    %5 = vector.load %arg2[%c0_2, %c0_3, %c0_4, %c0_5, %c0_6] : memref<1x1x10x18x8xf32, #tpu.memory_space<vmem>>, vector<1x1x1x16x8xf32>
    %6 = vector.shape_cast %5 : vector<1x1x1x16x8xf32> to vector<16x8xf32>
    %c0_7 = arith.constant 0 : index
    %c0_8 = arith.constant 0 : index
    %c0_9 = arith.constant 0 : index
    %7 = vector.load %arg3[%c0_7, %c0_8, %c0_9] : memref<9x8x256xf32, #tpu.memory_space<vmem>>, vector<1x8x256xf32>
    %8 = vector.shape_cast %7 : vector<1x8x256xf32> to vector<8x256xf32>
    %cst_10 = arith.constant dense<0.000000e+00> : vector<16x256xf32>
    %9 = tpu.matmul %6, %8, %cst_10 {dimension_numbers = #tpu.dot_dimension_numbers<[1], [0], [0], [1], [0, 0, 1, 1], [], []>} : vector<16x8xf32>, vector<8x256xf32>, vector<16x256xf32> -> vector<16x256xf32>
    %c0_11 = arith.constant 0 : index
    %c0_12 = arith.constant 0 : index
    %c0_13 = arith.constant 0 : index
    %c1 = arith.constant 1 : index
    %c0_14 = arith.constant 0 : index
    %10 = vector.load %arg2[%c0_11, %c0_12, %c0_13, %c1, %c0_14] : memref<1x1x10x18x8xf32, #tpu.memory_space<vmem>>, vector<1x1x1x16x8xf32>
    %11 = vector.shape_cast %10 : vector<1x1x1x16x8xf32> to vector<16x8xf32>
    %c1_15 = arith.constant 1 : index
    %c0_16 = arith.constant 0 : index
    %c0_17 = arith.constant 0 : index
    %12 = vector.load %arg3[%c1_15, %c0_16, %c0_17] : memref<9x8x256xf32, #tpu.memory_space<vmem>>, vector<1x8x256xf32>
    %13 = vector.shape_cast %12 : vector<1x8x256xf32> to vector<8x256xf32>
    %cst_18 = arith.constant dense<0.000000e+00> : vector<16x256xf32>
    %14 = tpu.matmul %11, %13, %cst_18 {dimension_numbers = #tpu.dot_dimension_numbers<[1], [0], [0], [1], [0, 0, 1, 1], [], []>} : vector<16x8xf32>, vector<8x256xf32>, vector<16x256xf32> -> vector<16x256xf32>
    %15 = arith.addf %9, %14 : vector<16x256xf32>
    %c0_19 = arith.constant 0 : index
    %c0_20 = arith.constant 0 : index
    %c0_21 = arith.constant 0 : index
    %c2 = arith.constant 2 : index
    %c0_22 = arith.constant 0 : index
    %16 = vector.load %arg2[%c0_19, %c0_20, %c0_21, %c2, %c0_22] : memref<1x1x10x18x8xf32, #tpu.memory_space<vmem>>, vector<1x1x1x16x8xf32>
    %17 = vector.shape_cast %16 : vector<1x1x1x16x8xf32> to vector<16x8xf32>
    %c2_23 = arith.constant 2 : index
    %c0_24 = arith.constant 0 : index
    %c0_25 = arith.constant 0 : index
    %18 = vector.load %arg3[%c2_23, %c0_24, %c0_25] : memref<9x8x256xf32, #tpu.memory_space<vmem>>, vector<1x8x256xf32>
    %19 = vector.shape_cast %18 : vector<1x8x256xf32> to vector<8x256xf32>
    %cst_26 = arith.constant dense<0.000000e+00> : vector<16x256xf32>
    %20 = tpu.matmul %17, %19, %cst_26 {dimension_numbers = #tpu.dot_dimension_numbers<[1], [0], [0], [1], [0, 0, 1, 1], [], []>} : vector<16x8xf32>, vector<8x256xf32>, vector<16x256xf32> -> vector<16x256xf32>
    %21 = arith.addf %15, %20 : vector<16x256xf32>
    %c0_27 = arith.constant 0 : index
    %c0_28 = arith.constant 0 : index
    %c1_29 = arith.constant 1 : index
    %c0_30 = arith.constant 0 : index
    %c0_31 = arith.constant 0 : index
    %22 = vector.load %arg2[%c0_27, %c0_28, %c1_29, %c0_30, %c0_31] : memref<1x1x10x18x8xf32, #tpu.memory_space<vmem>>, vector<1x1x1x16x8xf32>
    %23 = vector.shape_cast %22 : vector<1x1x1x16x8xf32> to vector<16x8xf32>
    %c3 = arith.constant 3 : index
    %c0_32 = arith.constant 0 : index
    %c0_33 = arith.constant 0 : index
    %24 = vector.load %arg3[%c3, %c0_32, %c0_33] : memref<9x8x256xf32, #tpu.memory_space<vmem>>, vector<1x8x256xf32>
    %25 = vector.shape_cast %24 : vector<1x8x256xf32> to vector<8x256xf32>
    %cst_34 = arith.constant dense<0.000000e+00> : vector<16x256xf32>
    %26 = tpu.matmul %23, %25, %cst_34 {dimension_numbers = #tpu.dot_dimension_numbers<[1], [0], [0], [1], [0, 0, 1, 1], [], []>} : vector<16x8xf32>, vector<8x256xf32>, vector<16x256xf32> -> vector<16x256xf32>
    %27 = arith.addf %21, %26 : vector<16x256xf32>
    %c0_35 = arith.constant 0 : index
    %c0_36 = arith.constant 0 : index
    %c1_37 = arith.constant 1 : index
    %c1_38 = arith.constant 1 : index
    %c0_39 = arith.constant 0 : index
    %28 = vector.load %arg2[%c0_35, %c0_36, %c1_37, %c1_38, %c0_39] : memref<1x1x10x18x8xf32, #tpu.memory_space<vmem>>, vector<1x1x1x16x8xf32>
    %29 = vector.shape_cast %28 : vector<1x1x1x16x8xf32> to vector<16x8xf32>
    %c4 = arith.constant 4 : index
    %c0_40 = arith.constant 0 : index
    %c0_41 = arith.constant 0 : index
    %30 = vector.load %arg3[%c4, %c0_40, %c0_41] : memref<9x8x256xf32, #tpu.memory_space<vmem>>, vector<1x8x256xf32>
    %31 = vector.shape_cast %30 : vector<1x8x256xf32> to vector<8x256xf32>
    %cst_42 = arith.constant dense<0.000000e+00> : vector<16x256xf32>
    %32 = tpu.matmul %29, %31, %cst_42 {dimension_numbers = #tpu.dot_dimension_numbers<[1], [0], [0], [1], [0, 0, 1, 1], [], []>} : vector<16x8xf32>, vector<8x256xf32>, vector<16x256xf32> -> vector<16x256xf32>
    %33 = arith.addf %27, %32 : vector<16x256xf32>
    %c0_43 = arith.constant 0 : index
    %c0_44 = arith.constant 0 : index
    %c1_45 = arith.constant 1 : index
    %c2_46 = arith.constant 2 : index
    %c0_47 = arith.constant 0 : index
    %34 = vector.load %arg2[%c0_43, %c0_44, %c1_45, %c2_46, %c0_47] : memref<1x1x10x18x8xf32, #tpu.memory_space<vmem>>, vector<1x1x1x16x8xf32>
    %35 = vector.shape_cast %34 : vector<1x1x1x16x8xf32> to vector<16x8xf32>
    %c5 = arith.constant 5 : index
    %c0_48 = arith.constant 0 : index
    %c0_49 = arith.constant 0 : index
    %36 = vector.load %arg3[%c5, %c0_48, %c0_49] : memref<9x8x256xf32, #tpu.memory_space<vmem>>, vector<1x8x256xf32>
    %37 = vector.shape_cast %36 : vector<1x8x256xf32> to vector<8x256xf32>
    %cst_50 = arith.constant dense<0.000000e+00> : vector<16x256xf32>
    %38 = tpu.matmul %35, %37, %cst_50 {dimension_numbers = #tpu.dot_dimension_numbers<[1], [0], [0], [1], [0, 0, 1, 1], [], []>} : vector<16x8xf32>, vector<8x256xf32>, vector<16x256xf32> -> vector<16x256xf32>
    %39 = arith.addf %33, %38 : vector<16x256xf32>
    %c0_51 = arith.constant 0 : index
    %c0_52 = arith.constant 0 : index
    %c2_53 = arith.constant 2 : index
    %c0_54 = arith.constant 0 : index
    %c0_55 = arith.constant 0 : index
    %40 = vector.load %arg2[%c0_51, %c0_52, %c2_53, %c0_54, %c0_55] : memref<1x1x10x18x8xf32, #tpu.memory_space<vmem>>, vector<1x1x1x16x8xf32>
    %41 = vector.shape_cast %40 : vector<1x1x1x16x8xf32> to vector<16x8xf32>
    %c6 = arith.constant 6 : index
    %c0_56 = arith.constant 0 : index
    %c0_57 = arith.constant 0 : index
    %42 = vector.load %arg3[%c6, %c0_56, %c0_57] : memref<9x8x256xf32, #tpu.memory_space<vmem>>, vector<1x8x256xf32>
    %43 = vector.shape_cast %42 : vector<1x8x256xf32> to vector<8x256xf32>
    %cst_58 = arith.constant dense<0.000000e+00> : vector<16x256xf32>
    %44 = tpu.matmul %41, %43, %cst_58 {dimension_numbers = #tpu.dot_dimension_numbers<[1], [0], [0], [1], [0, 0, 1, 1], [], []>} : vector<16x8xf32>, vector<8x256xf32>, vector<16x256xf32> -> vector<16x256xf32>
    %45 = arith.addf %39, %44 : vector<16x256xf32>
    %c0_59 = arith.constant 0 : index
    %c0_60 = arith.constant 0 : index
    %c2_61 = arith.constant 2 : index
    %c1_62 = arith.constant 1 : index
    %c0_63 = arith.constant 0 : index
    %46 = vector.load %arg2[%c0_59, %c0_60, %c2_61, %c1_62, %c0_63] : memref<1x1x10x18x8xf32, #tpu.memory_space<vmem>>, vector<1x1x1x16x8xf32>
    %47 = vector.shape_cast %46 : vector<1x1x1x16x8xf32> to vector<16x8xf32>
    %c7 = arith.constant 7 : index
    %c0_64 = arith.constant 0 : index
    %c0_65 = arith.constant 0 : index
    %48 = vector.load %arg3[%c7, %c0_64, %c0_65] : memref<9x8x256xf32, #tpu.memory_space<vmem>>, vector<1x8x256xf32>
    %49 = vector.shape_cast %48 : vector<1x8x256xf32> to vector<8x256xf32>
    %cst_66 = arith.constant dense<0.000000e+00> : vector<16x256xf32>
    %50 = tpu.matmul %47, %49, %cst_66 {dimension_numbers = #tpu.dot_dimension_numbers<[1], [0], [0], [1], [0, 0, 1, 1], [], []>} : vector<16x8xf32>, vector<8x256xf32>, vector<16x256xf32> -> vector<16x256xf32>
    %51 = arith.addf %45, %50 : vector<16x256xf32>
    %c0_67 = arith.constant 0 : index
    %c0_68 = arith.constant 0 : index
    %c2_69 = arith.constant 2 : index
    %c2_70 = arith.constant 2 : index
    %c0_71 = arith.constant 0 : index
    %52 = vector.load %arg2[%c0_67, %c0_68, %c2_69, %c2_70, %c0_71] : memref<1x1x10x18x8xf32, #tpu.memory_space<vmem>>, vector<1x1x1x16x8xf32>
    %53 = vector.shape_cast %52 : vector<1x1x1x16x8xf32> to vector<16x8xf32>
    %c8 = arith.constant 8 : index
    %c0_72 = arith.constant 0 : index
    %c0_73 = arith.constant 0 : index
    %54 = vector.load %arg3[%c8, %c0_72, %c0_73] : memref<9x8x256xf32, #tpu.memory_space<vmem>>, vector<1x8x256xf32>
    %55 = vector.shape_cast %54 : vector<1x8x256xf32> to vector<8x256xf32>
    %cst_74 = arith.constant dense<0.000000e+00> : vector<16x256xf32>
    %56 = tpu.matmul %53, %55, %cst_74 {dimension_numbers = #tpu.dot_dimension_numbers<[1], [0], [0], [1], [0, 0, 1, 1], [], []>} : vector<16x8xf32>, vector<8x256xf32>, vector<16x256xf32> -> vector<16x256xf32>
    %57 = arith.addf %51, %56 : vector<16x256xf32>
    %58 = vector.broadcast %3 : vector<1x256xf32> to vector<16x256xf32>
    %59 = arith.addf %57, %58 : vector<16x256xf32>
    %cst_75 = arith.constant 0.000000e+00 : f32
    %60 = vector.broadcast %cst_75 : f32 to vector<16x256xf32>
    %61 = arith.maximumf %59, %60 : vector<16x256xf32>
    %cst_76 = arith.constant dense<0.000000e+00> : vector<256xf32>
    %62 = vector.multi_reduction <add>, %61, %cst_76 [0] : vector<16x256xf32> to vector<256xf32>
    %63 = vector.shape_cast %62 : vector<256xf32> to vector<1x256xf32>
    %64 = arith.addf %4, %63 : vector<1x256xf32>
    %c0_77 = arith.constant 0 : index
    %c0_78 = arith.constant 0 : index
    %c1_79 = arith.constant 1 : index
    %c0_80 = arith.constant 0 : index
    %c0_81 = arith.constant 0 : index
    %65 = vector.load %arg2[%c0_77, %c0_78, %c1_79, %c0_80, %c0_81] : memref<1x1x10x18x8xf32, #tpu.memory_space<vmem>>, vector<1x1x1x16x8xf32>
    %66 = vector.shape_cast %65 : vector<1x1x1x16x8xf32> to vector<16x8xf32>
    %c0_82 = arith.constant 0 : index
    %c0_83 = arith.constant 0 : index
    %c0_84 = arith.constant 0 : index
    %67 = vector.load %arg3[%c0_82, %c0_83, %c0_84] : memref<9x8x256xf32, #tpu.memory_space<vmem>>, vector<1x8x256xf32>
    %68 = vector.shape_cast %67 : vector<1x8x256xf32> to vector<8x256xf32>
    %cst_85 = arith.constant dense<0.000000e+00> : vector<16x256xf32>
    %69 = tpu.matmul %66, %68, %cst_85 {dimension_numbers = #tpu.dot_dimension_numbers<[1], [0], [0], [1], [0, 0, 1, 1], [], []>} : vector<16x8xf32>, vector<8x256xf32>, vector<16x256xf32> -> vector<16x256xf32>
    %c0_86 = arith.constant 0 : index
    %c0_87 = arith.constant 0 : index
    %c1_88 = arith.constant 1 : index
    %c1_89 = arith.constant 1 : index
    %c0_90 = arith.constant 0 : index
    %70 = vector.load %arg2[%c0_86, %c0_87, %c1_88, %c1_89, %c0_90] : memref<1x1x10x18x8xf32, #tpu.memory_space<vmem>>, vector<1x1x1x16x8xf32>
    %71 = vector.shape_cast %70 : vector<1x1x1x16x8xf32> to vector<16x8xf32>
    %c1_91 = arith.constant 1 : index
    %c0_92 = arith.constant 0 : index
    %c0_93 = arith.constant 0 : index
    %72 = vector.load %arg3[%c1_91, %c0_92, %c0_93] : memref<9x8x256xf32, #tpu.memory_space<vmem>>, vector<1x8x256xf32>
    %73 = vector.shape_cast %72 : vector<1x8x256xf32> to vector<8x256xf32>
    %cst_94 = arith.constant dense<0.000000e+00> : vector<16x256xf32>
    %74 = tpu.matmul %71, %73, %cst_94 {dimension_numbers = #tpu.dot_dimension_numbers<[1], [0], [0], [1], [0, 0, 1, 1], [], []>} : vector<16x8xf32>, vector<8x256xf32>, vector<16x256xf32> -> vector<16x256xf32>
    %75 = arith.addf %69, %74 : vector<16x256xf32>
    %c0_95 = arith.constant 0 : index
    %c0_96 = arith.constant 0 : index
    %c1_97 = arith.constant 1 : index
    %c2_98 = arith.constant 2 : index
    %c0_99 = arith.constant 0 : index
    %76 = vector.load %arg2[%c0_95, %c0_96, %c1_97, %c2_98, %c0_99] : memref<1x1x10x18x8xf32, #tpu.memory_space<vmem>>, vector<1x1x1x16x8xf32>
    %77 = vector.shape_cast %76 : vector<1x1x1x16x8xf32> to vector<16x8xf32>
    %c2_100 = arith.constant 2 : index
    %c0_101 = arith.constant 0 : index
    %c0_102 = arith.constant 0 : index
    %78 = vector.load %arg3[%c2_100, %c0_101, %c0_102] : memref<9x8x256xf32, #tpu.memory_space<vmem>>, vector<1x8x256xf32>
    %79 = vector.shape_cast %78 : vector<1x8x256xf32> to vector<8x256xf32>
    %cst_103 = arith.constant dense<0.000000e+00> : vector<16x256xf32>
    %80 = tpu.matmul %77, %79, %cst_103 {dimension_numbers = #tpu.dot_dimension_numbers<[1], [0], [0], [1], [0, 0, 1, 1], [], []>} : vector<16x8xf32>, vector<8x256xf32>, vector<16x256xf32> -> vector<16x256xf32>
    %81 = arith.addf %75, %80 : vector<16x256xf32>
    %c0_104 = arith.constant 0 : index
    %c0_105 = arith.constant 0 : index
    %c2_106 = arith.constant 2 : index
    %c0_107 = arith.constant 0 : index
    %c0_108 = arith.constant 0 : index
    %82 = vector.load %arg2[%c0_104, %c0_105, %c2_106, %c0_107, %c0_108] : memref<1x1x10x18x8xf32, #tpu.memory_space<vmem>>, vector<1x1x1x16x8xf32>
    %83 = vector.shape_cast %82 : vector<1x1x1x16x8xf32> to vector<16x8xf32>
    %c3_109 = arith.constant 3 : index
    %c0_110 = arith.constant 0 : index
    %c0_111 = arith.constant 0 : index
    %84 = vector.load %arg3[%c3_109, %c0_110, %c0_111] : memref<9x8x256xf32, #tpu.memory_space<vmem>>, vector<1x8x256xf32>
    %85 = vector.shape_cast %84 : vector<1x8x256xf32> to vector<8x256xf32>
    %cst_112 = arith.constant dense<0.000000e+00> : vector<16x256xf32>
    %86 = tpu.matmul %83, %85, %cst_112 {dimension_numbers = #tpu.dot_dimension_numbers<[1], [0], [0], [1], [0, 0, 1, 1], [], []>} : vector<16x8xf32>, vector<8x256xf32>, vector<16x256xf32> -> vector<16x256xf32>
    %87 = arith.addf %81, %86 : vector<16x256xf32>
    %c0_113 = arith.constant 0 : index
    %c0_114 = arith.constant 0 : index
    %c2_115 = arith.constant 2 : index
    %c1_116 = arith.constant 1 : index
    %c0_117 = arith.constant 0 : index
    %88 = vector.load %arg2[%c0_113, %c0_114, %c2_115, %c1_116, %c0_117] : memref<1x1x10x18x8xf32, #tpu.memory_space<vmem>>, vector<1x1x1x16x8xf32>
    %89 = vector.shape_cast %88 : vector<1x1x1x16x8xf32> to vector<16x8xf32>
    %c4_118 = arith.constant 4 : index
    %c0_119 = arith.constant 0 : index
    %c0_120 = arith.constant 0 : index
    %90 = vector.load %arg3[%c4_118, %c0_119, %c0_120] : memref<9x8x256xf32, #tpu.memory_space<vmem>>, vector<1x8x256xf32>
    %91 = vector.shape_cast %90 : vector<1x8x256xf32> to vector<8x256xf32>
    %cst_121 = arith.constant dense<0.000000e+00> : vector<16x256xf32>
    %92 = tpu.matmul %89, %91, %cst_121 {dimension_numbers = #tpu.dot_dimension_numbers<[1], [0], [0], [1], [0, 0, 1, 1], [], []>} : vector<16x8xf32>, vector<8x256xf32>, vector<16x256xf32> -> vector<16x256xf32>
    %93 = arith.addf %87, %92 : vector<16x256xf32>
    %c0_122 = arith.constant 0 : index
    %c0_123 = arith.constant 0 : index
    %c2_124 = arith.constant 2 : index
    %c2_125 = arith.constant 2 : index
    %c0_126 = arith.constant 0 : index
    %94 = vector.load %arg2[%c0_122, %c0_123, %c2_124, %c2_125, %c0_126] : memref<1x1x10x18x8xf32, #tpu.memory_space<vmem>>, vector<1x1x1x16x8xf32>
    %95 = vector.shape_cast %94 : vector<1x1x1x16x8xf32> to vector<16x8xf32>
    %c5_127 = arith.constant 5 : index
    %c0_128 = arith.constant 0 : index
    %c0_129 = arith.constant 0 : index
    %96 = vector.load %arg3[%c5_127, %c0_128, %c0_129] : memref<9x8x256xf32, #tpu.memory_space<vmem>>, vector<1x8x256xf32>
    %97 = vector.shape_cast %96 : vector<1x8x256xf32> to vector<8x256xf32>
    %cst_130 = arith.constant dense<0.000000e+00> : vector<16x256xf32>
    %98 = tpu.matmul %95, %97, %cst_130 {dimension_numbers = #tpu.dot_dimension_numbers<[1], [0], [0], [1], [0, 0, 1, 1], [], []>} : vector<16x8xf32>, vector<8x256xf32>, vector<16x256xf32> -> vector<16x256xf32>
    %99 = arith.addf %93, %98 : vector<16x256xf32>
    %c0_131 = arith.constant 0 : index
    %c0_132 = arith.constant 0 : index
    %c3_133 = arith.constant 3 : index
    %c0_134 = arith.constant 0 : index
    %c0_135 = arith.constant 0 : index
    %100 = vector.load %arg2[%c0_131, %c0_132, %c3_133, %c0_134, %c0_135] : memref<1x1x10x18x8xf32, #tpu.memory_space<vmem>>, vector<1x1x1x16x8xf32>
    %101 = vector.shape_cast %100 : vector<1x1x1x16x8xf32> to vector<16x8xf32>
    %c6_136 = arith.constant 6 : index
    %c0_137 = arith.constant 0 : index
    %c0_138 = arith.constant 0 : index
    %102 = vector.load %arg3[%c6_136, %c0_137, %c0_138] : memref<9x8x256xf32, #tpu.memory_space<vmem>>, vector<1x8x256xf32>
    %103 = vector.shape_cast %102 : vector<1x8x256xf32> to vector<8x256xf32>
    %cst_139 = arith.constant dense<0.000000e+00> : vector<16x256xf32>
    %104 = tpu.matmul %101, %103, %cst_139 {dimension_numbers = #tpu.dot_dimension_numbers<[1], [0], [0], [1], [0, 0, 1, 1], [], []>} : vector<16x8xf32>, vector<8x256xf32>, vector<16x256xf32> -> vector<16x256xf32>
    %105 = arith.addf %99, %104 : vector<16x256xf32>
    %c0_140 = arith.constant 0 : index
    %c0_141 = arith.constant 0 : index
    %c3_142 = arith.constant 3 : index
    %c1_143 = arith.constant 1 : index
    %c0_144 = arith.constant 0 : index
    %106 = vector.load %arg2[%c0_140, %c0_141, %c3_142, %c1_143, %c0_144] : memref<1x1x10x18x8xf32, #tpu.memory_space<vmem>>, vector<1x1x1x16x8xf32>
    %107 = vector.shape_cast %106 : vector<1x1x1x16x8xf32> to vector<16x8xf32>
    %c7_145 = arith.constant 7 : index
    %c0_146 = arith.constant 0 : index
    %c0_147 = arith.constant 0 : index
    %108 = vector.load %arg3[%c7_145, %c0_146, %c0_147] : memref<9x8x256xf32, #tpu.memory_space<vmem>>, vector<1x8x256xf32>
    %109 = vector.shape_cast %108 : vector<1x8x256xf32> to vector<8x256xf32>
    %cst_148 = arith.constant dense<0.000000e+00> : vector<16x256xf32>
    %110 = tpu.matmul %107, %109, %cst_148 {dimension_numbers = #tpu.dot_dimension_numbers<[1], [0], [0], [1], [0, 0, 1, 1], [], []>} : vector<16x8xf32>, vector<8x256xf32>, vector<16x256xf32> -> vector<16x256xf32>
    %111 = arith.addf %105, %110 : vector<16x256xf32>
    %c0_149 = arith.constant 0 : index
    %c0_150 = arith.constant 0 : index
    %c3_151 = arith.constant 3 : index
    %c2_152 = arith.constant 2 : index
    %c0_153 = arith.constant 0 : index
    %112 = vector.load %arg2[%c0_149, %c0_150, %c3_151, %c2_152, %c0_153] : memref<1x1x10x18x8xf32, #tpu.memory_space<vmem>>, vector<1x1x1x16x8xf32>
    %113 = vector.shape_cast %112 : vector<1x1x1x16x8xf32> to vector<16x8xf32>
    %c8_154 = arith.constant 8 : index
    %c0_155 = arith.constant 0 : index
    %c0_156 = arith.constant 0 : index
    %114 = vector.load %arg3[%c8_154, %c0_155, %c0_156] : memref<9x8x256xf32, #tpu.memory_space<vmem>>, vector<1x8x256xf32>
    %115 = vector.shape_cast %114 : vector<1x8x256xf32> to vector<8x256xf32>
    %cst_157 = arith.constant dense<0.000000e+00> : vector<16x256xf32>
    %116 = tpu.matmul %113, %115, %cst_157 {dimension_numbers = #tpu.dot_dimension_numbers<[1], [0], [0], [1], [0, 0, 1, 1], [], []>} : vector<16x8xf32>, vector<8x256xf32>, vector<16x256xf32> -> vector<16x256xf32>
    %117 = arith.addf %111, %116 : vector<16x256xf32>
    %118 = vector.broadcast %3 : vector<1x256xf32> to vector<16x256xf32>
    %119 = arith.addf %117, %118 : vector<16x256xf32>
    %cst_158 = arith.constant 0.000000e+00 : f32
    %120 = vector.broadcast %cst_158 : f32 to vector<16x256xf32>
    %121 = arith.maximumf %119, %120 : vector<16x256xf32>
    %cst_159 = arith.constant dense<0.000000e+00> : vector<256xf32>
    %122 = vector.multi_reduction <add>, %121, %cst_159 [0] : vector<16x256xf32> to vector<256xf32>
    %123 = vector.shape_cast %122 : vector<256xf32> to vector<1x256xf32>
    %124 = arith.addf %64, %123 : vector<1x256xf32>
    %c0_160 = arith.constant 0 : index
    %c0_161 = arith.constant 0 : index
    %c2_162 = arith.constant 2 : index
    %c0_163 = arith.constant 0 : index
    %c0_164 = arith.constant 0 : index
    %125 = vector.load %arg2[%c0_160, %c0_161, %c2_162, %c0_163, %c0_164] : memref<1x1x10x18x8xf32, #tpu.memory_space<vmem>>, vector<1x1x1x16x8xf32>
    %126 = vector.shape_cast %125 : vector<1x1x1x16x8xf32> to vector<16x8xf32>
    %c0_165 = arith.constant 0 : index
    %c0_166 = arith.constant 0 : index
    %c0_167 = arith.constant 0 : index
    %127 = vector.load %arg3[%c0_165, %c0_166, %c0_167] : memref<9x8x256xf32, #tpu.memory_space<vmem>>, vector<1x8x256xf32>
    %128 = vector.shape_cast %127 : vector<1x8x256xf32> to vector<8x256xf32>
    %cst_168 = arith.constant dense<0.000000e+00> : vector<16x256xf32>
    %129 = tpu.matmul %126, %128, %cst_168 {dimension_numbers = #tpu.dot_dimension_numbers<[1], [0], [0], [1], [0, 0, 1, 1], [], []>} : vector<16x8xf32>, vector<8x256xf32>, vector<16x256xf32> -> vector<16x256xf32>
    %c0_169 = arith.constant 0 : index
    %c0_170 = arith.constant 0 : index
    %c2_171 = arith.constant 2 : index
    %c1_172 = arith.constant 1 : index
    %c0_173 = arith.constant 0 : index
    %130 = vector.load %arg2[%c0_169, %c0_170, %c2_171, %c1_172, %c0_173] : memref<1x1x10x18x8xf32, #tpu.memory_space<vmem>>, vector<1x1x1x16x8xf32>
    %131 = vector.shape_cast %130 : vector<1x1x1x16x8xf32> to vector<16x8xf32>
    %c1_174 = arith.constant 1 : index
    %c0_175 = arith.constant 0 : index
    %c0_176 = arith.constant 0 : index
    %132 = vector.load %arg3[%c1_174, %c0_175, %c0_176] : memref<9x8x256xf32, #tpu.memory_space<vmem>>, vector<1x8x256xf32>
    %133 = vector.shape_cast %132 : vector<1x8x256xf32> to vector<8x256xf32>
    %cst_177 = arith.constant dense<0.000000e+00> : vector<16x256xf32>
    %134 = tpu.matmul %131, %133, %cst_177 {dimension_numbers = #tpu.dot_dimension_numbers<[1], [0], [0], [1], [0, 0, 1, 1], [], []>} : vector<16x8xf32>, vector<8x256xf32>, vector<16x256xf32> -> vector<16x256xf32>
    %135 = arith.addf %129, %134 : vector<16x256xf32>
    %c0_178 = arith.constant 0 : index
    %c0_179 = arith.constant 0 : index
    %c2_180 = arith.constant 2 : index
    %c2_181 = arith.constant 2 : index
    %c0_182 = arith.constant 0 : index
    %136 = vector.load %arg2[%c0_178, %c0_179, %c2_180, %c2_181, %c0_182] : memref<1x1x10x18x8xf32, #tpu.memory_space<vmem>>, vector<1x1x1x16x8xf32>
    %137 = vector.shape_cast %136 : vector<1x1x1x16x8xf32> to vector<16x8xf32>
    %c2_183 = arith.constant 2 : index
    %c0_184 = arith.constant 0 : index
    %c0_185 = arith.constant 0 : index
    %138 = vector.load %arg3[%c2_183, %c0_184, %c0_185] : memref<9x8x256xf32, #tpu.memory_space<vmem>>, vector<1x8x256xf32>
    %139 = vector.shape_cast %138 : vector<1x8x256xf32> to vector<8x256xf32>
    %cst_186 = arith.constant dense<0.000000e+00> : vector<16x256xf32>
    %140 = tpu.matmul %137, %139, %cst_186 {dimension_numbers = #tpu.dot_dimension_numbers<[1], [0], [0], [1], [0, 0, 1, 1], [], []>} : vector<16x8xf32>, vector<8x256xf32>, vector<16x256xf32> -> vector<16x256xf32>
    %141 = arith.addf %135, %140 : vector<16x256xf32>
    %c0_187 = arith.constant 0 : index
    %c0_188 = arith.constant 0 : index
    %c3_189 = arith.constant 3 : index
    %c0_190 = arith.constant 0 : index
    %c0_191 = arith.constant 0 : index
    %142 = vector.load %arg2[%c0_187, %c0_188, %c3_189, %c0_190, %c0_191] : memref<1x1x10x18x8xf32, #tpu.memory_space<vmem>>, vector<1x1x1x16x8xf32>
    %143 = vector.shape_cast %142 : vector<1x1x1x16x8xf32> to vector<16x8xf32>
    %c3_192 = arith.constant 3 : index
    %c0_193 = arith.constant 0 : index
    %c0_194 = arith.constant 0 : index
    %144 = vector.load %arg3[%c3_192, %c0_193, %c0_194] : memref<9x8x256xf32, #tpu.memory_space<vmem>>, vector<1x8x256xf32>
    %145 = vector.shape_cast %144 : vector<1x8x256xf32> to vector<8x256xf32>
    %cst_195 = arith.constant dense<0.000000e+00> : vector<16x256xf32>
    %146 = tpu.matmul %143, %145, %cst_195 {dimension_numbers = #tpu.dot_dimension_numbers<[1], [0], [0], [1], [0, 0, 1, 1], [], []>} : vector<16x8xf32>, vector<8x256xf32>, vector<16x256xf32> -> vector<16x256xf32>
    %147 = arith.addf %141, %146 : vector<16x256xf32>
    %c0_196 = arith.constant 0 : index
    %c0_197 = arith.constant 0 : index
    %c3_198 = arith.constant 3 : index
    %c1_199 = arith.constant 1 : index
    %c0_200 = arith.constant 0 : index
    %148 = vector.load %arg2[%c0_196, %c0_197, %c3_198, %c1_199, %c0_200] : memref<1x1x10x18x8xf32, #tpu.memory_space<vmem>>, vector<1x1x1x16x8xf32>
    %149 = vector.shape_cast %148 : vector<1x1x1x16x8xf32> to vector<16x8xf32>
    %c4_201 = arith.constant 4 : index
    %c0_202 = arith.constant 0 : index
    %c0_203 = arith.constant 0 : index
    %150 = vector.load %arg3[%c4_201, %c0_202, %c0_203] : memref<9x8x256xf32, #tpu.memory_space<vmem>>, vector<1x8x256xf32>
    %151 = vector.shape_cast %150 : vector<1x8x256xf32> to vector<8x256xf32>
    %cst_204 = arith.constant dense<0.000000e+00> : vector<16x256xf32>
    %152 = tpu.matmul %149, %151, %cst_204 {dimension_numbers = #tpu.dot_dimension_numbers<[1], [0], [0], [1], [0, 0, 1, 1], [], []>} : vector<16x8xf32>, vector<8x256xf32>, vector<16x256xf32> -> vector<16x256xf32>
    %153 = arith.addf %147, %152 : vector<16x256xf32>
    %c0_205 = arith.constant 0 : index
    %c0_206 = arith.constant 0 : index
    %c3_207 = arith.constant 3 : index
    %c2_208 = arith.constant 2 : index
    %c0_209 = arith.constant 0 : index
    %154 = vector.load %arg2[%c0_205, %c0_206, %c3_207, %c2_208, %c0_209] : memref<1x1x10x18x8xf32, #tpu.memory_space<vmem>>, vector<1x1x1x16x8xf32>
    %155 = vector.shape_cast %154 : vector<1x1x1x16x8xf32> to vector<16x8xf32>
    %c5_210 = arith.constant 5 : index
    %c0_211 = arith.constant 0 : index
    %c0_212 = arith.constant 0 : index
    %156 = vector.load %arg3[%c5_210, %c0_211, %c0_212] : memref<9x8x256xf32, #tpu.memory_space<vmem>>, vector<1x8x256xf32>
    %157 = vector.shape_cast %156 : vector<1x8x256xf32> to vector<8x256xf32>
    %cst_213 = arith.constant dense<0.000000e+00> : vector<16x256xf32>
    %158 = tpu.matmul %155, %157, %cst_213 {dimension_numbers = #tpu.dot_dimension_numbers<[1], [0], [0], [1], [0, 0, 1, 1], [], []>} : vector<16x8xf32>, vector<8x256xf32>, vector<16x256xf32> -> vector<16x256xf32>
    %159 = arith.addf %153, %158 : vector<16x256xf32>
    %c0_214 = arith.constant 0 : index
    %c0_215 = arith.constant 0 : index
    %c4_216 = arith.constant 4 : index
    %c0_217 = arith.constant 0 : index
    %c0_218 = arith.constant 0 : index
    %160 = vector.load %arg2[%c0_214, %c0_215, %c4_216, %c0_217, %c0_218] : memref<1x1x10x18x8xf32, #tpu.memory_space<vmem>>, vector<1x1x1x16x8xf32>
    %161 = vector.shape_cast %160 : vector<1x1x1x16x8xf32> to vector<16x8xf32>
    %c6_219 = arith.constant 6 : index
    %c0_220 = arith.constant 0 : index
    %c0_221 = arith.constant 0 : index
    %162 = vector.load %arg3[%c6_219, %c0_220, %c0_221] : memref<9x8x256xf32, #tpu.memory_space<vmem>>, vector<1x8x256xf32>
    %163 = vector.shape_cast %162 : vector<1x8x256xf32> to vector<8x256xf32>
    %cst_222 = arith.constant dense<0.000000e+00> : vector<16x256xf32>
    %164 = tpu.matmul %161, %163, %cst_222 {dimension_numbers = #tpu.dot_dimension_numbers<[1], [0], [0], [1], [0, 0, 1, 1], [], []>} : vector<16x8xf32>, vector<8x256xf32>, vector<16x256xf32> -> vector<16x256xf32>
    %165 = arith.addf %159, %164 : vector<16x256xf32>
    %c0_223 = arith.constant 0 : index
    %c0_224 = arith.constant 0 : index
    %c4_225 = arith.constant 4 : index
    %c1_226 = arith.constant 1 : index
    %c0_227 = arith.constant 0 : index
    %166 = vector.load %arg2[%c0_223, %c0_224, %c4_225, %c1_226, %c0_227] : memref<1x1x10x18x8xf32, #tpu.memory_space<vmem>>, vector<1x1x1x16x8xf32>
    %167 = vector.shape_cast %166 : vector<1x1x1x16x8xf32> to vector<16x8xf32>
    %c7_228 = arith.constant 7 : index
    %c0_229 = arith.constant 0 : index
    %c0_230 = arith.constant 0 : index
    %168 = vector.load %arg3[%c7_228, %c0_229, %c0_230] : memref<9x8x256xf32, #tpu.memory_space<vmem>>, vector<1x8x256xf32>
    %169 = vector.shape_cast %168 : vector<1x8x256xf32> to vector<8x256xf32>
    %cst_231 = arith.constant dense<0.000000e+00> : vector<16x256xf32>
    %170 = tpu.matmul %167, %169, %cst_231 {dimension_numbers = #tpu.dot_dimension_numbers<[1], [0], [0], [1], [0, 0, 1, 1], [], []>} : vector<16x8xf32>, vector<8x256xf32>, vector<16x256xf32> -> vector<16x256xf32>
    %171 = arith.addf %165, %170 : vector<16x256xf32>
    %c0_232 = arith.constant 0 : index
    %c0_233 = arith.constant 0 : index
    %c4_234 = arith.constant 4 : index
    %c2_235 = arith.constant 2 : index
    %c0_236 = arith.constant 0 : index
    %172 = vector.load %arg2[%c0_232, %c0_233, %c4_234, %c2_235, %c0_236] : memref<1x1x10x18x8xf32, #tpu.memory_space<vmem>>, vector<1x1x1x16x8xf32>
    %173 = vector.shape_cast %172 : vector<1x1x1x16x8xf32> to vector<16x8xf32>
    %c8_237 = arith.constant 8 : index
    %c0_238 = arith.constant 0 : index
    %c0_239 = arith.constant 0 : index
    %174 = vector.load %arg3[%c8_237, %c0_238, %c0_239] : memref<9x8x256xf32, #tpu.memory_space<vmem>>, vector<1x8x256xf32>
    %175 = vector.shape_cast %174 : vector<1x8x256xf32> to vector<8x256xf32>
    %cst_240 = arith.constant dense<0.000000e+00> : vector<16x256xf32>
    %176 = tpu.matmul %173, %175, %cst_240 {dimension_numbers = #tpu.dot_dimension_numbers<[1], [0], [0], [1], [0, 0, 1, 1], [], []>} : vector<16x8xf32>, vector<8x256xf32>, vector<16x256xf32> -> vector<16x256xf32>
    %177 = arith.addf %171, %176 : vector<16x256xf32>
    %178 = vector.broadcast %3 : vector<1x256xf32> to vector<16x256xf32>
    %179 = arith.addf %177, %178 : vector<16x256xf32>
    %cst_241 = arith.constant 0.000000e+00 : f32
    %180 = vector.broadcast %cst_241 : f32 to vector<16x256xf32>
    %181 = arith.maximumf %179, %180 : vector<16x256xf32>
    %cst_242 = arith.constant dense<0.000000e+00> : vector<256xf32>
    %182 = vector.multi_reduction <add>, %181, %cst_242 [0] : vector<16x256xf32> to vector<256xf32>
    %183 = vector.shape_cast %182 : vector<256xf32> to vector<1x256xf32>
    %184 = arith.addf %124, %183 : vector<1x256xf32>
    %c0_243 = arith.constant 0 : index
    %c0_244 = arith.constant 0 : index
    %c3_245 = arith.constant 3 : index
    %c0_246 = arith.constant 0 : index
    %c0_247 = arith.constant 0 : index
    %185 = vector.load %arg2[%c0_243, %c0_244, %c3_245, %c0_246, %c0_247] : memref<1x1x10x18x8xf32, #tpu.memory_space<vmem>>, vector<1x1x1x16x8xf32>
    %186 = vector.shape_cast %185 : vector<1x1x1x16x8xf32> to vector<16x8xf32>
    %c0_248 = arith.constant 0 : index
    %c0_249 = arith.constant 0 : index
    %c0_250 = arith.constant 0 : index
    %187 = vector.load %arg3[%c0_248, %c0_249, %c0_250] : memref<9x8x256xf32, #tpu.memory_space<vmem>>, vector<1x8x256xf32>
    %188 = vector.shape_cast %187 : vector<1x8x256xf32> to vector<8x256xf32>
    %cst_251 = arith.constant dense<0.000000e+00> : vector<16x256xf32>
    %189 = tpu.matmul %186, %188, %cst_251 {dimension_numbers = #tpu.dot_dimension_numbers<[1], [0], [0], [1], [0, 0, 1, 1], [], []>} : vector<16x8xf32>, vector<8x256xf32>, vector<16x256xf32> -> vector<16x256xf32>
    %c0_252 = arith.constant 0 : index
    %c0_253 = arith.constant 0 : index
    %c3_254 = arith.constant 3 : index
    %c1_255 = arith.constant 1 : index
    %c0_256 = arith.constant 0 : index
    %190 = vector.load %arg2[%c0_252, %c0_253, %c3_254, %c1_255, %c0_256] : memref<1x1x10x18x8xf32, #tpu.memory_space<vmem>>, vector<1x1x1x16x8xf32>
    %191 = vector.shape_cast %190 : vector<1x1x1x16x8xf32> to vector<16x8xf32>
    %c1_257 = arith.constant 1 : index
    %c0_258 = arith.constant 0 : index
    %c0_259 = arith.constant 0 : index
    %192 = vector.load %arg3[%c1_257, %c0_258, %c0_259] : memref<9x8x256xf32, #tpu.memory_space<vmem>>, vector<1x8x256xf32>
    %193 = vector.shape_cast %192 : vector<1x8x256xf32> to vector<8x256xf32>
    %cst_260 = arith.constant dense<0.000000e+00> : vector<16x256xf32>
    %194 = tpu.matmul %191, %193, %cst_260 {dimension_numbers = #tpu.dot_dimension_numbers<[1], [0], [0], [1], [0, 0, 1, 1], [], []>} : vector<16x8xf32>, vector<8x256xf32>, vector<16x256xf32> -> vector<16x256xf32>
    %195 = arith.addf %189, %194 : vector<16x256xf32>
    %c0_261 = arith.constant 0 : index
    %c0_262 = arith.constant 0 : index
    %c3_263 = arith.constant 3 : index
    %c2_264 = arith.constant 2 : index
    %c0_265 = arith.constant 0 : index
    %196 = vector.load %arg2[%c0_261, %c0_262, %c3_263, %c2_264, %c0_265] : memref<1x1x10x18x8xf32, #tpu.memory_space<vmem>>, vector<1x1x1x16x8xf32>
    %197 = vector.shape_cast %196 : vector<1x1x1x16x8xf32> to vector<16x8xf32>
    %c2_266 = arith.constant 2 : index
    %c0_267 = arith.constant 0 : index
    %c0_268 = arith.constant 0 : index
    %198 = vector.load %arg3[%c2_266, %c0_267, %c0_268] : memref<9x8x256xf32, #tpu.memory_space<vmem>>, vector<1x8x256xf32>
    %199 = vector.shape_cast %198 : vector<1x8x256xf32> to vector<8x256xf32>
    %cst_269 = arith.constant dense<0.000000e+00> : vector<16x256xf32>
    %200 = tpu.matmul %197, %199, %cst_269 {dimension_numbers = #tpu.dot_dimension_numbers<[1], [0], [0], [1], [0, 0, 1, 1], [], []>} : vector<16x8xf32>, vector<8x256xf32>, vector<16x256xf32> -> vector<16x256xf32>
    %201 = arith.addf %195, %200 : vector<16x256xf32>
    %c0_270 = arith.constant 0 : index
    %c0_271 = arith.constant 0 : index
    %c4_272 = arith.constant 4 : index
    %c0_273 = arith.constant 0 : index
    %c0_274 = arith.constant 0 : index
    %202 = vector.load %arg2[%c0_270, %c0_271, %c4_272, %c0_273, %c0_274] : memref<1x1x10x18x8xf32, #tpu.memory_space<vmem>>, vector<1x1x1x16x8xf32>
    %203 = vector.shape_cast %202 : vector<1x1x1x16x8xf32> to vector<16x8xf32>
    %c3_275 = arith.constant 3 : index
    %c0_276 = arith.constant 0 : index
    %c0_277 = arith.constant 0 : index
    %204 = vector.load %arg3[%c3_275, %c0_276, %c0_277] : memref<9x8x256xf32, #tpu.memory_space<vmem>>, vector<1x8x256xf32>
    %205 = vector.shape_cast %204 : vector<1x8x256xf32> to vector<8x256xf32>
    %cst_278 = arith.constant dense<0.000000e+00> : vector<16x256xf32>
    %206 = tpu.matmul %203, %205, %cst_278 {dimension_numbers = #tpu.dot_dimension_numbers<[1], [0], [0], [1], [0, 0, 1, 1], [], []>} : vector<16x8xf32>, vector<8x256xf32>, vector<16x256xf32> -> vector<16x256xf32>
    %207 = arith.addf %201, %206 : vector<16x256xf32>
    %c0_279 = arith.constant 0 : index
    %c0_280 = arith.constant 0 : index
    %c4_281 = arith.constant 4 : index
    %c1_282 = arith.constant 1 : index
    %c0_283 = arith.constant 0 : index
    %208 = vector.load %arg2[%c0_279, %c0_280, %c4_281, %c1_282, %c0_283] : memref<1x1x10x18x8xf32, #tpu.memory_space<vmem>>, vector<1x1x1x16x8xf32>
    %209 = vector.shape_cast %208 : vector<1x1x1x16x8xf32> to vector<16x8xf32>
    %c4_284 = arith.constant 4 : index
    %c0_285 = arith.constant 0 : index
    %c0_286 = arith.constant 0 : index
    %210 = vector.load %arg3[%c4_284, %c0_285, %c0_286] : memref<9x8x256xf32, #tpu.memory_space<vmem>>, vector<1x8x256xf32>
    %211 = vector.shape_cast %210 : vector<1x8x256xf32> to vector<8x256xf32>
    %cst_287 = arith.constant dense<0.000000e+00> : vector<16x256xf32>
    %212 = tpu.matmul %209, %211, %cst_287 {dimension_numbers = #tpu.dot_dimension_numbers<[1], [0], [0], [1], [0, 0, 1, 1], [], []>} : vector<16x8xf32>, vector<8x256xf32>, vector<16x256xf32> -> vector<16x256xf32>
    %213 = arith.addf %207, %212 : vector<16x256xf32>
    %c0_288 = arith.constant 0 : index
    %c0_289 = arith.constant 0 : index
    %c4_290 = arith.constant 4 : index
    %c2_291 = arith.constant 2 : index
    %c0_292 = arith.constant 0 : index
    %214 = vector.load %arg2[%c0_288, %c0_289, %c4_290, %c2_291, %c0_292] : memref<1x1x10x18x8xf32, #tpu.memory_space<vmem>>, vector<1x1x1x16x8xf32>
    %215 = vector.shape_cast %214 : vector<1x1x1x16x8xf32> to vector<16x8xf32>
    %c5_293 = arith.constant 5 : index
    %c0_294 = arith.constant 0 : index
    %c0_295 = arith.constant 0 : index
    %216 = vector.load %arg3[%c5_293, %c0_294, %c0_295] : memref<9x8x256xf32, #tpu.memory_space<vmem>>, vector<1x8x256xf32>
    %217 = vector.shape_cast %216 : vector<1x8x256xf32> to vector<8x256xf32>
    %cst_296 = arith.constant dense<0.000000e+00> : vector<16x256xf32>
    %218 = tpu.matmul %215, %217, %cst_296 {dimension_numbers = #tpu.dot_dimension_numbers<[1], [0], [0], [1], [0, 0, 1, 1], [], []>} : vector<16x8xf32>, vector<8x256xf32>, vector<16x256xf32> -> vector<16x256xf32>
    %219 = arith.addf %213, %218 : vector<16x256xf32>
    %c0_297 = arith.constant 0 : index
    %c0_298 = arith.constant 0 : index
    %c5_299 = arith.constant 5 : index
    %c0_300 = arith.constant 0 : index
    %c0_301 = arith.constant 0 : index
    %220 = vector.load %arg2[%c0_297, %c0_298, %c5_299, %c0_300, %c0_301] : memref<1x1x10x18x8xf32, #tpu.memory_space<vmem>>, vector<1x1x1x16x8xf32>
    %221 = vector.shape_cast %220 : vector<1x1x1x16x8xf32> to vector<16x8xf32>
    %c6_302 = arith.constant 6 : index
    %c0_303 = arith.constant 0 : index
    %c0_304 = arith.constant 0 : index
    %222 = vector.load %arg3[%c6_302, %c0_303, %c0_304] : memref<9x8x256xf32, #tpu.memory_space<vmem>>, vector<1x8x256xf32>
    %223 = vector.shape_cast %222 : vector<1x8x256xf32> to vector<8x256xf32>
    %cst_305 = arith.constant dense<0.000000e+00> : vector<16x256xf32>
    %224 = tpu.matmul %221, %223, %cst_305 {dimension_numbers = #tpu.dot_dimension_numbers<[1], [0], [0], [1], [0, 0, 1, 1], [], []>} : vector<16x8xf32>, vector<8x256xf32>, vector<16x256xf32> -> vector<16x256xf32>
    %225 = arith.addf %219, %224 : vector<16x256xf32>
    %c0_306 = arith.constant 0 : index
    %c0_307 = arith.constant 0 : index
    %c5_308 = arith.constant 5 : index
    %c1_309 = arith.constant 1 : index
    %c0_310 = arith.constant 0 : index
    %226 = vector.load %arg2[%c0_306, %c0_307, %c5_308, %c1_309, %c0_310] : memref<1x1x10x18x8xf32, #tpu.memory_space<vmem>>, vector<1x1x1x16x8xf32>
    %227 = vector.shape_cast %226 : vector<1x1x1x16x8xf32> to vector<16x8xf32>
    %c7_311 = arith.constant 7 : index
    %c0_312 = arith.constant 0 : index
    %c0_313 = arith.constant 0 : index
    %228 = vector.load %arg3[%c7_311, %c0_312, %c0_313] : memref<9x8x256xf32, #tpu.memory_space<vmem>>, vector<1x8x256xf32>
    %229 = vector.shape_cast %228 : vector<1x8x256xf32> to vector<8x256xf32>
    %cst_314 = arith.constant dense<0.000000e+00> : vector<16x256xf32>
    %230 = tpu.matmul %227, %229, %cst_314 {dimension_numbers = #tpu.dot_dimension_numbers<[1], [0], [0], [1], [0, 0, 1, 1], [], []>} : vector<16x8xf32>, vector<8x256xf32>, vector<16x256xf32> -> vector<16x256xf32>
    %231 = arith.addf %225, %230 : vector<16x256xf32>
    %c0_315 = arith.constant 0 : index
    %c0_316 = arith.constant 0 : index
    %c5_317 = arith.constant 5 : index
    %c2_318 = arith.constant 2 : index
    %c0_319 = arith.constant 0 : index
    %232 = vector.load %arg2[%c0_315, %c0_316, %c5_317, %c2_318, %c0_319] : memref<1x1x10x18x8xf32, #tpu.memory_space<vmem>>, vector<1x1x1x16x8xf32>
    %233 = vector.shape_cast %232 : vector<1x1x1x16x8xf32> to vector<16x8xf32>
    %c8_320 = arith.constant 8 : index
    %c0_321 = arith.constant 0 : index
    %c0_322 = arith.constant 0 : index
    %234 = vector.load %arg3[%c8_320, %c0_321, %c0_322] : memref<9x8x256xf32, #tpu.memory_space<vmem>>, vector<1x8x256xf32>
    %235 = vector.shape_cast %234 : vector<1x8x256xf32> to vector<8x256xf32>
    %cst_323 = arith.constant dense<0.000000e+00> : vector<16x256xf32>
    %236 = tpu.matmul %233, %235, %cst_323 {dimension_numbers = #tpu.dot_dimension_numbers<[1], [0], [0], [1], [0, 0, 1, 1], [], []>} : vector<16x8xf32>, vector<8x256xf32>, vector<16x256xf32> -> vector<16x256xf32>
    %237 = arith.addf %231, %236 : vector<16x256xf32>
    %238 = vector.broadcast %3 : vector<1x256xf32> to vector<16x256xf32>
    %239 = arith.addf %237, %238 : vector<16x256xf32>
    %cst_324 = arith.constant 0.000000e+00 : f32
    %240 = vector.broadcast %cst_324 : f32 to vector<16x256xf32>
    %241 = arith.maximumf %239, %240 : vector<16x256xf32>
    %cst_325 = arith.constant dense<0.000000e+00> : vector<256xf32>
    %242 = vector.multi_reduction <add>, %241, %cst_325 [0] : vector<16x256xf32> to vector<256xf32>
    %243 = vector.shape_cast %242 : vector<256xf32> to vector<1x256xf32>
    %244 = arith.addf %184, %243 : vector<1x256xf32>
    %c0_326 = arith.constant 0 : index
    %c0_327 = arith.constant 0 : index
    %c4_328 = arith.constant 4 : index
    %c0_329 = arith.constant 0 : index
    %c0_330 = arith.constant 0 : index
    %245 = vector.load %arg2[%c0_326, %c0_327, %c4_328, %c0_329, %c0_330] : memref<1x1x10x18x8xf32, #tpu.memory_space<vmem>>, vector<1x1x1x16x8xf32>
    %246 = vector.shape_cast %245 : vector<1x1x1x16x8xf32> to vector<16x8xf32>
    %c0_331 = arith.constant 0 : index
    %c0_332 = arith.constant 0 : index
    %c0_333 = arith.constant 0 : index
    %247 = vector.load %arg3[%c0_331, %c0_332, %c0_333] : memref<9x8x256xf32, #tpu.memory_space<vmem>>, vector<1x8x256xf32>
    %248 = vector.shape_cast %247 : vector<1x8x256xf32> to vector<8x256xf32>
    %cst_334 = arith.constant dense<0.000000e+00> : vector<16x256xf32>
    %249 = tpu.matmul %246, %248, %cst_334 {dimension_numbers = #tpu.dot_dimension_numbers<[1], [0], [0], [1], [0, 0, 1, 1], [], []>} : vector<16x8xf32>, vector<8x256xf32>, vector<16x256xf32> -> vector<16x256xf32>
    %c0_335 = arith.constant 0 : index
    %c0_336 = arith.constant 0 : index
    %c4_337 = arith.constant 4 : index
    %c1_338 = arith.constant 1 : index
    %c0_339 = arith.constant 0 : index
    %250 = vector.load %arg2[%c0_335, %c0_336, %c4_337, %c1_338, %c0_339] : memref<1x1x10x18x8xf32, #tpu.memory_space<vmem>>, vector<1x1x1x16x8xf32>
    %251 = vector.shape_cast %250 : vector<1x1x1x16x8xf32> to vector<16x8xf32>
    %c1_340 = arith.constant 1 : index
    %c0_341 = arith.constant 0 : index
    %c0_342 = arith.constant 0 : index
    %252 = vector.load %arg3[%c1_340, %c0_341, %c0_342] : memref<9x8x256xf32, #tpu.memory_space<vmem>>, vector<1x8x256xf32>
    %253 = vector.shape_cast %252 : vector<1x8x256xf32> to vector<8x256xf32>
    %cst_343 = arith.constant dense<0.000000e+00> : vector<16x256xf32>
    %254 = tpu.matmul %251, %253, %cst_343 {dimension_numbers = #tpu.dot_dimension_numbers<[1], [0], [0], [1], [0, 0, 1, 1], [], []>} : vector<16x8xf32>, vector<8x256xf32>, vector<16x256xf32> -> vector<16x256xf32>
    %255 = arith.addf %249, %254 : vector<16x256xf32>
    %c0_344 = arith.constant 0 : index
    %c0_345 = arith.constant 0 : index
    %c4_346 = arith.constant 4 : index
    %c2_347 = arith.constant 2 : index
    %c0_348 = arith.constant 0 : index
    %256 = vector.load %arg2[%c0_344, %c0_345, %c4_346, %c2_347, %c0_348] : memref<1x1x10x18x8xf32, #tpu.memory_space<vmem>>, vector<1x1x1x16x8xf32>
    %257 = vector.shape_cast %256 : vector<1x1x1x16x8xf32> to vector<16x8xf32>
    %c2_349 = arith.constant 2 : index
    %c0_350 = arith.constant 0 : index
    %c0_351 = arith.constant 0 : index
    %258 = vector.load %arg3[%c2_349, %c0_350, %c0_351] : memref<9x8x256xf32, #tpu.memory_space<vmem>>, vector<1x8x256xf32>
    %259 = vector.shape_cast %258 : vector<1x8x256xf32> to vector<8x256xf32>
    %cst_352 = arith.constant dense<0.000000e+00> : vector<16x256xf32>
    %260 = tpu.matmul %257, %259, %cst_352 {dimension_numbers = #tpu.dot_dimension_numbers<[1], [0], [0], [1], [0, 0, 1, 1], [], []>} : vector<16x8xf32>, vector<8x256xf32>, vector<16x256xf32> -> vector<16x256xf32>
    %261 = arith.addf %255, %260 : vector<16x256xf32>
    %c0_353 = arith.constant 0 : index
    %c0_354 = arith.constant 0 : index
    %c5_355 = arith.constant 5 : index
    %c0_356 = arith.constant 0 : index
    %c0_357 = arith.constant 0 : index
    %262 = vector.load %arg2[%c0_353, %c0_354, %c5_355, %c0_356, %c0_357] : memref<1x1x10x18x8xf32, #tpu.memory_space<vmem>>, vector<1x1x1x16x8xf32>
    %263 = vector.shape_cast %262 : vector<1x1x1x16x8xf32> to vector<16x8xf32>
    %c3_358 = arith.constant 3 : index
    %c0_359 = arith.constant 0 : index
    %c0_360 = arith.constant 0 : index
    %264 = vector.load %arg3[%c3_358, %c0_359, %c0_360] : memref<9x8x256xf32, #tpu.memory_space<vmem>>, vector<1x8x256xf32>
    %265 = vector.shape_cast %264 : vector<1x8x256xf32> to vector<8x256xf32>
    %cst_361 = arith.constant dense<0.000000e+00> : vector<16x256xf32>
    %266 = tpu.matmul %263, %265, %cst_361 {dimension_numbers = #tpu.dot_dimension_numbers<[1], [0], [0], [1], [0, 0, 1, 1], [], []>} : vector<16x8xf32>, vector<8x256xf32>, vector<16x256xf32> -> vector<16x256xf32>
    %267 = arith.addf %261, %266 : vector<16x256xf32>
    %c0_362 = arith.constant 0 : index
    %c0_363 = arith.constant 0 : index
    %c5_364 = arith.constant 5 : index
    %c1_365 = arith.constant 1 : index
    %c0_366 = arith.constant 0 : index
    %268 = vector.load %arg2[%c0_362, %c0_363, %c5_364, %c1_365, %c0_366] : memref<1x1x10x18x8xf32, #tpu.memory_space<vmem>>, vector<1x1x1x16x8xf32>
    %269 = vector.shape_cast %268 : vector<1x1x1x16x8xf32> to vector<16x8xf32>
    %c4_367 = arith.constant 4 : index
    %c0_368 = arith.constant 0 : index
    %c0_369 = arith.constant 0 : index
    %270 = vector.load %arg3[%c4_367, %c0_368, %c0_369] : memref<9x8x256xf32, #tpu.memory_space<vmem>>, vector<1x8x256xf32>
    %271 = vector.shape_cast %270 : vector<1x8x256xf32> to vector<8x256xf32>
    %cst_370 = arith.constant dense<0.000000e+00> : vector<16x256xf32>
    %272 = tpu.matmul %269, %271, %cst_370 {dimension_numbers = #tpu.dot_dimension_numbers<[1], [0], [0], [1], [0, 0, 1, 1], [], []>} : vector<16x8xf32>, vector<8x256xf32>, vector<16x256xf32> -> vector<16x256xf32>
    %273 = arith.addf %267, %272 : vector<16x256xf32>
    %c0_371 = arith.constant 0 : index
    %c0_372 = arith.constant 0 : index
    %c5_373 = arith.constant 5 : index
    %c2_374 = arith.constant 2 : index
    %c0_375 = arith.constant 0 : index
    %274 = vector.load %arg2[%c0_371, %c0_372, %c5_373, %c2_374, %c0_375] : memref<1x1x10x18x8xf32, #tpu.memory_space<vmem>>, vector<1x1x1x16x8xf32>
    %275 = vector.shape_cast %274 : vector<1x1x1x16x8xf32> to vector<16x8xf32>
    %c5_376 = arith.constant 5 : index
    %c0_377 = arith.constant 0 : index
    %c0_378 = arith.constant 0 : index
    %276 = vector.load %arg3[%c5_376, %c0_377, %c0_378] : memref<9x8x256xf32, #tpu.memory_space<vmem>>, vector<1x8x256xf32>
    %277 = vector.shape_cast %276 : vector<1x8x256xf32> to vector<8x256xf32>
    %cst_379 = arith.constant dense<0.000000e+00> : vector<16x256xf32>
    %278 = tpu.matmul %275, %277, %cst_379 {dimension_numbers = #tpu.dot_dimension_numbers<[1], [0], [0], [1], [0, 0, 1, 1], [], []>} : vector<16x8xf32>, vector<8x256xf32>, vector<16x256xf32> -> vector<16x256xf32>
    %279 = arith.addf %273, %278 : vector<16x256xf32>
    %c0_380 = arith.constant 0 : index
    %c0_381 = arith.constant 0 : index
    %c6_382 = arith.constant 6 : index
    %c0_383 = arith.constant 0 : index
    %c0_384 = arith.constant 0 : index
    %280 = vector.load %arg2[%c0_380, %c0_381, %c6_382, %c0_383, %c0_384] : memref<1x1x10x18x8xf32, #tpu.memory_space<vmem>>, vector<1x1x1x16x8xf32>
    %281 = vector.shape_cast %280 : vector<1x1x1x16x8xf32> to vector<16x8xf32>
    %c6_385 = arith.constant 6 : index
    %c0_386 = arith.constant 0 : index
    %c0_387 = arith.constant 0 : index
    %282 = vector.load %arg3[%c6_385, %c0_386, %c0_387] : memref<9x8x256xf32, #tpu.memory_space<vmem>>, vector<1x8x256xf32>
    %283 = vector.shape_cast %282 : vector<1x8x256xf32> to vector<8x256xf32>
    %cst_388 = arith.constant dense<0.000000e+00> : vector<16x256xf32>
    %284 = tpu.matmul %281, %283, %cst_388 {dimension_numbers = #tpu.dot_dimension_numbers<[1], [0], [0], [1], [0, 0, 1, 1], [], []>} : vector<16x8xf32>, vector<8x256xf32>, vector<16x256xf32> -> vector<16x256xf32>
    %285 = arith.addf %279, %284 : vector<16x256xf32>
    %c0_389 = arith.constant 0 : index
    %c0_390 = arith.constant 0 : index
    %c6_391 = arith.constant 6 : index
    %c1_392 = arith.constant 1 : index
    %c0_393 = arith.constant 0 : index
    %286 = vector.load %arg2[%c0_389, %c0_390, %c6_391, %c1_392, %c0_393] : memref<1x1x10x18x8xf32, #tpu.memory_space<vmem>>, vector<1x1x1x16x8xf32>
    %287 = vector.shape_cast %286 : vector<1x1x1x16x8xf32> to vector<16x8xf32>
    %c7_394 = arith.constant 7 : index
    %c0_395 = arith.constant 0 : index
    %c0_396 = arith.constant 0 : index
    %288 = vector.load %arg3[%c7_394, %c0_395, %c0_396] : memref<9x8x256xf32, #tpu.memory_space<vmem>>, vector<1x8x256xf32>
    %289 = vector.shape_cast %288 : vector<1x8x256xf32> to vector<8x256xf32>
    %cst_397 = arith.constant dense<0.000000e+00> : vector<16x256xf32>
    %290 = tpu.matmul %287, %289, %cst_397 {dimension_numbers = #tpu.dot_dimension_numbers<[1], [0], [0], [1], [0, 0, 1, 1], [], []>} : vector<16x8xf32>, vector<8x256xf32>, vector<16x256xf32> -> vector<16x256xf32>
    %291 = arith.addf %285, %290 : vector<16x256xf32>
    %c0_398 = arith.constant 0 : index
    %c0_399 = arith.constant 0 : index
    %c6_400 = arith.constant 6 : index
    %c2_401 = arith.constant 2 : index
    %c0_402 = arith.constant 0 : index
    %292 = vector.load %arg2[%c0_398, %c0_399, %c6_400, %c2_401, %c0_402] : memref<1x1x10x18x8xf32, #tpu.memory_space<vmem>>, vector<1x1x1x16x8xf32>
    %293 = vector.shape_cast %292 : vector<1x1x1x16x8xf32> to vector<16x8xf32>
    %c8_403 = arith.constant 8 : index
    %c0_404 = arith.constant 0 : index
    %c0_405 = arith.constant 0 : index
    %294 = vector.load %arg3[%c8_403, %c0_404, %c0_405] : memref<9x8x256xf32, #tpu.memory_space<vmem>>, vector<1x8x256xf32>
    %295 = vector.shape_cast %294 : vector<1x8x256xf32> to vector<8x256xf32>
    %cst_406 = arith.constant dense<0.000000e+00> : vector<16x256xf32>
    %296 = tpu.matmul %293, %295, %cst_406 {dimension_numbers = #tpu.dot_dimension_numbers<[1], [0], [0], [1], [0, 0, 1, 1], [], []>} : vector<16x8xf32>, vector<8x256xf32>, vector<16x256xf32> -> vector<16x256xf32>
    %297 = arith.addf %291, %296 : vector<16x256xf32>
    %298 = vector.broadcast %3 : vector<1x256xf32> to vector<16x256xf32>
    %299 = arith.addf %297, %298 : vector<16x256xf32>
    %cst_407 = arith.constant 0.000000e+00 : f32
    %300 = vector.broadcast %cst_407 : f32 to vector<16x256xf32>
    %301 = arith.maximumf %299, %300 : vector<16x256xf32>
    %cst_408 = arith.constant dense<0.000000e+00> : vector<256xf32>
    %302 = vector.multi_reduction <add>, %301, %cst_408 [0] : vector<16x256xf32> to vector<256xf32>
    %303 = vector.shape_cast %302 : vector<256xf32> to vector<1x256xf32>
    %304 = arith.addf %244, %303 : vector<1x256xf32>
    %c0_409 = arith.constant 0 : index
    %c0_410 = arith.constant 0 : index
    %c5_411 = arith.constant 5 : index
    %c0_412 = arith.constant 0 : index
    %c0_413 = arith.constant 0 : index
    %305 = vector.load %arg2[%c0_409, %c0_410, %c5_411, %c0_412, %c0_413] : memref<1x1x10x18x8xf32, #tpu.memory_space<vmem>>, vector<1x1x1x16x8xf32>
    %306 = vector.shape_cast %305 : vector<1x1x1x16x8xf32> to vector<16x8xf32>
    %c0_414 = arith.constant 0 : index
    %c0_415 = arith.constant 0 : index
    %c0_416 = arith.constant 0 : index
    %307 = vector.load %arg3[%c0_414, %c0_415, %c0_416] : memref<9x8x256xf32, #tpu.memory_space<vmem>>, vector<1x8x256xf32>
    %308 = vector.shape_cast %307 : vector<1x8x256xf32> to vector<8x256xf32>
    %cst_417 = arith.constant dense<0.000000e+00> : vector<16x256xf32>
    %309 = tpu.matmul %306, %308, %cst_417 {dimension_numbers = #tpu.dot_dimension_numbers<[1], [0], [0], [1], [0, 0, 1, 1], [], []>} : vector<16x8xf32>, vector<8x256xf32>, vector<16x256xf32> -> vector<16x256xf32>
    %c0_418 = arith.constant 0 : index
    %c0_419 = arith.constant 0 : index
    %c5_420 = arith.constant 5 : index
    %c1_421 = arith.constant 1 : index
    %c0_422 = arith.constant 0 : index
    %310 = vector.load %arg2[%c0_418, %c0_419, %c5_420, %c1_421, %c0_422] : memref<1x1x10x18x8xf32, #tpu.memory_space<vmem>>, vector<1x1x1x16x8xf32>
    %311 = vector.shape_cast %310 : vector<1x1x1x16x8xf32> to vector<16x8xf32>
    %c1_423 = arith.constant 1 : index
    %c0_424 = arith.constant 0 : index
    %c0_425 = arith.constant 0 : index
    %312 = vector.load %arg3[%c1_423, %c0_424, %c0_425] : memref<9x8x256xf32, #tpu.memory_space<vmem>>, vector<1x8x256xf32>
    %313 = vector.shape_cast %312 : vector<1x8x256xf32> to vector<8x256xf32>
    %cst_426 = arith.constant dense<0.000000e+00> : vector<16x256xf32>
    %314 = tpu.matmul %311, %313, %cst_426 {dimension_numbers = #tpu.dot_dimension_numbers<[1], [0], [0], [1], [0, 0, 1, 1], [], []>} : vector<16x8xf32>, vector<8x256xf32>, vector<16x256xf32> -> vector<16x256xf32>
    %315 = arith.addf %309, %314 : vector<16x256xf32>
    %c0_427 = arith.constant 0 : index
    %c0_428 = arith.constant 0 : index
    %c5_429 = arith.constant 5 : index
    %c2_430 = arith.constant 2 : index
    %c0_431 = arith.constant 0 : index
    %316 = vector.load %arg2[%c0_427, %c0_428, %c5_429, %c2_430, %c0_431] : memref<1x1x10x18x8xf32, #tpu.memory_space<vmem>>, vector<1x1x1x16x8xf32>
    %317 = vector.shape_cast %316 : vector<1x1x1x16x8xf32> to vector<16x8xf32>
    %c2_432 = arith.constant 2 : index
    %c0_433 = arith.constant 0 : index
    %c0_434 = arith.constant 0 : index
    %318 = vector.load %arg3[%c2_432, %c0_433, %c0_434] : memref<9x8x256xf32, #tpu.memory_space<vmem>>, vector<1x8x256xf32>
    %319 = vector.shape_cast %318 : vector<1x8x256xf32> to vector<8x256xf32>
    %cst_435 = arith.constant dense<0.000000e+00> : vector<16x256xf32>
    %320 = tpu.matmul %317, %319, %cst_435 {dimension_numbers = #tpu.dot_dimension_numbers<[1], [0], [0], [1], [0, 0, 1, 1], [], []>} : vector<16x8xf32>, vector<8x256xf32>, vector<16x256xf32> -> vector<16x256xf32>
    %321 = arith.addf %315, %320 : vector<16x256xf32>
    %c0_436 = arith.constant 0 : index
    %c0_437 = arith.constant 0 : index
    %c6_438 = arith.constant 6 : index
    %c0_439 = arith.constant 0 : index
    %c0_440 = arith.constant 0 : index
    %322 = vector.load %arg2[%c0_436, %c0_437, %c6_438, %c0_439, %c0_440] : memref<1x1x10x18x8xf32, #tpu.memory_space<vmem>>, vector<1x1x1x16x8xf32>
    %323 = vector.shape_cast %322 : vector<1x1x1x16x8xf32> to vector<16x8xf32>
    %c3_441 = arith.constant 3 : index
    %c0_442 = arith.constant 0 : index
    %c0_443 = arith.constant 0 : index
    %324 = vector.load %arg3[%c3_441, %c0_442, %c0_443] : memref<9x8x256xf32, #tpu.memory_space<vmem>>, vector<1x8x256xf32>
    %325 = vector.shape_cast %324 : vector<1x8x256xf32> to vector<8x256xf32>
    %cst_444 = arith.constant dense<0.000000e+00> : vector<16x256xf32>
    %326 = tpu.matmul %323, %325, %cst_444 {dimension_numbers = #tpu.dot_dimension_numbers<[1], [0], [0], [1], [0, 0, 1, 1], [], []>} : vector<16x8xf32>, vector<8x256xf32>, vector<16x256xf32> -> vector<16x256xf32>
    %327 = arith.addf %321, %326 : vector<16x256xf32>
    %c0_445 = arith.constant 0 : index
    %c0_446 = arith.constant 0 : index
    %c6_447 = arith.constant 6 : index
    %c1_448 = arith.constant 1 : index
    %c0_449 = arith.constant 0 : index
    %328 = vector.load %arg2[%c0_445, %c0_446, %c6_447, %c1_448, %c0_449] : memref<1x1x10x18x8xf32, #tpu.memory_space<vmem>>, vector<1x1x1x16x8xf32>
    %329 = vector.shape_cast %328 : vector<1x1x1x16x8xf32> to vector<16x8xf32>
    %c4_450 = arith.constant 4 : index
    %c0_451 = arith.constant 0 : index
    %c0_452 = arith.constant 0 : index
    %330 = vector.load %arg3[%c4_450, %c0_451, %c0_452] : memref<9x8x256xf32, #tpu.memory_space<vmem>>, vector<1x8x256xf32>
    %331 = vector.shape_cast %330 : vector<1x8x256xf32> to vector<8x256xf32>
    %cst_453 = arith.constant dense<0.000000e+00> : vector<16x256xf32>
    %332 = tpu.matmul %329, %331, %cst_453 {dimension_numbers = #tpu.dot_dimension_numbers<[1], [0], [0], [1], [0, 0, 1, 1], [], []>} : vector<16x8xf32>, vector<8x256xf32>, vector<16x256xf32> -> vector<16x256xf32>
    %333 = arith.addf %327, %332 : vector<16x256xf32>
    %c0_454 = arith.constant 0 : index
    %c0_455 = arith.constant 0 : index
    %c6_456 = arith.constant 6 : index
    %c2_457 = arith.constant 2 : index
    %c0_458 = arith.constant 0 : index
    %334 = vector.load %arg2[%c0_454, %c0_455, %c6_456, %c2_457, %c0_458] : memref<1x1x10x18x8xf32, #tpu.memory_space<vmem>>, vector<1x1x1x16x8xf32>
    %335 = vector.shape_cast %334 : vector<1x1x1x16x8xf32> to vector<16x8xf32>
    %c5_459 = arith.constant 5 : index
    %c0_460 = arith.constant 0 : index
    %c0_461 = arith.constant 0 : index
    %336 = vector.load %arg3[%c5_459, %c0_460, %c0_461] : memref<9x8x256xf32, #tpu.memory_space<vmem>>, vector<1x8x256xf32>
    %337 = vector.shape_cast %336 : vector<1x8x256xf32> to vector<8x256xf32>
    %cst_462 = arith.constant dense<0.000000e+00> : vector<16x256xf32>
    %338 = tpu.matmul %335, %337, %cst_462 {dimension_numbers = #tpu.dot_dimension_numbers<[1], [0], [0], [1], [0, 0, 1, 1], [], []>} : vector<16x8xf32>, vector<8x256xf32>, vector<16x256xf32> -> vector<16x256xf32>
    %339 = arith.addf %333, %338 : vector<16x256xf32>
    %c0_463 = arith.constant 0 : index
    %c0_464 = arith.constant 0 : index
    %c7_465 = arith.constant 7 : index
    %c0_466 = arith.constant 0 : index
    %c0_467 = arith.constant 0 : index
    %340 = vector.load %arg2[%c0_463, %c0_464, %c7_465, %c0_466, %c0_467] : memref<1x1x10x18x8xf32, #tpu.memory_space<vmem>>, vector<1x1x1x16x8xf32>
    %341 = vector.shape_cast %340 : vector<1x1x1x16x8xf32> to vector<16x8xf32>
    %c6_468 = arith.constant 6 : index
    %c0_469 = arith.constant 0 : index
    %c0_470 = arith.constant 0 : index
    %342 = vector.load %arg3[%c6_468, %c0_469, %c0_470] : memref<9x8x256xf32, #tpu.memory_space<vmem>>, vector<1x8x256xf32>
    %343 = vector.shape_cast %342 : vector<1x8x256xf32> to vector<8x256xf32>
    %cst_471 = arith.constant dense<0.000000e+00> : vector<16x256xf32>
    %344 = tpu.matmul %341, %343, %cst_471 {dimension_numbers = #tpu.dot_dimension_numbers<[1], [0], [0], [1], [0, 0, 1, 1], [], []>} : vector<16x8xf32>, vector<8x256xf32>, vector<16x256xf32> -> vector<16x256xf32>
    %345 = arith.addf %339, %344 : vector<16x256xf32>
    %c0_472 = arith.constant 0 : index
    %c0_473 = arith.constant 0 : index
    %c7_474 = arith.constant 7 : index
    %c1_475 = arith.constant 1 : index
    %c0_476 = arith.constant 0 : index
    %346 = vector.load %arg2[%c0_472, %c0_473, %c7_474, %c1_475, %c0_476] : memref<1x1x10x18x8xf32, #tpu.memory_space<vmem>>, vector<1x1x1x16x8xf32>
    %347 = vector.shape_cast %346 : vector<1x1x1x16x8xf32> to vector<16x8xf32>
    %c7_477 = arith.constant 7 : index
    %c0_478 = arith.constant 0 : index
    %c0_479 = arith.constant 0 : index
    %348 = vector.load %arg3[%c7_477, %c0_478, %c0_479] : memref<9x8x256xf32, #tpu.memory_space<vmem>>, vector<1x8x256xf32>
    %349 = vector.shape_cast %348 : vector<1x8x256xf32> to vector<8x256xf32>
    %cst_480 = arith.constant dense<0.000000e+00> : vector<16x256xf32>
    %350 = tpu.matmul %347, %349, %cst_480 {dimension_numbers = #tpu.dot_dimension_numbers<[1], [0], [0], [1], [0, 0, 1, 1], [], []>} : vector<16x8xf32>, vector<8x256xf32>, vector<16x256xf32> -> vector<16x256xf32>
    %351 = arith.addf %345, %350 : vector<16x256xf32>
    %c0_481 = arith.constant 0 : index
    %c0_482 = arith.constant 0 : index
    %c7_483 = arith.constant 7 : index
    %c2_484 = arith.constant 2 : index
    %c0_485 = arith.constant 0 : index
    %352 = vector.load %arg2[%c0_481, %c0_482, %c7_483, %c2_484, %c0_485] : memref<1x1x10x18x8xf32, #tpu.memory_space<vmem>>, vector<1x1x1x16x8xf32>
    %353 = vector.shape_cast %352 : vector<1x1x1x16x8xf32> to vector<16x8xf32>
    %c8_486 = arith.constant 8 : index
    %c0_487 = arith.constant 0 : index
    %c0_488 = arith.constant 0 : index
    %354 = vector.load %arg3[%c8_486, %c0_487, %c0_488] : memref<9x8x256xf32, #tpu.memory_space<vmem>>, vector<1x8x256xf32>
    %355 = vector.shape_cast %354 : vector<1x8x256xf32> to vector<8x256xf32>
    %cst_489 = arith.constant dense<0.000000e+00> : vector<16x256xf32>
    %356 = tpu.matmul %353, %355, %cst_489 {dimension_numbers = #tpu.dot_dimension_numbers<[1], [0], [0], [1], [0, 0, 1, 1], [], []>} : vector<16x8xf32>, vector<8x256xf32>, vector<16x256xf32> -> vector<16x256xf32>
    %357 = arith.addf %351, %356 : vector<16x256xf32>
    %358 = vector.broadcast %3 : vector<1x256xf32> to vector<16x256xf32>
    %359 = arith.addf %357, %358 : vector<16x256xf32>
    %cst_490 = arith.constant 0.000000e+00 : f32
    %360 = vector.broadcast %cst_490 : f32 to vector<16x256xf32>
    %361 = arith.maximumf %359, %360 : vector<16x256xf32>
    %cst_491 = arith.constant dense<0.000000e+00> : vector<256xf32>
    %362 = vector.multi_reduction <add>, %361, %cst_491 [0] : vector<16x256xf32> to vector<256xf32>
    %363 = vector.shape_cast %362 : vector<256xf32> to vector<1x256xf32>
    %364 = arith.addf %304, %363 : vector<1x256xf32>
    %c0_492 = arith.constant 0 : index
    %c0_493 = arith.constant 0 : index
    %c6_494 = arith.constant 6 : index
    %c0_495 = arith.constant 0 : index
    %c0_496 = arith.constant 0 : index
    %365 = vector.load %arg2[%c0_492, %c0_493, %c6_494, %c0_495, %c0_496] : memref<1x1x10x18x8xf32, #tpu.memory_space<vmem>>, vector<1x1x1x16x8xf32>
    %366 = vector.shape_cast %365 : vector<1x1x1x16x8xf32> to vector<16x8xf32>
    %c0_497 = arith.constant 0 : index
    %c0_498 = arith.constant 0 : index
    %c0_499 = arith.constant 0 : index
    %367 = vector.load %arg3[%c0_497, %c0_498, %c0_499] : memref<9x8x256xf32, #tpu.memory_space<vmem>>, vector<1x8x256xf32>
    %368 = vector.shape_cast %367 : vector<1x8x256xf32> to vector<8x256xf32>
    %cst_500 = arith.constant dense<0.000000e+00> : vector<16x256xf32>
    %369 = tpu.matmul %366, %368, %cst_500 {dimension_numbers = #tpu.dot_dimension_numbers<[1], [0], [0], [1], [0, 0, 1, 1], [], []>} : vector<16x8xf32>, vector<8x256xf32>, vector<16x256xf32> -> vector<16x256xf32>
    %c0_501 = arith.constant 0 : index
    %c0_502 = arith.constant 0 : index
    %c6_503 = arith.constant 6 : index
    %c1_504 = arith.constant 1 : index
    %c0_505 = arith.constant 0 : index
    %370 = vector.load %arg2[%c0_501, %c0_502, %c6_503, %c1_504, %c0_505] : memref<1x1x10x18x8xf32, #tpu.memory_space<vmem>>, vector<1x1x1x16x8xf32>
    %371 = vector.shape_cast %370 : vector<1x1x1x16x8xf32> to vector<16x8xf32>
    %c1_506 = arith.constant 1 : index
    %c0_507 = arith.constant 0 : index
    %c0_508 = arith.constant 0 : index
    %372 = vector.load %arg3[%c1_506, %c0_507, %c0_508] : memref<9x8x256xf32, #tpu.memory_space<vmem>>, vector<1x8x256xf32>
    %373 = vector.shape_cast %372 : vector<1x8x256xf32> to vector<8x256xf32>
    %cst_509 = arith.constant dense<0.000000e+00> : vector<16x256xf32>
    %374 = tpu.matmul %371, %373, %cst_509 {dimension_numbers = #tpu.dot_dimension_numbers<[1], [0], [0], [1], [0, 0, 1, 1], [], []>} : vector<16x8xf32>, vector<8x256xf32>, vector<16x256xf32> -> vector<16x256xf32>
    %375 = arith.addf %369, %374 : vector<16x256xf32>
    %c0_510 = arith.constant 0 : index
    %c0_511 = arith.constant 0 : index
    %c6_512 = arith.constant 6 : index
    %c2_513 = arith.constant 2 : index
    %c0_514 = arith.constant 0 : index
    %376 = vector.load %arg2[%c0_510, %c0_511, %c6_512, %c2_513, %c0_514] : memref<1x1x10x18x8xf32, #tpu.memory_space<vmem>>, vector<1x1x1x16x8xf32>
    %377 = vector.shape_cast %376 : vector<1x1x1x16x8xf32> to vector<16x8xf32>
    %c2_515 = arith.constant 2 : index
    %c0_516 = arith.constant 0 : index
    %c0_517 = arith.constant 0 : index
    %378 = vector.load %arg3[%c2_515, %c0_516, %c0_517] : memref<9x8x256xf32, #tpu.memory_space<vmem>>, vector<1x8x256xf32>
    %379 = vector.shape_cast %378 : vector<1x8x256xf32> to vector<8x256xf32>
    %cst_518 = arith.constant dense<0.000000e+00> : vector<16x256xf32>
    %380 = tpu.matmul %377, %379, %cst_518 {dimension_numbers = #tpu.dot_dimension_numbers<[1], [0], [0], [1], [0, 0, 1, 1], [], []>} : vector<16x8xf32>, vector<8x256xf32>, vector<16x256xf32> -> vector<16x256xf32>
    %381 = arith.addf %375, %380 : vector<16x256xf32>
    %c0_519 = arith.constant 0 : index
    %c0_520 = arith.constant 0 : index
    %c7_521 = arith.constant 7 : index
    %c0_522 = arith.constant 0 : index
    %c0_523 = arith.constant 0 : index
    %382 = vector.load %arg2[%c0_519, %c0_520, %c7_521, %c0_522, %c0_523] : memref<1x1x10x18x8xf32, #tpu.memory_space<vmem>>, vector<1x1x1x16x8xf32>
    %383 = vector.shape_cast %382 : vector<1x1x1x16x8xf32> to vector<16x8xf32>
    %c3_524 = arith.constant 3 : index
    %c0_525 = arith.constant 0 : index
    %c0_526 = arith.constant 0 : index
    %384 = vector.load %arg3[%c3_524, %c0_525, %c0_526] : memref<9x8x256xf32, #tpu.memory_space<vmem>>, vector<1x8x256xf32>
    %385 = vector.shape_cast %384 : vector<1x8x256xf32> to vector<8x256xf32>
    %cst_527 = arith.constant dense<0.000000e+00> : vector<16x256xf32>
    %386 = tpu.matmul %383, %385, %cst_527 {dimension_numbers = #tpu.dot_dimension_numbers<[1], [0], [0], [1], [0, 0, 1, 1], [], []>} : vector<16x8xf32>, vector<8x256xf32>, vector<16x256xf32> -> vector<16x256xf32>
    %387 = arith.addf %381, %386 : vector<16x256xf32>
    %c0_528 = arith.constant 0 : index
    %c0_529 = arith.constant 0 : index
    %c7_530 = arith.constant 7 : index
    %c1_531 = arith.constant 1 : index
    %c0_532 = arith.constant 0 : index
    %388 = vector.load %arg2[%c0_528, %c0_529, %c7_530, %c1_531, %c0_532] : memref<1x1x10x18x8xf32, #tpu.memory_space<vmem>>, vector<1x1x1x16x8xf32>
    %389 = vector.shape_cast %388 : vector<1x1x1x16x8xf32> to vector<16x8xf32>
    %c4_533 = arith.constant 4 : index
    %c0_534 = arith.constant 0 : index
    %c0_535 = arith.constant 0 : index
    %390 = vector.load %arg3[%c4_533, %c0_534, %c0_535] : memref<9x8x256xf32, #tpu.memory_space<vmem>>, vector<1x8x256xf32>
    %391 = vector.shape_cast %390 : vector<1x8x256xf32> to vector<8x256xf32>
    %cst_536 = arith.constant dense<0.000000e+00> : vector<16x256xf32>
    %392 = tpu.matmul %389, %391, %cst_536 {dimension_numbers = #tpu.dot_dimension_numbers<[1], [0], [0], [1], [0, 0, 1, 1], [], []>} : vector<16x8xf32>, vector<8x256xf32>, vector<16x256xf32> -> vector<16x256xf32>
    %393 = arith.addf %387, %392 : vector<16x256xf32>
    %c0_537 = arith.constant 0 : index
    %c0_538 = arith.constant 0 : index
    %c7_539 = arith.constant 7 : index
    %c2_540 = arith.constant 2 : index
    %c0_541 = arith.constant 0 : index
    %394 = vector.load %arg2[%c0_537, %c0_538, %c7_539, %c2_540, %c0_541] : memref<1x1x10x18x8xf32, #tpu.memory_space<vmem>>, vector<1x1x1x16x8xf32>
    %395 = vector.shape_cast %394 : vector<1x1x1x16x8xf32> to vector<16x8xf32>
    %c5_542 = arith.constant 5 : index
    %c0_543 = arith.constant 0 : index
    %c0_544 = arith.constant 0 : index
    %396 = vector.load %arg3[%c5_542, %c0_543, %c0_544] : memref<9x8x256xf32, #tpu.memory_space<vmem>>, vector<1x8x256xf32>
    %397 = vector.shape_cast %396 : vector<1x8x256xf32> to vector<8x256xf32>
    %cst_545 = arith.constant dense<0.000000e+00> : vector<16x256xf32>
    %398 = tpu.matmul %395, %397, %cst_545 {dimension_numbers = #tpu.dot_dimension_numbers<[1], [0], [0], [1], [0, 0, 1, 1], [], []>} : vector<16x8xf32>, vector<8x256xf32>, vector<16x256xf32> -> vector<16x256xf32>
    %399 = arith.addf %393, %398 : vector<16x256xf32>
    %c0_546 = arith.constant 0 : index
    %c0_547 = arith.constant 0 : index
    %c8_548 = arith.constant 8 : index
    %c0_549 = arith.constant 0 : index
    %c0_550 = arith.constant 0 : index
    %400 = vector.load %arg2[%c0_546, %c0_547, %c8_548, %c0_549, %c0_550] : memref<1x1x10x18x8xf32, #tpu.memory_space<vmem>>, vector<1x1x1x16x8xf32>
    %401 = vector.shape_cast %400 : vector<1x1x1x16x8xf32> to vector<16x8xf32>
    %c6_551 = arith.constant 6 : index
    %c0_552 = arith.constant 0 : index
    %c0_553 = arith.constant 0 : index
    %402 = vector.load %arg3[%c6_551, %c0_552, %c0_553] : memref<9x8x256xf32, #tpu.memory_space<vmem>>, vector<1x8x256xf32>
    %403 = vector.shape_cast %402 : vector<1x8x256xf32> to vector<8x256xf32>
    %cst_554 = arith.constant dense<0.000000e+00> : vector<16x256xf32>
    %404 = tpu.matmul %401, %403, %cst_554 {dimension_numbers = #tpu.dot_dimension_numbers<[1], [0], [0], [1], [0, 0, 1, 1], [], []>} : vector<16x8xf32>, vector<8x256xf32>, vector<16x256xf32> -> vector<16x256xf32>
    %405 = arith.addf %399, %404 : vector<16x256xf32>
    %c0_555 = arith.constant 0 : index
    %c0_556 = arith.constant 0 : index
    %c8_557 = arith.constant 8 : index
    %c1_558 = arith.constant 1 : index
    %c0_559 = arith.constant 0 : index
    %406 = vector.load %arg2[%c0_555, %c0_556, %c8_557, %c1_558, %c0_559] : memref<1x1x10x18x8xf32, #tpu.memory_space<vmem>>, vector<1x1x1x16x8xf32>
    %407 = vector.shape_cast %406 : vector<1x1x1x16x8xf32> to vector<16x8xf32>
    %c7_560 = arith.constant 7 : index
    %c0_561 = arith.constant 0 : index
    %c0_562 = arith.constant 0 : index
    %408 = vector.load %arg3[%c7_560, %c0_561, %c0_562] : memref<9x8x256xf32, #tpu.memory_space<vmem>>, vector<1x8x256xf32>
    %409 = vector.shape_cast %408 : vector<1x8x256xf32> to vector<8x256xf32>
    %cst_563 = arith.constant dense<0.000000e+00> : vector<16x256xf32>
    %410 = tpu.matmul %407, %409, %cst_563 {dimension_numbers = #tpu.dot_dimension_numbers<[1], [0], [0], [1], [0, 0, 1, 1], [], []>} : vector<16x8xf32>, vector<8x256xf32>, vector<16x256xf32> -> vector<16x256xf32>
    %411 = arith.addf %405, %410 : vector<16x256xf32>
    %c0_564 = arith.constant 0 : index
    %c0_565 = arith.constant 0 : index
    %c8_566 = arith.constant 8 : index
    %c2_567 = arith.constant 2 : index
    %c0_568 = arith.constant 0 : index
    %412 = vector.load %arg2[%c0_564, %c0_565, %c8_566, %c2_567, %c0_568] : memref<1x1x10x18x8xf32, #tpu.memory_space<vmem>>, vector<1x1x1x16x8xf32>
    %413 = vector.shape_cast %412 : vector<1x1x1x16x8xf32> to vector<16x8xf32>
    %c8_569 = arith.constant 8 : index
    %c0_570 = arith.constant 0 : index
    %c0_571 = arith.constant 0 : index
    %414 = vector.load %arg3[%c8_569, %c0_570, %c0_571] : memref<9x8x256xf32, #tpu.memory_space<vmem>>, vector<1x8x256xf32>
    %415 = vector.shape_cast %414 : vector<1x8x256xf32> to vector<8x256xf32>
    %cst_572 = arith.constant dense<0.000000e+00> : vector<16x256xf32>
    %416 = tpu.matmul %413, %415, %cst_572 {dimension_numbers = #tpu.dot_dimension_numbers<[1], [0], [0], [1], [0, 0, 1, 1], [], []>} : vector<16x8xf32>, vector<8x256xf32>, vector<16x256xf32> -> vector<16x256xf32>
    %417 = arith.addf %411, %416 : vector<16x256xf32>
    %418 = vector.broadcast %3 : vector<1x256xf32> to vector<16x256xf32>
    %419 = arith.addf %417, %418 : vector<16x256xf32>
    %cst_573 = arith.constant 0.000000e+00 : f32
    %420 = vector.broadcast %cst_573 : f32 to vector<16x256xf32>
    %421 = arith.maximumf %419, %420 : vector<16x256xf32>
    %cst_574 = arith.constant dense<0.000000e+00> : vector<256xf32>
    %422 = vector.multi_reduction <add>, %421, %cst_574 [0] : vector<16x256xf32> to vector<256xf32>
    %423 = vector.shape_cast %422 : vector<256xf32> to vector<1x256xf32>
    %424 = arith.addf %364, %423 : vector<1x256xf32>
    %c0_575 = arith.constant 0 : index
    %c0_576 = arith.constant 0 : index
    %c7_577 = arith.constant 7 : index
    %c0_578 = arith.constant 0 : index
    %c0_579 = arith.constant 0 : index
    %425 = vector.load %arg2[%c0_575, %c0_576, %c7_577, %c0_578, %c0_579] : memref<1x1x10x18x8xf32, #tpu.memory_space<vmem>>, vector<1x1x1x16x8xf32>
    %426 = vector.shape_cast %425 : vector<1x1x1x16x8xf32> to vector<16x8xf32>
    %c0_580 = arith.constant 0 : index
    %c0_581 = arith.constant 0 : index
    %c0_582 = arith.constant 0 : index
    %427 = vector.load %arg3[%c0_580, %c0_581, %c0_582] : memref<9x8x256xf32, #tpu.memory_space<vmem>>, vector<1x8x256xf32>
    %428 = vector.shape_cast %427 : vector<1x8x256xf32> to vector<8x256xf32>
    %cst_583 = arith.constant dense<0.000000e+00> : vector<16x256xf32>
    %429 = tpu.matmul %426, %428, %cst_583 {dimension_numbers = #tpu.dot_dimension_numbers<[1], [0], [0], [1], [0, 0, 1, 1], [], []>} : vector<16x8xf32>, vector<8x256xf32>, vector<16x256xf32> -> vector<16x256xf32>
    %c0_584 = arith.constant 0 : index
    %c0_585 = arith.constant 0 : index
    %c7_586 = arith.constant 7 : index
    %c1_587 = arith.constant 1 : index
    %c0_588 = arith.constant 0 : index
    %430 = vector.load %arg2[%c0_584, %c0_585, %c7_586, %c1_587, %c0_588] : memref<1x1x10x18x8xf32, #tpu.memory_space<vmem>>, vector<1x1x1x16x8xf32>
    %431 = vector.shape_cast %430 : vector<1x1x1x16x8xf32> to vector<16x8xf32>
    %c1_589 = arith.constant 1 : index
    %c0_590 = arith.constant 0 : index
    %c0_591 = arith.constant 0 : index
    %432 = vector.load %arg3[%c1_589, %c0_590, %c0_591] : memref<9x8x256xf32, #tpu.memory_space<vmem>>, vector<1x8x256xf32>
    %433 = vector.shape_cast %432 : vector<1x8x256xf32> to vector<8x256xf32>
    %cst_592 = arith.constant dense<0.000000e+00> : vector<16x256xf32>
    %434 = tpu.matmul %431, %433, %cst_592 {dimension_numbers = #tpu.dot_dimension_numbers<[1], [0], [0], [1], [0, 0, 1, 1], [], []>} : vector<16x8xf32>, vector<8x256xf32>, vector<16x256xf32> -> vector<16x256xf32>
    %435 = arith.addf %429, %434 : vector<16x256xf32>
    %c0_593 = arith.constant 0 : index
    %c0_594 = arith.constant 0 : index
    %c7_595 = arith.constant 7 : index
    %c2_596 = arith.constant 2 : index
    %c0_597 = arith.constant 0 : index
    %436 = vector.load %arg2[%c0_593, %c0_594, %c7_595, %c2_596, %c0_597] : memref<1x1x10x18x8xf32, #tpu.memory_space<vmem>>, vector<1x1x1x16x8xf32>
    %437 = vector.shape_cast %436 : vector<1x1x1x16x8xf32> to vector<16x8xf32>
    %c2_598 = arith.constant 2 : index
    %c0_599 = arith.constant 0 : index
    %c0_600 = arith.constant 0 : index
    %438 = vector.load %arg3[%c2_598, %c0_599, %c0_600] : memref<9x8x256xf32, #tpu.memory_space<vmem>>, vector<1x8x256xf32>
    %439 = vector.shape_cast %438 : vector<1x8x256xf32> to vector<8x256xf32>
    %cst_601 = arith.constant dense<0.000000e+00> : vector<16x256xf32>
    %440 = tpu.matmul %437, %439, %cst_601 {dimension_numbers = #tpu.dot_dimension_numbers<[1], [0], [0], [1], [0, 0, 1, 1], [], []>} : vector<16x8xf32>, vector<8x256xf32>, vector<16x256xf32> -> vector<16x256xf32>
    %441 = arith.addf %435, %440 : vector<16x256xf32>
    %c0_602 = arith.constant 0 : index
    %c0_603 = arith.constant 0 : index
    %c8_604 = arith.constant 8 : index
    %c0_605 = arith.constant 0 : index
    %c0_606 = arith.constant 0 : index
    %442 = vector.load %arg2[%c0_602, %c0_603, %c8_604, %c0_605, %c0_606] : memref<1x1x10x18x8xf32, #tpu.memory_space<vmem>>, vector<1x1x1x16x8xf32>
    %443 = vector.shape_cast %442 : vector<1x1x1x16x8xf32> to vector<16x8xf32>
    %c3_607 = arith.constant 3 : index
    %c0_608 = arith.constant 0 : index
    %c0_609 = arith.constant 0 : index
    %444 = vector.load %arg3[%c3_607, %c0_608, %c0_609] : memref<9x8x256xf32, #tpu.memory_space<vmem>>, vector<1x8x256xf32>
    %445 = vector.shape_cast %444 : vector<1x8x256xf32> to vector<8x256xf32>
    %cst_610 = arith.constant dense<0.000000e+00> : vector<16x256xf32>
    %446 = tpu.matmul %443, %445, %cst_610 {dimension_numbers = #tpu.dot_dimension_numbers<[1], [0], [0], [1], [0, 0, 1, 1], [], []>} : vector<16x8xf32>, vector<8x256xf32>, vector<16x256xf32> -> vector<16x256xf32>
    %447 = arith.addf %441, %446 : vector<16x256xf32>
    %c0_611 = arith.constant 0 : index
    %c0_612 = arith.constant 0 : index
    %c8_613 = arith.constant 8 : index
    %c1_614 = arith.constant 1 : index
    %c0_615 = arith.constant 0 : index
    %448 = vector.load %arg2[%c0_611, %c0_612, %c8_613, %c1_614, %c0_615] : memref<1x1x10x18x8xf32, #tpu.memory_space<vmem>>, vector<1x1x1x16x8xf32>
    %449 = vector.shape_cast %448 : vector<1x1x1x16x8xf32> to vector<16x8xf32>
    %c4_616 = arith.constant 4 : index
    %c0_617 = arith.constant 0 : index
    %c0_618 = arith.constant 0 : index
    %450 = vector.load %arg3[%c4_616, %c0_617, %c0_618] : memref<9x8x256xf32, #tpu.memory_space<vmem>>, vector<1x8x256xf32>
    %451 = vector.shape_cast %450 : vector<1x8x256xf32> to vector<8x256xf32>
    %cst_619 = arith.constant dense<0.000000e+00> : vector<16x256xf32>
    %452 = tpu.matmul %449, %451, %cst_619 {dimension_numbers = #tpu.dot_dimension_numbers<[1], [0], [0], [1], [0, 0, 1, 1], [], []>} : vector<16x8xf32>, vector<8x256xf32>, vector<16x256xf32> -> vector<16x256xf32>
    %453 = arith.addf %447, %452 : vector<16x256xf32>
    %c0_620 = arith.constant 0 : index
    %c0_621 = arith.constant 0 : index
    %c8_622 = arith.constant 8 : index
    %c2_623 = arith.constant 2 : index
    %c0_624 = arith.constant 0 : index
    %454 = vector.load %arg2[%c0_620, %c0_621, %c8_622, %c2_623, %c0_624] : memref<1x1x10x18x8xf32, #tpu.memory_space<vmem>>, vector<1x1x1x16x8xf32>
    %455 = vector.shape_cast %454 : vector<1x1x1x16x8xf32> to vector<16x8xf32>
    %c5_625 = arith.constant 5 : index
    %c0_626 = arith.constant 0 : index
    %c0_627 = arith.constant 0 : index
    %456 = vector.load %arg3[%c5_625, %c0_626, %c0_627] : memref<9x8x256xf32, #tpu.memory_space<vmem>>, vector<1x8x256xf32>
    %457 = vector.shape_cast %456 : vector<1x8x256xf32> to vector<8x256xf32>
    %cst_628 = arith.constant dense<0.000000e+00> : vector<16x256xf32>
    %458 = tpu.matmul %455, %457, %cst_628 {dimension_numbers = #tpu.dot_dimension_numbers<[1], [0], [0], [1], [0, 0, 1, 1], [], []>} : vector<16x8xf32>, vector<8x256xf32>, vector<16x256xf32> -> vector<16x256xf32>
    %459 = arith.addf %453, %458 : vector<16x256xf32>
    %c0_629 = arith.constant 0 : index
    %c0_630 = arith.constant 0 : index
    %c9 = arith.constant 9 : index
    %c0_631 = arith.constant 0 : index
    %c0_632 = arith.constant 0 : index
    %460 = vector.load %arg2[%c0_629, %c0_630, %c9, %c0_631, %c0_632] : memref<1x1x10x18x8xf32, #tpu.memory_space<vmem>>, vector<1x1x1x16x8xf32>
    %461 = vector.shape_cast %460 : vector<1x1x1x16x8xf32> to vector<16x8xf32>
    %c6_633 = arith.constant 6 : index
    %c0_634 = arith.constant 0 : index
    %c0_635 = arith.constant 0 : index
    %462 = vector.load %arg3[%c6_633, %c0_634, %c0_635] : memref<9x8x256xf32, #tpu.memory_space<vmem>>, vector<1x8x256xf32>
    %463 = vector.shape_cast %462 : vector<1x8x256xf32> to vector<8x256xf32>
    %cst_636 = arith.constant dense<0.000000e+00> : vector<16x256xf32>
    %464 = tpu.matmul %461, %463, %cst_636 {dimension_numbers = #tpu.dot_dimension_numbers<[1], [0], [0], [1], [0, 0, 1, 1], [], []>} : vector<16x8xf32>, vector<8x256xf32>, vector<16x256xf32> -> vector<16x256xf32>
    %465 = arith.addf %459, %464 : vector<16x256xf32>
    %c0_637 = arith.constant 0 : index
    %c0_638 = arith.constant 0 : index
    %c9_639 = arith.constant 9 : index
    %c1_640 = arith.constant 1 : index
    %c0_641 = arith.constant 0 : index
    %466 = vector.load %arg2[%c0_637, %c0_638, %c9_639, %c1_640, %c0_641] : memref<1x1x10x18x8xf32, #tpu.memory_space<vmem>>, vector<1x1x1x16x8xf32>
    %467 = vector.shape_cast %466 : vector<1x1x1x16x8xf32> to vector<16x8xf32>
    %c7_642 = arith.constant 7 : index
    %c0_643 = arith.constant 0 : index
    %c0_644 = arith.constant 0 : index
    %468 = vector.load %arg3[%c7_642, %c0_643, %c0_644] : memref<9x8x256xf32, #tpu.memory_space<vmem>>, vector<1x8x256xf32>
    %469 = vector.shape_cast %468 : vector<1x8x256xf32> to vector<8x256xf32>
    %cst_645 = arith.constant dense<0.000000e+00> : vector<16x256xf32>
    %470 = tpu.matmul %467, %469, %cst_645 {dimension_numbers = #tpu.dot_dimension_numbers<[1], [0], [0], [1], [0, 0, 1, 1], [], []>} : vector<16x8xf32>, vector<8x256xf32>, vector<16x256xf32> -> vector<16x256xf32>
    %471 = arith.addf %465, %470 : vector<16x256xf32>
    %c0_646 = arith.constant 0 : index
    %c0_647 = arith.constant 0 : index
    %c9_648 = arith.constant 9 : index
    %c2_649 = arith.constant 2 : index
    %c0_650 = arith.constant 0 : index
    %472 = vector.load %arg2[%c0_646, %c0_647, %c9_648, %c2_649, %c0_650] : memref<1x1x10x18x8xf32, #tpu.memory_space<vmem>>, vector<1x1x1x16x8xf32>
    %473 = vector.shape_cast %472 : vector<1x1x1x16x8xf32> to vector<16x8xf32>
    %c8_651 = arith.constant 8 : index
    %c0_652 = arith.constant 0 : index
    %c0_653 = arith.constant 0 : index
    %474 = vector.load %arg3[%c8_651, %c0_652, %c0_653] : memref<9x8x256xf32, #tpu.memory_space<vmem>>, vector<1x8x256xf32>
    %475 = vector.shape_cast %474 : vector<1x8x256xf32> to vector<8x256xf32>
    %cst_654 = arith.constant dense<0.000000e+00> : vector<16x256xf32>
    %476 = tpu.matmul %473, %475, %cst_654 {dimension_numbers = #tpu.dot_dimension_numbers<[1], [0], [0], [1], [0, 0, 1, 1], [], []>} : vector<16x8xf32>, vector<8x256xf32>, vector<16x256xf32> -> vector<16x256xf32>
    %477 = arith.addf %471, %476 : vector<16x256xf32>
    %478 = vector.broadcast %3 : vector<1x256xf32> to vector<16x256xf32>
    %479 = arith.addf %477, %478 : vector<16x256xf32>
    %cst_655 = arith.constant 0.000000e+00 : f32
    %480 = vector.broadcast %cst_655 : f32 to vector<16x256xf32>
    %481 = arith.maximumf %479, %480 : vector<16x256xf32>
    %cst_656 = arith.constant dense<0.000000e+00> : vector<256xf32>
    %482 = vector.multi_reduction <add>, %481, %cst_656 [0] : vector<16x256xf32> to vector<256xf32>
    %483 = vector.shape_cast %482 : vector<256xf32> to vector<1x256xf32>
    %484 = arith.addf %424, %483 : vector<1x256xf32>
    %c0_657 = arith.constant 0 : index
    %c0_658 = arith.constant 0 : index
    %485 = vector.load %arg8[%c0_657, %c0_658] : memref<1x256xf32, #tpu.memory_space<vmem>>, vector<1x256xf32>
    %486 = arith.addf %485, %484 : vector<1x256xf32>
    %c0_659 = arith.constant 0 : index
    %c0_660 = arith.constant 0 : index
    %487 = vector.load %arg8[%c0_659, %c0_660] : memref<1x256xf32, #tpu.memory_space<vmem>>, vector<1x256xf32>
    tpu.vector_store %arg8[%c0_659, %c0_660], %486 {strides = array<i32>} : memref<1x256xf32, #tpu.memory_space<vmem>>, vector<1x256xf32>,
    %c1_i32 = arith.constant 1 : i32
    %488 = arith.cmpi eq, %arg1, %c1_i32 : i32
    %489 = arith.extui %488 : i1 to i32
    %c0_i32_661 = arith.constant 0 : i32
    %490 = arith.cmpi ne, %489, %c0_i32_661 : i32
    scf.if %490 {
      %c0_662 = arith.constant 0 : index
      %c0_663 = arith.constant 0 : index
      %491 = vector.load %arg8[%c0_662, %c0_663] : memref<1x256xf32, #tpu.memory_space<vmem>>, vector<1x256xf32>
      %cst_664 = arith.constant 3.906250e-03 : f32
      %492 = vector.broadcast %cst_664 : f32 to vector<1x256xf32>
      %493 = arith.mulf %491, %492 : vector<1x256xf32>
      %c0_665 = arith.constant 0 : index
      %c0_666 = arith.constant 0 : index
      %494 = vector.load %arg5[%c0_665, %c0_666] : memref<256x128xf32, #tpu.memory_space<vmem>>, vector<256x128xf32>
      %cst_667 = arith.constant dense<0.000000e+00> : vector<1x128xf32>
      %495 = tpu.matmul %493, %494, %cst_667 {dimension_numbers = #tpu.dot_dimension_numbers<[1], [0], [0], [1], [0, 0, 1, 1], [], []>} : vector<1x256xf32>, vector<256x128xf32>, vector<1x128xf32> -> vector<1x128xf32>
      %c0_668 = arith.constant 0 : index
      %c0_669 = arith.constant 0 : index
      %496 = vector.load %arg6[%c0_668, %c0_669] : memref<1x128xf32, #tpu.memory_space<vmem>>, vector<1x128xf32>
      %497 = arith.addf %495, %496 : vector<1x128xf32>
      %c0_670 = arith.constant 0 : index
      %c0_671 = arith.constant 0 : index
      %c0_672 = arith.constant 0 : index
      %498 = vector.load %arg7[%c0_670, %c0_671, %c0_672] : memref<1x1x128xf32, #tpu.memory_space<vmem>>, vector<1x1x128xf32>
      %499 = vector.shape_cast %498 : vector<1x1x128xf32> to vector<1x128xf32>
      %500 = vector.shape_cast %497 : vector<1x128xf32> to vector<1x1x128xf32>
      tpu.vector_store %arg7[%c0_670, %c0_671, %c0_672], %500 {strides = array<i32>} : memref<1x1x128xf32, #tpu.memory_space<vmem>>, vector<1x1x128xf32>,
    } else {
    }
    return
  }
  func.func @transform_0(%arg0: i32, %arg1: i32) -> (i32, i32, i32, i32, i32) {
    %c0_i32 = arith.constant 0 : i32
    %c0_i32_0 = arith.constant 0 : i32
    %c0_i32_1 = arith.constant 0 : i32
    %c0_i32_2 = arith.constant 0 : i32
    return %arg0, %arg1, %c0_i32, %c0_i32_0, %c0_i32_1 : i32, i32, i32, i32, i32
  }
  func.func @transform_1(%arg0: i32, %arg1: i32) -> (i32, i32, i32) {
    %c0_i32 = arith.constant 0 : i32
    %c0_i32_0 = arith.constant 0 : i32
    %c0_i32_1 = arith.constant 0 : i32
    %c0_i32_2 = arith.constant 0 : i32
    return %c0_i32, %c0_i32_0, %c0_i32_1 : i32, i32, i32
  }
  func.func @transform_2(%arg0: i32, %arg1: i32) -> (i32, i32) {
    %c0_i32 = arith.constant 0 : i32
    %c0_i32_0 = arith.constant 0 : i32
    %c0_i32_1 = arith.constant 0 : i32
    return %c0_i32, %c0_i32_0 : i32, i32
  }
  func.func @transform_3(%arg0: i32, %arg1: i32) -> (i32, i32) {
    %c0_i32 = arith.constant 0 : i32
    %c0_i32_0 = arith.constant 0 : i32
    %c0_i32_1 = arith.constant 0 : i32
    return %c0_i32, %c0_i32_0 : i32, i32
  }
  func.func @transform_4(%arg0: i32, %arg1: i32) -> (i32, i32) {
    %c0_i32 = arith.constant 0 : i32
    %c0_i32_0 = arith.constant 0 : i32
    %c0_i32_1 = arith.constant 0 : i32
    return %c0_i32, %c0_i32_0 : i32, i32
  }
  func.func @transform_5(%arg0: i32, %arg1: i32) -> (i32, i32, i32) {
    %c0_i32 = arith.constant 0 : i32
    %c0_i32_0 = arith.constant 0 : i32
    %c0_i32_1 = arith.constant 0 : i32
    return %arg0, %c0_i32, %c0_i32_0 : i32, i32, i32
  }
}

</mosaic_0001>

<llo_original>
// kernel: tpu_custom_call.1
$region0: #{tpu_custom_call.1}
  #allocation0 [shape = 'u32[]', space=smem, size = 0x4, offset = 0x4, fixed_abs, tag = 'smem constant byte address 0x4 - core index']
  #allocation1 [shape = 'u32[144,128]{1,0:T(1,128)}', space=vmem, size = 0x12000, scoped, tag = 'internal scratch']
  #allocation2 [shape = 'f32[1,256]{1,0:T(1,128)}', space=vmem, size = 0x400, scoped, tag = 'scratch operand']
  %s0 = inlined_call_operand.vmem [shape: f32[2,2,10,18,8], index: 0, kind: input, shape index: {}]
  %s1 = inlined_call_operand.vmem [shape: f32[9,8,256], index: 1, kind: input, shape index: {}]
  %s2 = inlined_call_operand.vmem [shape: f32[1,256], index: 2, kind: input, shape index: {}]
  %s3 = inlined_call_operand.vmem [shape: f32[256,128], index: 3, kind: input, shape index: {}]
  %s4 = inlined_call_operand.vmem [shape: f32[1,128], index: 4, kind: input, shape index: {}]
  %s5 = inlined_call_operand.hbm [shape: f32[2,1,128], index: 5, kind: output, shape index: {}]
  %s6 = sld [smem:[#allocation0]]
  $region61: #{tpu_custom_call.1} parent=0
    _
  %s8 = ssub.s32 1, %s6
  %s9 = scalar_select 0, %s8, %s6
  $region1: #{tpu_custom_call.1} parent=0
    #allocation3 [shape = 'u8[1024]{0}', space=vmem, size = 0x400, scoped, tag = 'output window, operand 0']
    #allocation4 [shape = 's32[2]{0}', space=sflag, size = 0x8, scoped, tag = 'scoped memory for tpu_custom_call.1']
    %10 = vsyncpa [#allocation4], 0
    %s11 = scalar_lea.sflag [#allocation4], 1
    %12 = vsyncpa %s11, 0
    loop: start=0, step=1, limit=6
    $region2: #{tpu_custom_call.1} parent=1 // loop_pre_header
      _
    $region3: #{tpu_custom_call.1} parent=1 // loop_header
      %s14 = sphi 0, %s18
      %p15 = scmp.ge.s32.totalorder %s14, 6
      %s21 = sphi 0, %s33
      %s22 = sphi 0, %s29
      %s23 = sphi 0, %s21
      %s24 = sphi 0, %s22
      %s25 = sphi 0, %s23
      %s26 = sphi 0, %s24
      %s38 = sphi 0, %s40
      %s41 = sphi 0, %s38
      %s42 = sphi 0, %s41
      %s58 = sphi 0, %s42
      %s62 = sphi 0, %s62
      %s64 = sphi 0, %s62
      %s65 = sphi 0, %s64
      %s79 = sphi 0, %s65
      %s83 = sphi 0, %s83
      %s85 = sphi 0, %s83
      %s86 = sphi 0, %s85
      %s100 = sphi 0, %s86
      %s104 = sphi 0, %s104
      %s106 = sphi 0, %s104
      %s107 = sphi 0, %s106
      %s121 = sphi 0, %s107
      %s125 = sphi 0, %s125
      %s127 = sphi 0, %s125
      %s128 = sphi 0, %s127
      %s142 = sphi 0, %s128
      %s148 = sphi 0, %s150
      %s151 = sphi 0, %s148
      %s152 = sphi 0, %s151
      %s168 = sphi 0, %s152
    $region4: #{tpu_custom_call.1} parent=1 // loop_header_branch
      %17 = sbr.rel (%p15) target = $region8
    $region5: #{tpu_custom_call.1} parent=1 // loop_body
      %s19 = ssub.s32 %s14, 1
      %s20 = ssub.s32 %s14, 2
      %s27 = sadd.s32 1, %s22
      %p28 = scmp.ge.s32.totalorder %s27, 2
      %s29 = scalar_select %p28, 0, %s27
      %s30 = sadd.s32 1, %s21
      %s31 = scalar_select %p28, %s30, %s21
      %p32 = scmp.ge.s32.totalorder %s31, 2
      %s33 = scalar_select %p32, 0, %s31
      %s34 = ssub.s32 %s21, %s33
      %s35 = ssub.s32 %s22, %s29
      %s36 = sor.u32 %s34, %s35
      %p37 = scmp.eq.s32.totalorder %s36, 0
      %s39 = sadd.s32 %s38, 1
      %s40 = scalar_select %p37, %s38, %s39
      %p43 = pneg %p37
      %p44 = scmp.eq.s32.totalorder %s14, 3
      %p45 = por %p43, %p44
      %p46 = scmp.ne.s32.totalorder %s38, %s41
      %p47 = scmp.eq.s32.totalorder %s14, 0
      %p48 = por %p46, %p47
      %p49 = scmp.ne.s32.totalorder %s38, %s41
      %p50 = scmp.eq.s32.totalorder %s19, 3
      %p51 = por %p49, %p50
      %p52 = scmp.ne.s32.totalorder %s41, %s42
      %p53 = scmp.eq.s32.totalorder %s19, 0
      %p54 = por %p52, %p53
      %p55 = scmp.ne.s32.totalorder %s41, %s42
      %p56 = scmp.eq.s32.totalorder %s20, 3
      %p57 = por %p55, %p56
      %p59 = scmp.ne.s32.totalorder %s42, %s58
      %p60 = scmp.eq.s32.totalorder %s20, 0
      %p61 = por %p59, %p60
      %s63 = sadd.s32 %s62, 1
      %p66 = scmp.eq.s32.totalorder %s14, 3
      %p67 = scmp.ne.s32.totalorder %s62, %s64
      %p68 = scmp.eq.s32.totalorder %s14, 0
      %p69 = por %p67, %p68
      %p70 = scmp.ne.s32.totalorder %s62, %s64
      %p71 = scmp.eq.s32.totalorder %s19, 3
      %p72 = por %p70, %p71
      %p73 = scmp.ne.s32.totalorder %s64, %s65
      %p74 = scmp.eq.s32.totalorder %s19, 0
      %p75 = por %p73, %p74
      %p76 = scmp.ne.s32.totalorder %s64, %s65
      %p77 = scmp.eq.s32.totalorder %s20, 3
      %p78 = por %p76, %p77
      %p80 = scmp.ne.s32.totalorder %s65, %s79
      %p81 = scmp.eq.s32.totalorder %s20, 0
      %p82 = por %p80, %p81
      %s84 = sadd.s32 %s83, 1
      %p87 = scmp.eq.s32.totalorder %s14, 3
      %p88 = scmp.ne.s32.totalorder %s83, %s85
      %p89 = scmp.eq.s32.totalorder %s14, 0
      %p90 = por %p88, %p89
      %p91 = scmp.ne.s32.totalorder %s83, %s85
      %p92 = scmp.eq.s32.totalorder %s19, 3
      %p93 = por %p91, %p92
      %p94 = scmp.ne.s32.totalorder %s85, %s86
      %p95 = scmp.eq.s32.totalorder %s19, 0
      %p96 = por %p94, %p95
      %p97 = scmp.ne.s32.totalorder %s85, %s86
      %p98 = scmp.eq.s32.totalorder %s20, 3
      %p99 = por %p97, %p98
      %p101 = scmp.ne.s32.totalorder %s86, %s100
      %p102 = scmp.eq.s32.totalorder %s20, 0
      %p103 = por %p101, %p102
      %s105 = sadd.s32 %s104, 1
      %p108 = scmp.eq.s32.totalorder %s14, 3
      %p109 = scmp.ne.s32.totalorder %s104, %s106
      %p110 = scmp.eq.s32.totalorder %s14, 0
      %p111 = por %p109, %p110
      %p112 = scmp.ne.s32.totalorder %s104, %s106
      %p113 = scmp.eq.s32.totalorder %s19, 3
      %p114 = por %p112, %p113
      %p115 = scmp.ne.s32.totalorder %s106, %s107
      %p116 = scmp.eq.s32.totalorder %s19, 0
      %p117 = por %p115, %p116
      %p118 = scmp.ne.s32.totalorder %s106, %s107
      %p119 = scmp.eq.s32.totalorder %s20, 3
      %p120 = por %p118, %p119
      %p122 = scmp.ne.s32.totalorder %s107, %s121
      %p123 = scmp.eq.s32.totalorder %s20, 0
      %p124 = por %p122, %p123
      %s126 = sadd.s32 %s125, 1
      %p129 = scmp.eq.s32.totalorder %s14, 3
      %p130 = scmp.ne.s32.totalorder %s125, %s127
      %p131 = scmp.eq.s32.totalorder %s14, 0
      %p132 = por %p130, %p131
      %p133 = scmp.ne.s32.totalorder %s125, %s127
      %p134 = scmp.eq.s32.totalorder %s19, 3
      %p135 = por %p133, %p134
      %p136 = scmp.ne.s32.totalorder %s127, %s128
      %p137 = scmp.eq.s32.totalorder %s19, 0
      %p138 = por %p136, %p137
      %p139 = scmp.ne.s32.totalorder %s127, %s128
      %p140 = scmp.eq.s32.totalorder %s20, 3
      %p141 = por %p139, %p140
      %p143 = scmp.ne.s32.totalorder %s128, %s142
      %p144 = scmp.eq.s32.totalorder %s20, 0
      %p145 = por %p143, %p144
      %s146 = ssub.s32 %s21, %s33
      %p147 = scmp.eq.s32.totalorder %s146, 0
      %s149 = sadd.s32 %s148, 1
      %s150 = scalar_select %p147, %s148, %s149
      %p153 = pneg %p147
      %p154 = scmp.eq.s32.totalorder %s14, 3
      %p155 = por %p153, %p154
      %p156 = scmp.ne.s32.totalorder %s148, %s151
      %p157 = scmp.eq.s32.totalorder %s14, 0
      %p158 = por %p156, %p157
      %p159 = scmp.ne.s32.totalorder %s148, %s151
      %p160 = scmp.eq.s32.totalorder %s19, 3
      %p161 = por %p159, %p160
      %p162 = scmp.ne.s32.totalorder %s151, %s152
      %p163 = scmp.eq.s32.totalorder %s19, 0
      %p164 = por %p162, %p163
      %p165 = scmp.ne.s32.totalorder %s151, %s152
      %p166 = scmp.eq.s32.totalorder %s20, 3
      %p167 = por %p165, %p166
      %p169 = scmp.ne.s32.totalorder %s152, %s168
      %p170 = scmp.eq.s32.totalorder %s20, 0
      %p171 = por %p169, %p170
      %p172 = scmp.le.s32.totalorder 1, %s14
      %p173 = scmp.lt.s32.totalorder %s14, 5
      %p174 = pnand %p172, %p173
      %p175 = pneg %p174
      // Predicated region
      $region9: #{tpu_custom_call.1} parent=5 // pred_check
        _
      $region10: #{tpu_custom_call.1} parent=5 // pred_check_branch
        %177 = sbr.rel (%p174) target = $region12
      $region11: #{tpu_custom_call.1} parent=5 // pred_region
        %s178 = ssub.s32 %s14, 1
        // Predicated region
        $region13: #{tpu_custom_call.1} parent=11 // pred_check
          %p179 = pneg %p75
        $region14: #{tpu_custom_call.1} parent=11 // pred_check_branch
          %181 = sbr.rel (%p179) target = $region16
        $region15: #{tpu_custom_call.1} parent=11 // pred_region
          _
        $region16: #{tpu_custom_call.1} parent=11 // pred_fallthru
          _
        // Predicated region
        $region17: #{tpu_custom_call.1} parent=11 // pred_check
          %p182 = pneg %p96
        $region18: #{tpu_custom_call.1} parent=11 // pred_check_branch
          %184 = sbr.rel (%p182) target = $region20
        $region19: #{tpu_custom_call.1} parent=11 // pred_region
          _
        $region20: #{tpu_custom_call.1} parent=11 // pred_fallthru
          _
        // Predicated region
        $region21: #{tpu_custom_call.1} parent=11 // pred_check
          %p185 = pneg %p117
        $region22: #{tpu_custom_call.1} parent=11 // pred_check_branch
          %187 = sbr.rel (%p185) target = $region24
        $region23: #{tpu_custom_call.1} parent=11 // pred_region
          _
        $region24: #{tpu_custom_call.1} parent=11 // pred_fallthru
          _
        // Predicated region
        $region25: #{tpu_custom_call.1} parent=11 // pred_check
          %p188 = pneg %p138
        $region26: #{tpu_custom_call.1} parent=11 // pred_check_branch
          %190 = sbr.rel (%p188) target = $region28
        $region27: #{tpu_custom_call.1} parent=11 // pred_region
          _
        $region28: #{tpu_custom_call.1} parent=11 // pred_fallthru
          _
      $region12: #{tpu_custom_call.1} parent=5 // pred_fallthru
        _
      %p191 = scmp.lt.s32.totalorder %s14, 4
      // Predicated region
      $region29: #{tpu_custom_call.1} parent=5 // pred_check
        %p192 = pneg %p191
      $region30: #{tpu_custom_call.1} parent=5 // pred_check_branch
        %194 = sbr.rel (%p192) target = $region32
      $region31: #{tpu_custom_call.1} parent=5 // pred_region
        // Predicated region
        $region33: #{tpu_custom_call.1} parent=31 // pred_check
          %p195 = pneg %p48
        $region34: #{tpu_custom_call.1} parent=31 // pred_check_branch
          %197 = sbr.rel (%p195) target = $region36
        $region35: #{tpu_custom_call.1} parent=31 // pred_region
          %p198 = scmp.lt.s32.totalorder %s21, 1
          %s199 = scalar_select %p198, %s21, 1
          %p200 = scmp.lt.s32.totalorder %s22, 1
          %s201 = scalar_select %p200, %s22, 1
          %s202 = smul.addr %s201, 30
          %s203 = smul.addr %s199, 60
          %s204 = sadd.s32 %s202, %s203
          %s205 = smul.addr %s204, 8
          %s206 = scalar_lea.vmem %s0, %s205
        $region36: #{tpu_custom_call.1} parent=31 // pred_fallthru
          _
      $region32: #{tpu_custom_call.1} parent=5 // pred_fallthru
        _
      %p207 = scmp.le.s32.totalorder 1, %s14
      %p208 = scmp.lt.s32.totalorder %s14, 5
      %p209 = pnand %p207, %p208
      %p210 = pneg %p209
      // Predicated region
      $region37: #{tpu_custom_call.1} parent=5 // pred_check
        _
      $region38: #{tpu_custom_call.1} parent=5 // pred_check_branch
        %212 = sbr.rel (%p209) target = $region40
      $region39: #{tpu_custom_call.1} parent=5 // pred_region
        %s213 = ssub.s32 %s14, 1
        %p214 = scmp.lt.s32.totalorder %s23, 1
        %s215 = scalar_select %p214, %s23, 1
        %p216 = scmp.lt.s32.totalorder %s24, 1
        %s217 = scalar_select %p216, %s24, 1
        %s218 = smul.addr %s217, 30
        %s219 = smul.addr %s215, 60
        %s220 = sadd.s32 %s218, %s219
        %s221 = smul.addr %s220, 8
        %s222 = scalar_lea.vmem %s0, %s221
        %p223 = pneg %p54
        %p224 = pneg %p51
        %p225 = pneg %p75
        %p226 = pneg %p72
        %p227 = pneg %p96
        %p228 = pneg %p93
        %p229 = pneg %p117
        %p230 = pneg %p114
        %p231 = pneg %p138
        %p232 = pneg %p135
        %p233 = pneg %p164
        %p234 = pneg %p161
        %s235 = sand.u32 %s151, 1
        %s236 = scalar_lea.sflag [#allocation4], %s235
        %s237 = sand.u32 %s151, 1
        %s238 = scalar_lea.vmem [#allocation3], %s237
        %p239 = scmp.lt.s32.totalorder %s23, 1
        %s240 = scalar_select %p239, %s23, 1
        %p241 = scmp.lt.s32.totalorder %s24, 1
        %s242 = scalar_select %p241, %s24, 1
        %s243 = smul.addr %s242, 30
        %s244 = smul.addr %s240, 60
        %s245 = sadd.s32 %s243, %s244
        %s246 = smul.addr %s245, 8
        %s247 = scalar_lea.vmem %s0, %s246
        %p248 = scmp.eq.s32.totalorder %s24, 0
        // Predicated region
        $region41: #{tpu_custom_call.1} parent=39 // pred_check
          %p249 = pneg %p248
        $region42: #{tpu_custom_call.1} parent=39 // pred_check_branch
          %251 = sbr.rel (%p249) target = $region44
        $region43: #{tpu_custom_call.1} parent=39 // pred_region
          %v252 = vlaneseq
          %vm253 = vcmp.ge.s32.totalorder %v252, 0
          %vm254 = vcmp.lt.s32.totalorder %v252, 256
          %vm255 = vmand %vm253, %vm254
          %256 = vst.msk [vmem:[#allocation2] sm:$0x3] %vm255, 0.0
        $region44: #{tpu_custom_call.1} parent=39 // pred_fallthru
          _
        %v257 = vld [vmem:[%s2] sm:$0x3]
        %v258 = vld [vmem:[%s247] sm:$0xff]
        %v259 = vld [vmem:[%s247 + $0x8] sm:$0xff]
        %v260 = vld [vmem:[%s1] sm:$0xff]
        %v261 = vld [vmem:[%s1 + $0x8] sm:$0xff]
        %v262 = vld [vmem:[%s247 + $0x1] sm:$0xff]
        %v263 = vld [vmem:[%s247 + $0x9] sm:$0xff]
        %s264 = scalar_lea.vmem %s1, 16
        %v265 = vld [vmem:[%s264] sm:$0xff]
        %v266 = vld [vmem:[%s264 + $0x8] sm:$0xff]
        %vm267 = vcmask 64512
        %v269 = vsel %vm267, %v262, 0
        %v272 = vsel %vm267, %v263, 0
        %274 = vmatprep.subr.mxu0 0.0
        %275 = vmatpush1.msra.mxu0 0.0
        %276 = vmatprep.subr.mxu0 0.0
        %277 = vmatpush1.msra.mxu0 0.0
        %278 = vmatprep.subr.mxu0 0.0
        %279 = vmatpush1.msra.mxu0 0.0
        %280 = vmatprep.subr.mxu0 0.0
        %281 = vmatpush1.msra.mxu0 0.0
        %282 = vmatprep.subr.mxu0 0.0
        %283 = vmatpush1.msra.mxu0 0.0
        %284 = vmatprep.subr.mxu0 0.0
        %285 = vmatpush1.msra.mxu0 0.0
        %286 = vmatprep.subr.mxu0 0.0
        %287 = vmatpush1.msra.mxu0 0.0
        %288 = vmatprep.subr.mxu0 0.0
        %289 = vmatpush1.msra.mxu0 0.0
        %290 = vmatprep.subr.mxu0 0.0
        %291 = vmatpush1.msra.mxu0 0.0
        %292 = vmatprep.subr.mxu0 0.0
        %293 = vmatpush1.msra.mxu0 0.0
        %294 = vmatprep.subr.mxu0 0.0
        %295 = vmatpush1.msra.mxu0 0.0
        %296 = vmatprep.subr.mxu0 0.0
        %297 = vmatpush1.msra.mxu0 0.0
        %298 = vmatprep.subr.mxu0 0.0
        %299 = vmatpush1.msra.mxu0 0.0
        %300 = vmatprep.subr.mxu0 0.0
        %301 = vmatpush1.msra.mxu0 0.0
        %302 = vmatprep.subr.mxu0 0.0
        %303 = vmatpush1.msra.mxu0 0.0
        %304 = vmatprep.subr.mxu0 %v266
        %305 = vmatpush1.msra.mxu0 %v265
        %306 = vmatprep.subr.mxu0 0.0
        %307 = vmatpush2.msra.mxu0 0.0
        %308 = vmatprep.subr.mxu0 0.0
        %309 = vmatpush2.msra.mxu0 0.0
        %310 = vmatprep.subr.mxu0 0.0
        %311 = vmatpush2.msra.mxu0 0.0
        %312 = vmatprep.subr.mxu0 0.0
        %313 = vmatpush2.msra.mxu0 0.0
        %314 = vmatprep.subr.mxu0 0.0
        %315 = vmatpush2.msra.mxu0 0.0
        %316 = vmatprep.subr.mxu0 0.0
        %317 = vmatpush2.msra.mxu0 0.0
        %318 = vmatprep.subr.mxu0 0.0
        %319 = vmatpush2.msra.mxu0 0.0
        %320 = vmatprep.subr.mxu0 0.0
        %321 = vmatpush2.msra.mxu0 0.0
        %322 = vmatprep.subr.mxu0 0.0
        %323 = vmatpush2.msra.mxu0 0.0
        %324 = vmatprep.subr.mxu0 0.0
        %325 = vmatpush2.msra.mxu0 0.0
        %326 = vmatprep.subr.mxu0 0.0
        %327 = vmatpush2.msra.mxu0 0.0
        %328 = vmatprep.subr.mxu0 0.0
        %329 = vmatpush2.msra.mxu0 0.0
        %330 = vmatprep.subr.mxu0 0.0
        %331 = vmatpush2.msra.mxu0 0.0
        %332 = vmatprep.subr.mxu0 0.0
        %333 = vmatpush2.msra.mxu0 0.0
        %334 = vmatprep.subr.mxu0 0.0
        %335 = vmatpush2.msra.mxu0 0.0
        %336 = vmatprep.subr.mxu0 0.0
        %337 = vmatpush2.msra.mxu0 0.0
        %338 = vmatprep.mubr.f32.mxu0 0.0
        %339 = vmatmul.mubr.f32.gmra.mxu0 %v269
        %v340 = vpop.f32.mrf.mxu0
        %v341 = vadd.f32 0.0, %v340
        %v342 = vpop.f32.mrf.mxu0
        %v343 = vadd.f32 0.0, %v342
        %344 = vmatprep.mubr.f32.mxu0 0.0
        %345 = vmatmul.mubr.f32.gmra.mxu0 %v272
        %v346 = vpop.f32.mrf.mxu0
        %v347 = vadd.f32 0.0, %v346
        %v348 = vpop.f32.mrf.mxu0
        %v349 = vadd.f32 0.0, %v348
        %350 = vdwg.mxu0
        %v352 = vsel %vm267, %v258, 0
        %v355 = vsel %vm267, %v259, 0
        %357 = vmatprep.subr.mxu0 0.0
        %358 = vmatpush1.msra.mxu0 0.0
        %359 = vmatprep.subr.mxu0 0.0
        %360 = vmatpush1.msra.mxu0 0.0
        %361 = vmatprep.subr.mxu0 0.0
        %362 = vmatpush1.msra.mxu0 0.0
        %363 = vmatprep.subr.mxu0 0.0
        %364 = vmatpush1.msra.mxu0 0.0
        %365 = vmatprep.subr.mxu0 0.0
        %366 = vmatpush1.msra.mxu0 0.0
        %367 = vmatprep.subr.mxu0 0.0
        %368 = vmatpush1.msra.mxu0 0.0
        %369 = vmatprep.subr.mxu0 0.0
        %370 = vmatpush1.msra.mxu0 0.0
        %371 = vmatprep.subr.mxu0 0.0
        %372 = vmatpush1.msra.mxu0 0.0
        %373 = vmatprep.subr.mxu0 0.0
        %374 = vmatpush1.msra.mxu0 0.0
        %375 = vmatprep.subr.mxu0 0.0
        %376 = vmatpush1.msra.mxu0 0.0
        %377 = vmatprep.subr.mxu0 0.0
        %378 = vmatpush1.msra.mxu0 0.0
        %379 = vmatprep.subr.mxu0 0.0
        %380 = vmatpush1.msra.mxu0 0.0
        %381 = vmatprep.subr.mxu0 0.0
        %382 = vmatpush1.msra.mxu0 0.0
        %383 = vmatprep.subr.mxu0 0.0
        %384 = vmatpush1.msra.mxu0 0.0
        %385 = vmatprep.subr.mxu0 0.0
        %386 = vmatpush1.msra.mxu0 0.0
        %387 = vmatprep.subr.mxu0 %v261
        %388 = vmatpush1.msra.mxu0 %v260
        %389 = vmatprep.subr.mxu0 0.0
        %390 = vmatpush2.msra.mxu0 0.0
        %391 = vmatprep.subr.mxu0 0.0
        %392 = vmatpush2.msra.mxu0 0.0
        %393 = vmatprep.subr.mxu0 0.0
        %394 = vmatpush2.msra.mxu0 0.0
        %395 = vmatprep.subr.mxu0 0.0
        %396 = vmatpush2.msra.mxu0 0.0
        %397 = vmatprep.subr.mxu0 0.0
        %398 = vmatpush2.msra.mxu0 0.0
        %399 = vmatprep.subr.mxu0 0.0
        %400 = vmatpush2.msra.mxu0 0.0
        %401 = vmatprep.subr.mxu0 0.0
        %402 = vmatpush2.msra.mxu0 0.0
        %403 = vmatprep.subr.mxu0 0.0
        %404 = vmatpush2.msra.mxu0 0.0
        %405 = vmatprep.subr.mxu0 0.0
        %406 = vmatpush2.msra.mxu0 0.0
        %407 = vmatprep.subr.mxu0 0.0
        %408 = vmatpush2.msra.mxu0 0.0
        %409 = vmatprep.subr.mxu0 0.0
        %410 = vmatpush2.msra.mxu0 0.0
        %411 = vmatprep.subr.mxu0 0.0
        %412 = vmatpush2.msra.mxu0 0.0
        %413 = vmatprep.subr.mxu0 0.0
        %414 = vmatpush2.msra.mxu0 0.0
        %415 = vmatprep.subr.mxu0 0.0
        %416 = vmatpush2.msra.mxu0 0.0
        %417 = vmatprep.subr.mxu0 0.0
        %418 = vmatpush2.msra.mxu0 0.0
        %419 = vmatprep.subr.mxu0 0.0
        %420 = vmatpush2.msra.mxu0 0.0
        %421 = vmatprep.mubr.f32.mxu0 0.0
        %422 = vmatmul.mubr.f32.gmra.mxu0 %v352
        %v423 = vpop.f32.mrf.mxu0
        %v424 = vadd.f32 %v341, %v423
        %v425 = vpop.f32.mrf.mxu0
        %v426 = vadd.f32 %v343, %v425
        %427 = vmatprep.mubr.f32.mxu0 0.0
        %428 = vmatmul.mubr.f32.gmra.mxu0 %v355
        %v429 = vpop.f32.mrf.mxu0
        %v430 = vadd.f32 %v347, %v429
        %v431 = vpop.f32.mrf.mxu0
        %v432 = vadd.f32 %v349, %v431
        %433 = vdwg.mxu0
        %v434 = vld [vmem:[%s247 + $0x2] sm:$0xff]
        %v435 = vld [vmem:[%s247 + $0xa] sm:$0xff]
        %s436 = scalar_lea.vmem %s1, 32
        %v437 = vld [vmem:[%s436] sm:$0xff]
        %v438 = vld [vmem:[%s436 + $0x8] sm:$0xff]
        %v440 = vsel %vm267, %v434, 0
        %v443 = vsel %vm267, %v435, 0
        %445 = vmatprep.subr.mxu0 0.0
        %446 = vmatpush1.msra.mxu0 0.0
        %447 = vmatprep.subr.mxu0 0.0
        %448 = vmatpush1.msra.mxu0 0.0
        %449 = vmatprep.subr.mxu0 0.0
        %450 = vmatpush1.msra.mxu0 0.0
        %451 = vmatprep.subr.mxu0 0.0
        %452 = vmatpush1.msra.mxu0 0.0
        %453 = vmatprep.subr.mxu0 0.0
        %454 = vmatpush1.msra.mxu0 0.0
        %455 = vmatprep.subr.mxu0 0.0
        %456 = vmatpush1.msra.mxu0 0.0
        %457 = vmatprep.subr.mxu0 0.0
        %458 = vmatpush1.msra.mxu0 0.0
        %459 = vmatprep.subr.mxu0 0.0
        %460 = vmatpush1.msra.mxu0 0.0
        %461 = vmatprep.subr.mxu0 0.0
        %462 = vmatpush1.msra.mxu0 0.0
        %463 = vmatprep.subr.mxu0 0.0
        %464 = vmatpush1.msra.mxu0 0.0
        %465 = vmatprep.subr.mxu0 0.0
        %466 = vmatpush1.msra.mxu0 0.0
        %467 = vmatprep.subr.mxu0 0.0
        %468 = vmatpush1.msra.mxu0 0.0
        %469 = vmatprep.subr.mxu0 0.0
        %470 = vmatpush1.msra.mxu0 0.0
        %471 = vmatprep.subr.mxu0 0.0
        %472 = vmatpush1.msra.mxu0 0.0
        %473 = vmatprep.subr.mxu0 0.0
        %474 = vmatpush1.msra.mxu0 0.0
        %475 = vmatprep.subr.mxu0 %v438
        %476 = vmatpush1.msra.mxu0 %v437
        %477 = vmatprep.subr.mxu0 0.0
        %478 = vmatpush2.msra.mxu0 0.0
        %479 = vmatprep.subr.mxu0 0.0
        %480 = vmatpush2.msra.mxu0 0.0
        %481 = vmatprep.subr.mxu0 0.0
        %482 = vmatpush2.msra.mxu0 0.0
        %483 = vmatprep.subr.mxu0 0.0
        %484 = vmatpush2.msra.mxu0 0.0
        %485 = vmatprep.subr.mxu0 0.0
        %486 = vmatpush2.msra.mxu0 0.0
        %487 = vmatprep.subr.mxu0 0.0
        %488 = vmatpush2.msra.mxu0 0.0
        %489 = vmatprep.subr.mxu0 0.0
        %490 = vmatpush2.msra.mxu0 0.0
        %491 = vmatprep.subr.mxu0 0.0
        %492 = vmatpush2.msra.mxu0 0.0
        %493 = vmatprep.subr.mxu0 0.0
        %494 = vmatpush2.msra.mxu0 0.0
        %495 = vmatprep.subr.mxu0 0.0
        %496 = vmatpush2.msra.mxu0 0.0
        %497 = vmatprep.subr.mxu0 0.0
        %498 = vmatpush2.msra.mxu0 0.0
        %499 = vmatprep.subr.mxu0 0.0
        %500 = vmatpush2.msra.mxu0 0.0
        %501 = vmatprep.subr.mxu0 0.0
        %502 = vmatpush2.msra.mxu0 0.0
        %503 = vmatprep.subr.mxu0 0.0
        %504 = vmatpush2.msra.mxu0 0.0
        %505 = vmatprep.subr.mxu0 0.0
        %506 = vmatpush2.msra.mxu0 0.0
        %507 = vmatprep.subr.mxu0 0.0
        %508 = vmatpush2.msra.mxu0 0.0
        %509 = vmatprep.mubr.f32.mxu0 0.0
        %510 = vmatmul.mubr.f32.gmra.mxu0 %v440
        %v511 = vpop.f32.mrf.mxu0
        %v512 = vadd.f32 0.0, %v511
        %v513 = vpop.f32.mrf.mxu0
        %v514 = vadd.f32 0.0, %v513
        %515 = vmatprep.mubr.f32.mxu0 0.0
        %516 = vmatmul.mubr.f32.gmra.mxu0 %v443
        %v517 = vpop.f32.mrf.mxu0
        %v518 = vadd.f32 0.0, %v517
        %v519 = vpop.f32.mrf.mxu0
        %v520 = vadd.f32 0.0, %v519
        %521 = vdwg.mxu0
        %v522 = vadd.f32 %v424, %v512
        %v523 = vadd.f32 %v426, %v514
        %v524 = vadd.f32 %v430, %v518
        %v525 = vadd.f32 %v432, %v520
        %s526 = scalar_lea.vmem %s247, 24
        %v527 = vld [vmem:[%s526] sm:$0xff]
        %v528 = vld [vmem:[%s526 + $0x8] sm:$0xff]
        %s529 = scalar_lea.vmem %s1, 48
        %v530 = vld [vmem:[%s529] sm:$0xff]
        %v531 = vld [vmem:[%s529 + $0x8] sm:$0xff]
        %v533 = vsel %vm267, %v527, 0
        %v536 = vsel %vm267, %v528, 0
        %538 = vmatprep.subr.mxu0 0.0
        %539 = vmatpush1.msra.mxu0 0.0
        %540 = vmatprep.subr.mxu0 0.0
        %541 = vmatpush1.msra.mxu0 0.0
        %542 = vmatprep.subr.mxu0 0.0
        %543 = vmatpush1.msra.mxu0 0.0
        %544 = vmatprep.subr.mxu0 0.0
        %545 = vmatpush1.msra.mxu0 0.0
        %546 = vmatprep.subr.mxu0 0.0
        %547 = vmatpush1.msra.mxu0 0.0
        %548 = vmatprep.subr.mxu0 0.0
        %549 = vmatpush1.msra.mxu0 0.0
        %550 = vmatprep.subr.mxu0 0.0
        %551 = vmatpush1.msra.mxu0 0.0
        %552 = vmatprep.subr.mxu0 0.0
        %553 = vmatpush1.msra.mxu0 0.0
        %554 = vmatprep.subr.mxu0 0.0
        %555 = vmatpush1.msra.mxu0 0.0
        %556 = vmatprep.subr.mxu0 0.0
        %557 = vmatpush1.msra.mxu0 0.0
        %558 = vmatprep.subr.mxu0 0.0
        %559 = vmatpush1.msra.mxu0 0.0
        %560 = vmatprep.subr.mxu0 0.0
        %561 = vmatpush1.msra.mxu0 0.0
        %562 = vmatprep.subr.mxu0 0.0
        %563 = vmatpush1.msra.mxu0 0.0
        %564 = vmatprep.subr.mxu0 0.0
        %565 = vmatpush1.msra.mxu0 0.0
        %566 = vmatprep.subr.mxu0 0.0
        %567 = vmatpush1.msra.mxu0 0.0
        %568 = vmatprep.subr.mxu0 %v531
        %569 = vmatpush1.msra.mxu0 %v530
        %570 = vmatprep.subr.mxu0 0.0
        %571 = vmatpush2.msra.mxu0 0.0
        %572 = vmatprep.subr.mxu0 0.0
        %573 = vmatpush2.msra.mxu0 0.0
        %574 = vmatprep.subr.mxu0 0.0
        %575 = vmatpush2.msra.mxu0 0.0
        %576 = vmatprep.subr.mxu0 0.0
        %577 = vmatpush2.msra.mxu0 0.0
        %578 = vmatprep.subr.mxu0 0.0
        %579 = vmatpush2.msra.mxu0 0.0
        %580 = vmatprep.subr.mxu0 0.0
        %581 = vmatpush2.msra.mxu0 0.0
        %582 = vmatprep.subr.mxu0 0.0
        %583 = vmatpush2.msra.mxu0 0.0
        %584 = vmatprep.subr.mxu0 0.0
        %585 = vmatpush2.msra.mxu0 0.0
        %586 = vmatprep.subr.mxu0 0.0
        %587 = vmatpush2.msra.mxu0 0.0
        %588 = vmatprep.subr.mxu0 0.0
        %589 = vmatpush2.msra.mxu0 0.0
        %590 = vmatprep.subr.mxu0 0.0
        %591 = vmatpush2.msra.mxu0 0.0
        %592 = vmatprep.subr.mxu0 0.0
        %593 = vmatpush2.msra.mxu0 0.0
        %594 = vmatprep.subr.mxu0 0.0
        %595 = vmatpush2.msra.mxu0 0.0
        %596 = vmatprep.subr.mxu0 0.0
        %597 = vmatpush2.msra.mxu0 0.0
        %598 = vmatprep.subr.mxu0 0.0
        %599 = vmatpush2.msra.mxu0 0.0
        %600 = vmatprep.subr.mxu0 0.0
        %601 = vmatpush2.msra.mxu0 0.0
        %602 = vmatprep.mubr.f32.mxu0 0.0
        %603 = vmatmul.mubr.f32.gmra.mxu0 %v533
        %v604 = vpop.f32.mrf.mxu0
        %v605 = vadd.f32 0.0, %v604
        %v606 = vpop.f32.mrf.mxu0
        %v607 = vadd.f32 0.0, %v606
        %608 = vmatprep.mubr.f32.mxu0 0.0
        %609 = vmatmul.mubr.f32.gmra.mxu0 %v536
        %v610 = vpop.f32.mrf.mxu0
        %v611 = vadd.f32 0.0, %v610
        %v612 = vpop.f32.mrf.mxu0
        %v613 = vadd.f32 0.0, %v612
        %614 = vdwg.mxu0
        %v615 = vadd.f32 %v522, %v605
        %v616 = vadd.f32 %v523, %v607
        %v617 = vadd.f32 %v524, %v611
        %v618 = vadd.f32 %v525, %v613
        %v619 = vld [vmem:[%s526 + $0x1] sm:$0xff]
        %v620 = vld [vmem:[%s526 + $0x9] sm:$0xff]
        %s621 = scalar_lea.vmem %s1, 64
        %v622 = vld [vmem:[%s621] sm:$0xff]
        %v623 = vld [vmem:[%s621 + $0x8] sm:$0xff]
        %v625 = vsel %vm267, %v619, 0
        %v628 = vsel %vm267, %v620, 0
        %630 = vmatprep.subr.mxu0 0.0
        %631 = vmatpush1.msra.mxu0 0.0
        %632 = vmatprep.subr.mxu0 0.0
        %633 = vmatpush1.msra.mxu0 0.0
        %634 = vmatprep.subr.mxu0 0.0
        %635 = vmatpush1.msra.mxu0 0.0
        %636 = vmatprep.subr.mxu0 0.0
        %637 = vmatpush1.msra.mxu0 0.0
        %638 = vmatprep.subr.mxu0 0.0
        %639 = vmatpush1.msra.mxu0 0.0
        %640 = vmatprep.subr.mxu0 0.0
        %641 = vmatpush1.msra.mxu0 0.0
        %642 = vmatprep.subr.mxu0 0.0
        %643 = vmatpush1.msra.mxu0 0.0
        %644 = vmatprep.subr.mxu0 0.0
        %645 = vmatpush1.msra.mxu0 0.0
        %646 = vmatprep.subr.mxu0 0.0
        %647 = vmatpush1.msra.mxu0 0.0
        %648 = vmatprep.subr.mxu0 0.0
        %649 = vmatpush1.msra.mxu0 0.0
        %650 = vmatprep.subr.mxu0 0.0
        %651 = vmatpush1.msra.mxu0 0.0
        %652 = vmatprep.subr.mxu0 0.0
        %653 = vmatpush1.msra.mxu0 0.0
        %654 = vmatprep.subr.mxu0 0.0
        %655 = vmatpush1.msra.mxu0 0.0
        %656 = vmatprep.subr.mxu0 0.0
        %657 = vmatpush1.msra.mxu0 0.0
        %658 = vmatprep.subr.mxu0 0.0
        %659 = vmatpush1.msra.mxu0 0.0
        %660 = vmatprep.subr.mxu0 %v623
        %661 = vmatpush1.msra.mxu0 %v622
        %662 = vmatprep.subr.mxu0 0.0
        %663 = vmatpush2.msra.mxu0 0.0
        %664 = vmatprep.subr.mxu0 0.0
        %665 = vmatpush2.msra.mxu0 0.0
        %666 = vmatprep.subr.mxu0 0.0
        %667 = vmatpush2.msra.mxu0 0.0
        %668 = vmatprep.subr.mxu0 0.0
        %669 = vmatpush2.msra.mxu0 0.0
        %670 = vmatprep.subr.mxu0 0.0
        %671 = vmatpush2.msra.mxu0 0.0
        %672 = vmatprep.subr.mxu0 0.0
        %673 = vmatpush2.msra.mxu0 0.0
        %674 = vmatprep.subr.mxu0 0.0
        %675 = vmatpush2.msra.mxu0 0.0
        %676 = vmatprep.subr.mxu0 0.0
        %677 = vmatpush2.msra.mxu0 0.0
        %678 = vmatprep.subr.mxu0 0.0
        %679 = vmatpush2.msra.mxu0 0.0
        %680 = vmatprep.subr.mxu0 0.0
        %681 = vmatpush2.msra.mxu0 0.0
        %682 = vmatprep.subr.mxu0 0.0
        %683 = vmatpush2.msra.mxu0 0.0
        %684 = vmatprep.subr.mxu0 0.0
        %685 = vmatpush2.msra.mxu0 0.0
        %686 = vmatprep.subr.mxu0 0.0
        %687 = vmatpush2.msra.mxu0 0.0
        %688 = vmatprep.subr.mxu0 0.0
        %689 = vmatpush2.msra.mxu0 0.0
        %690 = vmatprep.subr.mxu0 0.0
        %691 = vmatpush2.msra.mxu0 0.0
        %692 = vmatprep.subr.mxu0 0.0
        %693 = vmatpush2.msra.mxu0 0.0
        %694 = vmatprep.mubr.f32.mxu0 0.0
        %695 = vmatmul.mubr.f32.gmra.mxu0 %v625
        %v696 = vpop.f32.mrf.mxu0
        %v697 = vadd.f32 0.0, %v696
        %v698 = vpop.f32.mrf.mxu0
        %v699 = vadd.f32 0.0, %v698
        %700 = vmatprep.mubr.f32.mxu0 0.0
        %701 = vmatmul.mubr.f32.gmra.mxu0 %v628
        %v702 = vpop.f32.mrf.mxu0
        %v703 = vadd.f32 0.0, %v702
        %v704 = vpop.f32.mrf.mxu0
        %v705 = vadd.f32 0.0, %v704
        %706 = vdwg.mxu0
        %v707 = vadd.f32 %v615, %v697
        %v708 = vadd.f32 %v616, %v699
        %v709 = vadd.f32 %v617, %v703
        %v710 = vadd.f32 %v618, %v705
        %v711 = vld [vmem:[%s526 + $0x2] sm:$0xff]
        %v712 = vld [vmem:[%s526 + $0xa] sm:$0xff]
        %s713 = scalar_lea.vmem %s1, 80
        %v714 = vld [vmem:[%s713] sm:$0xff]
        %v715 = vld [vmem:[%s713 + $0x8] sm:$0xff]
        %v717 = vsel %vm267, %v711, 0
        %v720 = vsel %vm267, %v712, 0
        %722 = vmatprep.subr.mxu0 0.0
        %723 = vmatpush1.msra.mxu0 0.0
        %724 = vmatprep.subr.mxu0 0.0
        %725 = vmatpush1.msra.mxu0 0.0
        %726 = vmatprep.subr.mxu0 0.0
        %727 = vmatpush1.msra.mxu0 0.0
        %728 = vmatprep.subr.mxu0 0.0
        %729 = vmatpush1.msra.mxu0 0.0
        %730 = vmatprep.subr.mxu0 0.0
        %731 = vmatpush1.msra.mxu0 0.0
        %732 = vmatprep.subr.mxu0 0.0
        %733 = vmatpush1.msra.mxu0 0.0
        %734 = vmatprep.subr.mxu0 0.0
        %735 = vmatpush1.msra.mxu0 0.0
        %736 = vmatprep.subr.mxu0 0.0
        %737 = vmatpush1.msra.mxu0 0.0
        %738 = vmatprep.subr.mxu0 0.0
        %739 = vmatpush1.msra.mxu0 0.0
        %740 = vmatprep.subr.mxu0 0.0
        %741 = vmatpush1.msra.mxu0 0.0
        %742 = vmatprep.subr.mxu0 0.0
        %743 = vmatpush1.msra.mxu0 0.0
        %744 = vmatprep.subr.mxu0 0.0
        %745 = vmatpush1.msra.mxu0 0.0
        %746 = vmatprep.subr.mxu0 0.0
        %747 = vmatpush1.msra.mxu0 0.0
        %748 = vmatprep.subr.mxu0 0.0
        %749 = vmatpush1.msra.mxu0 0.0
        %750 = vmatprep.subr.mxu0 0.0
        %751 = vmatpush1.msra.mxu0 0.0
        %752 = vmatprep.subr.mxu0 %v715
        %753 = vmatpush1.msra.mxu0 %v714
        %754 = vmatprep.subr.mxu0 0.0
        %755 = vmatpush2.msra.mxu0 0.0
        %756 = vmatprep.subr.mxu0 0.0
        %757 = vmatpush2.msra.mxu0 0.0
        %758 = vmatprep.subr.mxu0 0.0
        %759 = vmatpush2.msra.mxu0 0.0
        %760 = vmatprep.subr.mxu0 0.0
        %761 = vmatpush2.msra.mxu0 0.0
        %762 = vmatprep.subr.mxu0 0.0
        %763 = vmatpush2.msra.mxu0 0.0
        %764 = vmatprep.subr.mxu0 0.0
        %765 = vmatpush2.msra.mxu0 0.0
        %766 = vmatprep.subr.mxu0 0.0
        %767 = vmatpush2.msra.mxu0 0.0
        %768 = vmatprep.subr.mxu0 0.0
        %769 = vmatpush2.msra.mxu0 0.0
        %770 = vmatprep.subr.mxu0 0.0
        %771 = vmatpush2.msra.mxu0 0.0
        %772 = vmatprep.subr.mxu0 0.0
        %773 = vmatpush2.msra.mxu0 0.0
        %774 = vmatprep.subr.mxu0 0.0
        %775 = vmatpush2.msra.mxu0 0.0
        %776 = vmatprep.subr.mxu0 0.0
        %777 = vmatpush2.msra.mxu0 0.0
        %778 = vmatprep.subr.mxu0 0.0
        %779 = vmatpush2.msra.mxu0 0.0
        %780 = vmatprep.subr.mxu0 0.0
        %781 = vmatpush2.msra.mxu0 0.0
        %782 = vmatprep.subr.mxu0 0.0
        %783 = vmatpush2.msra.mxu0 0.0
        %784 = vmatprep.subr.mxu0 0.0
        %785 = vmatpush2.msra.mxu0 0.0
        %786 = vmatprep.mubr.f32.mxu0 0.0
        %787 = vmatmul.mubr.f32.gmra.mxu0 %v717
        %v788 = vpop.f32.mrf.mxu0
        %v789 = vadd.f32 0.0, %v788
        %v790 = vpop.f32.mrf.mxu0
        %v791 = vadd.f32 0.0, %v790
        %792 = vmatprep.mubr.f32.mxu0 0.0
        %793 = vmatmul.mubr.f32.gmra.mxu0 %v720
        %v794 = vpop.f32.mrf.mxu0
        %v795 = vadd.f32 0.0, %v794
        %v796 = vpop.f32.mrf.mxu0
        %v797 = vadd.f32 0.0, %v796
        %798 = vdwg.mxu0
        %v799 = vadd.f32 %v707, %v789
        %v800 = vadd.f32 %v708, %v791
        %v801 = vadd.f32 %v709, %v795
        %v802 = vadd.f32 %v710, %v797
        %s803 = scalar_lea.vmem %s247, 48
        %v804 = vld [vmem:[%s803] sm:$0xff]
        %v805 = vld [vmem:[%s803 + $0x8] sm:$0xff]
        %s806 = scalar_lea.vmem %s1, 96
        %v807 = vld [vmem:[%s806] sm:$0xff]
        %v808 = vld [vmem:[%s806 + $0x8] sm:$0xff]
        %v810 = vsel %vm267, %v804, 0
        %v813 = vsel %vm267, %v805, 0
        %815 = vmatprep.subr.mxu0 0.0
        %816 = vmatpush1.msra.mxu0 0.0
        %817 = vmatprep.subr.mxu0 0.0
        %818 = vmatpush1.msra.mxu0 0.0
        %819 = vmatprep.subr.mxu0 0.0
        %820 = vmatpush1.msra.mxu0 0.0
        %821 = vmatprep.subr.mxu0 0.0
        %822 = vmatpush1.msra.mxu0 0.0
        %823 = vmatprep.subr.mxu0 0.0
        %824 = vmatpush1.msra.mxu0 0.0
        %825 = vmatprep.subr.mxu0 0.0
        %826 = vmatpush1.msra.mxu0 0.0
        %827 = vmatprep.subr.mxu0 0.0
        %828 = vmatpush1.msra.mxu0 0.0
        %829 = vmatprep.subr.mxu0 0.0
        %830 = vmatpush1.msra.mxu0 0.0
        %831 = vmatprep.subr.mxu0 0.0
        %832 = vmatpush1.msra.mxu0 0.0
        %833 = vmatprep.subr.mxu0 0.0
        %834 = vmatpush1.msra.mxu0 0.0
        %835 = vmatprep.subr.mxu0 0.0
        %836 = vmatpush1.msra.mxu0 0.0
        %837 = vmatprep.subr.mxu0 0.0
        %838 = vmatpush1.msra.mxu0 0.0
        %839 = vmatprep.subr.mxu0 0.0
        %840 = vmatpush1.msra.mxu0 0.0
        %841 = vmatprep.subr.mxu0 0.0
        %842 = vmatpush1.msra.mxu0 0.0
        %843 = vmatprep.subr.mxu0 0.0
        %844 = vmatpush1.msra.mxu0 0.0
        %845 = vmatprep.subr.mxu0 %v808
        %846 = vmatpush1.msra.mxu0 %v807
        %847 = vmatprep.subr.mxu0 0.0
        %848 = vmatpush2.msra.mxu0 0.0
        %849 = vmatprep.subr.mxu0 0.0
        %850 = vmatpush2.msra.mxu0 0.0
        %851 = vmatprep.subr.mxu0 0.0
        %852 = vmatpush2.msra.mxu0 0.0
        %853 = vmatprep.subr.mxu0 0.0
        %854 = vmatpush2.msra.mxu0 0.0
        %855 = vmatprep.subr.mxu0 0.0
        %856 = vmatpush2.msra.mxu0 0.0
        %857 = vmatprep.subr.mxu0 0.0
        %858 = vmatpush2.msra.mxu0 0.0
        %859 = vmatprep.subr.mxu0 0.0
        %860 = vmatpush2.msra.mxu0 0.0
        %861 = vmatprep.subr.mxu0 0.0
        %862 = vmatpush2.msra.mxu0 0.0
        %863 = vmatprep.subr.mxu0 0.0
        %864 = vmatpush2.msra.mxu0 0.0
        %865 = vmatprep.subr.mxu0 0.0
        %866 = vmatpush2.msra.mxu0 0.0
        %867 = vmatprep.subr.mxu0 0.0
        %868 = vmatpush2.msra.mxu0 0.0
        %869 = vmatprep.subr.mxu0 0.0
        %870 = vmatpush2.msra.mxu0 0.0
        %871 = vmatprep.subr.mxu0 0.0
        %872 = vmatpush2.msra.mxu0 0.0
        %873 = vmatprep.subr.mxu0 0.0
        %874 = vmatpush2.msra.mxu0 0.0
        %875 = vmatprep.subr.mxu0 0.0
        %876 = vmatpush2.msra.mxu0 0.0
        %877 = vmatprep.subr.mxu0 0.0
        %878 = vmatpush2.msra.mxu0 0.0
        %879 = vmatprep.mubr.f32.mxu0 0.0
        %880 = vmatmul.mubr.f32.gmra.mxu0 %v810
        %v881 = vpop.f32.mrf.mxu0
        %v882 = vadd.f32 0.0, %v881
        %v883 = vpop.f32.mrf.mxu0
        %v884 = vadd.f32 0.0, %v883
        %885 = vmatprep.mubr.f32.mxu0 0.0
        %886 = vmatmul.mubr.f32.gmra.mxu0 %v813
        %v887 = vpop.f32.mrf.mxu0
        %v888 = vadd.f32 0.0, %v887
        %v889 = vpop.f32.mrf.mxu0
        %v890 = vadd.f32 0.0, %v889
        %891 = vdwg.mxu0
        %v892 = vadd.f32 %v799, %v882
        %v893 = vadd.f32 %v800, %v884
        %v894 = vadd.f32 %v801, %v888
        %v895 = vadd.f32 %v802, %v890
        %v896 = vld [vmem:[%s803 + $0x1] sm:$0xff]
        %v897 = vld [vmem:[%s803 + $0x9] sm:$0xff]
        %s898 = scalar_lea.vmem %s1, 112
        %v899 = vld [vmem:[%s898] sm:$0xff]
        %v900 = vld [vmem:[%s898 + $0x8] sm:$0xff]
        %v902 = vsel %vm267, %v896, 0
        %v905 = vsel %vm267, %v897, 0
        %907 = vmatprep.subr.mxu0 0.0
        %908 = vmatpush1.msra.mxu0 0.0
        %909 = vmatprep.subr.mxu0 0.0
        %910 = vmatpush1.msra.mxu0 0.0
        %911 = vmatprep.subr.mxu0 0.0
        %912 = vmatpush1.msra.mxu0 0.0
        %913 = vmatprep.subr.mxu0 0.0
        %914 = vmatpush1.msra.mxu0 0.0
        %915 = vmatprep.subr.mxu0 0.0
        %916 = vmatpush1.msra.mxu0 0.0
        %917 = vmatprep.subr.mxu0 0.0
        %918 = vmatpush1.msra.mxu0 0.0
        %919 = vmatprep.subr.mxu0 0.0
        %920 = vmatpush1.msra.mxu0 0.0
        %921 = vmatprep.subr.mxu0 0.0
        %922 = vmatpush1.msra.mxu0 0.0
        %923 = vmatprep.subr.mxu0 0.0
        %924 = vmatpush1.msra.mxu0 0.0
        %925 = vmatprep.subr.mxu0 0.0
        %926 = vmatpush1.msra.mxu0 0.0
        %927 = vmatprep.subr.mxu0 0.0
        %928 = vmatpush1.msra.mxu0 0.0
        %929 = vmatprep.subr.mxu0 0.0
        %930 = vmatpush1.msra.mxu0 0.0
        %931 = vmatprep.subr.mxu0 0.0
        %932 = vmatpush1.msra.mxu0 0.0
        %933 = vmatprep.subr.mxu0 0.0
        %934 = vmatpush1.msra.mxu0 0.0
        %935 = vmatprep.subr.mxu0 0.0
        %936 = vmatpush1.msra.mxu0 0.0
        %937 = vmatprep.subr.mxu0 %v900
        %938 = vmatpush1.msra.mxu0 %v899
        %939 = vmatprep.subr.mxu0 0.0
        %940 = vmatpush2.msra.mxu0 0.0
        %941 = vmatprep.subr.mxu0 0.0
        %942 = vmatpush2.msra.mxu0 0.0
        %943 = vmatprep.subr.mxu0 0.0
        %944 = vmatpush2.msra.mxu0 0.0
        %945 = vmatprep.subr.mxu0 0.0
        %946 = vmatpush2.msra.mxu0 0.0
        %947 = vmatprep.subr.mxu0 0.0
        %948 = vmatpush2.msra.mxu0 0.0
        %949 = vmatprep.subr.mxu0 0.0
        %950 = vmatpush2.msra.mxu0 0.0
        %951 = vmatprep.subr.mxu0 0.0
        %952 = vmatpush2.msra.mxu0 0.0
        %953 = vmatprep.subr.mxu0 0.0
        %954 = vmatpush2.msra.mxu0 0.0
        %955 = vmatprep.subr.mxu0 0.0
        %956 = vmatpush2.msra.mxu0 0.0
        %957 = vmatprep.subr.mxu0 0.0
        %958 = vmatpush2.msra.mxu0 0.0
        %959 = vmatprep.subr.mxu0 0.0
        %960 = vmatpush2.msra.mxu0 0.0
        %961 = vmatprep.subr.mxu0 0.0
        %962 = vmatpush2.msra.mxu0 0.0
        %963 = vmatprep.subr.mxu0 0.0
        %964 = vmatpush2.msra.mxu0 0.0
        %965 = vmatprep.subr.mxu0 0.0
        %966 = vmatpush2.msra.mxu0 0.0
        %967 = vmatprep.subr.mxu0 0.0
        %968 = vmatpush2.msra.mxu0 0.0
        %969 = vmatprep.subr.mxu0 0.0
        %970 = vmatpush2.msra.mxu0 0.0
        %971 = vmatprep.mubr.f32.mxu0 0.0
        %972 = vmatmul.mubr.f32.gmra.mxu0 %v902
        %v973 = vpop.f32.mrf.mxu0
        %v974 = vadd.f32 0.0, %v973
        %v975 = vpop.f32.mrf.mxu0
        %v976 = vadd.f32 0.0, %v975
        %977 = vmatprep.mubr.f32.mxu0 0.0
        %978 = vmatmul.mubr.f32.gmra.mxu0 %v905
        %v979 = vpop.f32.mrf.mxu0
        %v980 = vadd.f32 0.0, %v979
        %v981 = vpop.f32.mrf.mxu0
        %v982 = vadd.f32 0.0, %v981
        %983 = vdwg.mxu0
        %v984 = vadd.f32 %v892, %v974
        %v985 = vadd.f32 %v893, %v976
        %v986 = vadd.f32 %v894, %v980
        %v987 = vadd.f32 %v895, %v982
        %v988 = vld [vmem:[%s803 + $0x2] sm:$0xff]
        %v989 = vld [vmem:[%s803 + $0xa] sm:$0xff]
        %s990 = scalar_lea.vmem %s1, 128
        %v991 = vld [vmem:[%s990] sm:$0xff]
        %v992 = vld [vmem:[%s990 + $0x8] sm:$0xff]
        %v994 = vsel %vm267, %v988, 0
        %v997 = vsel %vm267, %v989, 0
        %999 = vmatprep.subr.mxu0 0.0
        %1000 = vmatpush1.msra.mxu0 0.0
        %1001 = vmatprep.subr.mxu0 0.0
        %1002 = vmatpush1.msra.mxu0 0.0
        %1003 = vmatprep.subr.mxu0 0.0
        %1004 = vmatpush1.msra.mxu0 0.0
        %1005 = vmatprep.subr.mxu0 0.0
        %1006 = vmatpush1.msra.mxu0 0.0
        %1007 = vmatprep.subr.mxu0 0.0
        %1008 = vmatpush1.msra.mxu0 0.0
        %1009 = vmatprep.subr.mxu0 0.0
        %1010 = vmatpush1.msra.mxu0 0.0
        %1011 = vmatprep.subr.mxu0 0.0
        %1012 = vmatpush1.msra.mxu0 0.0
        %1013 = vmatprep.subr.mxu0 0.0
        %1014 = vmatpush1.msra.mxu0 0.0
        %1015 = vmatprep.subr.mxu0 0.0
        %1016 = vmatpush1.msra.mxu0 0.0
        %1017 = vmatprep.subr.mxu0 0.0
        %1018 = vmatpush1.msra.mxu0 0.0
        %1019 = vmatprep.subr.mxu0 0.0
        %1020 = vmatpush1.msra.mxu0 0.0
        %1021 = vmatprep.subr.mxu0 0.0
        %1022 = vmatpush1.msra.mxu0 0.0
        %1023 = vmatprep.subr.mxu0 0.0
        %1024 = vmatpush1.msra.mxu0 0.0
        %1025 = vmatprep.subr.mxu0 0.0
        %1026 = vmatpush1.msra.mxu0 0.0
        %1027 = vmatprep.subr.mxu0 0.0
        %1028 = vmatpush1.msra.mxu0 0.0
        %1029 = vmatprep.subr.mxu0 %v992
        %1030 = vmatpush1.msra.mxu0 %v991
        %1031 = vmatprep.subr.mxu0 0.0
        %1032 = vmatpush2.msra.mxu0 0.0
        %1033 = vmatprep.subr.mxu0 0.0
        %1034 = vmatpush2.msra.mxu0 0.0
        %1035 = vmatprep.subr.mxu0 0.0
        %1036 = vmatpush2.msra.mxu0 0.0
        %1037 = vmatprep.subr.mxu0 0.0
        %1038 = vmatpush2.msra.mxu0 0.0
        %1039 = vmatprep.subr.mxu0 0.0
        %1040 = vmatpush2.msra.mxu0 0.0
        %1041 = vmatprep.subr.mxu0 0.0
        %1042 = vmatpush2.msra.mxu0 0.0
        %1043 = vmatprep.subr.mxu0 0.0
        %1044 = vmatpush2.msra.mxu0 0.0
        %1045 = vmatprep.subr.mxu0 0.0
        %1046 = vmatpush2.msra.mxu0 0.0
        %1047 = vmatprep.subr.mxu0 0.0
        %1048 = vmatpush2.msra.mxu0 0.0
        %1049 = vmatprep.subr.mxu0 0.0
        %1050 = vmatpush2.msra.mxu0 0.0
        %1051 = vmatprep.subr.mxu0 0.0
        %1052 = vmatpush2.msra.mxu0 0.0
        %1053 = vmatprep.subr.mxu0 0.0
        %1054 = vmatpush2.msra.mxu0 0.0
        %1055 = vmatprep.subr.mxu0 0.0
        %1056 = vmatpush2.msra.mxu0 0.0
        %1057 = vmatprep.subr.mxu0 0.0
        %1058 = vmatpush2.msra.mxu0 0.0
        %1059 = vmatprep.subr.mxu0 0.0
        %1060 = vmatpush2.msra.mxu0 0.0
        %1061 = vmatprep.subr.mxu0 0.0
        %1062 = vmatpush2.msra.mxu0 0.0
        %1063 = vmatprep.mubr.f32.mxu0 0.0
        %1064 = vmatmul.mubr.f32.gmra.mxu0 %v994
        %v1065 = vpop.f32.mrf.mxu0
        %v1066 = vadd.f32 0.0, %v1065
        %v1067 = vpop.f32.mrf.mxu0
        %v1068 = vadd.f32 0.0, %v1067
        %1069 = vmatprep.mubr.f32.mxu0 0.0
        %1070 = vmatmul.mubr.f32.gmra.mxu0 %v997
        %v1071 = vpop.f32.mrf.mxu0
        %v1072 = vadd.f32 0.0, %v1071
        %v1073 = vpop.f32.mrf.mxu0
        %v1074 = vadd.f32 0.0, %v1073
        %1075 = vdwg.mxu0
        %v1076 = vadd.f32 %v984, %v1066
        %v1077 = vadd.f32 %v985, %v1068
        %v1078 = vadd.f32 %v986, %v1072
        %v1079 = vadd.f32 %v987, %v1074
        %v1081 = vlaneseq
        %v1082 = vshrl.u32 %v1081, 7
        %v1083 = vsub.s32 0, %v1082
        %v1084 = vrot.slane %v257, %v1083
        %v1085 = vlaneseq
        %v1086 = vshrl.u32 %v1085, 7
        %v1087 = vsub.s32 1, %v1086
        %v1088 = vrot.slane %v257, %v1087
        %v1091 = vadd.f32 %v1076, %v1084
        %v1092 = vadd.f32 %v1077, %v1088
        %v1093 = vadd.f32 %v1078, %v1084
        %v1094 = vadd.f32 %v1079, %v1088
        %v1095 = vmax.f32 %v1091, 0.0
        %v1096 = vmax.f32 %v1092, 0.0
        %v1097 = vmax.f32 %v1093, 0.0
        %v1098 = vmax.f32 %v1094, 0.0
        %v1099 = vadd.f32 %v1095, %v1097
        %v1100 = vrot.slane %v1099, 4
        %v1101 = vadd.f32 %v1099, %v1100
        %v1102 = vrot.slane %v1101, 2
        %v1103 = vadd.f32 %v1101, %v1102
        %v1104 = vrot.slane %v1103, 1
        %v1105 = vadd.f32 %v1103, %v1104
        %v1106 = vadd.f32 %v1096, %v1098
        %v1107 = vrot.slane %v1106, 4
        %v1108 = vadd.f32 %v1106, %v1107
        %v1109 = vrot.slane %v1108, 2
        %v1110 = vadd.f32 %v1108, %v1109
        %v1111 = vrot.slane %v1110, 1
        %v1112 = vadd.f32 %v1110, %v1111
        %v1113 = vadd.f32 %v1105, 0.0
        %v1114 = vadd.f32 %v1112, 0.0
        %1115 = vmatprep.subr.mxu0 0.0
        %1116 = vmatpush1.msra.mxu0 0.0
        %1117 = vmatprep.subr.mxu0 0.0
        %1118 = vmatpush1.msra.mxu0 0.0
        %1119 = vmatprep.subr.mxu0 0.0
        %1120 = vmatpush1.msra.mxu0 0.0
        %1121 = vmatprep.subr.mxu0 0.0
        %1122 = vmatpush1.msra.mxu0 0.0
        %1123 = vmatprep.subr.mxu0 0.0
        %1124 = vmatpush1.msra.mxu0 0.0
        %1125 = vmatprep.subr.mxu0 0.0
        %1126 = vmatpush1.msra.mxu0 0.0
        %1127 = vmatprep.subr.mxu0 0.0
        %1128 = vmatpush1.msra.mxu0 0.0
        %1129 = vmatprep.subr.mxu0 0.0
        %1130 = vmatpush1.msra.mxu0 0.0
        %1131 = vmatprep.subr.mxu0 0.0
        %1132 = vmatpush1.msra.mxu0 0.0
        %1133 = vmatprep.subr.mxu0 0.0
        %1134 = vmatpush1.msra.mxu0 0.0
        %1135 = vmatprep.subr.mxu0 0.0
        %1136 = vmatpush1.msra.mxu0 0.0
        %1137 = vmatprep.subr.mxu0 0.0
        %1138 = vmatpush1.msra.mxu0 0.0
        %1139 = vmatprep.subr.mxu0 0.0
        %1140 = vmatpush1.msra.mxu0 0.0
        %1141 = vmatprep.subr.mxu0 0.0
        %1142 = vmatpush1.msra.mxu0 0.0
        %1143 = vmatprep.subr.mxu0 0.0
        %1144 = vmatpush1.msra.mxu0 0.0
        %1145 = vmatprep.subr.mxu0 %v266
        %1146 = vmatpush1.msra.mxu0 %v265
        %1147 = vmatprep.subr.mxu0 0.0
        %1148 = vmatpush2.msra.mxu0 0.0
        %1149 = vmatprep.subr.mxu0 0.0
        %1150 = vmatpush2.msra.mxu0 0.0
        %1151 = vmatprep.subr.mxu0 0.0
        %1152 = vmatpush2.msra.mxu0 0.0
        %1153 = vmatprep.subr.mxu0 0.0
        %1154 = vmatpush2.msra.mxu0 0.0
        %1155 = vmatprep.subr.mxu0 0.0
        %1156 = vmatpush2.msra.mxu0 0.0
        %1157 = vmatprep.subr.mxu0 0.0
        %1158 = vmatpush2.msra.mxu0 0.0
        %1159 = vmatprep.subr.mxu0 0.0
        %1160 = vmatpush2.msra.mxu0 0.0
        %1161 = vmatprep.subr.mxu0 0.0
        %1162 = vmatpush2.msra.mxu0 0.0
        %1163 = vmatprep.subr.mxu0 0.0
        %1164 = vmatpush2.msra.mxu0 0.0
        %1165 = vmatprep.subr.mxu0 0.0
        %1166 = vmatpush2.msra.mxu0 0.0
        %1167 = vmatprep.subr.mxu0 0.0
        %1168 = vmatpush2.msra.mxu0 0.0
        %1169 = vmatprep.subr.mxu0 0.0
        %1170 = vmatpush2.msra.mxu0 0.0
        %1171 = vmatprep.subr.mxu0 0.0
        %1172 = vmatpush2.msra.mxu0 0.0
        %1173 = vmatprep.subr.mxu0 0.0
        %1174 = vmatpush2.msra.mxu0 0.0
        %1175 = vmatprep.subr.mxu0 0.0
        %1176 = vmatpush2.msra.mxu0 0.0
        %1177 = vmatprep.subr.mxu0 0.0
        %1178 = vmatpush2.msra.mxu0 0.0
        %1179 = vmatprep.mubr.f32.mxu0 0.0
        %1180 = vmatmul.mubr.f32.gmra.mxu0 %v625
        %v1181 = vpop.f32.mrf.mxu0
        %v1182 = vadd.f32 0.0, %v1181
        %v1183 = vpop.f32.mrf.mxu0
        %v1184 = vadd.f32 0.0, %v1183
        %1185 = vmatprep.mubr.f32.mxu0 0.0
        %1186 = vmatmul.mubr.f32.gmra.mxu0 %v628
        %v1187 = vpop.f32.mrf.mxu0
        %v1188 = vadd.f32 0.0, %v1187
        %v1189 = vpop.f32.mrf.mxu0
        %v1190 = vadd.f32 0.0, %v1189
        %1191 = vdwg.mxu0
        %1192 = vmatprep.subr.mxu0 0.0
        %1193 = vmatpush1.msra.mxu0 0.0
        %1194 = vmatprep.subr.mxu0 0.0
        %1195 = vmatpush1.msra.mxu0 0.0
        %1196 = vmatprep.subr.mxu0 0.0
        %1197 = vmatpush1.msra.mxu0 0.0
        %1198 = vmatprep.subr.mxu0 0.0
        %1199 = vmatpush1.msra.mxu0 0.0
        %1200 = vmatprep.subr.mxu0 0.0
        %1201 = vmatpush1.msra.mxu0 0.0
        %1202 = vmatprep.subr.mxu0 0.0
        %1203 = vmatpush1.msra.mxu0 0.0
        %1204 = vmatprep.subr.mxu0 0.0
        %1205 = vmatpush1.msra.mxu0 0.0
        %1206 = vmatprep.subr.mxu0 0.0
        %1207 = vmatpush1.msra.mxu0 0.0
        %1208 = vmatprep.subr.mxu0 0.0
        %1209 = vmatpush1.msra.mxu0 0.0
        %1210 = vmatprep.subr.mxu0 0.0
        %1211 = vmatpush1.msra.mxu0 0.0
        %1212 = vmatprep.subr.mxu0 0.0
        %1213 = vmatpush1.msra.mxu0 0.0
        %1214 = vmatprep.subr.mxu0 0.0
        %1215 = vmatpush1.msra.mxu0 0.0
        %1216 = vmatprep.subr.mxu0 0.0
        %1217 = vmatpush1.msra.mxu0 0.0
        %1218 = vmatprep.subr.mxu0 0.0
        %1219 = vmatpush1.msra.mxu0 0.0
        %1220 = vmatprep.subr.mxu0 0.0
        %1221 = vmatpush1.msra.mxu0 0.0
        %1222 = vmatprep.subr.mxu0 %v261
        %1223 = vmatpush1.msra.mxu0 %v260
        %1224 = vmatprep.subr.mxu0 0.0
        %1225 = vmatpush2.msra.mxu0 0.0
        %1226 = vmatprep.subr.mxu0 0.0
        %1227 = vmatpush2.msra.mxu0 0.0
        %1228 = vmatprep.subr.mxu0 0.0
        %1229 = vmatpush2.msra.mxu0 0.0
        %1230 = vmatprep.subr.mxu0 0.0
        %1231 = vmatpush2.msra.mxu0 0.0
        %1232 = vmatprep.subr.mxu0 0.0
        %1233 = vmatpush2.msra.mxu0 0.0
        %1234 = vmatprep.subr.mxu0 0.0
        %1235 = vmatpush2.msra.mxu0 0.0
        %1236 = vmatprep.subr.mxu0 0.0
        %1237 = vmatpush2.msra.mxu0 0.0
        %1238 = vmatprep.subr.mxu0 0.0
        %1239 = vmatpush2.msra.mxu0 0.0
        %1240 = vmatprep.subr.mxu0 0.0
        %1241 = vmatpush2.msra.mxu0 0.0
        %1242 = vmatprep.subr.mxu0 0.0
        %1243 = vmatpush2.msra.mxu0 0.0
        %1244 = vmatprep.subr.mxu0 0.0
        %1245 = vmatpush2.msra.mxu0 0.0
        %1246 = vmatprep.subr.mxu0 0.0
        %1247 = vmatpush2.msra.mxu0 0.0
        %1248 = vmatprep.subr.mxu0 0.0
        %1249 = vmatpush2.msra.mxu0 0.0
        %1250 = vmatprep.subr.mxu0 0.0
        %1251 = vmatpush2.msra.mxu0 0.0
        %1252 = vmatprep.subr.mxu0 0.0
        %1253 = vmatpush2.msra.mxu0 0.0
        %1254 = vmatprep.subr.mxu0 0.0
        %1255 = vmatpush2.msra.mxu0 0.0
        %1256 = vmatprep.mubr.f32.mxu0 0.0
        %1257 = vmatmul.mubr.f32.gmra.mxu0 %v533
        %v1258 = vpop.f32.mrf.mxu0
        %v1259 = vadd.f32 %v1182, %v1258
        %v1260 = vpop.f32.mrf.mxu0
        %v1261 = vadd.f32 %v1184, %v1260
        %1262 = vmatprep.mubr.f32.mxu0 0.0
        %1263 = vmatmul.mubr.f32.gmra.mxu0 %v536
        %v1264 = vpop.f32.mrf.mxu0
        %v1265 = vadd.f32 %v1188, %v1264
        %v1266 = vpop.f32.mrf.mxu0
        %v1267 = vadd.f32 %v1190, %v1266
        %1268 = vdwg.mxu0
        %1269 = vmatprep.subr.mxu0 0.0
        %1270 = vmatpush1.msra.mxu0 0.0
        %1271 = vmatprep.subr.mxu0 0.0
        %1272 = vmatpush1.msra.mxu0 0.0
        %1273 = vmatprep.subr.mxu0 0.0
        %1274 = vmatpush1.msra.mxu0 0.0
        %1275 = vmatprep.subr.mxu0 0.0
        %1276 = vmatpush1.msra.mxu0 0.0
        %1277 = vmatprep.subr.mxu0 0.0
        %1278 = vmatpush1.msra.mxu0 0.0
        %1279 = vmatprep.subr.mxu0 0.0
        %1280 = vmatpush1.msra.mxu0 0.0
        %1281 = vmatprep.subr.mxu0 0.0
        %1282 = vmatpush1.msra.mxu0 0.0
        %1283 = vmatprep.subr.mxu0 0.0
        %1284 = vmatpush1.msra.mxu0 0.0
        %1285 = vmatprep.subr.mxu0 0.0
        %1286 = vmatpush1.msra.mxu0 0.0
        %1287 = vmatprep.subr.mxu0 0.0
        %1288 = vmatpush1.msra.mxu0 0.0
        %1289 = vmatprep.subr.mxu0 0.0
        %1290 = vmatpush1.msra.mxu0 0.0
        %1291 = vmatprep.subr.mxu0 0.0
        %1292 = vmatpush1.msra.mxu0 0.0
        %1293 = vmatprep.subr.mxu0 0.0
        %1294 = vmatpush1.msra.mxu0 0.0
        %1295 = vmatprep.subr.mxu0 0.0
        %1296 = vmatpush1.msra.mxu0 0.0
        %1297 = vmatprep.subr.mxu0 0.0
        %1298 = vmatpush1.msra.mxu0 0.0
        %1299 = vmatprep.subr.mxu0 %v438
        %1300 = vmatpush1.msra.mxu0 %v437
        %1301 = vmatprep.subr.mxu0 0.0
        %1302 = vmatpush2.msra.mxu0 0.0
        %1303 = vmatprep.subr.mxu0 0.0
        %1304 = vmatpush2.msra.mxu0 0.0
        %1305 = vmatprep.subr.mxu0 0.0
        %1306 = vmatpush2.msra.mxu0 0.0
        %1307 = vmatprep.subr.mxu0 0.0
        %1308 = vmatpush2.msra.mxu0 0.0
        %1309 = vmatprep.subr.mxu0 0.0
        %1310 = vmatpush2.msra.mxu0 0.0
        %1311 = vmatprep.subr.mxu0 0.0
        %1312 = vmatpush2.msra.mxu0 0.0
        %1313 = vmatprep.subr.mxu0 0.0
        %1314 = vmatpush2.msra.mxu0 0.0
        %1315 = vmatprep.subr.mxu0 0.0
        %1316 = vmatpush2.msra.mxu0 0.0
        %1317 = vmatprep.subr.mxu0 0.0
        %1318 = vmatpush2.msra.mxu0 0.0
        %1319 = vmatprep.subr.mxu0 0.0
        %1320 = vmatpush2.msra.mxu0 0.0
        %1321 = vmatprep.subr.mxu0 0.0
        %1322 = vmatpush2.msra.mxu0 0.0
        %1323 = vmatprep.subr.mxu0 0.0
        %1324 = vmatpush2.msra.mxu0 0.0
        %1325 = vmatprep.subr.mxu0 0.0
        %1326 = vmatpush2.msra.mxu0 0.0
        %1327 = vmatprep.subr.mxu0 0.0
        %1328 = vmatpush2.msra.mxu0 0.0
        %1329 = vmatprep.subr.mxu0 0.0
        %1330 = vmatpush2.msra.mxu0 0.0
        %1331 = vmatprep.subr.mxu0 0.0
        %1332 = vmatpush2.msra.mxu0 0.0
        %1333 = vmatprep.mubr.f32.mxu0 0.0
        %1334 = vmatmul.mubr.f32.gmra.mxu0 %v717
        %v1335 = vpop.f32.mrf.mxu0
        %v1336 = vadd.f32 0.0, %v1335
        %v1337 = vpop.f32.mrf.mxu0
        %v1338 = vadd.f32 0.0, %v1337
        %1339 = vmatprep.mubr.f32.mxu0 0.0
        %1340 = vmatmul.mubr.f32.gmra.mxu0 %v720
        %v1341 = vpop.f32.mrf.mxu0
        %v1342 = vadd.f32 0.0, %v1341
        %v1343 = vpop.f32.mrf.mxu0
        %v1344 = vadd.f32 0.0, %v1343
        %1345 = vdwg.mxu0
        %v1346 = vadd.f32 %v1259, %v1336
        %v1347 = vadd.f32 %v1261, %v1338
        %v1348 = vadd.f32 %v1265, %v1342
        %v1349 = vadd.f32 %v1267, %v1344
        %1350 = vmatprep.subr.mxu0 0.0
        %1351 = vmatpush1.msra.mxu0 0.0
        %1352 = vmatprep.subr.mxu0 0.0
        %1353 = vmatpush1.msra.mxu0 0.0
        %1354 = vmatprep.subr.mxu0 0.0
        %1355 = vmatpush1.msra.mxu0 0.0
        %1356 = vmatprep.subr.mxu0 0.0
        %1357 = vmatpush1.msra.mxu0 0.0
        %1358 = vmatprep.subr.mxu0 0.0
        %1359 = vmatpush1.msra.mxu0 0.0
        %1360 = vmatprep.subr.mxu0 0.0
        %1361 = vmatpush1.msra.mxu0 0.0
        %1362 = vmatprep.subr.mxu0 0.0
        %1363 = vmatpush1.msra.mxu0 0.0
        %1364 = vmatprep.subr.mxu0 0.0
        %1365 = vmatpush1.msra.mxu0 0.0
        %1366 = vmatprep.subr.mxu0 0.0
        %1367 = vmatpush1.msra.mxu0 0.0
        %1368 = vmatprep.subr.mxu0 0.0
        %1369 = vmatpush1.msra.mxu0 0.0
        %1370 = vmatprep.subr.mxu0 0.0
        %1371 = vmatpush1.msra.mxu0 0.0
        %1372 = vmatprep.subr.mxu0 0.0
        %1373 = vmatpush1.msra.mxu0 0.0
        %1374 = vmatprep.subr.mxu0 0.0
        %1375 = vmatpush1.msra.mxu0 0.0
        %1376 = vmatprep.subr.mxu0 0.0
        %1377 = vmatpush1.msra.mxu0 0.0
        %1378 = vmatprep.subr.mxu0 0.0
        %1379 = vmatpush1.msra.mxu0 0.0
        %1380 = vmatprep.subr.mxu0 %v531
        %1381 = vmatpush1.msra.mxu0 %v530
        %1382 = vmatprep.subr.mxu0 0.0
        %1383 = vmatpush2.msra.mxu0 0.0
        %1384 = vmatprep.subr.mxu0 0.0
        %1385 = vmatpush2.msra.mxu0 0.0
        %1386 = vmatprep.subr.mxu0 0.0
        %1387 = vmatpush2.msra.mxu0 0.0
        %1388 = vmatprep.subr.mxu0 0.0
        %1389 = vmatpush2.msra.mxu0 0.0
        %1390 = vmatprep.subr.mxu0 0.0
        %1391 = vmatpush2.msra.mxu0 0.0
        %1392 = vmatprep.subr.mxu0 0.0
        %1393 = vmatpush2.msra.mxu0 0.0
        %1394 = vmatprep.subr.mxu0 0.0
        %1395 = vmatpush2.msra.mxu0 0.0
        %1396 = vmatprep.subr.mxu0 0.0
        %1397 = vmatpush2.msra.mxu0 0.0
        %1398 = vmatprep.subr.mxu0 0.0
        %1399 = vmatpush2.msra.mxu0 0.0
        %1400 = vmatprep.subr.mxu0 0.0
        %1401 = vmatpush2.msra.mxu0 0.0
        %1402 = vmatprep.subr.mxu0 0.0
        %1403 = vmatpush2.msra.mxu0 0.0
        %1404 = vmatprep.subr.mxu0 0.0
        %1405 = vmatpush2.msra.mxu0 0.0
        %1406 = vmatprep.subr.mxu0 0.0
        %1407 = vmatpush2.msra.mxu0 0.0
        %1408 = vmatprep.subr.mxu0 0.0
        %1409 = vmatpush2.msra.mxu0 0.0
        %1410 = vmatprep.subr.mxu0 0.0
        %1411 = vmatpush2.msra.mxu0 0.0
        %1412 = vmatprep.subr.mxu0 0.0
        %1413 = vmatpush2.msra.mxu0 0.0
        %1414 = vmatprep.mubr.f32.mxu0 0.0
        %1415 = vmatmul.mubr.f32.gmra.mxu0 %v810
        %v1416 = vpop.f32.mrf.mxu0
        %v1417 = vadd.f32 0.0, %v1416
        %v1418 = vpop.f32.mrf.mxu0
        %v1419 = vadd.f32 0.0, %v1418
        %1420 = vmatprep.mubr.f32.mxu0 0.0
        %1421 = vmatmul.mubr.f32.gmra.mxu0 %v813
        %v1422 = vpop.f32.mrf.mxu0
        %v1423 = vadd.f32 0.0, %v1422
        %v1424 = vpop.f32.mrf.mxu0
        %v1425 = vadd.f32 0.0, %v1424
        %1426 = vdwg.mxu0
        %v1427 = vadd.f32 %v1346, %v1417
        %v1428 = vadd.f32 %v1347, %v1419
        %v1429 = vadd.f32 %v1348, %v1423
        %v1430 = vadd.f32 %v1349, %v1425
        %1431 = vmatprep.subr.mxu0 0.0
        %1432 = vmatpush1.msra.mxu0 0.0
        %1433 = vmatprep.subr.mxu0 0.0
        %1434 = vmatpush1.msra.mxu0 0.0
        %1435 = vmatprep.subr.mxu0 0.0
        %1436 = vmatpush1.msra.mxu0 0.0
        %1437 = vmatprep.subr.mxu0 0.0
        %1438 = vmatpush1.msra.mxu0 0.0
        %1439 = vmatprep.subr.mxu0 0.0
        %1440 = vmatpush1.msra.mxu0 0.0
        %1441 = vmatprep.subr.mxu0 0.0
        %1442 = vmatpush1.msra.mxu0 0.0
        %1443 = vmatprep.subr.mxu0 0.0
        %1444 = vmatpush1.msra.mxu0 0.0
        %1445 = vmatprep.subr.mxu0 0.0
        %1446 = vmatpush1.msra.mxu0 0.0
        %1447 = vmatprep.subr.mxu0 0.0
        %1448 = vmatpush1.msra.mxu0 0.0
        %1449 = vmatprep.subr.mxu0 0.0
        %1450 = vmatpush1.msra.mxu0 0.0
        %1451 = vmatprep.subr.mxu0 0.0
        %1452 = vmatpush1.msra.mxu0 0.0
        %1453 = vmatprep.subr.mxu0 0.0
        %1454 = vmatpush1.msra.mxu0 0.0
        %1455 = vmatprep.subr.mxu0 0.0
        %1456 = vmatpush1.msra.mxu0 0.0
        %1457 = vmatprep.subr.mxu0 0.0
        %1458 = vmatpush1.msra.mxu0 0.0
        %1459 = vmatprep.subr.mxu0 0.0
        %1460 = vmatpush1.msra.mxu0 0.0
        %1461 = vmatprep.subr.mxu0 %v623
        %1462 = vmatpush1.msra.mxu0 %v622
        %1463 = vmatprep.subr.mxu0 0.0
        %1464 = vmatpush2.msra.mxu0 0.0
        %1465 = vmatprep.subr.mxu0 0.0
        %1466 = vmatpush2.msra.mxu0 0.0
        %1467 = vmatprep.subr.mxu0 0.0
        %1468 = vmatpush2.msra.mxu0 0.0
        %1469 = vmatprep.subr.mxu0 0.0
        %1470 = vmatpush2.msra.mxu0 0.0
        %1471 = vmatprep.subr.mxu0 0.0
        %1472 = vmatpush2.msra.mxu0 0.0
        %1473 = vmatprep.subr.mxu0 0.0
        %1474 = vmatpush2.msra.mxu0 0.0
        %1475 = vmatprep.subr.mxu0 0.0
        %1476 = vmatpush2.msra.mxu0 0.0
        %1477 = vmatprep.subr.mxu0 0.0
        %1478 = vmatpush2.msra.mxu0 0.0
        %1479 = vmatprep.subr.mxu0 0.0
        %1480 = vmatpush2.msra.mxu0 0.0
        %1481 = vmatprep.subr.mxu0 0.0
        %1482 = vmatpush2.msra.mxu0 0.0
        %1483 = vmatprep.subr.mxu0 0.0
        %1484 = vmatpush2.msra.mxu0 0.0
        %1485 = vmatprep.subr.mxu0 0.0
        %1486 = vmatpush2.msra.mxu0 0.0
        %1487 = vmatprep.subr.mxu0 0.0
        %1488 = vmatpush2.msra.mxu0 0.0
        %1489 = vmatprep.subr.mxu0 0.0
        %1490 = vmatpush2.msra.mxu0 0.0
        %1491 = vmatprep.subr.mxu0 0.0
        %1492 = vmatpush2.msra.mxu0 0.0
        %1493 = vmatprep.subr.mxu0 0.0
        %1494 = vmatpush2.msra.mxu0 0.0
        %1495 = vmatprep.mubr.f32.mxu0 0.0
        %1496 = vmatmul.mubr.f32.gmra.mxu0 %v902
        %v1497 = vpop.f32.mrf.mxu0
        %v1498 = vadd.f32 0.0, %v1497
        %v1499 = vpop.f32.mrf.mxu0
        %v1500 = vadd.f32 0.0, %v1499
        %1501 = vmatprep.mubr.f32.mxu0 0.0
        %1502 = vmatmul.mubr.f32.gmra.mxu0 %v905
        %v1503 = vpop.f32.mrf.mxu0
        %v1504 = vadd.f32 0.0, %v1503
        %v1505 = vpop.f32.mrf.mxu0
        %v1506 = vadd.f32 0.0, %v1505
        %1507 = vdwg.mxu0
        %v1508 = vadd.f32 %v1427, %v1498
        %v1509 = vadd.f32 %v1428, %v1500
        %v1510 = vadd.f32 %v1429, %v1504
        %v1511 = vadd.f32 %v1430, %v1506
        %1512 = vmatprep.subr.mxu0 0.0
        %1513 = vmatpush1.msra.mxu0 0.0
        %1514 = vmatprep.subr.mxu0 0.0
        %1515 = vmatpush1.msra.mxu0 0.0
        %1516 = vmatprep.subr.mxu0 0.0
        %1517 = vmatpush1.msra.mxu0 0.0
        %1518 = vmatprep.subr.mxu0 0.0
        %1519 = vmatpush1.msra.mxu0 0.0
        %1520 = vmatprep.subr.mxu0 0.0
        %1521 = vmatpush1.msra.mxu0 0.0
        %1522 = vmatprep.subr.mxu0 0.0
        %1523 = vmatpush1.msra.mxu0 0.0
        %1524 = vmatprep.subr.mxu0 0.0
        %1525 = vmatpush1.msra.mxu0 0.0
        %1526 = vmatprep.subr.mxu0 0.0
        %1527 = vmatpush1.msra.mxu0 0.0
        %1528 = vmatprep.subr.mxu0 0.0
        %1529 = vmatpush1.msra.mxu0 0.0
        %1530 = vmatprep.subr.mxu0 0.0
        %1531 = vmatpush1.msra.mxu0 0.0
        %1532 = vmatprep.subr.mxu0 0.0
        %1533 = vmatpush1.msra.mxu0 0.0
        %1534 = vmatprep.subr.mxu0 0.0
        %1535 = vmatpush1.msra.mxu0 0.0
        %1536 = vmatprep.subr.mxu0 0.0
        %1537 = vmatpush1.msra.mxu0 0.0
        %1538 = vmatprep.subr.mxu0 0.0
        %1539 = vmatpush1.msra.mxu0 0.0
        %1540 = vmatprep.subr.mxu0 0.0
        %1541 = vmatpush1.msra.mxu0 0.0
        %1542 = vmatprep.subr.mxu0 %v715
        %1543 = vmatpush1.msra.mxu0 %v714
        %1544 = vmatprep.subr.mxu0 0.0
        %1545 = vmatpush2.msra.mxu0 0.0
        %1546 = vmatprep.subr.mxu0 0.0
        %1547 = vmatpush2.msra.mxu0 0.0
        %1548 = vmatprep.subr.mxu0 0.0
        %1549 = vmatpush2.msra.mxu0 0.0
        %1550 = vmatprep.subr.mxu0 0.0
        %1551 = vmatpush2.msra.mxu0 0.0
        %1552 = vmatprep.subr.mxu0 0.0
        %1553 = vmatpush2.msra.mxu0 0.0
        %1554 = vmatprep.subr.mxu0 0.0
        %1555 = vmatpush2.msra.mxu0 0.0
        %1556 = vmatprep.subr.mxu0 0.0
        %1557 = vmatpush2.msra.mxu0 0.0
        %1558 = vmatprep.subr.mxu0 0.0
        %1559 = vmatpush2.msra.mxu0 0.0
        %1560 = vmatprep.subr.mxu0 0.0
        %1561 = vmatpush2.msra.mxu0 0.0
        %1562 = vmatprep.subr.mxu0 0.0
        %1563 = vmatpush2.msra.mxu0 0.0
        %1564 = vmatprep.subr.mxu0 0.0
        %1565 = vmatpush2.msra.mxu0 0.0
        %1566 = vmatprep.subr.mxu0 0.0
        %1567 = vmatpush2.msra.mxu0 0.0
        %1568 = vmatprep.subr.mxu0 0.0
        %1569 = vmatpush2.msra.mxu0 0.0
        %1570 = vmatprep.subr.mxu0 0.0
        %1571 = vmatpush2.msra.mxu0 0.0
        %1572 = vmatprep.subr.mxu0 0.0
        %1573 = vmatpush2.msra.mxu0 0.0
        %1574 = vmatprep.subr.mxu0 0.0
        %1575 = vmatpush2.msra.mxu0 0.0
        %1576 = vmatprep.mubr.f32.mxu0 0.0
        %1577 = vmatmul.mubr.f32.gmra.mxu0 %v994
        %v1578 = vpop.f32.mrf.mxu0
        %v1579 = vadd.f32 0.0, %v1578
        %v1580 = vpop.f32.mrf.mxu0
        %v1581 = vadd.f32 0.0, %v1580
        %1582 = vmatprep.mubr.f32.mxu0 0.0
        %1583 = vmatmul.mubr.f32.gmra.mxu0 %v997
        %v1584 = vpop.f32.mrf.mxu0
        %v1585 = vadd.f32 0.0, %v1584
        %v1586 = vpop.f32.mrf.mxu0
        %v1587 = vadd.f32 0.0, %v1586
        %1588 = vdwg.mxu0
        %v1589 = vadd.f32 %v1508, %v1579
        %v1590 = vadd.f32 %v1509, %v1581
        %v1591 = vadd.f32 %v1510, %v1585
        %v1592 = vadd.f32 %v1511, %v1587
        %s1593 = scalar_lea.vmem %s247, 72
        %v1594 = vld [vmem:[%s1593] sm:$0xff]
        %v1595 = vld [vmem:[%s1593 + $0x8] sm:$0xff]
        %v1597 = vsel %vm267, %v1594, 0
        %v1600 = vsel %vm267, %v1595, 0
        %1602 = vmatprep.subr.mxu0 0.0
        %1603 = vmatpush1.msra.mxu0 0.0
        %1604 = vmatprep.subr.mxu0 0.0
        %1605 = vmatpush1.msra.mxu0 0.0
        %1606 = vmatprep.subr.mxu0 0.0
        %1607 = vmatpush1.msra.mxu0 0.0
        %1608 = vmatprep.subr.mxu0 0.0
        %1609 = vmatpush1.msra.mxu0 0.0
        %1610 = vmatprep.subr.mxu0 0.0
        %1611 = vmatpush1.msra.mxu0 0.0
        %1612 = vmatprep.subr.mxu0 0.0
        %1613 = vmatpush1.msra.mxu0 0.0
        %1614 = vmatprep.subr.mxu0 0.0
        %1615 = vmatpush1.msra.mxu0 0.0
        %1616 = vmatprep.subr.mxu0 0.0
        %1617 = vmatpush1.msra.mxu0 0.0
        %1618 = vmatprep.subr.mxu0 0.0
        %1619 = vmatpush1.msra.mxu0 0.0
        %1620 = vmatprep.subr.mxu0 0.0
        %1621 = vmatpush1.msra.mxu0 0.0
        %1622 = vmatprep.subr.mxu0 0.0
        %1623 = vmatpush1.msra.mxu0 0.0
        %1624 = vmatprep.subr.mxu0 0.0
        %1625 = vmatpush1.msra.mxu0 0.0
        %1626 = vmatprep.subr.mxu0 0.0
        %1627 = vmatpush1.msra.mxu0 0.0
        %1628 = vmatprep.subr.mxu0 0.0
        %1629 = vmatpush1.msra.mxu0 0.0
        %1630 = vmatprep.subr.mxu0 0.0
        %1631 = vmatpush1.msra.mxu0 0.0
        %1632 = vmatprep.subr.mxu0 %v808
        %1633 = vmatpush1.msra.mxu0 %v807
        %1634 = vmatprep.subr.mxu0 0.0
        %1635 = vmatpush2.msra.mxu0 0.0
        %1636 = vmatprep.subr.mxu0 0.0
        %1637 = vmatpush2.msra.mxu0 0.0
        %1638 = vmatprep.subr.mxu0 0.0
        %1639 = vmatpush2.msra.mxu0 0.0
        %1640 = vmatprep.subr.mxu0 0.0
        %1641 = vmatpush2.msra.mxu0 0.0
        %1642 = vmatprep.subr.mxu0 0.0
        %1643 = vmatpush2.msra.mxu0 0.0
        %1644 = vmatprep.subr.mxu0 0.0
        %1645 = vmatpush2.msra.mxu0 0.0
        %1646 = vmatprep.subr.mxu0 0.0
        %1647 = vmatpush2.msra.mxu0 0.0
        %1648 = vmatprep.subr.mxu0 0.0
        %1649 = vmatpush2.msra.mxu0 0.0
        %1650 = vmatprep.subr.mxu0 0.0
        %1651 = vmatpush2.msra.mxu0 0.0
        %1652 = vmatprep.subr.mxu0 0.0
        %1653 = vmatpush2.msra.mxu0 0.0
        %1654 = vmatprep.subr.mxu0 0.0
        %1655 = vmatpush2.msra.mxu0 0.0
        %1656 = vmatprep.subr.mxu0 0.0
        %1657 = vmatpush2.msra.mxu0 0.0
        %1658 = vmatprep.subr.mxu0 0.0
        %1659 = vmatpush2.msra.mxu0 0.0
        %1660 = vmatprep.subr.mxu0 0.0
        %1661 = vmatpush2.msra.mxu0 0.0
        %1662 = vmatprep.subr.mxu0 0.0
        %1663 = vmatpush2.msra.mxu0 0.0
        %1664 = vmatprep.subr.mxu0 0.0
        %1665 = vmatpush2.msra.mxu0 0.0
        %1666 = vmatprep.mubr.f32.mxu0 0.0
        %1667 = vmatmul.mubr.f32.gmra.mxu0 %v1597
        %v1668 = vpop.f32.mrf.mxu0
        %v1669 = vadd.f32 0.0, %v1668
        %v1670 = vpop.f32.mrf.mxu0
        %v1671 = vadd.f32 0.0, %v1670
        %1672 = vmatprep.mubr.f32.mxu0 0.0
        %1673 = vmatmul.mubr.f32.gmra.mxu0 %v1600
        %v1674 = vpop.f32.mrf.mxu0
        %v1675 = vadd.f32 0.0, %v1674
        %v1676 = vpop.f32.mrf.mxu0
        %v1677 = vadd.f32 0.0, %v1676
        %1678 = vdwg.mxu0
        %v1679 = vadd.f32 %v1589, %v1669
        %v1680 = vadd.f32 %v1590, %v1671
        %v1681 = vadd.f32 %v1591, %v1675
        %v1682 = vadd.f32 %v1592, %v1677
        %v1683 = vld [vmem:[%s1593 + $0x1] sm:$0xff]
        %v1684 = vld [vmem:[%s1593 + $0x9] sm:$0xff]
        %v1686 = vsel %vm267, %v1683, 0
        %v1689 = vsel %vm267, %v1684, 0
        %1691 = vmatprep.subr.mxu0 0.0
        %1692 = vmatpush1.msra.mxu0 0.0
        %1693 = vmatprep.subr.mxu0 0.0
        %1694 = vmatpush1.msra.mxu0 0.0
        %1695 = vmatprep.subr.mxu0 0.0
        %1696 = vmatpush1.msra.mxu0 0.0
        %1697 = vmatprep.subr.mxu0 0.0
        %1698 = vmatpush1.msra.mxu0 0.0
        %1699 = vmatprep.subr.mxu0 0.0
        %1700 = vmatpush1.msra.mxu0 0.0
        %1701 = vmatprep.subr.mxu0 0.0
        %1702 = vmatpush1.msra.mxu0 0.0
        %1703 = vmatprep.subr.mxu0 0.0
        %1704 = vmatpush1.msra.mxu0 0.0
        %1705 = vmatprep.subr.mxu0 0.0
        %1706 = vmatpush1.msra.mxu0 0.0
        %1707 = vmatprep.subr.mxu0 0.0
        %1708 = vmatpush1.msra.mxu0 0.0
        %1709 = vmatprep.subr.mxu0 0.0
        %1710 = vmatpush1.msra.mxu0 0.0
        %1711 = vmatprep.subr.mxu0 0.0
        %1712 = vmatpush1.msra.mxu0 0.0
        %1713 = vmatprep.subr.mxu0 0.0
        %1714 = vmatpush1.msra.mxu0 0.0
        %1715 = vmatprep.subr.mxu0 0.0
        %1716 = vmatpush1.msra.mxu0 0.0
        %1717 = vmatprep.subr.mxu0 0.0
        %1718 = vmatpush1.msra.mxu0 0.0
        %1719 = vmatprep.subr.mxu0 0.0
        %1720 = vmatpush1.msra.mxu0 0.0
        %1721 = vmatprep.subr.mxu0 %v900
        %1722 = vmatpush1.msra.mxu0 %v899
        %1723 = vmatprep.subr.mxu0 0.0
        %1724 = vmatpush2.msra.mxu0 0.0
        %1725 = vmatprep.subr.mxu0 0.0
        %1726 = vmatpush2.msra.mxu0 0.0
        %1727 = vmatprep.subr.mxu0 0.0
        %1728 = vmatpush2.msra.mxu0 0.0
        %1729 = vmatprep.subr.mxu0 0.0
        %1730 = vmatpush2.msra.mxu0 0.0
        %1731 = vmatprep.subr.mxu0 0.0
        %1732 = vmatpush2.msra.mxu0 0.0
        %1733 = vmatprep.subr.mxu0 0.0
        %1734 = vmatpush2.msra.mxu0 0.0
        %1735 = vmatprep.subr.mxu0 0.0
        %1736 = vmatpush2.msra.mxu0 0.0
        %1737 = vmatprep.subr.mxu0 0.0
        %1738 = vmatpush2.msra.mxu0 0.0
        %1739 = vmatprep.subr.mxu0 0.0
        %1740 = vmatpush2.msra.mxu0 0.0
        %1741 = vmatprep.subr.mxu0 0.0
        %1742 = vmatpush2.msra.mxu0 0.0
        %1743 = vmatprep.subr.mxu0 0.0
        %1744 = vmatpush2.msra.mxu0 0.0
        %1745 = vmatprep.subr.mxu0 0.0
        %1746 = vmatpush2.msra.mxu0 0.0
        %1747 = vmatprep.subr.mxu0 0.0
        %1748 = vmatpush2.msra.mxu0 0.0
        %1749 = vmatprep.subr.mxu0 0.0
        %1750 = vmatpush2.msra.mxu0 0.0
        %1751 = vmatprep.subr.mxu0 0.0
        %1752 = vmatpush2.msra.mxu0 0.0
        %1753 = vmatprep.subr.mxu0 0.0
        %1754 = vmatpush2.msra.mxu0 0.0
        %1755 = vmatprep.mubr.f32.mxu0 0.0
        %1756 = vmatmul.mubr.f32.gmra.mxu0 %v1686
        %v1757 = vpop.f32.mrf.mxu0
        %v1758 = vadd.f32 0.0, %v1757
        %v1759 = vpop.f32.mrf.mxu0
        %v1760 = vadd.f32 0.0, %v1759
        %1761 = vmatprep.mubr.f32.mxu0 0.0
        %1762 = vmatmul.mubr.f32.gmra.mxu0 %v1689
        %v1763 = vpop.f32.mrf.mxu0
        %v1764 = vadd.f32 0.0, %v1763
        %v1765 = vpop.f32.mrf.mxu0
        %v1766 = vadd.f32 0.0, %v1765
        %1767 = vdwg.mxu0
        %v1768 = vadd.f32 %v1679, %v1758
        %v1769 = vadd.f32 %v1680, %v1760
        %v1770 = vadd.f32 %v1681, %v1764
        %v1771 = vadd.f32 %v1682, %v1766
        %v1772 = vld [vmem:[%s1593 + $0x2] sm:$0xff]
        %v1773 = vld [vmem:[%s1593 + $0xa] sm:$0xff]
        %v1775 = vsel %vm267, %v1772, 0
        %v1778 = vsel %vm267, %v1773, 0
        %1780 = vmatprep.subr.mxu0 0.0
        %1781 = vmatpush1.msra.mxu0 0.0
        %1782 = vmatprep.subr.mxu0 0.0
        %1783 = vmatpush1.msra.mxu0 0.0
        %1784 = vmatprep.subr.mxu0 0.0
        %1785 = vmatpush1.msra.mxu0 0.0
        %1786 = vmatprep.subr.mxu0 0.0
        %1787 = vmatpush1.msra.mxu0 0.0
        %1788 = vmatprep.subr.mxu0 0.0
        %1789 = vmatpush1.msra.mxu0 0.0
        %1790 = vmatprep.subr.mxu0 0.0
        %1791 = vmatpush1.msra.mxu0 0.0
        %1792 = vmatprep.subr.mxu0 0.0
        %1793 = vmatpush1.msra.mxu0 0.0
        %1794 = vmatprep.subr.mxu0 0.0
        %1795 = vmatpush1.msra.mxu0 0.0
        %1796 = vmatprep.subr.mxu0 0.0
        %1797 = vmatpush1.msra.mxu0 0.0
        %1798 = vmatprep.subr.mxu0 0.0
        %1799 = vmatpush1.msra.mxu0 0.0
        %1800 = vmatprep.subr.mxu0 0.0
        %1801 = vmatpush1.msra.mxu0 0.0
        %1802 = vmatprep.subr.mxu0 0.0
        %1803 = vmatpush1.msra.mxu0 0.0
        %1804 = vmatprep.subr.mxu0 0.0
        %1805 = vmatpush1.msra.mxu0 0.0
        %1806 = vmatprep.subr.mxu0 0.0
        %1807 = vmatpush1.msra.mxu0 0.0
        %1808 = vmatprep.subr.mxu0 0.0
        %1809 = vmatpush1.msra.mxu0 0.0
        %1810 = vmatprep.subr.mxu0 %v992
        %1811 = vmatpush1.msra.mxu0 %v991
        %1812 = vmatprep.subr.mxu0 0.0
        %1813 = vmatpush2.msra.mxu0 0.0
        %1814 = vmatprep.subr.mxu0 0.0
        %1815 = vmatpush2.msra.mxu0 0.0
        %1816 = vmatprep.subr.mxu0 0.0
        %1817 = vmatpush2.msra.mxu0 0.0
        %1818 = vmatprep.subr.mxu0 0.0
        %1819 = vmatpush2.msra.mxu0 0.0
        %1820 = vmatprep.subr.mxu0 0.0
        %1821 = vmatpush2.msra.mxu0 0.0
        %1822 = vmatprep.subr.mxu0 0.0
        %1823 = vmatpush2.msra.mxu0 0.0
        %1824 = vmatprep.subr.mxu0 0.0
        %1825 = vmatpush2.msra.mxu0 0.0
        %1826 = vmatprep.subr.mxu0 0.0
        %1827 = vmatpush2.msra.mxu0 0.0
        %1828 = vmatprep.subr.mxu0 0.0
        %1829 = vmatpush2.msra.mxu0 0.0
        %1830 = vmatprep.subr.mxu0 0.0
        %1831 = vmatpush2.msra.mxu0 0.0
        %1832 = vmatprep.subr.mxu0 0.0
        %1833 = vmatpush2.msra.mxu0 0.0
        %1834 = vmatprep.subr.mxu0 0.0
        %1835 = vmatpush2.msra.mxu0 0.0
        %1836 = vmatprep.subr.mxu0 0.0
        %1837 = vmatpush2.msra.mxu0 0.0
        %1838 = vmatprep.subr.mxu0 0.0
        %1839 = vmatpush2.msra.mxu0 0.0
        %1840 = vmatprep.subr.mxu0 0.0
        %1841 = vmatpush2.msra.mxu0 0.0
        %1842 = vmatprep.subr.mxu0 0.0
        %1843 = vmatpush2.msra.mxu0 0.0
        %1844 = vmatprep.mubr.f32.mxu0 0.0
        %1845 = vmatmul.mubr.f32.gmra.mxu0 %v1775
        %v1846 = vpop.f32.mrf.mxu0
        %v1847 = vadd.f32 0.0, %v1846
        %v1848 = vpop.f32.mrf.mxu0
        %v1849 = vadd.f32 0.0, %v1848
        %1850 = vmatprep.mubr.f32.mxu0 0.0
        %1851 = vmatmul.mubr.f32.gmra.mxu0 %v1778
        %v1852 = vpop.f32.mrf.mxu0
        %v1853 = vadd.f32 0.0, %v1852
        %v1854 = vpop.f32.mrf.mxu0
        %v1855 = vadd.f32 0.0, %v1854
        %1856 = vdwg.mxu0
        %v1857 = vadd.f32 %v1768, %v1847
        %v1858 = vadd.f32 %v1769, %v1849
        %v1859 = vadd.f32 %v1770, %v1853
        %v1860 = vadd.f32 %v1771, %v1855
        %v1861 = vadd.f32 %v1857, %v1084
        %v1862 = vadd.f32 %v1858, %v1088
        %v1863 = vadd.f32 %v1859, %v1084
        %v1864 = vadd.f32 %v1860, %v1088
        %v1865 = vmax.f32 %v1861, 0.0
        %v1866 = vmax.f32 %v1862, 0.0
        %v1867 = vmax.f32 %v1863, 0.0
        %v1868 = vmax.f32 %v1864, 0.0
        %v1869 = vadd.f32 %v1865, %v1867
        %v1870 = vrot.slane %v1869, 4
        %v1871 = vadd.f32 %v1869, %v1870
        %v1872 = vrot.slane %v1871, 2
        %v1873 = vadd.f32 %v1871, %v1872
        %v1874 = vrot.slane %v1873, 1
        %v1875 = vadd.f32 %v1873, %v1874
        %v1876 = vadd.f32 %v1866, %v1868
        %v1877 = vrot.slane %v1876, 4
        %v1878 = vadd.f32 %v1876, %v1877
        %v1879 = vrot.slane %v1878, 2
        %v1880 = vadd.f32 %v1878, %v1879
        %v1881 = vrot.slane %v1880, 1
        %v1882 = vadd.f32 %v1880, %v1881
        %v1883 = vadd.f32 %v1113, %v1875
        %v1884 = vadd.f32 %v1114, %v1882
        %1885 = vmatprep.subr.mxu0 0.0
        %1886 = vmatpush1.msra.mxu0 0.0
        %1887 = vmatprep.subr.mxu0 0.0
        %1888 = vmatpush1.msra.mxu0 0.0
        %1889 = vmatprep.subr.mxu0 0.0
        %1890 = vmatpush1.msra.mxu0 0.0
        %1891 = vmatprep.subr.mxu0 0.0
        %1892 = vmatpush1.msra.mxu0 0.0
        %1893 = vmatprep.subr.mxu0 0.0
        %1894 = vmatpush1.msra.mxu0 0.0
        %1895 = vmatprep.subr.mxu0 0.0
        %1896 = vmatpush1.msra.mxu0 0.0
        %1897 = vmatprep.subr.mxu0 0.0
        %1898 = vmatpush1.msra.mxu0 0.0
        %1899 = vmatprep.subr.mxu0 0.0
        %1900 = vmatpush1.msra.mxu0 0.0
        %1901 = vmatprep.subr.mxu0 0.0
        %1902 = vmatpush1.msra.mxu0 0.0
        %1903 = vmatprep.subr.mxu0 0.0
        %1904 = vmatpush1.msra.mxu0 0.0
        %1905 = vmatprep.subr.mxu0 0.0
        %1906 = vmatpush1.msra.mxu0 0.0
        %1907 = vmatprep.subr.mxu0 0.0
        %1908 = vmatpush1.msra.mxu0 0.0
        %1909 = vmatprep.subr.mxu0 0.0
        %1910 = vmatpush1.msra.mxu0 0.0
        %1911 = vmatprep.subr.mxu0 0.0
        %1912 = vmatpush1.msra.mxu0 0.0
        %1913 = vmatprep.subr.mxu0 0.0
        %1914 = vmatpush1.msra.mxu0 0.0
        %1915 = vmatprep.subr.mxu0 %v266
        %1916 = vmatpush1.msra.mxu0 %v265
        %1917 = vmatprep.subr.mxu0 0.0
        %1918 = vmatpush2.msra.mxu0 0.0
        %1919 = vmatprep.subr.mxu0 0.0
        %1920 = vmatpush2.msra.mxu0 0.0
        %1921 = vmatprep.subr.mxu0 0.0
        %1922 = vmatpush2.msra.mxu0 0.0
        %1923 = vmatprep.subr.mxu0 0.0
        %1924 = vmatpush2.msra.mxu0 0.0
        %1925 = vmatprep.subr.mxu0 0.0
        %1926 = vmatpush2.msra.mxu0 0.0
        %1927 = vmatprep.subr.mxu0 0.0
        %1928 = vmatpush2.msra.mxu0 0.0
        %1929 = vmatprep.subr.mxu0 0.0
        %1930 = vmatpush2.msra.mxu0 0.0
        %1931 = vmatprep.subr.mxu0 0.0
        %1932 = vmatpush2.msra.mxu0 0.0
        %1933 = vmatprep.subr.mxu0 0.0
        %1934 = vmatpush2.msra.mxu0 0.0
        %1935 = vmatprep.subr.mxu0 0.0
        %1936 = vmatpush2.msra.mxu0 0.0
        %1937 = vmatprep.subr.mxu0 0.0
        %1938 = vmatpush2.msra.mxu0 0.0
        %1939 = vmatprep.subr.mxu0 0.0
        %1940 = vmatpush2.msra.mxu0 0.0
        %1941 = vmatprep.subr.mxu0 0.0
        %1942 = vmatpush2.msra.mxu0 0.0
        %1943 = vmatprep.subr.mxu0 0.0
        %1944 = vmatpush2.msra.mxu0 0.0
        %1945 = vmatprep.subr.mxu0 0.0
        %1946 = vmatpush2.msra.mxu0 0.0
        %1947 = vmatprep.subr.mxu0 0.0
        %1948 = vmatpush2.msra.mxu0 0.0
        %1949 = vmatprep.mubr.f32.mxu0 0.0
        %1950 = vmatmul.mubr.f32.gmra.mxu0 %v902
        %v1951 = vpop.f32.mrf.mxu0
        %v1952 = vadd.f32 0.0, %v1951
        %v1953 = vpop.f32.mrf.mxu0
        %v1954 = vadd.f32 0.0, %v1953
        %1955 = vmatprep.mubr.f32.mxu0 0.0
        %1956 = vmatmul.mubr.f32.gmra.mxu0 %v905
        %v1957 = vpop.f32.mrf.mxu0
        %v1958 = vadd.f32 0.0, %v1957
        %v1959 = vpop.f32.mrf.mxu0
        %v1960 = vadd.f32 0.0, %v1959
        %1961 = vdwg.mxu0
        %1962 = vmatprep.subr.mxu0 0.0
        %1963 = vmatpush1.msra.mxu0 0.0
        %1964 = vmatprep.subr.mxu0 0.0
        %1965 = vmatpush1.msra.mxu0 0.0
        %1966 = vmatprep.subr.mxu0 0.0
        %1967 = vmatpush1.msra.mxu0 0.0
        %1968 = vmatprep.subr.mxu0 0.0
        %1969 = vmatpush1.msra.mxu0 0.0
        %1970 = vmatprep.subr.mxu0 0.0
        %1971 = vmatpush1.msra.mxu0 0.0
        %1972 = vmatprep.subr.mxu0 0.0
        %1973 = vmatpush1.msra.mxu0 0.0
        %1974 = vmatprep.subr.mxu0 0.0
        %1975 = vmatpush1.msra.mxu0 0.0
        %1976 = vmatprep.subr.mxu0 0.0
        %1977 = vmatpush1.msra.mxu0 0.0
        %1978 = vmatprep.subr.mxu0 0.0
        %1979 = vmatpush1.msra.mxu0 0.0
        %1980 = vmatprep.subr.mxu0 0.0
        %1981 = vmatpush1.msra.mxu0 0.0
        %1982 = vmatprep.subr.mxu0 0.0
        %1983 = vmatpush1.msra.mxu0 0.0
        %1984 = vmatprep.subr.mxu0 0.0
        %1985 = vmatpush1.msra.mxu0 0.0
        %1986 = vmatprep.subr.mxu0 0.0
        %1987 = vmatpush1.msra.mxu0 0.0
        %1988 = vmatprep.subr.mxu0 0.0
        %1989 = vmatpush1.msra.mxu0 0.0
        %1990 = vmatprep.subr.mxu0 0.0
        %1991 = vmatpush1.msra.mxu0 0.0
        %1992 = vmatprep.subr.mxu0 %v261
        %1993 = vmatpush1.msra.mxu0 %v260
        %1994 = vmatprep.subr.mxu0 0.0
        %1995 = vmatpush2.msra.mxu0 0.0
        %1996 = vmatprep.subr.mxu0 0.0
        %1997 = vmatpush2.msra.mxu0 0.0
        %1998 = vmatprep.subr.mxu0 0.0
        %1999 = vmatpush2.msra.mxu0 0.0
        %2000 = vmatprep.subr.mxu0 0.0
        %2001 = vmatpush2.msra.mxu0 0.0
        %2002 = vmatprep.subr.mxu0 0.0
        %2003 = vmatpush2.msra.mxu0 0.0
        %2004 = vmatprep.subr.mxu0 0.0
        %2005 = vmatpush2.msra.mxu0 0.0
        %2006 = vmatprep.subr.mxu0 0.0
        %2007 = vmatpush2.msra.mxu0 0.0
        %2008 = vmatprep.subr.mxu0 0.0
        %2009 = vmatpush2.msra.mxu0 0.0
        %2010 = vmatprep.subr.mxu0 0.0
        %2011 = vmatpush2.msra.mxu0 0.0
        %2012 = vmatprep.subr.mxu0 0.0
        %2013 = vmatpush2.msra.mxu0 0.0
        %2014 = vmatprep.subr.mxu0 0.0
        %2015 = vmatpush2.msra.mxu0 0.0
        %2016 = vmatprep.subr.mxu0 0.0
        %2017 = vmatpush2.msra.mxu0 0.0
        %2018 = vmatprep.subr.mxu0 0.0
        %2019 = vmatpush2.msra.mxu0 0.0
        %2020 = vmatprep.subr.mxu0 0.0
        %2021 = vmatpush2.msra.mxu0 0.0
        %2022 = vmatprep.subr.mxu0 0.0
        %2023 = vmatpush2.msra.mxu0 0.0
        %2024 = vmatprep.subr.mxu0 0.0
        %2025 = vmatpush2.msra.mxu0 0.0
        %2026 = vmatprep.mubr.f32.mxu0 0.0
        %2027 = vmatmul.mubr.f32.gmra.mxu0 %v810
        %v2028 = vpop.f32.mrf.mxu0
        %v2029 = vadd.f32 %v1952, %v2028
        %v2030 = vpop.f32.mrf.mxu0
        %v2031 = vadd.f32 %v1954, %v2030
        %2032 = vmatprep.mubr.f32.mxu0 0.0
        %2033 = vmatmul.mubr.f32.gmra.mxu0 %v813
        %v2034 = vpop.f32.mrf.mxu0
        %v2035 = vadd.f32 %v1958, %v2034
        %v2036 = vpop.f32.mrf.mxu0
        %v2037 = vadd.f32 %v1960, %v2036
        %2038 = vdwg.mxu0
        %2039 = vmatprep.subr.mxu0 0.0
        %2040 = vmatpush1.msra.mxu0 0.0
        %2041 = vmatprep.subr.mxu0 0.0
        %2042 = vmatpush1.msra.mxu0 0.0
        %2043 = vmatprep.subr.mxu0 0.0
        %2044 = vmatpush1.msra.mxu0 0.0
        %2045 = vmatprep.subr.mxu0 0.0
        %2046 = vmatpush1.msra.mxu0 0.0
        %2047 = vmatprep.subr.mxu0 0.0
        %2048 = vmatpush1.msra.mxu0 0.0
        %2049 = vmatprep.subr.mxu0 0.0
        %2050 = vmatpush1.msra.mxu0 0.0
        %2051 = vmatprep.subr.mxu0 0.0
        %2052 = vmatpush1.msra.mxu0 0.0
        %2053 = vmatprep.subr.mxu0 0.0
        %2054 = vmatpush1.msra.mxu0 0.0
        %2055 = vmatprep.subr.mxu0 0.0
        %2056 = vmatpush1.msra.mxu0 0.0
        %2057 = vmatprep.subr.mxu0 0.0
        %2058 = vmatpush1.msra.mxu0 0.0
        %2059 = vmatprep.subr.mxu0 0.0
        %2060 = vmatpush1.msra.mxu0 0.0
        %2061 = vmatprep.subr.mxu0 0.0
        %2062 = vmatpush1.msra.mxu0 0.0
        %2063 = vmatprep.subr.mxu0 0.0
        %2064 = vmatpush1.msra.mxu0 0.0
        %2065 = vmatprep.subr.mxu0 0.0
        %2066 = vmatpush1.msra.mxu0 0.0
        %2067 = vmatprep.subr.mxu0 0.0
        %2068 = vmatpush1.msra.mxu0 0.0
        %2069 = vmatprep.subr.mxu0 %v438
        %2070 = vmatpush1.msra.mxu0 %v437
        %2071 = vmatprep.subr.mxu0 0.0
        %2072 = vmatpush2.msra.mxu0 0.0
        %2073 = vmatprep.subr.mxu0 0.0
        %2074 = vmatpush2.msra.mxu0 0.0
        %2075 = vmatprep.subr.mxu0 0.0
        %2076 = vmatpush2.msra.mxu0 0.0
        %2077 = vmatprep.subr.mxu0 0.0
        %2078 = vmatpush2.msra.mxu0 0.0
        %2079 = vmatprep.subr.mxu0 0.0
        %2080 = vmatpush2.msra.mxu0 0.0
        %2081 = vmatprep.subr.mxu0 0.0
        %2082 = vmatpush2.msra.mxu0 0.0
        %2083 = vmatprep.subr.mxu0 0.0
        %2084 = vmatpush2.msra.mxu0 0.0
        %2085 = vmatprep.subr.mxu0 0.0
        %2086 = vmatpush2.msra.mxu0 0.0
        %2087 = vmatprep.subr.mxu0 0.0
        %2088 = vmatpush2.msra.mxu0 0.0
        %2089 = vmatprep.subr.mxu0 0.0
        %2090 = vmatpush2.msra.mxu0 0.0
        %2091 = vmatprep.subr.mxu0 0.0
        %2092 = vmatpush2.msra.mxu0 0.0
        %2093 = vmatprep.subr.mxu0 0.0
        %2094 = vmatpush2.msra.mxu0 0.0
        %2095 = vmatprep.subr.mxu0 0.0
        %2096 = vmatpush2.msra.mxu0 0.0
        %2097 = vmatprep.subr.mxu0 0.0
        %2098 = vmatpush2.msra.mxu0 0.0
        %2099 = vmatprep.subr.mxu0 0.0
        %2100 = vmatpush2.msra.mxu0 0.0
        %2101 = vmatprep.subr.mxu0 0.0
        %2102 = vmatpush2.msra.mxu0 0.0
        %2103 = vmatprep.mubr.f32.mxu0 0.0
        %2104 = vmatmul.mubr.f32.gmra.mxu0 %v994
        %v2105 = vpop.f32.mrf.mxu0
        %v2106 = vadd.f32 0.0, %v2105
        %v2107 = vpop.f32.mrf.mxu0
        %v2108 = vadd.f32 0.0, %v2107
        %2109 = vmatprep.mubr.f32.mxu0 0.0
        %2110 = vmatmul.mubr.f32.gmra.mxu0 %v997
        %v2111 = vpop.f32.mrf.mxu0
        %v2112 = vadd.f32 0.0, %v2111
        %v2113 = vpop.f32.mrf.mxu0
        %v2114 = vadd.f32 0.0, %v2113
        %2115 = vdwg.mxu0
        %v2116 = vadd.f32 %v2029, %v2106
        %v2117 = vadd.f32 %v2031, %v2108
        %v2118 = vadd.f32 %v2035, %v2112
        %v2119 = vadd.f32 %v2037, %v2114
        %2120 = vmatprep.subr.mxu0 0.0
        %2121 = vmatpush1.msra.mxu0 0.0
        %2122 = vmatprep.subr.mxu0 0.0
        %2123 = vmatpush1.msra.mxu0 0.0
        %2124 = vmatprep.subr.mxu0 0.0
        %2125 = vmatpush1.msra.mxu0 0.0
        %2126 = vmatprep.subr.mxu0 0.0
        %2127 = vmatpush1.msra.mxu0 0.0
        %2128 = vmatprep.subr.mxu0 0.0
        %2129 = vmatpush1.msra.mxu0 0.0
        %2130 = vmatprep.subr.mxu0 0.0
        %2131 = vmatpush1.msra.mxu0 0.0
        %2132 = vmatprep.subr.mxu0 0.0
        %2133 = vmatpush1.msra.mxu0 0.0
        %2134 = vmatprep.subr.mxu0 0.0
        %2135 = vmatpush1.msra.mxu0 0.0
        %2136 = vmatprep.subr.mxu0 0.0
        %2137 = vmatpush1.msra.mxu0 0.0
        %2138 = vmatprep.subr.mxu0 0.0
        %2139 = vmatpush1.msra.mxu0 0.0
        %2140 = vmatprep.subr.mxu0 0.0
        %2141 = vmatpush1.msra.mxu0 0.0
        %2142 = vmatprep.subr.mxu0 0.0
        %2143 = vmatpush1.msra.mxu0 0.0
        %2144 = vmatprep.subr.mxu0 0.0
        %2145 = vmatpush1.msra.mxu0 0.0
        %2146 = vmatprep.subr.mxu0 0.0
        %2147 = vmatpush1.msra.mxu0 0.0
        %2148 = vmatprep.subr.mxu0 0.0
        %2149 = vmatpush1.msra.mxu0 0.0
        %2150 = vmatprep.subr.mxu0 %v531
        %2151 = vmatpush1.msra.mxu0 %v530
        %2152 = vmatprep.subr.mxu0 0.0
        %2153 = vmatpush2.msra.mxu0 0.0
        %2154 = vmatprep.subr.mxu0 0.0
        %2155 = vmatpush2.msra.mxu0 0.0
        %2156 = vmatprep.subr.mxu0 0.0
        %2157 = vmatpush2.msra.mxu0 0.0
        %2158 = vmatprep.subr.mxu0 0.0
        %2159 = vmatpush2.msra.mxu0 0.0
        %2160 = vmatprep.subr.mxu0 0.0
        %2161 = vmatpush2.msra.mxu0 0.0
        %2162 = vmatprep.subr.mxu0 0.0
        %2163 = vmatpush2.msra.mxu0 0.0
        %2164 = vmatprep.subr.mxu0 0.0
        %2165 = vmatpush2.msra.mxu0 0.0
        %2166 = vmatprep.subr.mxu0 0.0
        %2167 = vmatpush2.msra.mxu0 0.0
        %2168 = vmatprep.subr.mxu0 0.0
        %2169 = vmatpush2.msra.mxu0 0.0
        %2170 = vmatprep.subr.mxu0 0.0
        %2171 = vmatpush2.msra.mxu0 0.0
        %2172 = vmatprep.subr.mxu0 0.0
        %2173 = vmatpush2.msra.mxu0 0.0
        %2174 = vmatprep.subr.mxu0 0.0
        %2175 = vmatpush2.msra.mxu0 0.0
        %2176 = vmatprep.subr.mxu0 0.0
        %2177 = vmatpush2.msra.mxu0 0.0
        %2178 = vmatprep.subr.mxu0 0.0
        %2179 = vmatpush2.msra.mxu0 0.0
        %2180 = vmatprep.subr.mxu0 0.0
        %2181 = vmatpush2.msra.mxu0 0.0
        %2182 = vmatprep.subr.mxu0 0.0
        %2183 = vmatpush2.msra.mxu0 0.0
        %2184 = vmatprep.mubr.f32.mxu0 0.0
        %2185 = vmatmul.mubr.f32.gmra.mxu0 %v1597
        %v2186 = vpop.f32.mrf.mxu0
        %v2187 = vadd.f32 0.0, %v2186
        %v2188 = vpop.f32.mrf.mxu0
        %v2189 = vadd.f32 0.0, %v2188
        %2190 = vmatprep.mubr.f32.mxu0 0.0
        %2191 = vmatmul.mubr.f32.gmra.mxu0 %v1600
        %v2192 = vpop.f32.mrf.mxu0
        %v2193 = vadd.f32 0.0, %v2192
        %v2194 = vpop.f32.mrf.mxu0
        %v2195 = vadd.f32 0.0, %v2194
        %2196 = vdwg.mxu0
        %v2197 = vadd.f32 %v2116, %v2187
        %v2198 = vadd.f32 %v2117, %v2189
        %v2199 = vadd.f32 %v2118, %v2193
        %v2200 = vadd.f32 %v2119, %v2195
        %2201 = vmatprep.subr.mxu0 0.0
        %2202 = vmatpush1.msra.mxu0 0.0
        %2203 = vmatprep.subr.mxu0 0.0
        %2204 = vmatpush1.msra.mxu0 0.0
        %2205 = vmatprep.subr.mxu0 0.0
        %2206 = vmatpush1.msra.mxu0 0.0
        %2207 = vmatprep.subr.mxu0 0.0
        %2208 = vmatpush1.msra.mxu0 0.0
        %2209 = vmatprep.subr.mxu0 0.0
        %2210 = vmatpush1.msra.mxu0 0.0
        %2211 = vmatprep.subr.mxu0 0.0
        %2212 = vmatpush1.msra.mxu0 0.0
        %2213 = vmatprep.subr.mxu0 0.0
        %2214 = vmatpush1.msra.mxu0 0.0
        %2215 = vmatprep.subr.mxu0 0.0
        %2216 = vmatpush1.msra.mxu0 0.0
        %2217 = vmatprep.subr.mxu0 0.0
        %2218 = vmatpush1.msra.mxu0 0.0
        %2219 = vmatprep.subr.mxu0 0.0
        %2220 = vmatpush1.msra.mxu0 0.0
        %2221 = vmatprep.subr.mxu0 0.0
        %2222 = vmatpush1.msra.mxu0 0.0
        %2223 = vmatprep.subr.mxu0 0.0
        %2224 = vmatpush1.msra.mxu0 0.0
        %2225 = vmatprep.subr.mxu0 0.0
        %2226 = vmatpush1.msra.mxu0 0.0
        %2227 = vmatprep.subr.mxu0 0.0
        %2228 = vmatpush1.msra.mxu0 0.0
        %2229 = vmatprep.subr.mxu0 0.0
        %2230 = vmatpush1.msra.mxu0 0.0
        %2231 = vmatprep.subr.mxu0 %v623
        %2232 = vmatpush1.msra.mxu0 %v622
        %2233 = vmatprep.subr.mxu0 0.0
        %2234 = vmatpush2.msra.mxu0 0.0
        %2235 = vmatprep.subr.mxu0 0.0
        %2236 = vmatpush2.msra.mxu0 0.0
        %2237 = vmatprep.subr.mxu0 0.0
        %2238 = vmatpush2.msra.mxu0 0.0
        %2239 = vmatprep.subr.mxu0 0.0
        %2240 = vmatpush2.msra.mxu0 0.0
        %2241 = vmatprep.subr.mxu0 0.0
        %2242 = vmatpush2.msra.mxu0 0.0
        %2243 = vmatprep.subr.mxu0 0.0
        %2244 = vmatpush2.msra.mxu0 0.0
        %2245 = vmatprep.subr.mxu0 0.0
        %2246 = vmatpush2.msra.mxu0 0.0
        %2247 = vmatprep.subr.mxu0 0.0
        %2248 = vmatpush2.msra.mxu0 0.0
        %2249 = vmatprep.subr.mxu0 0.0
        %2250 = vmatpush2.msra.mxu0 0.0
        %2251 = vmatprep.subr.mxu0 0.0
        %2252 = vmatpush2.msra.mxu0 0.0
        %2253 = vmatprep.subr.mxu0 0.0
        %2254 = vmatpush2.msra.mxu0 0.0
        %2255 = vmatprep.subr.mxu0 0.0
        %2256 = vmatpush2.msra.mxu0 0.0
        %2257 = vmatprep.subr.mxu0 0.0
        %2258 = vmatpush2.msra.mxu0 0.0
        %2259 = vmatprep.subr.mxu0 0.0
        %2260 = vmatpush2.msra.mxu0 0.0
        %2261 = vmatprep.subr.mxu0 0.0
        %2262 = vmatpush2.msra.mxu0 0.0
        %2263 = vmatprep.subr.mxu0 0.0
        %2264 = vmatpush2.msra.mxu0 0.0
        %2265 = vmatprep.mubr.f32.mxu0 0.0
        %2266 = vmatmul.mubr.f32.gmra.mxu0 %v1686
        %v2267 = vpop.f32.mrf.mxu0
        %v2268 = vadd.f32 0.0, %v2267
        %v2269 = vpop.f32.mrf.mxu0
        %v2270 = vadd.f32 0.0, %v2269
        %2271 = vmatprep.mubr.f32.mxu0 0.0
        %2272 = vmatmul.mubr.f32.gmra.mxu0 %v1689
        %v2273 = vpop.f32.mrf.mxu0
        %v2274 = vadd.f32 0.0, %v2273
        %v2275 = vpop.f32.mrf.mxu0
        %v2276 = vadd.f32 0.0, %v2275
        %2277 = vdwg.mxu0
        %v2278 = vadd.f32 %v2197, %v2268
        %v2279 = vadd.f32 %v2198, %v2270
        %v2280 = vadd.f32 %v2199, %v2274
        %v2281 = vadd.f32 %v2200, %v2276
        %2282 = vmatprep.subr.mxu0 0.0
        %2283 = vmatpush1.msra.mxu0 0.0
        %2284 = vmatprep.subr.mxu0 0.0
        %2285 = vmatpush1.msra.mxu0 0.0
        %2286 = vmatprep.subr.mxu0 0.0
        %2287 = vmatpush1.msra.mxu0 0.0
        %2288 = vmatprep.subr.mxu0 0.0
        %2289 = vmatpush1.msra.mxu0 0.0
        %2290 = vmatprep.subr.mxu0 0.0
        %2291 = vmatpush1.msra.mxu0 0.0
        %2292 = vmatprep.subr.mxu0 0.0
        %2293 = vmatpush1.msra.mxu0 0.0
        %2294 = vmatprep.subr.mxu0 0.0
        %2295 = vmatpush1.msra.mxu0 0.0
        %2296 = vmatprep.subr.mxu0 0.0
        %2297 = vmatpush1.msra.mxu0 0.0
        %2298 = vmatprep.subr.mxu0 0.0
        %2299 = vmatpush1.msra.mxu0 0.0
        %2300 = vmatprep.subr.mxu0 0.0
        %2301 = vmatpush1.msra.mxu0 0.0
        %2302 = vmatprep.subr.mxu0 0.0
        %2303 = vmatpush1.msra.mxu0 0.0
        %2304 = vmatprep.subr.mxu0 0.0
        %2305 = vmatpush1.msra.mxu0 0.0
        %2306 = vmatprep.subr.mxu0 0.0
        %2307 = vmatpush1.msra.mxu0 0.0
        %2308 = vmatprep.subr.mxu0 0.0
        %2309 = vmatpush1.msra.mxu0 0.0
        %2310 = vmatprep.subr.mxu0 0.0
        %2311 = vmatpush1.msra.mxu0 0.0
        %2312 = vmatprep.subr.mxu0 %v715
        %2313 = vmatpush1.msra.mxu0 %v714
        %2314 = vmatprep.subr.mxu0 0.0
        %2315 = vmatpush2.msra.mxu0 0.0
        %2316 = vmatprep.subr.mxu0 0.0
        %2317 = vmatpush2.msra.mxu0 0.0
        %2318 = vmatprep.subr.mxu0 0.0
        %2319 = vmatpush2.msra.mxu0 0.0
        %2320 = vmatprep.subr.mxu0 0.0
        %2321 = vmatpush2.msra.mxu0 0.0
        %2322 = vmatprep.subr.mxu0 0.0
        %2323 = vmatpush2.msra.mxu0 0.0
        %2324 = vmatprep.subr.mxu0 0.0
        %2325 = vmatpush2.msra.mxu0 0.0
        %2326 = vmatprep.subr.mxu0 0.0
        %2327 = vmatpush2.msra.mxu0 0.0
        %2328 = vmatprep.subr.mxu0 0.0
        %2329 = vmatpush2.msra.mxu0 0.0
        %2330 = vmatprep.subr.mxu0 0.0
        %2331 = vmatpush2.msra.mxu0 0.0
        %2332 = vmatprep.subr.mxu0 0.0
        %2333 = vmatpush2.msra.mxu0 0.0
        %2334 = vmatprep.subr.mxu0 0.0
        %2335 = vmatpush2.msra.mxu0 0.0
        %2336 = vmatprep.subr.mxu0 0.0
        %2337 = vmatpush2.msra.mxu0 0.0
        %2338 = vmatprep.subr.mxu0 0.0
        %2339 = vmatpush2.msra.mxu0 0.0
        %2340 = vmatprep.subr.mxu0 0.0
        %2341 = vmatpush2.msra.mxu0 0.0
        %2342 = vmatprep.subr.mxu0 0.0
        %2343 = vmatpush2.msra.mxu0 0.0
        %2344 = vmatprep.subr.mxu0 0.0
        %2345 = vmatpush2.msra.mxu0 0.0
        %2346 = vmatprep.mubr.f32.mxu0 0.0
        %2347 = vmatmul.mubr.f32.gmra.mxu0 %v1775
        %v2348 = vpop.f32.mrf.mxu0
        %v2349 = vadd.f32 0.0, %v2348
        %v2350 = vpop.f32.mrf.mxu0
        %v2351 = vadd.f32 0.0, %v2350
        %2352 = vmatprep.mubr.f32.mxu0 0.0
        %2353 = vmatmul.mubr.f32.gmra.mxu0 %v1778
        %v2354 = vpop.f32.mrf.mxu0
        %v2355 = vadd.f32 0.0, %v2354
        %v2356 = vpop.f32.mrf.mxu0
        %v2357 = vadd.f32 0.0, %v2356
        %2358 = vdwg.mxu0
        %v2359 = vadd.f32 %v2278, %v2349
        %v2360 = vadd.f32 %v2279, %v2351
        %v2361 = vadd.f32 %v2280, %v2355
        %v2362 = vadd.f32 %v2281, %v2357
        %s2363 = scalar_lea.vmem %s247, 96
        %v2364 = vld [vmem:[%s2363] sm:$0xff]
        %v2365 = vld [vmem:[%s2363 + $0x8] sm:$0xff]
        %v2367 = vsel %vm267, %v2364, 0
        %v2370 = vsel %vm267, %v2365, 0
        %2372 = vmatprep.subr.mxu0 0.0
        %2373 = vmatpush1.msra.mxu0 0.0
        %2374 = vmatprep.subr.mxu0 0.0
        %2375 = vmatpush1.msra.mxu0 0.0
        %2376 = vmatprep.subr.mxu0 0.0
        %2377 = vmatpush1.msra.mxu0 0.0
        %2378 = vmatprep.subr.mxu0 0.0
        %2379 = vmatpush1.msra.mxu0 0.0
        %2380 = vmatprep.subr.mxu0 0.0
        %2381 = vmatpush1.msra.mxu0 0.0
        %2382 = vmatprep.subr.mxu0 0.0
        %2383 = vmatpush1.msra.mxu0 0.0
        %2384 = vmatprep.subr.mxu0 0.0
        %2385 = vmatpush1.msra.mxu0 0.0
        %2386 = vmatprep.subr.mxu0 0.0
        %2387 = vmatpush1.msra.mxu0 0.0
        %2388 = vmatprep.subr.mxu0 0.0
        %2389 = vmatpush1.msra.mxu0 0.0
        %2390 = vmatprep.subr.mxu0 0.0
        %2391 = vmatpush1.msra.mxu0 0.0
        %2392 = vmatprep.subr.mxu0 0.0
        %2393 = vmatpush1.msra.mxu0 0.0
        %2394 = vmatprep.subr.mxu0 0.0
        %2395 = vmatpush1.msra.mxu0 0.0
        %2396 = vmatprep.subr.mxu0 0.0
        %2397 = vmatpush1.msra.mxu0 0.0
        %2398 = vmatprep.subr.mxu0 0.0
        %2399 = vmatpush1.msra.mxu0 0.0
        %2400 = vmatprep.subr.mxu0 0.0
        %2401 = vmatpush1.msra.mxu0 0.0
        %2402 = vmatprep.subr.mxu0 %v808
        %2403 = vmatpush1.msra.mxu0 %v807
        %2404 = vmatprep.subr.mxu0 0.0
        %2405 = vmatpush2.msra.mxu0 0.0
        %2406 = vmatprep.subr.mxu0 0.0
        %2407 = vmatpush2.msra.mxu0 0.0
        %2408 = vmatprep.subr.mxu0 0.0
        %2409 = vmatpush2.msra.mxu0 0.0
        %2410 = vmatprep.subr.mxu0 0.0
        %2411 = vmatpush2.msra.mxu0 0.0
        %2412 = vmatprep.subr.mxu0 0.0
        %2413 = vmatpush2.msra.mxu0 0.0
        %2414 = vmatprep.subr.mxu0 0.0
        %2415 = vmatpush2.msra.mxu0 0.0
        %2416 = vmatprep.subr.mxu0 0.0
        %2417 = vmatpush2.msra.mxu0 0.0
        %2418 = vmatprep.subr.mxu0 0.0
        %2419 = vmatpush2.msra.mxu0 0.0
        %2420 = vmatprep.subr.mxu0 0.0
        %2421 = vmatpush2.msra.mxu0 0.0
        %2422 = vmatprep.subr.mxu0 0.0
        %2423 = vmatpush2.msra.mxu0 0.0
        %2424 = vmatprep.subr.mxu0 0.0
        %2425 = vmatpush2.msra.mxu0 0.0
        %2426 = vmatprep.subr.mxu0 0.0
        %2427 = vmatpush2.msra.mxu0 0.0
        %2428 = vmatprep.subr.mxu0 0.0
        %2429 = vmatpush2.msra.mxu0 0.0
        %2430 = vmatprep.subr.mxu0 0.0
        %2431 = vmatpush2.msra.mxu0 0.0
        %2432 = vmatprep.subr.mxu0 0.0
        %2433 = vmatpush2.msra.mxu0 0.0
        %2434 = vmatprep.subr.mxu0 0.0
        %2435 = vmatpush2.msra.mxu0 0.0
        %2436 = vmatprep.mubr.f32.mxu0 0.0
        %2437 = vmatmul.mubr.f32.gmra.mxu0 %v2367
        %v2438 = vpop.f32.mrf.mxu0
        %v2439 = vadd.f32 0.0, %v2438
        %v2440 = vpop.f32.mrf.mxu0
        %v2441 = vadd.f32 0.0, %v2440
        %2442 = vmatprep.mubr.f32.mxu0 0.0
        %2443 = vmatmul.mubr.f32.gmra.mxu0 %v2370
        %v2444 = vpop.f32.mrf.mxu0
        %v2445 = vadd.f32 0.0, %v2444
        %v2446 = vpop.f32.mrf.mxu0
        %v2447 = vadd.f32 0.0, %v2446
        %2448 = vdwg.mxu0
        %v2449 = vadd.f32 %v2359, %v2439
        %v2450 = vadd.f32 %v2360, %v2441
        %v2451 = vadd.f32 %v2361, %v2445
        %v2452 = vadd.f32 %v2362, %v2447
        %v2453 = vld [vmem:[%s2363 + $0x1] sm:$0xff]
        %v2454 = vld [vmem:[%s2363 + $0x9] sm:$0xff]
        %v2456 = vsel %vm267, %v2453, 0
        %v2459 = vsel %vm267, %v2454, 0
        %2461 = vmatprep.subr.mxu0 0.0
        %2462 = vmatpush1.msra.mxu0 0.0
        %2463 = vmatprep.subr.mxu0 0.0
        %2464 = vmatpush1.msra.mxu0 0.0
        %2465 = vmatprep.subr.mxu0 0.0
        %2466 = vmatpush1.msra.mxu0 0.0
        %2467 = vmatprep.subr.mxu0 0.0
        %2468 = vmatpush1.msra.mxu0 0.0
        %2469 = vmatprep.subr.mxu0 0.0
        %2470 = vmatpush1.msra.mxu0 0.0
        %2471 = vmatprep.subr.mxu0 0.0
        %2472 = vmatpush1.msra.mxu0 0.0
        %2473 = vmatprep.subr.mxu0 0.0
        %2474 = vmatpush1.msra.mxu0 0.0
        %2475 = vmatprep.subr.mxu0 0.0
        %2476 = vmatpush1.msra.mxu0 0.0
        %2477 = vmatprep.subr.mxu0 0.0
        %2478 = vmatpush1.msra.mxu0 0.0
        %2479 = vmatprep.subr.mxu0 0.0
        %2480 = vmatpush1.msra.mxu0 0.0
        %2481 = vmatprep.subr.mxu0 0.0
        %2482 = vmatpush1.msra.mxu0 0.0
        %2483 = vmatprep.subr.mxu0 0.0
        %2484 = vmatpush1.msra.mxu0 0.0
        %2485 = vmatprep.subr.mxu0 0.0
        %2486 = vmatpush1.msra.mxu0 0.0
        %2487 = vmatprep.subr.mxu0 0.0
        %2488 = vmatpush1.msra.mxu0 0.0
        %2489 = vmatprep.subr.mxu0 0.0
        %2490 = vmatpush1.msra.mxu0 0.0
        %2491 = vmatprep.subr.mxu0 %v900
        %2492 = vmatpush1.msra.mxu0 %v899
        %2493 = vmatprep.subr.mxu0 0.0
        %2494 = vmatpush2.msra.mxu0 0.0
        %2495 = vmatprep.subr.mxu0 0.0
        %2496 = vmatpush2.msra.mxu0 0.0
        %2497 = vmatprep.subr.mxu0 0.0
        %2498 = vmatpush2.msra.mxu0 0.0
        %2499 = vmatprep.subr.mxu0 0.0
        %2500 = vmatpush2.msra.mxu0 0.0
        %2501 = vmatprep.subr.mxu0 0.0
        %2502 = vmatpush2.msra.mxu0 0.0
        %2503 = vmatprep.subr.mxu0 0.0
        %2504 = vmatpush2.msra.mxu0 0.0
        %2505 = vmatprep.subr.mxu0 0.0
        %2506 = vmatpush2.msra.mxu0 0.0
        %2507 = vmatprep.subr.mxu0 0.0
        %2508 = vmatpush2.msra.mxu0 0.0
        %2509 = vmatprep.subr.mxu0 0.0
        %2510 = vmatpush2.msra.mxu0 0.0
        %2511 = vmatprep.subr.mxu0 0.0
        %2512 = vmatpush2.msra.mxu0 0.0
        %2513 = vmatprep.subr.mxu0 0.0
        %2514 = vmatpush2.msra.mxu0 0.0
        %2515 = vmatprep.subr.mxu0 0.0
        %2516 = vmatpush2.msra.mxu0 0.0
        %2517 = vmatprep.subr.mxu0 0.0
        %2518 = vmatpush2.msra.mxu0 0.0
        %2519 = vmatprep.subr.mxu0 0.0
        %2520 = vmatpush2.msra.mxu0 0.0
        %2521 = vmatprep.subr.mxu0 0.0
        %2522 = vmatpush2.msra.mxu0 0.0
        %2523 = vmatprep.subr.mxu0 0.0
        %2524 = vmatpush2.msra.mxu0 0.0
        %2525 = vmatprep.mubr.f32.mxu0 0.0
        %2526 = vmatmul.mubr.f32.gmra.mxu0 %v2456
        %v2527 = vpop.f32.mrf.mxu0
        %v2528 = vadd.f32 0.0, %v2527
        %v2529 = vpop.f32.mrf.mxu0
        %v2530 = vadd.f32 0.0, %v2529
        %2531 = vmatprep.mubr.f32.mxu0 0.0
        %2532 = vmatmul.mubr.f32.gmra.mxu0 %v2459
        %v2533 = vpop.f32.mrf.mxu0
        %v2534 = vadd.f32 0.0, %v2533
        %v2535 = vpop.f32.mrf.mxu0
        %v2536 = vadd.f32 0.0, %v2535
        %2537 = vdwg.mxu0
        %v2538 = vadd.f32 %v2449, %v2528
        %v2539 = vadd.f32 %v2450, %v2530
        %v2540 = vadd.f32 %v2451, %v2534
        %v2541 = vadd.f32 %v2452, %v2536
        %v2542 = vld [vmem:[%s2363 + $0x2] sm:$0xff]
        %v2543 = vld [vmem:[%s2363 + $0xa] sm:$0xff]
        %v2545 = vsel %vm267, %v2542, 0
        %v2548 = vsel %vm267, %v2543, 0
        %2550 = vmatprep.subr.mxu0 0.0
        %2551 = vmatpush1.msra.mxu0 0.0
        %2552 = vmatprep.subr.mxu0 0.0
        %2553 = vmatpush1.msra.mxu0 0.0
        %2554 = vmatprep.subr.mxu0 0.0
        %2555 = vmatpush1.msra.mxu0 0.0
        %2556 = vmatprep.subr.mxu0 0.0
        %2557 = vmatpush1.msra.mxu0 0.0
        %2558 = vmatprep.subr.mxu0 0.0
        %2559 = vmatpush1.msra.mxu0 0.0
        %2560 = vmatprep.subr.mxu0 0.0
        %2561 = vmatpush1.msra.mxu0 0.0
        %2562 = vmatprep.subr.mxu0 0.0
        %2563 = vmatpush1.msra.mxu0 0.0
        %2564 = vmatprep.subr.mxu0 0.0
        %2565 = vmatpush1.msra.mxu0 0.0
        %2566 = vmatprep.subr.mxu0 0.0
        %2567 = vmatpush1.msra.mxu0 0.0
        %2568 = vmatprep.subr.mxu0 0.0
        %2569 = vmatpush1.msra.mxu0 0.0
        %2570 = vmatprep.subr.mxu0 0.0
        %2571 = vmatpush1.msra.mxu0 0.0
        %2572 = vmatprep.subr.mxu0 0.0
        %2573 = vmatpush1.msra.mxu0 0.0
        %2574 = vmatprep.subr.mxu0 0.0
        %2575 = vmatpush1.msra.mxu0 0.0
        %2576 = vmatprep.subr.mxu0 0.0
        %2577 = vmatpush1.msra.mxu0 0.0
        %2578 = vmatprep.subr.mxu0 0.0
        %2579 = vmatpush1.msra.mxu0 0.0
        %2580 = vmatprep.subr.mxu0 %v992
        %2581 = vmatpush1.msra.mxu0 %v991
        %2582 = vmatprep.subr.mxu0 0.0
        %2583 = vmatpush2.msra.mxu0 0.0
        %2584 = vmatprep.subr.mxu0 0.0
        %2585 = vmatpush2.msra.mxu0 0.0
        %2586 = vmatprep.subr.mxu0 0.0
        %2587 = vmatpush2.msra.mxu0 0.0
        %2588 = vmatprep.subr.mxu0 0.0
        %2589 = vmatpush2.msra.mxu0 0.0
        %2590 = vmatprep.subr.mxu0 0.0
        %2591 = vmatpush2.msra.mxu0 0.0
        %2592 = vmatprep.subr.mxu0 0.0
        %2593 = vmatpush2.msra.mxu0 0.0
        %2594 = vmatprep.subr.mxu0 0.0
        %2595 = vmatpush2.msra.mxu0 0.0
        %2596 = vmatprep.subr.mxu0 0.0
        %2597 = vmatpush2.msra.mxu0 0.0
        %2598 = vmatprep.subr.mxu0 0.0
        %2599 = vmatpush2.msra.mxu0 0.0
        %2600 = vmatprep.subr.mxu0 0.0
        %2601 = vmatpush2.msra.mxu0 0.0
        %2602 = vmatprep.subr.mxu0 0.0
        %2603 = vmatpush2.msra.mxu0 0.0
        %2604 = vmatprep.subr.mxu0 0.0
        %2605 = vmatpush2.msra.mxu0 0.0
        %2606 = vmatprep.subr.mxu0 0.0
        %2607 = vmatpush2.msra.mxu0 0.0
        %2608 = vmatprep.subr.mxu0 0.0
        %2609 = vmatpush2.msra.mxu0 0.0
        %2610 = vmatprep.subr.mxu0 0.0
        %2611 = vmatpush2.msra.mxu0 0.0
        %2612 = vmatprep.subr.mxu0 0.0
        %2613 = vmatpush2.msra.mxu0 0.0
        %2614 = vmatprep.mubr.f32.mxu0 0.0
        %2615 = vmatmul.mubr.f32.gmra.mxu0 %v2545
        %v2616 = vpop.f32.mrf.mxu0
        %v2617 = vadd.f32 0.0, %v2616
        %v2618 = vpop.f32.mrf.mxu0
        %v2619 = vadd.f32 0.0, %v2618
        %2620 = vmatprep.mubr.f32.mxu0 0.0
        %2621 = vmatmul.mubr.f32.gmra.mxu0 %v2548
        %v2622 = vpop.f32.mrf.mxu0
        %v2623 = vadd.f32 0.0, %v2622
        %v2624 = vpop.f32.mrf.mxu0
        %v2625 = vadd.f32 0.0, %v2624
        %2626 = vdwg.mxu0
        %v2627 = vadd.f32 %v2538, %v2617
        %v2628 = vadd.f32 %v2539, %v2619
        %v2629 = vadd.f32 %v2540, %v2623
        %v2630 = vadd.f32 %v2541, %v2625
        %v2631 = vadd.f32 %v2627, %v1084
        %v2632 = vadd.f32 %v2628, %v1088
        %v2633 = vadd.f32 %v2629, %v1084
        %v2634 = vadd.f32 %v2630, %v1088
        %v2635 = vmax.f32 %v2631, 0.0
        %v2636 = vmax.f32 %v2632, 0.0
        %v2637 = vmax.f32 %v2633, 0.0
        %v2638 = vmax.f32 %v2634, 0.0
        %v2639 = vadd.f32 %v2635, %v2637
        %v2640 = vrot.slane %v2639, 4
        %v2641 = vadd.f32 %v2639, %v2640
        %v2642 = vrot.slane %v2641, 2
        %v2643 = vadd.f32 %v2641, %v2642
        %v2644 = vrot.slane %v2643, 1
        %v2645 = vadd.f32 %v2643, %v2644
        %v2646 = vadd.f32 %v2636, %v2638
        %v2647 = vrot.slane %v2646, 4
        %v2648 = vadd.f32 %v2646, %v2647
        %v2649 = vrot.slane %v2648, 2
        %v2650 = vadd.f32 %v2648, %v2649
        %v2651 = vrot.slane %v2650, 1
        %v2652 = vadd.f32 %v2650, %v2651
        %v2653 = vadd.f32 %v1883, %v2645
        %v2654 = vadd.f32 %v1884, %v2652
        %2655 = vmatprep.subr.mxu0 0.0
        %2656 = vmatpush1.msra.mxu0 0.0
        %2657 = vmatprep.subr.mxu0 0.0
        %2658 = vmatpush1.msra.mxu0 0.0
        %2659 = vmatprep.subr.mxu0 0.0
        %2660 = vmatpush1.msra.mxu0 0.0
        %2661 = vmatprep.subr.mxu0 0.0
        %2662 = vmatpush1.msra.mxu0 0.0
        %2663 = vmatprep.subr.mxu0 0.0
        %2664 = vmatpush1.msra.mxu0 0.0
        %2665 = vmatprep.subr.mxu0 0.0
        %2666 = vmatpush1.msra.mxu0 0.0
        %2667 = vmatprep.subr.mxu0 0.0
        %2668 = vmatpush1.msra.mxu0 0.0
        %2669 = vmatprep.subr.mxu0 0.0
        %2670 = vmatpush1.msra.mxu0 0.0
        %2671 = vmatprep.subr.mxu0 0.0
        %2672 = vmatpush1.msra.mxu0 0.0
        %2673 = vmatprep.subr.mxu0 0.0
        %2674 = vmatpush1.msra.mxu0 0.0
        %2675 = vmatprep.subr.mxu0 0.0
        %2676 = vmatpush1.msra.mxu0 0.0
        %2677 = vmatprep.subr.mxu0 0.0
        %2678 = vmatpush1.msra.mxu0 0.0
        %2679 = vmatprep.subr.mxu0 0.0
        %2680 = vmatpush1.msra.mxu0 0.0
        %2681 = vmatprep.subr.mxu0 0.0
        %2682 = vmatpush1.msra.mxu0 0.0
        %2683 = vmatprep.subr.mxu0 0.0
        %2684 = vmatpush1.msra.mxu0 0.0
        %2685 = vmatprep.subr.mxu0 %v266
        %2686 = vmatpush1.msra.mxu0 %v265
        %2687 = vmatprep.subr.mxu0 0.0
        %2688 = vmatpush2.msra.mxu0 0.0
        %2689 = vmatprep.subr.mxu0 0.0
        %2690 = vmatpush2.msra.mxu0 0.0
        %2691 = vmatprep.subr.mxu0 0.0
        %2692 = vmatpush2.msra.mxu0 0.0
        %2693 = vmatprep.subr.mxu0 0.0
        %2694 = vmatpush2.msra.mxu0 0.0
        %2695 = vmatprep.subr.mxu0 0.0
        %2696 = vmatpush2.msra.mxu0 0.0
        %2697 = vmatprep.subr.mxu0 0.0
        %2698 = vmatpush2.msra.mxu0 0.0
        %2699 = vmatprep.subr.mxu0 0.0
        %2700 = vmatpush2.msra.mxu0 0.0
        %2701 = vmatprep.subr.mxu0 0.0
        %2702 = vmatpush2.msra.mxu0 0.0
        %2703 = vmatprep.subr.mxu0 0.0
        %2704 = vmatpush2.msra.mxu0 0.0
        %2705 = vmatprep.subr.mxu0 0.0
        %2706 = vmatpush2.msra.mxu0 0.0
        %2707 = vmatprep.subr.mxu0 0.0
        %2708 = vmatpush2.msra.mxu0 0.0
        %2709 = vmatprep.subr.mxu0 0.0
        %2710 = vmatpush2.msra.mxu0 0.0
        %2711 = vmatprep.subr.mxu0 0.0
        %2712 = vmatpush2.msra.mxu0 0.0
        %2713 = vmatprep.subr.mxu0 0.0
        %2714 = vmatpush2.msra.mxu0 0.0
        %2715 = vmatprep.subr.mxu0 0.0
        %2716 = vmatpush2.msra.mxu0 0.0
        %2717 = vmatprep.subr.mxu0 0.0
        %2718 = vmatpush2.msra.mxu0 0.0
        %2719 = vmatprep.mubr.f32.mxu0 0.0
        %2720 = vmatmul.mubr.f32.gmra.mxu0 %v1686
        %v2721 = vpop.f32.mrf.mxu0
        %v2722 = vadd.f32 0.0, %v2721
        %v2723 = vpop.f32.mrf.mxu0
        %v2724 = vadd.f32 0.0, %v2723
        %2725 = vmatprep.mubr.f32.mxu0 0.0
        %2726 = vmatmul.mubr.f32.gmra.mxu0 %v1689
        %v2727 = vpop.f32.mrf.mxu0
        %v2728 = vadd.f32 0.0, %v2727
        %v2729 = vpop.f32.mrf.mxu0
        %v2730 = vadd.f32 0.0, %v2729
        %2731 = vdwg.mxu0
        %2732 = vmatprep.subr.mxu0 0.0
        %2733 = vmatpush1.msra.mxu0 0.0
        %2734 = vmatprep.subr.mxu0 0.0
        %2735 = vmatpush1.msra.mxu0 0.0
        %2736 = vmatprep.subr.mxu0 0.0
        %2737 = vmatpush1.msra.mxu0 0.0
        %2738 = vmatprep.subr.mxu0 0.0
        %2739 = vmatpush1.msra.mxu0 0.0
        %2740 = vmatprep.subr.mxu0 0.0
        %2741 = vmatpush1.msra.mxu0 0.0
        %2742 = vmatprep.subr.mxu0 0.0
        %2743 = vmatpush1.msra.mxu0 0.0
        %2744 = vmatprep.subr.mxu0 0.0
        %2745 = vmatpush1.msra.mxu0 0.0
        %2746 = vmatprep.subr.mxu0 0.0
        %2747 = vmatpush1.msra.mxu0 0.0
        %2748 = vmatprep.subr.mxu0 0.0
        %2749 = vmatpush1.msra.mxu0 0.0
        %2750 = vmatprep.subr.mxu0 0.0
        %2751 = vmatpush1.msra.mxu0 0.0
        %2752 = vmatprep.subr.mxu0 0.0
        %2753 = vmatpush1.msra.mxu0 0.0
        %2754 = vmatprep.subr.mxu0 0.0
        %2755 = vmatpush1.msra.mxu0 0.0
        %2756 = vmatprep.subr.mxu0 0.0
        %2757 = vmatpush1.msra.mxu0 0.0
        %2758 = vmatprep.subr.mxu0 0.0
        %2759 = vmatpush1.msra.mxu0 0.0
        %2760 = vmatprep.subr.mxu0 0.0
        %2761 = vmatpush1.msra.mxu0 0.0
        %2762 = vmatprep.subr.mxu0 %v261
        %2763 = vmatpush1.msra.mxu0 %v260
        %2764 = vmatprep.subr.mxu0 0.0
        %2765 = vmatpush2.msra.mxu0 0.0
        %2766 = vmatprep.subr.mxu0 0.0
        %2767 = vmatpush2.msra.mxu0 0.0
        %2768 = vmatprep.subr.mxu0 0.0
        %2769 = vmatpush2.msra.mxu0 0.0
        %2770 = vmatprep.subr.mxu0 0.0
        %2771 = vmatpush2.msra.mxu0 0.0
        %2772 = vmatprep.subr.mxu0 0.0
        %2773 = vmatpush2.msra.mxu0 0.0
        %2774 = vmatprep.subr.mxu0 0.0
        %2775 = vmatpush2.msra.mxu0 0.0
        %2776 = vmatprep.subr.mxu0 0.0
        %2777 = vmatpush2.msra.mxu0 0.0
        %2778 = vmatprep.subr.mxu0 0.0
        %2779 = vmatpush2.msra.mxu0 0.0
        %2780 = vmatprep.subr.mxu0 0.0
        %2781 = vmatpush2.msra.mxu0 0.0
        %2782 = vmatprep.subr.mxu0 0.0
        %2783 = vmatpush2.msra.mxu0 0.0
        %2784 = vmatprep.subr.mxu0 0.0
        %2785 = vmatpush2.msra.mxu0 0.0
        %2786 = vmatprep.subr.mxu0 0.0
        %2787 = vmatpush2.msra.mxu0 0.0
        %2788 = vmatprep.subr.mxu0 0.0
        %2789 = vmatpush2.msra.mxu0 0.0
        %2790 = vmatprep.subr.mxu0 0.0
        %2791 = vmatpush2.msra.mxu0 0.0
        %2792 = vmatprep.subr.mxu0 0.0
        %2793 = vmatpush2.msra.mxu0 0.0
        %2794 = vmatprep.subr.mxu0 0.0
        %2795 = vmatpush2.msra.mxu0 0.0
        %2796 = vmatprep.mubr.f32.mxu0 0.0
        %2797 = vmatmul.mubr.f32.gmra.mxu0 %v1597
        %v2798 = vpop.f32.mrf.mxu0
        %v2799 = vadd.f32 %v2722, %v2798
        %v2800 = vpop.f32.mrf.mxu0
        %v2801 = vadd.f32 %v2724, %v2800
        %2802 = vmatprep.mubr.f32.mxu0 0.0
        %2803 = vmatmul.mubr.f32.gmra.mxu0 %v1600
        %v2804 = vpop.f32.mrf.mxu0
        %v2805 = vadd.f32 %v2728, %v2804
        %v2806 = vpop.f32.mrf.mxu0
        %v2807 = vadd.f32 %v2730, %v2806
        %2808 = vdwg.mxu0
        %2809 = vmatprep.subr.mxu0 0.0
        %2810 = vmatpush1.msra.mxu0 0.0
        %2811 = vmatprep.subr.mxu0 0.0
        %2812 = vmatpush1.msra.mxu0 0.0
        %2813 = vmatprep.subr.mxu0 0.0
        %2814 = vmatpush1.msra.mxu0 0.0
        %2815 = vmatprep.subr.mxu0 0.0
        %2816 = vmatpush1.msra.mxu0 0.0
        %2817 = vmatprep.subr.mxu0 0.0
        %2818 = vmatpush1.msra.mxu0 0.0
        %2819 = vmatprep.subr.mxu0 0.0
        %2820 = vmatpush1.msra.mxu0 0.0
        %2821 = vmatprep.subr.mxu0 0.0
        %2822 = vmatpush1.msra.mxu0 0.0
        %2823 = vmatprep.subr.mxu0 0.0
        %2824 = vmatpush1.msra.mxu0 0.0
        %2825 = vmatprep.subr.mxu0 0.0
        %2826 = vmatpush1.msra.mxu0 0.0
        %2827 = vmatprep.subr.mxu0 0.0
        %2828 = vmatpush1.msra.mxu0 0.0
        %2829 = vmatprep.subr.mxu0 0.0
        %2830 = vmatpush1.msra.mxu0 0.0
        %2831 = vmatprep.subr.mxu0 0.0
        %2832 = vmatpush1.msra.mxu0 0.0
        %2833 = vmatprep.subr.mxu0 0.0
        %2834 = vmatpush1.msra.mxu0 0.0
        %2835 = vmatprep.subr.mxu0 0.0
        %2836 = vmatpush1.msra.mxu0 0.0
        %2837 = vmatprep.subr.mxu0 0.0
        %2838 = vmatpush1.msra.mxu0 0.0
        %2839 = vmatprep.subr.mxu0 %v438
        %2840 = vmatpush1.msra.mxu0 %v437
        %2841 = vmatprep.subr.mxu0 0.0
        %2842 = vmatpush2.msra.mxu0 0.0
        %2843 = vmatprep.subr.mxu0 0.0
        %2844 = vmatpush2.msra.mxu0 0.0
        %2845 = vmatprep.subr.mxu0 0.0
        %2846 = vmatpush2.msra.mxu0 0.0
        %2847 = vmatprep.subr.mxu0 0.0
        %2848 = vmatpush2.msra.mxu0 0.0
        %2849 = vmatprep.subr.mxu0 0.0
        %2850 = vmatpush2.msra.mxu0 0.0
        %2851 = vmatprep.subr.mxu0 0.0
        %2852 = vmatpush2.msra.mxu0 0.0
        %2853 = vmatprep.subr.mxu0 0.0
        %2854 = vmatpush2.msra.mxu0 0.0
        %2855 = vmatprep.subr.mxu0 0.0
        %2856 = vmatpush2.msra.mxu0 0.0
        %2857 = vmatprep.subr.mxu0 0.0
        %2858 = vmatpush2.msra.mxu0 0.0
        %2859 = vmatprep.subr.mxu0 0.0
        %2860 = vmatpush2.msra.mxu0 0.0
        %2861 = vmatprep.subr.mxu0 0.0
        %2862 = vmatpush2.msra.mxu0 0.0
        %2863 = vmatprep.subr.mxu0 0.0
        %2864 = vmatpush2.msra.mxu0 0.0
        %2865 = vmatprep.subr.mxu0 0.0
        %2866 = vmatpush2.msra.mxu0 0.0
        %2867 = vmatprep.subr.mxu0 0.0
        %2868 = vmatpush2.msra.mxu0 0.0
        %2869 = vmatprep.subr.mxu0 0.0
        %2870 = vmatpush2.msra.mxu0 0.0
        %2871 = vmatprep.subr.mxu0 0.0
        %2872 = vmatpush2.msra.mxu0 0.0
        %2873 = vmatprep.mubr.f32.mxu0 0.0
        %2874 = vmatmul.mubr.f32.gmra.mxu0 %v1775
        %v2875 = vpop.f32.mrf.mxu0
        %v2876 = vadd.f32 0.0, %v2875
        %v2877 = vpop.f32.mrf.mxu0
        %v2878 = vadd.f32 0.0, %v2877
        %2879 = vmatprep.mubr.f32.mxu0 0.0
        %2880 = vmatmul.mubr.f32.gmra.mxu0 %v1778
        %v2881 = vpop.f32.mrf.mxu0
        %v2882 = vadd.f32 0.0, %v2881
        %v2883 = vpop.f32.mrf.mxu0
        %v2884 = vadd.f32 0.0, %v2883
        %2885 = vdwg.mxu0
        %v2886 = vadd.f32 %v2799, %v2876
        %v2887 = vadd.f32 %v2801, %v2878
        %v2888 = vadd.f32 %v2805, %v2882
        %v2889 = vadd.f32 %v2807, %v2884
        %2890 = vmatprep.subr.mxu0 0.0
        %2891 = vmatpush1.msra.mxu0 0.0
        %2892 = vmatprep.subr.mxu0 0.0
        %2893 = vmatpush1.msra.mxu0 0.0
        %2894 = vmatprep.subr.mxu0 0.0
        %2895 = vmatpush1.msra.mxu0 0.0
        %2896 = vmatprep.subr.mxu0 0.0
        %2897 = vmatpush1.msra.mxu0 0.0
        %2898 = vmatprep.subr.mxu0 0.0
        %2899 = vmatpush1.msra.mxu0 0.0
        %2900 = vmatprep.subr.mxu0 0.0
        %2901 = vmatpush1.msra.mxu0 0.0
        %2902 = vmatprep.subr.mxu0 0.0
        %2903 = vmatpush1.msra.mxu0 0.0
        %2904 = vmatprep.subr.mxu0 0.0
        %2905 = vmatpush1.msra.mxu0 0.0
        %2906 = vmatprep.subr.mxu0 0.0
        %2907 = vmatpush1.msra.mxu0 0.0
        %2908 = vmatprep.subr.mxu0 0.0
        %2909 = vmatpush1.msra.mxu0 0.0
        %2910 = vmatprep.subr.mxu0 0.0
        %2911 = vmatpush1.msra.mxu0 0.0
        %2912 = vmatprep.subr.mxu0 0.0
        %2913 = vmatpush1.msra.mxu0 0.0
        %2914 = vmatprep.subr.mxu0 0.0
        %2915 = vmatpush1.msra.mxu0 0.0
        %2916 = vmatprep.subr.mxu0 0.0
        %2917 = vmatpush1.msra.mxu0 0.0
        %2918 = vmatprep.subr.mxu0 0.0
        %2919 = vmatpush1.msra.mxu0 0.0
        %2920 = vmatprep.subr.mxu0 %v531
        %2921 = vmatpush1.msra.mxu0 %v530
        %2922 = vmatprep.subr.mxu0 0.0
        %2923 = vmatpush2.msra.mxu0 0.0
        %2924 = vmatprep.subr.mxu0 0.0
        %2925 = vmatpush2.msra.mxu0 0.0
        %2926 = vmatprep.subr.mxu0 0.0
        %2927 = vmatpush2.msra.mxu0 0.0
        %2928 = vmatprep.subr.mxu0 0.0
        %2929 = vmatpush2.msra.mxu0 0.0
        %2930 = vmatprep.subr.mxu0 0.0
        %2931 = vmatpush2.msra.mxu0 0.0
        %2932 = vmatprep.subr.mxu0 0.0
        %2933 = vmatpush2.msra.mxu0 0.0
        %2934 = vmatprep.subr.mxu0 0.0
        %2935 = vmatpush2.msra.mxu0 0.0
        %2936 = vmatprep.subr.mxu0 0.0
        %2937 = vmatpush2.msra.mxu0 0.0
        %2938 = vmatprep.subr.mxu0 0.0
        %2939 = vmatpush2.msra.mxu0 0.0
        %2940 = vmatprep.subr.mxu0 0.0
        %2941 = vmatpush2.msra.mxu0 0.0
        %2942 = vmatprep.subr.mxu0 0.0
        %2943 = vmatpush2.msra.mxu0 0.0
        %2944 = vmatprep.subr.mxu0 0.0
        %2945 = vmatpush2.msra.mxu0 0.0
        %2946 = vmatprep.subr.mxu0 0.0
        %2947 = vmatpush2.msra.mxu0 0.0
        %2948 = vmatprep.subr.mxu0 0.0
        %2949 = vmatpush2.msra.mxu0 0.0
        %2950 = vmatprep.subr.mxu0 0.0
        %2951 = vmatpush2.msra.mxu0 0.0
        %2952 = vmatprep.subr.mxu0 0.0
        %2953 = vmatpush2.msra.mxu0 0.0
        %2954 = vmatprep.mubr.f32.mxu0 0.0
        %2955 = vmatmul.mubr.f32.gmra.mxu0 %v2367
        %v2956 = vpop.f32.mrf.mxu0
        %v2957 = vadd.f32 0.0, %v2956
        %v2958 = vpop.f32.mrf.mxu0
        %v2959 = vadd.f32 0.0, %v2958
        %2960 = vmatprep.mubr.f32.mxu0 0.0
        %2961 = vmatmul.mubr.f32.gmra.mxu0 %v2370
        %v2962 = vpop.f32.mrf.mxu0
        %v2963 = vadd.f32 0.0, %v2962
        %v2964 = vpop.f32.mrf.mxu0
        %v2965 = vadd.f32 0.0, %v2964
        %2966 = vdwg.mxu0
        %v2967 = vadd.f32 %v2886, %v2957
        %v2968 = vadd.f32 %v2887, %v2959
        %v2969 = vadd.f32 %v2888, %v2963
        %v2970 = vadd.f32 %v2889, %v2965
        %2971 = vmatprep.subr.mxu0 0.0
        %2972 = vmatpush1.msra.mxu0 0.0
        %2973 = vmatprep.subr.mxu0 0.0
        %2974 = vmatpush1.msra.mxu0 0.0
        %2975 = vmatprep.subr.mxu0 0.0
        %2976 = vmatpush1.msra.mxu0 0.0
        %2977 = vmatprep.subr.mxu0 0.0
        %2978 = vmatpush1.msra.mxu0 0.0
        %2979 = vmatprep.subr.mxu0 0.0
        %2980 = vmatpush1.msra.mxu0 0.0
        %2981 = vmatprep.subr.mxu0 0.0
        %2982 = vmatpush1.msra.mxu0 0.0
        %2983 = vmatprep.subr.mxu0 0.0
        %2984 = vmatpush1.msra.mxu0 0.0
        %2985 = vmatprep.subr.mxu0 0.0
        %2986 = vmatpush1.msra.mxu0 0.0
        %2987 = vmatprep.subr.mxu0 0.0
        %2988 = vmatpush1.msra.mxu0 0.0
        %2989 = vmatprep.subr.mxu0 0.0
        %2990 = vmatpush1.msra.mxu0 0.0
        %2991 = vmatprep.subr.mxu0 0.0
        %2992 = vmatpush1.msra.mxu0 0.0
        %2993 = vmatprep.subr.mxu0 0.0
        %2994 = vmatpush1.msra.mxu0 0.0
        %2995 = vmatprep.subr.mxu0 0.0
        %2996 = vmatpush1.msra.mxu0 0.0
        %2997 = vmatprep.subr.mxu0 0.0
        %2998 = vmatpush1.msra.mxu0 0.0
        %2999 = vmatprep.subr.mxu0 0.0
        %3000 = vmatpush1.msra.mxu0 0.0
        %3001 = vmatprep.subr.mxu0 %v623
        %3002 = vmatpush1.msra.mxu0 %v622
        %3003 = vmatprep.subr.mxu0 0.0
        %3004 = vmatpush2.msra.mxu0 0.0
        %3005 = vmatprep.subr.mxu0 0.0
        %3006 = vmatpush2.msra.mxu0 0.0
        %3007 = vmatprep.subr.mxu0 0.0
        %3008 = vmatpush2.msra.mxu0 0.0
        %3009 = vmatprep.subr.mxu0 0.0
        %3010 = vmatpush2.msra.mxu0 0.0
        %3011 = vmatprep.subr.mxu0 0.0
        %3012 = vmatpush2.msra.mxu0 0.0
        %3013 = vmatprep.subr.mxu0 0.0
        %3014 = vmatpush2.msra.mxu0 0.0
        %3015 = vmatprep.subr.mxu0 0.0
        %3016 = vmatpush2.msra.mxu0 0.0
        %3017 = vmatprep.subr.mxu0 0.0
        %3018 = vmatpush2.msra.mxu0 0.0
        %3019 = vmatprep.subr.mxu0 0.0
        %3020 = vmatpush2.msra.mxu0 0.0
        %3021 = vmatprep.subr.mxu0 0.0
        %3022 = vmatpush2.msra.mxu0 0.0
        %3023 = vmatprep.subr.mxu0 0.0
        %3024 = vmatpush2.msra.mxu0 0.0
        %3025 = vmatprep.subr.mxu0 0.0
        %3026 = vmatpush2.msra.mxu0 0.0
        %3027 = vmatprep.subr.mxu0 0.0
        %3028 = vmatpush2.msra.mxu0 0.0
        %3029 = vmatprep.subr.mxu0 0.0
        %3030 = vmatpush2.msra.mxu0 0.0
        %3031 = vmatprep.subr.mxu0 0.0
        %3032 = vmatpush2.msra.mxu0 0.0
        %3033 = vmatprep.subr.mxu0 0.0
        %3034 = vmatpush2.msra.mxu0 0.0
        %3035 = vmatprep.mubr.f32.mxu0 0.0
        %3036 = vmatmul.mubr.f32.gmra.mxu0 %v2456
        %v3037 = vpop.f32.mrf.mxu0
        %v3038 = vadd.f32 0.0, %v3037
        %v3039 = vpop.f32.mrf.mxu0
        %v3040 = vadd.f32 0.0, %v3039
        %3041 = vmatprep.mubr.f32.mxu0 0.0
        %3042 = vmatmul.mubr.f32.gmra.mxu0 %v2459
        %v3043 = vpop.f32.mrf.mxu0
        %v3044 = vadd.f32 0.0, %v3043
        %v3045 = vpop.f32.mrf.mxu0
        %v3046 = vadd.f32 0.0, %v3045
        %3047 = vdwg.mxu0
        %v3048 = vadd.f32 %v2967, %v3038
        %v3049 = vadd.f32 %v2968, %v3040
        %v3050 = vadd.f32 %v2969, %v3044
        %v3051 = vadd.f32 %v2970, %v3046
        %3052 = vmatprep.subr.mxu0 0.0
        %3053 = vmatpush1.msra.mxu0 0.0
        %3054 = vmatprep.subr.mxu0 0.0
        %3055 = vmatpush1.msra.mxu0 0.0
        %3056 = vmatprep.subr.mxu0 0.0
        %3057 = vmatpush1.msra.mxu0 0.0
        %3058 = vmatprep.subr.mxu0 0.0
        %3059 = vmatpush1.msra.mxu0 0.0
        %3060 = vmatprep.subr.mxu0 0.0
        %3061 = vmatpush1.msra.mxu0 0.0
        %3062 = vmatprep.subr.mxu0 0.0
        %3063 = vmatpush1.msra.mxu0 0.0
        %3064 = vmatprep.subr.mxu0 0.0
        %3065 = vmatpush1.msra.mxu0 0.0
        %3066 = vmatprep.subr.mxu0 0.0
        %3067 = vmatpush1.msra.mxu0 0.0
        %3068 = vmatprep.subr.mxu0 0.0
        %3069 = vmatpush1.msra.mxu0 0.0
        %3070 = vmatprep.subr.mxu0 0.0
        %3071 = vmatpush1.msra.mxu0 0.0
        %3072 = vmatprep.subr.mxu0 0.0
        %3073 = vmatpush1.msra.mxu0 0.0
        %3074 = vmatprep.subr.mxu0 0.0
        %3075 = vmatpush1.msra.mxu0 0.0
        %3076 = vmatprep.subr.mxu0 0.0
        %3077 = vmatpush1.msra.mxu0 0.0
        %3078 = vmatprep.subr.mxu0 0.0
        %3079 = vmatpush1.msra.mxu0 0.0
        %3080 = vmatprep.subr.mxu0 0.0
        %3081 = vmatpush1.msra.mxu0 0.0
        %3082 = vmatprep.subr.mxu0 %v715
        %3083 = vmatpush1.msra.mxu0 %v714
        %3084 = vmatprep.subr.mxu0 0.0
        %3085 = vmatpush2.msra.mxu0 0.0
        %3086 = vmatprep.subr.mxu0 0.0
        %3087 = vmatpush2.msra.mxu0 0.0
        %3088 = vmatprep.subr.mxu0 0.0
        %3089 = vmatpush2.msra.mxu0 0.0
        %3090 = vmatprep.subr.mxu0 0.0
        %3091 = vmatpush2.msra.mxu0 0.0
        %3092 = vmatprep.subr.mxu0 0.0
        %3093 = vmatpush2.msra.mxu0 0.0
        %3094 = vmatprep.subr.mxu0 0.0
        %3095 = vmatpush2.msra.mxu0 0.0
        %3096 = vmatprep.subr.mxu0 0.0
        %3097 = vmatpush2.msra.mxu0 0.0
        %3098 = vmatprep.subr.mxu0 0.0
        %3099 = vmatpush2.msra.mxu0 0.0
        %3100 = vmatprep.subr.mxu0 0.0
        %3101 = vmatpush2.msra.mxu0 0.0
        %3102 = vmatprep.subr.mxu0 0.0
        %3103 = vmatpush2.msra.mxu0 0.0
        %3104 = vmatprep.subr.mxu0 0.0
        %3105 = vmatpush2.msra.mxu0 0.0
        %3106 = vmatprep.subr.mxu0 0.0
        %3107 = vmatpush2.msra.mxu0 0.0
        %3108 = vmatprep.subr.mxu0 0.0
        %3109 = vmatpush2.msra.mxu0 0.0
        %3110 = vmatprep.subr.mxu0 0.0
        %3111 = vmatpush2.msra.mxu0 0.0
        %3112 = vmatprep.subr.mxu0 0.0
        %3113 = vmatpush2.msra.mxu0 0.0
        %3114 = vmatprep.subr.mxu0 0.0
        %3115 = vmatpush2.msra.mxu0 0.0
        %3116 = vmatprep.mubr.f32.mxu0 0.0
        %3117 = vmatmul.mubr.f32.gmra.mxu0 %v2545
        %v3118 = vpop.f32.mrf.mxu0
        %v3119 = vadd.f32 0.0, %v3118
        %v3120 = vpop.f32.mrf.mxu0
        %v3121 = vadd.f32 0.0, %v3120
        %3122 = vmatprep.mubr.f32.mxu0 0.0
        %3123 = vmatmul.mubr.f32.gmra.mxu0 %v2548
        %v3124 = vpop.f32.mrf.mxu0
        %v3125 = vadd.f32 0.0, %v3124
        %v3126 = vpop.f32.mrf.mxu0
        %v3127 = vadd.f32 0.0, %v3126
        %3128 = vdwg.mxu0
        %v3129 = vadd.f32 %v3048, %v3119
        %v3130 = vadd.f32 %v3049, %v3121
        %v3131 = vadd.f32 %v3050, %v3125
        %v3132 = vadd.f32 %v3051, %v3127
        %s3133 = scalar_lea.vmem %s247, 120
        %v3134 = vld [vmem:[%s3133] sm:$0xff]
        %v3135 = vld [vmem:[%s3133 + $0x8] sm:$0xff]
        %v3137 = vsel %vm267, %v3134, 0
        %v3140 = vsel %vm267, %v3135, 0
        %3142 = vmatprep.subr.mxu0 0.0
        %3143 = vmatpush1.msra.mxu0 0.0
        %3144 = vmatprep.subr.mxu0 0.0
        %3145 = vmatpush1.msra.mxu0 0.0
        %3146 = vmatprep.subr.mxu0 0.0
        %3147 = vmatpush1.msra.mxu0 0.0
        %3148 = vmatprep.subr.mxu0 0.0
        %3149 = vmatpush1.msra.mxu0 0.0
        %3150 = vmatprep.subr.mxu0 0.0
        %3151 = vmatpush1.msra.mxu0 0.0
        %3152 = vmatprep.subr.mxu0 0.0
        %3153 = vmatpush1.msra.mxu0 0.0
        %3154 = vmatprep.subr.mxu0 0.0
        %3155 = vmatpush1.msra.mxu0 0.0
        %3156 = vmatprep.subr.mxu0 0.0
        %3157 = vmatpush1.msra.mxu0 0.0
        %3158 = vmatprep.subr.mxu0 0.0
        %3159 = vmatpush1.msra.mxu0 0.0
        %3160 = vmatprep.subr.mxu0 0.0
        %3161 = vmatpush1.msra.mxu0 0.0
        %3162 = vmatprep.subr.mxu0 0.0
        %3163 = vmatpush1.msra.mxu0 0.0
        %3164 = vmatprep.subr.mxu0 0.0
        %3165 = vmatpush1.msra.mxu0 0.0
        %3166 = vmatprep.subr.mxu0 0.0
        %3167 = vmatpush1.msra.mxu0 0.0
        %3168 = vmatprep.subr.mxu0 0.0
        %3169 = vmatpush1.msra.mxu0 0.0
        %3170 = vmatprep.subr.mxu0 0.0
        %3171 = vmatpush1.msra.mxu0 0.0
        %3172 = vmatprep.subr.mxu0 %v808
        %3173 = vmatpush1.msra.mxu0 %v807
        %3174 = vmatprep.subr.mxu0 0.0
        %3175 = vmatpush2.msra.mxu0 0.0
        %3176 = vmatprep.subr.mxu0 0.0
        %3177 = vmatpush2.msra.mxu0 0.0
        %3178 = vmatprep.subr.mxu0 0.0
        %3179 = vmatpush2.msra.mxu0 0.0
        %3180 = vmatprep.subr.mxu0 0.0
        %3181 = vmatpush2.msra.mxu0 0.0
        %3182 = vmatprep.subr.mxu0 0.0
        %3183 = vmatpush2.msra.mxu0 0.0
        %3184 = vmatprep.subr.mxu0 0.0
        %3185 = vmatpush2.msra.mxu0 0.0
        %3186 = vmatprep.subr.mxu0 0.0
        %3187 = vmatpush2.msra.mxu0 0.0
        %3188 = vmatprep.subr.mxu0 0.0
        %3189 = vmatpush2.msra.mxu0 0.0
        %3190 = vmatprep.subr.mxu0 0.0
        %3191 = vmatpush2.msra.mxu0 0.0
        %3192 = vmatprep.subr.mxu0 0.0
        %3193 = vmatpush2.msra.mxu0 0.0
        %3194 = vmatprep.subr.mxu0 0.0
        %3195 = vmatpush2.msra.mxu0 0.0
        %3196 = vmatprep.subr.mxu0 0.0
        %3197 = vmatpush2.msra.mxu0 0.0
        %3198 = vmatprep.subr.mxu0 0.0
        %3199 = vmatpush2.msra.mxu0 0.0
        %3200 = vmatprep.subr.mxu0 0.0
        %3201 = vmatpush2.msra.mxu0 0.0
        %3202 = vmatprep.subr.mxu0 0.0
        %3203 = vmatpush2.msra.mxu0 0.0
        %3204 = vmatprep.subr.mxu0 0.0
        %3205 = vmatpush2.msra.mxu0 0.0
        %3206 = vmatprep.mubr.f32.mxu0 0.0
        %3207 = vmatmul.mubr.f32.gmra.mxu0 %v3137
        %v3208 = vpop.f32.mrf.mxu0
        %v3209 = vadd.f32 0.0, %v3208
        %v3210 = vpop.f32.mrf.mxu0
        %v3211 = vadd.f32 0.0, %v3210
        %3212 = vmatprep.mubr.f32.mxu0 0.0
        %3213 = vmatmul.mubr.f32.gmra.mxu0 %v3140
        %v3214 = vpop.f32.mrf.mxu0
        %v3215 = vadd.f32 0.0, %v3214
        %v3216 = vpop.f32.mrf.mxu0
        %v3217 = vadd.f32 0.0, %v3216
        %3218 = vdwg.mxu0
        %v3219 = vadd.f32 %v3129, %v3209
        %v3220 = vadd.f32 %v3130, %v3211
        %v3221 = vadd.f32 %v3131, %v3215
        %v3222 = vadd.f32 %v3132, %v3217
        %v3223 = vld [vmem:[%s3133 + $0x1] sm:$0xff]
        %v3224 = vld [vmem:[%s3133 + $0x9] sm:$0xff]
        %v3226 = vsel %vm267, %v3223, 0
        %v3229 = vsel %vm267, %v3224, 0
        %3231 = vmatprep.subr.mxu0 0.0
        %3232 = vmatpush1.msra.mxu0 0.0
        %3233 = vmatprep.subr.mxu0 0.0
        %3234 = vmatpush1.msra.mxu0 0.0
        %3235 = vmatprep.subr.mxu0 0.0
        %3236 = vmatpush1.msra.mxu0 0.0
        %3237 = vmatprep.subr.mxu0 0.0
        %3238 = vmatpush1.msra.mxu0 0.0
        %3239 = vmatprep.subr.mxu0 0.0
        %3240 = vmatpush1.msra.mxu0 0.0
        %3241 = vmatprep.subr.mxu0 0.0
        %3242 = vmatpush1.msra.mxu0 0.0
        %3243 = vmatprep.subr.mxu0 0.0
        %3244 = vmatpush1.msra.mxu0 0.0
        %3245 = vmatprep.subr.mxu0 0.0
        %3246 = vmatpush1.msra.mxu0 0.0
        %3247 = vmatprep.subr.mxu0 0.0
        %3248 = vmatpush1.msra.mxu0 0.0
        %3249 = vmatprep.subr.mxu0 0.0
        %3250 = vmatpush1.msra.mxu0 0.0
        %3251 = vmatprep.subr.mxu0 0.0
        %3252 = vmatpush1.msra.mxu0 0.0
        %3253 = vmatprep.subr.mxu0 0.0
        %3254 = vmatpush1.msra.mxu0 0.0
        %3255 = vmatprep.subr.mxu0 0.0
        %3256 = vmatpush1.msra.mxu0 0.0
        %3257 = vmatprep.subr.mxu0 0.0
        %3258 = vmatpush1.msra.mxu0 0.0
        %3259 = vmatprep.subr.mxu0 0.0
        %3260 = vmatpush1.msra.mxu0 0.0
        %3261 = vmatprep.subr.mxu0 %v900
        %3262 = vmatpush1.msra.mxu0 %v899
        %3263 = vmatprep.subr.mxu0 0.0
        %3264 = vmatpush2.msra.mxu0 0.0
        %3265 = vmatprep.subr.mxu0 0.0
        %3266 = vmatpush2.msra.mxu0 0.0
        %3267 = vmatprep.subr.mxu0 0.0
        %3268 = vmatpush2.msra.mxu0 0.0
        %3269 = vmatprep.subr.mxu0 0.0
        %3270 = vmatpush2.msra.mxu0 0.0
        %3271 = vmatprep.subr.mxu0 0.0
        %3272 = vmatpush2.msra.mxu0 0.0
        %3273 = vmatprep.subr.mxu0 0.0
        %3274 = vmatpush2.msra.mxu0 0.0
        %3275 = vmatprep.subr.mxu0 0.0
        %3276 = vmatpush2.msra.mxu0 0.0
        %3277 = vmatprep.subr.mxu0 0.0
        %3278 = vmatpush2.msra.mxu0 0.0
        %3279 = vmatprep.subr.mxu0 0.0
        %3280 = vmatpush2.msra.mxu0 0.0
        %3281 = vmatprep.subr.mxu0 0.0
        %3282 = vmatpush2.msra.mxu0 0.0
        %3283 = vmatprep.subr.mxu0 0.0
        %3284 = vmatpush2.msra.mxu0 0.0
        %3285 = vmatprep.subr.mxu0 0.0
        %3286 = vmatpush2.msra.mxu0 0.0
        %3287 = vmatprep.subr.mxu0 0.0
        %3288 = vmatpush2.msra.mxu0 0.0
        %3289 = vmatprep.subr.mxu0 0.0
        %3290 = vmatpush2.msra.mxu0 0.0
        %3291 = vmatprep.subr.mxu0 0.0
        %3292 = vmatpush2.msra.mxu0 0.0
        %3293 = vmatprep.subr.mxu0 0.0
        %3294 = vmatpush2.msra.mxu0 0.0
        %3295 = vmatprep.mubr.f32.mxu0 0.0
        %3296 = vmatmul.mubr.f32.gmra.mxu0 %v3226
        %v3297 = vpop.f32.mrf.mxu0
        %v3298 = vadd.f32 0.0, %v3297
        %v3299 = vpop.f32.mrf.mxu0
        %v3300 = vadd.f32 0.0, %v3299
        %3301 = vmatprep.mubr.f32.mxu0 0.0
        %3302 = vmatmul.mubr.f32.gmra.mxu0 %v3229
        %v3303 = vpop.f32.mrf.mxu0
        %v3304 = vadd.f32 0.0, %v3303
        %v3305 = vpop.f32.mrf.mxu0
        %v3306 = vadd.f32 0.0, %v3305
        %3307 = vdwg.mxu0
        %v3308 = vadd.f32 %v3219, %v3298
        %v3309 = vadd.f32 %v3220, %v3300
        %v3310 = vadd.f32 %v3221, %v3304
        %v3311 = vadd.f32 %v3222, %v3306
        %v3312 = vld [vmem:[%s3133 + $0x2] sm:$0xff]
        %v3313 = vld [vmem:[%s3133 + $0xa] sm:$0xff]
        %v3315 = vsel %vm267, %v3312, 0
        %v3318 = vsel %vm267, %v3313, 0
        %3320 = vmatprep.subr.mxu0 0.0
        %3321 = vmatpush1.msra.mxu0 0.0
        %3322 = vmatprep.subr.mxu0 0.0
        %3323 = vmatpush1.msra.mxu0 0.0
        %3324 = vmatprep.subr.mxu0 0.0
        %3325 = vmatpush1.msra.mxu0 0.0
        %3326 = vmatprep.subr.mxu0 0.0
        %3327 = vmatpush1.msra.mxu0 0.0
        %3328 = vmatprep.subr.mxu0 0.0
        %3329 = vmatpush1.msra.mxu0 0.0
        %3330 = vmatprep.subr.mxu0 0.0
        %3331 = vmatpush1.msra.mxu0 0.0
        %3332 = vmatprep.subr.mxu0 0.0
        %3333 = vmatpush1.msra.mxu0 0.0
        %3334 = vmatprep.subr.mxu0 0.0
        %3335 = vmatpush1.msra.mxu0 0.0
        %3336 = vmatprep.subr.mxu0 0.0
        %3337 = vmatpush1.msra.mxu0 0.0
        %3338 = vmatprep.subr.mxu0 0.0
        %3339 = vmatpush1.msra.mxu0 0.0
        %3340 = vmatprep.subr.mxu0 0.0
        %3341 = vmatpush1.msra.mxu0 0.0
        %3342 = vmatprep.subr.mxu0 0.0
        %3343 = vmatpush1.msra.mxu0 0.0
        %3344 = vmatprep.subr.mxu0 0.0
        %3345 = vmatpush1.msra.mxu0 0.0
        %3346 = vmatprep.subr.mxu0 0.0
        %3347 = vmatpush1.msra.mxu0 0.0
        %3348 = vmatprep.subr.mxu0 0.0
        %3349 = vmatpush1.msra.mxu0 0.0
        %3350 = vmatprep.subr.mxu0 %v992
        %3351 = vmatpush1.msra.mxu0 %v991
        %3352 = vmatprep.subr.mxu0 0.0
        %3353 = vmatpush2.msra.mxu0 0.0
        %3354 = vmatprep.subr.mxu0 0.0
        %3355 = vmatpush2.msra.mxu0 0.0
        %3356 = vmatprep.subr.mxu0 0.0
        %3357 = vmatpush2.msra.mxu0 0.0
        %3358 = vmatprep.subr.mxu0 0.0
        %3359 = vmatpush2.msra.mxu0 0.0
        %3360 = vmatprep.subr.mxu0 0.0
        %3361 = vmatpush2.msra.mxu0 0.0
        %3362 = vmatprep.subr.mxu0 0.0
        %3363 = vmatpush2.msra.mxu0 0.0
        %3364 = vmatprep.subr.mxu0 0.0
        %3365 = vmatpush2.msra.mxu0 0.0
        %3366 = vmatprep.subr.mxu0 0.0
        %3367 = vmatpush2.msra.mxu0 0.0
        %3368 = vmatprep.subr.mxu0 0.0
        %3369 = vmatpush2.msra.mxu0 0.0
        %3370 = vmatprep.subr.mxu0 0.0
        %3371 = vmatpush2.msra.mxu0 0.0
        %3372 = vmatprep.subr.mxu0 0.0
        %3373 = vmatpush2.msra.mxu0 0.0
        %3374 = vmatprep.subr.mxu0 0.0
        %3375 = vmatpush2.msra.mxu0 0.0
        %3376 = vmatprep.subr.mxu0 0.0
        %3377 = vmatpush2.msra.mxu0 0.0
        %3378 = vmatprep.subr.mxu0 0.0
        %3379 = vmatpush2.msra.mxu0 0.0
        %3380 = vmatprep.subr.mxu0 0.0
        %3381 = vmatpush2.msra.mxu0 0.0
        %3382 = vmatprep.subr.mxu0 0.0
        %3383 = vmatpush2.msra.mxu0 0.0
        %3384 = vmatprep.mubr.f32.mxu0 0.0
        %3385 = vmatmul.mubr.f32.gmra.mxu0 %v3315
        %v3386 = vpop.f32.mrf.mxu0
        %v3387 = vadd.f32 0.0, %v3386
        %v3388 = vpop.f32.mrf.mxu0
        %v3389 = vadd.f32 0.0, %v3388
        %3390 = vmatprep.mubr.f32.mxu0 0.0
        %3391 = vmatmul.mubr.f32.gmra.mxu0 %v3318
        %v3392 = vpop.f32.mrf.mxu0
        %v3393 = vadd.f32 0.0, %v3392
        %v3394 = vpop.f32.mrf.mxu0
        %v3395 = vadd.f32 0.0, %v3394
        %3396 = vdwg.mxu0
        %v3397 = vadd.f32 %v3308, %v3387
        %v3398 = vadd.f32 %v3309, %v3389
        %v3399 = vadd.f32 %v3310, %v3393
        %v3400 = vadd.f32 %v3311, %v3395
        %v3401 = vadd.f32 %v3397, %v1084
        %v3402 = vadd.f32 %v3398, %v1088
        %v3403 = vadd.f32 %v3399, %v1084
        %v3404 = vadd.f32 %v3400, %v1088
        %v3405 = vmax.f32 %v3401, 0.0
        %v3406 = vmax.f32 %v3402, 0.0
        %v3407 = vmax.f32 %v3403, 0.0
        %v3408 = vmax.f32 %v3404, 0.0
        %v3409 = vadd.f32 %v3405, %v3407
        %v3410 = vrot.slane %v3409, 4
        %v3411 = vadd.f32 %v3409, %v3410
        %v3412 = vrot.slane %v3411, 2
        %v3413 = vadd.f32 %v3411, %v3412
        %v3414 = vrot.slane %v3413, 1
        %v3415 = vadd.f32 %v3413, %v3414
        %v3416 = vadd.f32 %v3406, %v3408
        %v3417 = vrot.slane %v3416, 4
        %v3418 = vadd.f32 %v3416, %v3417
        %v3419 = vrot.slane %v3418, 2
        %v3420 = vadd.f32 %v3418, %v3419
        %v3421 = vrot.slane %v3420, 1
        %v3422 = vadd.f32 %v3420, %v3421
        %v3423 = vadd.f32 %v2653, %v3415
        %v3424 = vadd.f32 %v2654, %v3422
        %3425 = vmatprep.subr.mxu0 0.0
        %3426 = vmatpush1.msra.mxu0 0.0
        %3427 = vmatprep.subr.mxu0 0.0
        %3428 = vmatpush1.msra.mxu0 0.0
        %3429 = vmatprep.subr.mxu0 0.0
        %3430 = vmatpush1.msra.mxu0 0.0
        %3431 = vmatprep.subr.mxu0 0.0
        %3432 = vmatpush1.msra.mxu0 0.0
        %3433 = vmatprep.subr.mxu0 0.0
        %3434 = vmatpush1.msra.mxu0 0.0
        %3435 = vmatprep.subr.mxu0 0.0
        %3436 = vmatpush1.msra.mxu0 0.0
        %3437 = vmatprep.subr.mxu0 0.0
        %3438 = vmatpush1.msra.mxu0 0.0
        %3439 = vmatprep.subr.mxu0 0.0
        %3440 = vmatpush1.msra.mxu0 0.0
        %3441 = vmatprep.subr.mxu0 0.0
        %3442 = vmatpush1.msra.mxu0 0.0
        %3443 = vmatprep.subr.mxu0 0.0
        %3444 = vmatpush1.msra.mxu0 0.0
        %3445 = vmatprep.subr.mxu0 0.0
        %3446 = vmatpush1.msra.mxu0 0.0
        %3447 = vmatprep.subr.mxu0 0.0
        %3448 = vmatpush1.msra.mxu0 0.0
        %3449 = vmatprep.subr.mxu0 0.0
        %3450 = vmatpush1.msra.mxu0 0.0
        %3451 = vmatprep.subr.mxu0 0.0
        %3452 = vmatpush1.msra.mxu0 0.0
        %3453 = vmatprep.subr.mxu0 0.0
        %3454 = vmatpush1.msra.mxu0 0.0
        %3455 = vmatprep.subr.mxu0 %v266
        %3456 = vmatpush1.msra.mxu0 %v265
        %3457 = vmatprep.subr.mxu0 0.0
        %3458 = vmatpush2.msra.mxu0 0.0
        %3459 = vmatprep.subr.mxu0 0.0
        %3460 = vmatpush2.msra.mxu0 0.0
        %3461 = vmatprep.subr.mxu0 0.0
        %3462 = vmatpush2.msra.mxu0 0.0
        %3463 = vmatprep.subr.mxu0 0.0
        %3464 = vmatpush2.msra.mxu0 0.0
        %3465 = vmatprep.subr.mxu0 0.0
        %3466 = vmatpush2.msra.mxu0 0.0
        %3467 = vmatprep.subr.mxu0 0.0
        %3468 = vmatpush2.msra.mxu0 0.0
        %3469 = vmatprep.subr.mxu0 0.0
        %3470 = vmatpush2.msra.mxu0 0.0
        %3471 = vmatprep.subr.mxu0 0.0
        %3472 = vmatpush2.msra.mxu0 0.0
        %3473 = vmatprep.subr.mxu0 0.0
        %3474 = vmatpush2.msra.mxu0 0.0
        %3475 = vmatprep.subr.mxu0 0.0
        %3476 = vmatpush2.msra.mxu0 0.0
        %3477 = vmatprep.subr.mxu0 0.0
        %3478 = vmatpush2.msra.mxu0 0.0
        %3479 = vmatprep.subr.mxu0 0.0
        %3480 = vmatpush2.msra.mxu0 0.0
        %3481 = vmatprep.subr.mxu0 0.0
        %3482 = vmatpush2.msra.mxu0 0.0
        %3483 = vmatprep.subr.mxu0 0.0
        %3484 = vmatpush2.msra.mxu0 0.0
        %3485 = vmatprep.subr.mxu0 0.0
        %3486 = vmatpush2.msra.mxu0 0.0
        %3487 = vmatprep.subr.mxu0 0.0
        %3488 = vmatpush2.msra.mxu0 0.0
        %3489 = vmatprep.mubr.f32.mxu0 0.0
        %3490 = vmatmul.mubr.f32.gmra.mxu0 %v2456
        %v3491 = vpop.f32.mrf.mxu0
        %v3492 = vadd.f32 0.0, %v3491
        %v3493 = vpop.f32.mrf.mxu0
        %v3494 = vadd.f32 0.0, %v3493
        %3495 = vmatprep.mubr.f32.mxu0 0.0
        %3496 = vmatmul.mubr.f32.gmra.mxu0 %v2459
        %v3497 = vpop.f32.mrf.mxu0
        %v3498 = vadd.f32 0.0, %v3497
        %v3499 = vpop.f32.mrf.mxu0
        %v3500 = vadd.f32 0.0, %v3499
        %3501 = vdwg.mxu0
        %3502 = vmatprep.subr.mxu0 0.0
        %3503 = vmatpush1.msra.mxu0 0.0
        %3504 = vmatprep.subr.mxu0 0.0
        %3505 = vmatpush1.msra.mxu0 0.0
        %3506 = vmatprep.subr.mxu0 0.0
        %3507 = vmatpush1.msra.mxu0 0.0
        %3508 = vmatprep.subr.mxu0 0.0
        %3509 = vmatpush1.msra.mxu0 0.0
        %3510 = vmatprep.subr.mxu0 0.0
        %3511 = vmatpush1.msra.mxu0 0.0
        %3512 = vmatprep.subr.mxu0 0.0
        %3513 = vmatpush1.msra.mxu0 0.0
        %3514 = vmatprep.subr.mxu0 0.0
        %3515 = vmatpush1.msra.mxu0 0.0
        %3516 = vmatprep.subr.mxu0 0.0
        %3517 = vmatpush1.msra.mxu0 0.0
        %3518 = vmatprep.subr.mxu0 0.0
        %3519 = vmatpush1.msra.mxu0 0.0
        %3520 = vmatprep.subr.mxu0 0.0
        %3521 = vmatpush1.msra.mxu0 0.0
        %3522 = vmatprep.subr.mxu0 0.0
        %3523 = vmatpush1.msra.mxu0 0.0
        %3524 = vmatprep.subr.mxu0 0.0
        %3525 = vmatpush1.msra.mxu0 0.0
        %3526 = vmatprep.subr.mxu0 0.0
        %3527 = vmatpush1.msra.mxu0 0.0
        %3528 = vmatprep.subr.mxu0 0.0
        %3529 = vmatpush1.msra.mxu0 0.0
        %3530 = vmatprep.subr.mxu0 0.0
        %3531 = vmatpush1.msra.mxu0 0.0
        %3532 = vmatprep.subr.mxu0 %v261
        %3533 = vmatpush1.msra.mxu0 %v260
        %3534 = vmatprep.subr.mxu0 0.0
        %3535 = vmatpush2.msra.mxu0 0.0
        %3536 = vmatprep.subr.mxu0 0.0
        %3537 = vmatpush2.msra.mxu0 0.0
        %3538 = vmatprep.subr.mxu0 0.0
        %3539 = vmatpush2.msra.mxu0 0.0
        %3540 = vmatprep.subr.mxu0 0.0
        %3541 = vmatpush2.msra.mxu0 0.0
        %3542 = vmatprep.subr.mxu0 0.0
        %3543 = vmatpush2.msra.mxu0 0.0
        %3544 = vmatprep.subr.mxu0 0.0
        %3545 = vmatpush2.msra.mxu0 0.0
        %3546 = vmatprep.subr.mxu0 0.0
        %3547 = vmatpush2.msra.mxu0 0.0
        %3548 = vmatprep.subr.mxu0 0.0
        %3549 = vmatpush2.msra.mxu0 0.0
        %3550 = vmatprep.subr.mxu0 0.0
        %3551 = vmatpush2.msra.mxu0 0.0
        %3552 = vmatprep.subr.mxu0 0.0
        %3553 = vmatpush2.msra.mxu0 0.0
        %3554 = vmatprep.subr.mxu0 0.0
        %3555 = vmatpush2.msra.mxu0 0.0
        %3556 = vmatprep.subr.mxu0 0.0
        %3557 = vmatpush2.msra.mxu0 0.0
        %3558 = vmatprep.subr.mxu0 0.0
        %3559 = vmatpush2.msra.mxu0 0.0
        %3560 = vmatprep.subr.mxu0 0.0
        %3561 = vmatpush2.msra.mxu0 0.0
        %3562 = vmatprep.subr.mxu0 0.0
        %3563 = vmatpush2.msra.mxu0 0.0
        %3564 = vmatprep.subr.mxu0 0.0
        %3565 = vmatpush2.msra.mxu0 0.0
        %3566 = vmatprep.mubr.f32.mxu0 0.0
        %3567 = vmatmul.mubr.f32.gmra.mxu0 %v2367
        %v3568 = vpop.f32.mrf.mxu0
        %v3569 = vadd.f32 %v3492, %v3568
        %v3570 = vpop.f32.mrf.mxu0
        %v3571 = vadd.f32 %v3494, %v3570
        %3572 = vmatprep.mubr.f32.mxu0 0.0
        %3573 = vmatmul.mubr.f32.gmra.mxu0 %v2370
        %v3574 = vpop.f32.mrf.mxu0
        %v3575 = vadd.f32 %v3498, %v3574
        %v3576 = vpop.f32.mrf.mxu0
        %v3577 = vadd.f32 %v3500, %v3576
        %3578 = vdwg.mxu0
        %3579 = vmatprep.subr.mxu0 0.0
        %3580 = vmatpush1.msra.mxu0 0.0
        %3581 = vmatprep.subr.mxu0 0.0
        %3582 = vmatpush1.msra.mxu0 0.0
        %3583 = vmatprep.subr.mxu0 0.0
        %3584 = vmatpush1.msra.mxu0 0.0
        %3585 = vmatprep.subr.mxu0 0.0
        %3586 = vmatpush1.msra.mxu0 0.0
        %3587 = vmatprep.subr.mxu0 0.0
        %3588 = vmatpush1.msra.mxu0 0.0
        %3589 = vmatprep.subr.mxu0 0.0
        %3590 = vmatpush1.msra.mxu0 0.0
        %3591 = vmatprep.subr.mxu0 0.0
        %3592 = vmatpush1.msra.mxu0 0.0
        %3593 = vmatprep.subr.mxu0 0.0
        %3594 = vmatpush1.msra.mxu0 0.0
        %3595 = vmatprep.subr.mxu0 0.0
        %3596 = vmatpush1.msra.mxu0 0.0
        %3597 = vmatprep.subr.mxu0 0.0
        %3598 = vmatpush1.msra.mxu0 0.0
        %3599 = vmatprep.subr.mxu0 0.0
        %3600 = vmatpush1.msra.mxu0 0.0
        %3601 = vmatprep.subr.mxu0 0.0
        %3602 = vmatpush1.msra.mxu0 0.0
        %3603 = vmatprep.subr.mxu0 0.0
        %3604 = vmatpush1.msra.mxu0 0.0
        %3605 = vmatprep.subr.mxu0 0.0
        %3606 = vmatpush1.msra.mxu0 0.0
        %3607 = vmatprep.subr.mxu0 0.0
        %3608 = vmatpush1.msra.mxu0 0.0
        %3609 = vmatprep.subr.mxu0 %v438
        %3610 = vmatpush1.msra.mxu0 %v437
        %3611 = vmatprep.subr.mxu0 0.0
        %3612 = vmatpush2.msra.mxu0 0.0
        %3613 = vmatprep.subr.mxu0 0.0
        %3614 = vmatpush2.msra.mxu0 0.0
        %3615 = vmatprep.subr.mxu0 0.0
        %3616 = vmatpush2.msra.mxu0 0.0
        %3617 = vmatprep.subr.mxu0 0.0
        %3618 = vmatpush2.msra.mxu0 0.0
        %3619 = vmatprep.subr.mxu0 0.0
        %3620 = vmatpush2.msra.mxu0 0.0
        %3621 = vmatprep.subr.mxu0 0.0
        %3622 = vmatpush2.msra.mxu0 0.0
        %3623 = vmatprep.subr.mxu0 0.0
        %3624 = vmatpush2.msra.mxu0 0.0
        %3625 = vmatprep.subr.mxu0 0.0
        %3626 = vmatpush2.msra.mxu0 0.0
        %3627 = vmatprep.subr.mxu0 0.0
        %3628 = vmatpush2.msra.mxu0 0.0
        %3629 = vmatprep.subr.mxu0 0.0
        %3630 = vmatpush2.msra.mxu0 0.0
        %3631 = vmatprep.subr.mxu0 0.0
        %3632 = vmatpush2.msra.mxu0 0.0
        %3633 = vmatprep.subr.mxu0 0.0
        %3634 = vmatpush2.msra.mxu0 0.0
        %3635 = vmatprep.subr.mxu0 0.0
        %3636 = vmatpush2.msra.mxu0 0.0
        %3637 = vmatprep.subr.mxu0 0.0
        %3638 = vmatpush2.msra.mxu0 0.0
        %3639 = vmatprep.subr.mxu0 0.0
        %3640 = vmatpush2.msra.mxu0 0.0
        %3641 = vmatprep.subr.mxu0 0.0
        %3642 = vmatpush2.msra.mxu0 0.0
        %3643 = vmatprep.mubr.f32.mxu0 0.0
        %3644 = vmatmul.mubr.f32.gmra.mxu0 %v2545
        %v3645 = vpop.f32.mrf.mxu0
        %v3646 = vadd.f32 0.0, %v3645
        %v3647 = vpop.f32.mrf.mxu0
        %v3648 = vadd.f32 0.0, %v3647
        %3649 = vmatprep.mubr.f32.mxu0 0.0
        %3650 = vmatmul.mubr.f32.gmra.mxu0 %v2548
        %v3651 = vpop.f32.mrf.mxu0
        %v3652 = vadd.f32 0.0, %v3651
        %v3653 = vpop.f32.mrf.mxu0
        %v3654 = vadd.f32 0.0, %v3653
        %3655 = vdwg.mxu0
        %v3656 = vadd.f32 %v3569, %v3646
        %v3657 = vadd.f32 %v3571, %v3648
        %v3658 = vadd.f32 %v3575, %v3652
        %v3659 = vadd.f32 %v3577, %v3654
        %3660 = vmatprep.subr.mxu0 0.0
        %3661 = vmatpush1.msra.mxu0 0.0
        %3662 = vmatprep.subr.mxu0 0.0
        %3663 = vmatpush1.msra.mxu0 0.0
        %3664 = vmatprep.subr.mxu0 0.0
        %3665 = vmatpush1.msra.mxu0 0.0
        %3666 = vmatprep.subr.mxu0 0.0
        %3667 = vmatpush1.msra.mxu0 0.0
        %3668 = vmatprep.subr.mxu0 0.0
        %3669 = vmatpush1.msra.mxu0 0.0
        %3670 = vmatprep.subr.mxu0 0.0
        %3671 = vmatpush1.msra.mxu0 0.0
        %3672 = vmatprep.subr.mxu0 0.0
        %3673 = vmatpush1.msra.mxu0 0.0
        %3674 = vmatprep.subr.mxu0 0.0
        %3675 = vmatpush1.msra.mxu0 0.0
        %3676 = vmatprep.subr.mxu0 0.0
        %3677 = vmatpush1.msra.mxu0 0.0
        %3678 = vmatprep.subr.mxu0 0.0
        %3679 = vmatpush1.msra.mxu0 0.0
        %3680 = vmatprep.subr.mxu0 0.0
        %3681 = vmatpush1.msra.mxu0 0.0
        %3682 = vmatprep.subr.mxu0 0.0
        %3683 = vmatpush1.msra.mxu0 0.0
        %3684 = vmatprep.subr.mxu0 0.0
        %3685 = vmatpush1.msra.mxu0 0.0
        %3686 = vmatprep.subr.mxu0 0.0
        %3687 = vmatpush1.msra.mxu0 0.0
        %3688 = vmatprep.subr.mxu0 0.0
        %3689 = vmatpush1.msra.mxu0 0.0
        %3690 = vmatprep.subr.mxu0 %v531
        %3691 = vmatpush1.msra.mxu0 %v530
        %3692 = vmatprep.subr.mxu0 0.0
        %3693 = vmatpush2.msra.mxu0 0.0
        %3694 = vmatprep.subr.mxu0 0.0
        %3695 = vmatpush2.msra.mxu0 0.0
        %3696 = vmatprep.subr.mxu0 0.0
        %3697 = vmatpush2.msra.mxu0 0.0
        %3698 = vmatprep.subr.mxu0 0.0
        %3699 = vmatpush2.msra.mxu0 0.0
        %3700 = vmatprep.subr.mxu0 0.0
        %3701 = vmatpush2.msra.mxu0 0.0
        %3702 = vmatprep.subr.mxu0 0.0
        %3703 = vmatpush2.msra.mxu0 0.0
        %3704 = vmatprep.subr.mxu0 0.0
        %3705 = vmatpush2.msra.mxu0 0.0
        %3706 = vmatprep.subr.mxu0 0.0
        %3707 = vmatpush2.msra.mxu0 0.0
        %3708 = vmatprep.subr.mxu0 0.0
        %3709 = vmatpush2.msra.mxu0 0.0
        %3710 = vmatprep.subr.mxu0 0.0
        %3711 = vmatpush2.msra.mxu0 0.0
        %3712 = vmatprep.subr.mxu0 0.0
        %3713 = vmatpush2.msra.mxu0 0.0
        %3714 = vmatprep.subr.mxu0 0.0
        %3715 = vmatpush2.msra.mxu0 0.0
        %3716 = vmatprep.subr.mxu0 0.0
        %3717 = vmatpush2.msra.mxu0 0.0
        %3718 = vmatprep.subr.mxu0 0.0
        %3719 = vmatpush2.msra.mxu0 0.0
        %3720 = vmatprep.subr.mxu0 0.0
        %3721 = vmatpush2.msra.mxu0 0.0
        %3722 = vmatprep.subr.mxu0 0.0
        %3723 = vmatpush2.msra.mxu0 0.0
        %3724 = vmatprep.mubr.f32.mxu0 0.0
        %3725 = vmatmul.mubr.f32.gmra.mxu0 %v3137
        %v3726 = vpop.f32.mrf.mxu0
        %v3727 = vadd.f32 0.0, %v3726
        %v3728 = vpop.f32.mrf.mxu0
        %v3729 = vadd.f32 0.0, %v3728
        %3730 = vmatprep.mubr.f32.mxu0 0.0
        %3731 = vmatmul.mubr.f32.gmra.mxu0 %v3140
        %v3732 = vpop.f32.mrf.mxu0
        %v3733 = vadd.f32 0.0, %v3732
        %v3734 = vpop.f32.mrf.mxu0
        %v3735 = vadd.f32 0.0, %v3734
        %3736 = vdwg.mxu0
        %v3737 = vadd.f32 %v3656, %v3727
        %v3738 = vadd.f32 %v3657, %v3729
        %v3739 = vadd.f32 %v3658, %v3733
        %v3740 = vadd.f32 %v3659, %v3735
        %3741 = vmatprep.subr.mxu0 0.0
        %3742 = vmatpush1.msra.mxu0 0.0
        %3743 = vmatprep.subr.mxu0 0.0
        %3744 = vmatpush1.msra.mxu0 0.0
        %3745 = vmatprep.subr.mxu0 0.0
        %3746 = vmatpush1.msra.mxu0 0.0
        %3747 = vmatprep.subr.mxu0 0.0
        %3748 = vmatpush1.msra.mxu0 0.0
        %3749 = vmatprep.subr.mxu0 0.0
        %3750 = vmatpush1.msra.mxu0 0.0
        %3751 = vmatprep.subr.mxu0 0.0
        %3752 = vmatpush1.msra.mxu0 0.0
        %3753 = vmatprep.subr.mxu0 0.0
        %3754 = vmatpush1.msra.mxu0 0.0
        %3755 = vmatprep.subr.mxu0 0.0
        %3756 = vmatpush1.msra.mxu0 0.0
        %3757 = vmatprep.subr.mxu0 0.0
        %3758 = vmatpush1.msra.mxu0 0.0
        %3759 = vmatprep.subr.mxu0 0.0
        %3760 = vmatpush1.msra.mxu0 0.0
        %3761 = vmatprep.subr.mxu0 0.0
        %3762 = vmatpush1.msra.mxu0 0.0
        %3763 = vmatprep.subr.mxu0 0.0
        %3764 = vmatpush1.msra.mxu0 0.0
        %3765 = vmatprep.subr.mxu0 0.0
        %3766 = vmatpush1.msra.mxu0 0.0
        %3767 = vmatprep.subr.mxu0 0.0
        %3768 = vmatpush1.msra.mxu0 0.0
        %3769 = vmatprep.subr.mxu0 0.0
        %3770 = vmatpush1.msra.mxu0 0.0
        %3771 = vmatprep.subr.mxu0 %v623
        %3772 = vmatpush1.msra.mxu0 %v622
        %3773 = vmatprep.subr.mxu0 0.0
        %3774 = vmatpush2.msra.mxu0 0.0
        %3775 = vmatprep.subr.mxu0 0.0
        %3776 = vmatpush2.msra.mxu0 0.0
        %3777 = vmatprep.subr.mxu0 0.0
        %3778 = vmatpush2.msra.mxu0 0.0
        %3779 = vmatprep.subr.mxu0 0.0
        %3780 = vmatpush2.msra.mxu0 0.0
        %3781 = vmatprep.subr.mxu0 0.0
        %3782 = vmatpush2.msra.mxu0 0.0
        %3783 = vmatprep.subr.mxu0 0.0
        %3784 = vmatpush2.msra.mxu0 0.0
        %3785 = vmatprep.subr.mxu0 0.0
        %3786 = vmatpush2.msra.mxu0 0.0
        %3787 = vmatprep.subr.mxu0 0.0
        %3788 = vmatpush2.msra.mxu0 0.0
        %3789 = vmatprep.subr.mxu0 0.0
        %3790 = vmatpush2.msra.mxu0 0.0
        %3791 = vmatprep.subr.mxu0 0.0
        %3792 = vmatpush2.msra.mxu0 0.0
        %3793 = vmatprep.subr.mxu0 0.0
        %3794 = vmatpush2.msra.mxu0 0.0
        %3795 = vmatprep.subr.mxu0 0.0
        %3796 = vmatpush2.msra.mxu0 0.0
        %3797 = vmatprep.subr.mxu0 0.0
        %3798 = vmatpush2.msra.mxu0 0.0
        %3799 = vmatprep.subr.mxu0 0.0
        %3800 = vmatpush2.msra.mxu0 0.0
        %3801 = vmatprep.subr.mxu0 0.0
        %3802 = vmatpush2.msra.mxu0 0.0
        %3803 = vmatprep.subr.mxu0 0.0
        %3804 = vmatpush2.msra.mxu0 0.0
        %3805 = vmatprep.mubr.f32.mxu0 0.0
        %3806 = vmatmul.mubr.f32.gmra.mxu0 %v3226
        %v3807 = vpop.f32.mrf.mxu0
        %v3808 = vadd.f32 0.0, %v3807
        %v3809 = vpop.f32.mrf.mxu0
        %v3810 = vadd.f32 0.0, %v3809
        %3811 = vmatprep.mubr.f32.mxu0 0.0
        %3812 = vmatmul.mubr.f32.gmra.mxu0 %v3229
        %v3813 = vpop.f32.mrf.mxu0
        %v3814 = vadd.f32 0.0, %v3813
        %v3815 = vpop.f32.mrf.mxu0
        %v3816 = vadd.f32 0.0, %v3815
        %3817 = vdwg.mxu0
        %v3818 = vadd.f32 %v3737, %v3808
        %v3819 = vadd.f32 %v3738, %v3810
        %v3820 = vadd.f32 %v3739, %v3814
        %v3821 = vadd.f32 %v3740, %v3816
        %3822 = vmatprep.subr.mxu0 0.0
        %3823 = vmatpush1.msra.mxu0 0.0
        %3824 = vmatprep.subr.mxu0 0.0
        %3825 = vmatpush1.msra.mxu0 0.0
        %3826 = vmatprep.subr.mxu0 0.0
        %3827 = vmatpush1.msra.mxu0 0.0
        %3828 = vmatprep.subr.mxu0 0.0
        %3829 = vmatpush1.msra.mxu0 0.0
        %3830 = vmatprep.subr.mxu0 0.0
        %3831 = vmatpush1.msra.mxu0 0.0
        %3832 = vmatprep.subr.mxu0 0.0
        %3833 = vmatpush1.msra.mxu0 0.0
        %3834 = vmatprep.subr.mxu0 0.0
        %3835 = vmatpush1.msra.mxu0 0.0
        %3836 = vmatprep.subr.mxu0 0.0
        %3837 = vmatpush1.msra.mxu0 0.0
        %3838 = vmatprep.subr.mxu0 0.0
        %3839 = vmatpush1.msra.mxu0 0.0
        %3840 = vmatprep.subr.mxu0 0.0
        %3841 = vmatpush1.msra.mxu0 0.0
        %3842 = vmatprep.subr.mxu0 0.0
        %3843 = vmatpush1.msra.mxu0 0.0
        %3844 = vmatprep.subr.mxu0 0.0
        %3845 = vmatpush1.msra.mxu0 0.0
        %3846 = vmatprep.subr.mxu0 0.0
        %3847 = vmatpush1.msra.mxu0 0.0
        %3848 = vmatprep.subr.mxu0 0.0
        %3849 = vmatpush1.msra.mxu0 0.0
        %3850 = vmatprep.subr.mxu0 0.0
        %3851 = vmatpush1.msra.mxu0 0.0
        %3852 = vmatprep.subr.mxu0 %v715
        %3853 = vmatpush1.msra.mxu0 %v714
        %3854 = vmatprep.subr.mxu0 0.0
        %3855 = vmatpush2.msra.mxu0 0.0
        %3856 = vmatprep.subr.mxu0 0.0
        %3857 = vmatpush2.msra.mxu0 0.0
        %3858 = vmatprep.subr.mxu0 0.0
        %3859 = vmatpush2.msra.mxu0 0.0
        %3860 = vmatprep.subr.mxu0 0.0
        %3861 = vmatpush2.msra.mxu0 0.0
        %3862 = vmatprep.subr.mxu0 0.0
        %3863 = vmatpush2.msra.mxu0 0.0
        %3864 = vmatprep.subr.mxu0 0.0
        %3865 = vmatpush2.msra.mxu0 0.0
        %3866 = vmatprep.subr.mxu0 0.0
        %3867 = vmatpush2.msra.mxu0 0.0
        %3868 = vmatprep.subr.mxu0 0.0
        %3869 = vmatpush2.msra.mxu0 0.0
        %3870 = vmatprep.subr.mxu0 0.0
        %3871 = vmatpush2.msra.mxu0 0.0
        %3872 = vmatprep.subr.mxu0 0.0
        %3873 = vmatpush2.msra.mxu0 0.0
        %3874 = vmatprep.subr.mxu0 0.0
        %3875 = vmatpush2.msra.mxu0 0.0
        %3876 = vmatprep.subr.mxu0 0.0
        %3877 = vmatpush2.msra.mxu0 0.0
        %3878 = vmatprep.subr.mxu0 0.0
        %3879 = vmatpush2.msra.mxu0 0.0
        %3880 = vmatprep.subr.mxu0 0.0
        %3881 = vmatpush2.msra.mxu0 0.0
        %3882 = vmatprep.subr.mxu0 0.0
        %3883 = vmatpush2.msra.mxu0 0.0
        %3884 = vmatprep.subr.mxu0 0.0
        %3885 = vmatpush2.msra.mxu0 0.0
        %3886 = vmatprep.mubr.f32.mxu0 0.0
        %3887 = vmatmul.mubr.f32.gmra.mxu0 %v3315
        %v3888 = vpop.f32.mrf.mxu0
        %v3889 = vadd.f32 0.0, %v3888
        %v3890 = vpop.f32.mrf.mxu0
        %v3891 = vadd.f32 0.0, %v3890
        %3892 = vmatprep.mubr.f32.mxu0 0.0
        %3893 = vmatmul.mubr.f32.gmra.mxu0 %v3318
        %v3894 = vpop.f32.mrf.mxu0
        %v3895 = vadd.f32 0.0, %v3894
        %v3896 = vpop.f32.mrf.mxu0
        %v3897 = vadd.f32 0.0, %v3896
        %3898 = vdwg.mxu0
        %v3899 = vadd.f32 %v3818, %v3889
        %v3900 = vadd.f32 %v3819, %v3891
        %v3901 = vadd.f32 %v3820, %v3895
        %v3902 = vadd.f32 %v3821, %v3897
        %s3903 = scalar_lea.vmem %s247, 144
        %v3904 = vld [vmem:[%s3903] sm:$0xff]
        %v3905 = vld [vmem:[%s3903 + $0x8] sm:$0xff]
        %v3907 = vsel %vm267, %v3904, 0
        %v3910 = vsel %vm267, %v3905, 0
        %3912 = vmatprep.subr.mxu0 0.0
        %3913 = vmatpush1.msra.mxu0 0.0
        %3914 = vmatprep.subr.mxu0 0.0
        %3915 = vmatpush1.msra.mxu0 0.0
        %3916 = vmatprep.subr.mxu0 0.0
        %3917 = vmatpush1.msra.mxu0 0.0
        %3918 = vmatprep.subr.mxu0 0.0
        %3919 = vmatpush1.msra.mxu0 0.0
        %3920 = vmatprep.subr.mxu0 0.0
        %3921 = vmatpush1.msra.mxu0 0.0
        %3922 = vmatprep.subr.mxu0 0.0
        %3923 = vmatpush1.msra.mxu0 0.0
        %3924 = vmatprep.subr.mxu0 0.0
        %3925 = vmatpush1.msra.mxu0 0.0
        %3926 = vmatprep.subr.mxu0 0.0
        %3927 = vmatpush1.msra.mxu0 0.0
        %3928 = vmatprep.subr.mxu0 0.0
        %3929 = vmatpush1.msra.mxu0 0.0
        %3930 = vmatprep.subr.mxu0 0.0
        %3931 = vmatpush1.msra.mxu0 0.0
        %3932 = vmatprep.subr.mxu0 0.0
        %3933 = vmatpush1.msra.mxu0 0.0
        %3934 = vmatprep.subr.mxu0 0.0
        %3935 = vmatpush1.msra.mxu0 0.0
        %3936 = vmatprep.subr.mxu0 0.0
        %3937 = vmatpush1.msra.mxu0 0.0
        %3938 = vmatprep.subr.mxu0 0.0
        %3939 = vmatpush1.msra.mxu0 0.0
        %3940 = vmatprep.subr.mxu0 0.0
        %3941 = vmatpush1.msra.mxu0 0.0
        %3942 = vmatprep.subr.mxu0 %v808
        %3943 = vmatpush1.msra.mxu0 %v807
        %3944 = vmatprep.subr.mxu0 0.0
        %3945 = vmatpush2.msra.mxu0 0.0
        %3946 = vmatprep.subr.mxu0 0.0
        %3947 = vmatpush2.msra.mxu0 0.0
        %3948 = vmatprep.subr.mxu0 0.0
        %3949 = vmatpush2.msra.mxu0 0.0
        %3950 = vmatprep.subr.mxu0 0.0
        %3951 = vmatpush2.msra.mxu0 0.0
        %3952 = vmatprep.subr.mxu0 0.0
        %3953 = vmatpush2.msra.mxu0 0.0
        %3954 = vmatprep.subr.mxu0 0.0
        %3955 = vmatpush2.msra.mxu0 0.0
        %3956 = vmatprep.subr.mxu0 0.0
        %3957 = vmatpush2.msra.mxu0 0.0
        %3958 = vmatprep.subr.mxu0 0.0
        %3959 = vmatpush2.msra.mxu0 0.0
        %3960 = vmatprep.subr.mxu0 0.0
        %3961 = vmatpush2.msra.mxu0 0.0
        %3962 = vmatprep.subr.mxu0 0.0
        %3963 = vmatpush2.msra.mxu0 0.0
        %3964 = vmatprep.subr.mxu0 0.0
        %3965 = vmatpush2.msra.mxu0 0.0
        %3966 = vmatprep.subr.mxu0 0.0
        %3967 = vmatpush2.msra.mxu0 0.0
        %3968 = vmatprep.subr.mxu0 0.0
        %3969 = vmatpush2.msra.mxu0 0.0
        %3970 = vmatprep.subr.mxu0 0.0
        %3971 = vmatpush2.msra.mxu0 0.0
        %3972 = vmatprep.subr.mxu0 0.0
        %3973 = vmatpush2.msra.mxu0 0.0
        %3974 = vmatprep.subr.mxu0 0.0
        %3975 = vmatpush2.msra.mxu0 0.0
        %3976 = vmatprep.mubr.f32.mxu0 0.0
        %3977 = vmatmul.mubr.f32.gmra.mxu0 %v3907
        %v3978 = vpop.f32.mrf.mxu0
        %v3979 = vadd.f32 0.0, %v3978
        %v3980 = vpop.f32.mrf.mxu0
        %v3981 = vadd.f32 0.0, %v3980
        %3982 = vmatprep.mubr.f32.mxu0 0.0
        %3983 = vmatmul.mubr.f32.gmra.mxu0 %v3910
        %v3984 = vpop.f32.mrf.mxu0
        %v3985 = vadd.f32 0.0, %v3984
        %v3986 = vpop.f32.mrf.mxu0
        %v3987 = vadd.f32 0.0, %v3986
        %3988 = vdwg.mxu0
        %v3989 = vadd.f32 %v3899, %v3979
        %v3990 = vadd.f32 %v3900, %v3981
        %v3991 = vadd.f32 %v3901, %v3985
        %v3992 = vadd.f32 %v3902, %v3987
        %v3993 = vld [vmem:[%s3903 + $0x1] sm:$0xff]
        %v3994 = vld [vmem:[%s3903 + $0x9] sm:$0xff]
        %v3996 = vsel %vm267, %v3993, 0
        %v3999 = vsel %vm267, %v3994, 0
        %4001 = vmatprep.subr.mxu0 0.0
        %4002 = vmatpush1.msra.mxu0 0.0
        %4003 = vmatprep.subr.mxu0 0.0
        %4004 = vmatpush1.msra.mxu0 0.0
        %4005 = vmatprep.subr.mxu0 0.0
        %4006 = vmatpush1.msra.mxu0 0.0
        %4007 = vmatprep.subr.mxu0 0.0
        %4008 = vmatpush1.msra.mxu0 0.0
        %4009 = vmatprep.subr.mxu0 0.0
        %4010 = vmatpush1.msra.mxu0 0.0
        %4011 = vmatprep.subr.mxu0 0.0
        %4012 = vmatpush1.msra.mxu0 0.0
        %4013 = vmatprep.subr.mxu0 0.0
        %4014 = vmatpush1.msra.mxu0 0.0
        %4015 = vmatprep.subr.mxu0 0.0
        %4016 = vmatpush1.msra.mxu0 0.0
        %4017 = vmatprep.subr.mxu0 0.0
        %4018 = vmatpush1.msra.mxu0 0.0
        %4019 = vmatprep.subr.mxu0 0.0
        %4020 = vmatpush1.msra.mxu0 0.0
        %4021 = vmatprep.subr.mxu0 0.0
        %4022 = vmatpush1.msra.mxu0 0.0
        %4023 = vmatprep.subr.mxu0 0.0
        %4024 = vmatpush1.msra.mxu0 0.0
        %4025 = vmatprep.subr.mxu0 0.0
        %4026 = vmatpush1.msra.mxu0 0.0
        %4027 = vmatprep.subr.mxu0 0.0
        %4028 = vmatpush1.msra.mxu0 0.0
        %4029 = vmatprep.subr.mxu0 0.0
        %4030 = vmatpush1.msra.mxu0 0.0
        %4031 = vmatprep.subr.mxu0 %v900
        %4032 = vmatpush1.msra.mxu0 %v899
        %4033 = vmatprep.subr.mxu0 0.0
        %4034 = vmatpush2.msra.mxu0 0.0
        %4035 = vmatprep.subr.mxu0 0.0
        %4036 = vmatpush2.msra.mxu0 0.0
        %4037 = vmatprep.subr.mxu0 0.0
        %4038 = vmatpush2.msra.mxu0 0.0
        %4039 = vmatprep.subr.mxu0 0.0
        %4040 = vmatpush2.msra.mxu0 0.0
        %4041 = vmatprep.subr.mxu0 0.0
        %4042 = vmatpush2.msra.mxu0 0.0
        %4043 = vmatprep.subr.mxu0 0.0
        %4044 = vmatpush2.msra.mxu0 0.0
        %4045 = vmatprep.subr.mxu0 0.0
        %4046 = vmatpush2.msra.mxu0 0.0
        %4047 = vmatprep.subr.mxu0 0.0
        %4048 = vmatpush2.msra.mxu0 0.0
        %4049 = vmatprep.subr.mxu0 0.0
        %4050 = vmatpush2.msra.mxu0 0.0
        %4051 = vmatprep.subr.mxu0 0.0
        %4052 = vmatpush2.msra.mxu0 0.0
        %4053 = vmatprep.subr.mxu0 0.0
        %4054 = vmatpush2.msra.mxu0 0.0
        %4055 = vmatprep.subr.mxu0 0.0
        %4056 = vmatpush2.msra.mxu0 0.0
        %4057 = vmatprep.subr.mxu0 0.0
        %4058 = vmatpush2.msra.mxu0 0.0
        %4059 = vmatprep.subr.mxu0 0.0
        %4060 = vmatpush2.msra.mxu0 0.0
        %4061 = vmatprep.subr.mxu0 0.0
        %4062 = vmatpush2.msra.mxu0 0.0
        %4063 = vmatprep.subr.mxu0 0.0
        %4064 = vmatpush2.msra.mxu0 0.0
        %4065 = vmatprep.mubr.f32.mxu0 0.0
        %4066 = vmatmul.mubr.f32.gmra.mxu0 %v3996
        %v4067 = vpop.f32.mrf.mxu0
        %v4068 = vadd.f32 0.0, %v4067
        %v4069 = vpop.f32.mrf.mxu0
        %v4070 = vadd.f32 0.0, %v4069
        %4071 = vmatprep.mubr.f32.mxu0 0.0
        %4072 = vmatmul.mubr.f32.gmra.mxu0 %v3999
        %v4073 = vpop.f32.mrf.mxu0
        %v4074 = vadd.f32 0.0, %v4073
        %v4075 = vpop.f32.mrf.mxu0
        %v4076 = vadd.f32 0.0, %v4075
        %4077 = vdwg.mxu0
        %v4078 = vadd.f32 %v3989, %v4068
        %v4079 = vadd.f32 %v3990, %v4070
        %v4080 = vadd.f32 %v3991, %v4074
        %v4081 = vadd.f32 %v3992, %v4076
        %v4082 = vld [vmem:[%s3903 + $0x2] sm:$0xff]
        %v4083 = vld [vmem:[%s3903 + $0xa] sm:$0xff]
        %v4085 = vsel %vm267, %v4082, 0
        %v4088 = vsel %vm267, %v4083, 0
        %4090 = vmatprep.subr.mxu0 0.0
        %4091 = vmatpush1.msra.mxu0 0.0
        %4092 = vmatprep.subr.mxu0 0.0
        %4093 = vmatpush1.msra.mxu0 0.0
        %4094 = vmatprep.subr.mxu0 0.0
        %4095 = vmatpush1.msra.mxu0 0.0
        %4096 = vmatprep.subr.mxu0 0.0
        %4097 = vmatpush1.msra.mxu0 0.0
        %4098 = vmatprep.subr.mxu0 0.0
        %4099 = vmatpush1.msra.mxu0 0.0
        %4100 = vmatprep.subr.mxu0 0.0
        %4101 = vmatpush1.msra.mxu0 0.0
        %4102 = vmatprep.subr.mxu0 0.0
        %4103 = vmatpush1.msra.mxu0 0.0
        %4104 = vmatprep.subr.mxu0 0.0
        %4105 = vmatpush1.msra.mxu0 0.0
        %4106 = vmatprep.subr.mxu0 0.0
        %4107 = vmatpush1.msra.mxu0 0.0
        %4108 = vmatprep.subr.mxu0 0.0
        %4109 = vmatpush1.msra.mxu0 0.0
        %4110 = vmatprep.subr.mxu0 0.0
        %4111 = vmatpush1.msra.mxu0 0.0
        %4112 = vmatprep.subr.mxu0 0.0
        %4113 = vmatpush1.msra.mxu0 0.0
        %4114 = vmatprep.subr.mxu0 0.0
        %4115 = vmatpush1.msra.mxu0 0.0
        %4116 = vmatprep.subr.mxu0 0.0
        %4117 = vmatpush1.msra.mxu0 0.0
        %4118 = vmatprep.subr.mxu0 0.0
        %4119 = vmatpush1.msra.mxu0 0.0
        %4120 = vmatprep.subr.mxu0 %v992
        %4121 = vmatpush1.msra.mxu0 %v991
        %4122 = vmatprep.subr.mxu0 0.0
        %4123 = vmatpush2.msra.mxu0 0.0
        %4124 = vmatprep.subr.mxu0 0.0
        %4125 = vmatpush2.msra.mxu0 0.0
        %4126 = vmatprep.subr.mxu0 0.0
        %4127 = vmatpush2.msra.mxu0 0.0
        %4128 = vmatprep.subr.mxu0 0.0
        %4129 = vmatpush2.msra.mxu0 0.0
        %4130 = vmatprep.subr.mxu0 0.0
        %4131 = vmatpush2.msra.mxu0 0.0
        %4132 = vmatprep.subr.mxu0 0.0
        %4133 = vmatpush2.msra.mxu0 0.0
        %4134 = vmatprep.subr.mxu0 0.0
        %4135 = vmatpush2.msra.mxu0 0.0
        %4136 = vmatprep.subr.mxu0 0.0
        %4137 = vmatpush2.msra.mxu0 0.0
        %4138 = vmatprep.subr.mxu0 0.0
        %4139 = vmatpush2.msra.mxu0 0.0
        %4140 = vmatprep.subr.mxu0 0.0
        %4141 = vmatpush2.msra.mxu0 0.0
        %4142 = vmatprep.subr.mxu0 0.0
        %4143 = vmatpush2.msra.mxu0 0.0
        %4144 = vmatprep.subr.mxu0 0.0
        %4145 = vmatpush2.msra.mxu0 0.0
        %4146 = vmatprep.subr.mxu0 0.0
        %4147 = vmatpush2.msra.mxu0 0.0
        %4148 = vmatprep.subr.mxu0 0.0
        %4149 = vmatpush2.msra.mxu0 0.0
        %4150 = vmatprep.subr.mxu0 0.0
        %4151 = vmatpush2.msra.mxu0 0.0
        %4152 = vmatprep.subr.mxu0 0.0
        %4153 = vmatpush2.msra.mxu0 0.0
        %4154 = vmatprep.mubr.f32.mxu0 0.0
        %4155 = vmatmul.mubr.f32.gmra.mxu0 %v4085
        %v4156 = vpop.f32.mrf.mxu0
        %v4157 = vadd.f32 0.0, %v4156
        %v4158 = vpop.f32.mrf.mxu0
        %v4159 = vadd.f32 0.0, %v4158
        %4160 = vmatprep.mubr.f32.mxu0 0.0
        %4161 = vmatmul.mubr.f32.gmra.mxu0 %v4088
        %v4162 = vpop.f32.mrf.mxu0
        %v4163 = vadd.f32 0.0, %v4162
        %v4164 = vpop.f32.mrf.mxu0
        %v4165 = vadd.f32 0.0, %v4164
        %4166 = vdwg.mxu0
        %v4167 = vadd.f32 %v4078, %v4157
        %v4168 = vadd.f32 %v4079, %v4159
        %v4169 = vadd.f32 %v4080, %v4163
        %v4170 = vadd.f32 %v4081, %v4165
        %v4171 = vadd.f32 %v4167, %v1084
        %v4172 = vadd.f32 %v4168, %v1088
        %v4173 = vadd.f32 %v4169, %v1084
        %v4174 = vadd.f32 %v4170, %v1088
        %v4175 = vmax.f32 %v4171, 0.0
        %v4176 = vmax.f32 %v4172, 0.0
        %v4177 = vmax.f32 %v4173, 0.0
        %v4178 = vmax.f32 %v4174, 0.0
        %v4179 = vadd.f32 %v4175, %v4177
        %v4180 = vrot.slane %v4179, 4
        %v4181 = vadd.f32 %v4179, %v4180
        %v4182 = vrot.slane %v4181, 2
        %v4183 = vadd.f32 %v4181, %v4182
        %v4184 = vrot.slane %v4183, 1
        %v4185 = vadd.f32 %v4183, %v4184
        %v4186 = vadd.f32 %v4176, %v4178
        %v4187 = vrot.slane %v4186, 4
        %v4188 = vadd.f32 %v4186, %v4187
        %v4189 = vrot.slane %v4188, 2
        %v4190 = vadd.f32 %v4188, %v4189
        %v4191 = vrot.slane %v4190, 1
        %v4192 = vadd.f32 %v4190, %v4191
        %v4193 = vadd.f32 %v3423, %v4185
        %v4194 = vadd.f32 %v3424, %v4192
        %4195 = vmatprep.subr.mxu0 0.0
        %4196 = vmatpush1.msra.mxu0 0.0
        %4197 = vmatprep.subr.mxu0 0.0
        %4198 = vmatpush1.msra.mxu0 0.0
        %4199 = vmatprep.subr.mxu0 0.0
        %4200 = vmatpush1.msra.mxu0 0.0
        %4201 = vmatprep.subr.mxu0 0.0
        %4202 = vmatpush1.msra.mxu0 0.0
        %4203 = vmatprep.subr.mxu0 0.0
        %4204 = vmatpush1.msra.mxu0 0.0
        %4205 = vmatprep.subr.mxu0 0.0
        %4206 = vmatpush1.msra.mxu0 0.0
        %4207 = vmatprep.subr.mxu0 0.0
        %4208 = vmatpush1.msra.mxu0 0.0
        %4209 = vmatprep.subr.mxu0 0.0
        %4210 = vmatpush1.msra.mxu0 0.0
        %4211 = vmatprep.subr.mxu0 0.0
        %4212 = vmatpush1.msra.mxu0 0.0
        %4213 = vmatprep.subr.mxu0 0.0
        %4214 = vmatpush1.msra.mxu0 0.0
        %4215 = vmatprep.subr.mxu0 0.0
        %4216 = vmatpush1.msra.mxu0 0.0
        %4217 = vmatprep.subr.mxu0 0.0
        %4218 = vmatpush1.msra.mxu0 0.0
        %4219 = vmatprep.subr.mxu0 0.0
        %4220 = vmatpush1.msra.mxu0 0.0
        %4221 = vmatprep.subr.mxu0 0.0
        %4222 = vmatpush1.msra.mxu0 0.0
        %4223 = vmatprep.subr.mxu0 0.0
        %4224 = vmatpush1.msra.mxu0 0.0
        %4225 = vmatprep.subr.mxu0 %v266
        %4226 = vmatpush1.msra.mxu0 %v265
        %4227 = vmatprep.subr.mxu0 0.0
        %4228 = vmatpush2.msra.mxu0 0.0
        %4229 = vmatprep.subr.mxu0 0.0
        %4230 = vmatpush2.msra.mxu0 0.0
        %4231 = vmatprep.subr.mxu0 0.0
        %4232 = vmatpush2.msra.mxu0 0.0
        %4233 = vmatprep.subr.mxu0 0.0
        %4234 = vmatpush2.msra.mxu0 0.0
        %4235 = vmatprep.subr.mxu0 0.0
        %4236 = vmatpush2.msra.mxu0 0.0
        %4237 = vmatprep.subr.mxu0 0.0
        %4238 = vmatpush2.msra.mxu0 0.0
        %4239 = vmatprep.subr.mxu0 0.0
        %4240 = vmatpush2.msra.mxu0 0.0
        %4241 = vmatprep.subr.mxu0 0.0
        %4242 = vmatpush2.msra.mxu0 0.0
        %4243 = vmatprep.subr.mxu0 0.0
        %4244 = vmatpush2.msra.mxu0 0.0
        %4245 = vmatprep.subr.mxu0 0.0
        %4246 = vmatpush2.msra.mxu0 0.0
        %4247 = vmatprep.subr.mxu0 0.0
        %4248 = vmatpush2.msra.mxu0 0.0
        %4249 = vmatprep.subr.mxu0 0.0
        %4250 = vmatpush2.msra.mxu0 0.0
        %4251 = vmatprep.subr.mxu0 0.0
        %4252 = vmatpush2.msra.mxu0 0.0
        %4253 = vmatprep.subr.mxu0 0.0
        %4254 = vmatpush2.msra.mxu0 0.0
        %4255 = vmatprep.subr.mxu0 0.0
        %4256 = vmatpush2.msra.mxu0 0.0
        %4257 = vmatprep.subr.mxu0 0.0
        %4258 = vmatpush2.msra.mxu0 0.0
        %4259 = vmatprep.mubr.f32.mxu0 0.0
        %4260 = vmatmul.mubr.f32.gmra.mxu0 %v3226
        %v4261 = vpop.f32.mrf.mxu0
        %v4262 = vadd.f32 0.0, %v4261
        %v4263 = vpop.f32.mrf.mxu0
        %v4264 = vadd.f32 0.0, %v4263
        %4265 = vmatprep.mubr.f32.mxu0 0.0
        %4266 = vmatmul.mubr.f32.gmra.mxu0 %v3229
        %v4267 = vpop.f32.mrf.mxu0
        %v4268 = vadd.f32 0.0, %v4267
        %v4269 = vpop.f32.mrf.mxu0
        %v4270 = vadd.f32 0.0, %v4269
        %4271 = vdwg.mxu0
        %4272 = vmatprep.subr.mxu0 0.0
        %4273 = vmatpush1.msra.mxu0 0.0
        %4274 = vmatprep.subr.mxu0 0.0
        %4275 = vmatpush1.msra.mxu0 0.0
        %4276 = vmatprep.subr.mxu0 0.0
        %4277 = vmatpush1.msra.mxu0 0.0
        %4278 = vmatprep.subr.mxu0 0.0
        %4279 = vmatpush1.msra.mxu0 0.0
        %4280 = vmatprep.subr.mxu0 0.0
        %4281 = vmatpush1.msra.mxu0 0.0
        %4282 = vmatprep.subr.mxu0 0.0
        %4283 = vmatpush1.msra.mxu0 0.0
        %4284 = vmatprep.subr.mxu0 0.0
        %4285 = vmatpush1.msra.mxu0 0.0
        %4286 = vmatprep.subr.mxu0 0.0
        %4287 = vmatpush1.msra.mxu0 0.0
        %4288 = vmatprep.subr.mxu0 0.0
        %4289 = vmatpush1.msra.mxu0 0.0
        %4290 = vmatprep.subr.mxu0 0.0
        %4291 = vmatpush1.msra.mxu0 0.0
        %4292 = vmatprep.subr.mxu0 0.0
        %4293 = vmatpush1.msra.mxu0 0.0
        %4294 = vmatprep.subr.mxu0 0.0
        %4295 = vmatpush1.msra.mxu0 0.0
        %4296 = vmatprep.subr.mxu0 0.0
        %4297 = vmatpush1.msra.mxu0 0.0
        %4298 = vmatprep.subr.mxu0 0.0
        %4299 = vmatpush1.msra.mxu0 0.0
        %4300 = vmatprep.subr.mxu0 0.0
        %4301 = vmatpush1.msra.mxu0 0.0
        %4302 = vmatprep.subr.mxu0 %v261
        %4303 = vmatpush1.msra.mxu0 %v260
        %4304 = vmatprep.subr.mxu0 0.0
        %4305 = vmatpush2.msra.mxu0 0.0
        %4306 = vmatprep.subr.mxu0 0.0
        %4307 = vmatpush2.msra.mxu0 0.0
        %4308 = vmatprep.subr.mxu0 0.0
        %4309 = vmatpush2.msra.mxu0 0.0
        %4310 = vmatprep.subr.mxu0 0.0
        %4311 = vmatpush2.msra.mxu0 0.0
        %4312 = vmatprep.subr.mxu0 0.0
        %4313 = vmatpush2.msra.mxu0 0.0
        %4314 = vmatprep.subr.mxu0 0.0
        %4315 = vmatpush2.msra.mxu0 0.0
        %4316 = vmatprep.subr.mxu0 0.0
        %4317 = vmatpush2.msra.mxu0 0.0
        %4318 = vmatprep.subr.mxu0 0.0
        %4319 = vmatpush2.msra.mxu0 0.0
        %4320 = vmatprep.subr.mxu0 0.0
        %4321 = vmatpush2.msra.mxu0 0.0
        %4322 = vmatprep.subr.mxu0 0.0
        %4323 = vmatpush2.msra.mxu0 0.0
        %4324 = vmatprep.subr.mxu0 0.0
        %4325 = vmatpush2.msra.mxu0 0.0
        %4326 = vmatprep.subr.mxu0 0.0
        %4327 = vmatpush2.msra.mxu0 0.0
        %4328 = vmatprep.subr.mxu0 0.0
        %4329 = vmatpush2.msra.mxu0 0.0
        %4330 = vmatprep.subr.mxu0 0.0
        %4331 = vmatpush2.msra.mxu0 0.0
        %4332 = vmatprep.subr.mxu0 0.0
        %4333 = vmatpush2.msra.mxu0 0.0
        %4334 = vmatprep.subr.mxu0 0.0
        %4335 = vmatpush2.msra.mxu0 0.0
        %4336 = vmatprep.mubr.f32.mxu0 0.0
        %4337 = vmatmul.mubr.f32.gmra.mxu0 %v3137
        %v4338 = vpop.f32.mrf.mxu0
        %v4339 = vadd.f32 %v4262, %v4338
        %v4340 = vpop.f32.mrf.mxu0
        %v4341 = vadd.f32 %v4264, %v4340
        %4342 = vmatprep.mubr.f32.mxu0 0.0
        %4343 = vmatmul.mubr.f32.gmra.mxu0 %v3140
        %v4344 = vpop.f32.mrf.mxu0
        %v4345 = vadd.f32 %v4268, %v4344
        %v4346 = vpop.f32.mrf.mxu0
        %v4347 = vadd.f32 %v4270, %v4346
        %4348 = vdwg.mxu0
        %4349 = vmatprep.subr.mxu0 0.0
        %4350 = vmatpush1.msra.mxu0 0.0
        %4351 = vmatprep.subr.mxu0 0.0
        %4352 = vmatpush1.msra.mxu0 0.0
        %4353 = vmatprep.subr.mxu0 0.0
        %4354 = vmatpush1.msra.mxu0 0.0
        %4355 = vmatprep.subr.mxu0 0.0
        %4356 = vmatpush1.msra.mxu0 0.0
        %4357 = vmatprep.subr.mxu0 0.0
        %4358 = vmatpush1.msra.mxu0 0.0
        %4359 = vmatprep.subr.mxu0 0.0
        %4360 = vmatpush1.msra.mxu0 0.0
        %4361 = vmatprep.subr.mxu0 0.0
        %4362 = vmatpush1.msra.mxu0 0.0
        %4363 = vmatprep.subr.mxu0 0.0
        %4364 = vmatpush1.msra.mxu0 0.0
        %4365 = vmatprep.subr.mxu0 0.0
        %4366 = vmatpush1.msra.mxu0 0.0
        %4367 = vmatprep.subr.mxu0 0.0
        %4368 = vmatpush1.msra.mxu0 0.0
        %4369 = vmatprep.subr.mxu0 0.0
        %4370 = vmatpush1.msra.mxu0 0.0
        %4371 = vmatprep.subr.mxu0 0.0
        %4372 = vmatpush1.msra.mxu0 0.0
        %4373 = vmatprep.subr.mxu0 0.0
        %4374 = vmatpush1.msra.mxu0 0.0
        %4375 = vmatprep.subr.mxu0 0.0
        %4376 = vmatpush1.msra.mxu0 0.0
        %4377 = vmatprep.subr.mxu0 0.0
        %4378 = vmatpush1.msra.mxu0 0.0
        %4379 = vmatprep.subr.mxu0 %v438
        %4380 = vmatpush1.msra.mxu0 %v437
        %4381 = vmatprep.subr.mxu0 0.0
        %4382 = vmatpush2.msra.mxu0 0.0
        %4383 = vmatprep.subr.mxu0 0.0
        %4384 = vmatpush2.msra.mxu0 0.0
        %4385 = vmatprep.subr.mxu0 0.0
        %4386 = vmatpush2.msra.mxu0 0.0
        %4387 = vmatprep.subr.mxu0 0.0
        %4388 = vmatpush2.msra.mxu0 0.0
        %4389 = vmatprep.subr.mxu0 0.0
        %4390 = vmatpush2.msra.mxu0 0.0
        %4391 = vmatprep.subr.mxu0 0.0
        %4392 = vmatpush2.msra.mxu0 0.0
        %4393 = vmatprep.subr.mxu0 0.0
        %4394 = vmatpush2.msra.mxu0 0.0
        %4395 = vmatprep.subr.mxu0 0.0
        %4396 = vmatpush2.msra.mxu0 0.0
        %4397 = vmatprep.subr.mxu0 0.0
        %4398 = vmatpush2.msra.mxu0 0.0
        %4399 = vmatprep.subr.mxu0 0.0
        %4400 = vmatpush2.msra.mxu0 0.0
        %4401 = vmatprep.subr.mxu0 0.0
        %4402 = vmatpush2.msra.mxu0 0.0
        %4403 = vmatprep.subr.mxu0 0.0
        %4404 = vmatpush2.msra.mxu0 0.0
        %4405 = vmatprep.subr.mxu0 0.0
        %4406 = vmatpush2.msra.mxu0 0.0
        %4407 = vmatprep.subr.mxu0 0.0
        %4408 = vmatpush2.msra.mxu0 0.0
        %4409 = vmatprep.subr.mxu0 0.0
        %4410 = vmatpush2.msra.mxu0 0.0
        %4411 = vmatprep.subr.mxu0 0.0
        %4412 = vmatpush2.msra.mxu0 0.0
        %4413 = vmatprep.mubr.f32.mxu0 0.0
        %4414 = vmatmul.mubr.f32.gmra.mxu0 %v3315
        %v4415 = vpop.f32.mrf.mxu0
        %v4416 = vadd.f32 0.0, %v4415
        %v4417 = vpop.f32.mrf.mxu0
        %v4418 = vadd.f32 0.0, %v4417
        %4419 = vmatprep.mubr.f32.mxu0 0.0
        %4420 = vmatmul.mubr.f32.gmra.mxu0 %v3318
        %v4421 = vpop.f32.mrf.mxu0
        %v4422 = vadd.f32 0.0, %v4421
        %v4423 = vpop.f32.mrf.mxu0
        %v4424 = vadd.f32 0.0, %v4423
        %4425 = vdwg.mxu0
        %v4426 = vadd.f32 %v4339, %v4416
        %v4427 = vadd.f32 %v4341, %v4418
        %v4428 = vadd.f32 %v4345, %v4422
        %v4429 = vadd.f32 %v4347, %v4424
        %4430 = vmatprep.subr.mxu0 0.0
        %4431 = vmatpush1.msra.mxu0 0.0
        %4432 = vmatprep.subr.mxu0 0.0
        %4433 = vmatpush1.msra.mxu0 0.0
        %4434 = vmatprep.subr.mxu0 0.0
        %4435 = vmatpush1.msra.mxu0 0.0
        %4436 = vmatprep.subr.mxu0 0.0
        %4437 = vmatpush1.msra.mxu0 0.0
        %4438 = vmatprep.subr.mxu0 0.0
        %4439 = vmatpush1.msra.mxu0 0.0
        %4440 = vmatprep.subr.mxu0 0.0
        %4441 = vmatpush1.msra.mxu0 0.0
        %4442 = vmatprep.subr.mxu0 0.0
        %4443 = vmatpush1.msra.mxu0 0.0
        %4444 = vmatprep.subr.mxu0 0.0
        %4445 = vmatpush1.msra.mxu0 0.0
        %4446 = vmatprep.subr.mxu0 0.0
        %4447 = vmatpush1.msra.mxu0 0.0
        %4448 = vmatprep.subr.mxu0 0.0
        %4449 = vmatpush1.msra.mxu0 0.0
        %4450 = vmatprep.subr.mxu0 0.0
        %4451 = vmatpush1.msra.mxu0 0.0
        %4452 = vmatprep.subr.mxu0 0.0
        %4453 = vmatpush1.msra.mxu0 0.0
        %4454 = vmatprep.subr.mxu0 0.0
        %4455 = vmatpush1.msra.mxu0 0.0
        %4456 = vmatprep.subr.mxu0 0.0
        %4457 = vmatpush1.msra.mxu0 0.0
        %4458 = vmatprep.subr.mxu0 0.0
        %4459 = vmatpush1.msra.mxu0 0.0
        %4460 = vmatprep.subr.mxu0 %v531
        %4461 = vmatpush1.msra.mxu0 %v530
        %4462 = vmatprep.subr.mxu0 0.0
        %4463 = vmatpush2.msra.mxu0 0.0
        %4464 = vmatprep.subr.mxu0 0.0
        %4465 = vmatpush2.msra.mxu0 0.0
        %4466 = vmatprep.subr.mxu0 0.0
        %4467 = vmatpush2.msra.mxu0 0.0
        %4468 = vmatprep.subr.mxu0 0.0
        %4469 = vmatpush2.msra.mxu0 0.0
        %4470 = vmatprep.subr.mxu0 0.0
        %4471 = vmatpush2.msra.mxu0 0.0
        %4472 = vmatprep.subr.mxu0 0.0
        %4473 = vmatpush2.msra.mxu0 0.0
        %4474 = vmatprep.subr.mxu0 0.0
        %4475 = vmatpush2.msra.mxu0 0.0
        %4476 = vmatprep.subr.mxu0 0.0
        %4477 = vmatpush2.msra.mxu0 0.0
        %4478 = vmatprep.subr.mxu0 0.0
        %4479 = vmatpush2.msra.mxu0 0.0
        %4480 = vmatprep.subr.mxu0 0.0
        %4481 = vmatpush2.msra.mxu0 0.0
        %4482 = vmatprep.subr.mxu0 0.0
        %4483 = vmatpush2.msra.mxu0 0.0
        %4484 = vmatprep.subr.mxu0 0.0
        %4485 = vmatpush2.msra.mxu0 0.0
        %4486 = vmatprep.subr.mxu0 0.0
        %4487 = vmatpush2.msra.mxu0 0.0
        %4488 = vmatprep.subr.mxu0 0.0
        %4489 = vmatpush2.msra.mxu0 0.0
        %4490 = vmatprep.subr.mxu0 0.0
        %4491 = vmatpush2.msra.mxu0 0.0
        %4492 = vmatprep.subr.mxu0 0.0
        %4493 = vmatpush2.msra.mxu0 0.0
        %4494 = vmatprep.mubr.f32.mxu0 0.0
        %4495 = vmatmul.mubr.f32.gmra.mxu0 %v3907
        %v4496 = vpop.f32.mrf.mxu0
        %v4497 = vadd.f32 0.0, %v4496
        %v4498 = vpop.f32.mrf.mxu0
        %v4499 = vadd.f32 0.0, %v4498
        %4500 = vmatprep.mubr.f32.mxu0 0.0
        %4501 = vmatmul.mubr.f32.gmra.mxu0 %v3910
        %v4502 = vpop.f32.mrf.mxu0
        %v4503 = vadd.f32 0.0, %v4502
        %v4504 = vpop.f32.mrf.mxu0
        %v4505 = vadd.f32 0.0, %v4504
        %4506 = vdwg.mxu0
        %v4507 = vadd.f32 %v4426, %v4497
        %v4508 = vadd.f32 %v4427, %v4499
        %v4509 = vadd.f32 %v4428, %v4503
        %v4510 = vadd.f32 %v4429, %v4505
        %4511 = vmatprep.subr.mxu0 0.0
        %4512 = vmatpush1.msra.mxu0 0.0
        %4513 = vmatprep.subr.mxu0 0.0
        %4514 = vmatpush1.msra.mxu0 0.0
        %4515 = vmatprep.subr.mxu0 0.0
        %4516 = vmatpush1.msra.mxu0 0.0
        %4517 = vmatprep.subr.mxu0 0.0
        %4518 = vmatpush1.msra.mxu0 0.0
        %4519 = vmatprep.subr.mxu0 0.0
        %4520 = vmatpush1.msra.mxu0 0.0
        %4521 = vmatprep.subr.mxu0 0.0
        %4522 = vmatpush1.msra.mxu0 0.0
        %4523 = vmatprep.subr.mxu0 0.0
        %4524 = vmatpush1.msra.mxu0 0.0
        %4525 = vmatprep.subr.mxu0 0.0
        %4526 = vmatpush1.msra.mxu0 0.0
        %4527 = vmatprep.subr.mxu0 0.0
        %4528 = vmatpush1.msra.mxu0 0.0
        %4529 = vmatprep.subr.mxu0 0.0
        %4530 = vmatpush1.msra.mxu0 0.0
        %4531 = vmatprep.subr.mxu0 0.0
        %4532 = vmatpush1.msra.mxu0 0.0
        %4533 = vmatprep.subr.mxu0 0.0
        %4534 = vmatpush1.msra.mxu0 0.0
        %4535 = vmatprep.subr.mxu0 0.0
        %4536 = vmatpush1.msra.mxu0 0.0
        %4537 = vmatprep.subr.mxu0 0.0
        %4538 = vmatpush1.msra.mxu0 0.0
        %4539 = vmatprep.subr.mxu0 0.0
        %4540 = vmatpush1.msra.mxu0 0.0
        %4541 = vmatprep.subr.mxu0 %v623
        %4542 = vmatpush1.msra.mxu0 %v622
        %4543 = vmatprep.subr.mxu0 0.0
        %4544 = vmatpush2.msra.mxu0 0.0
        %4545 = vmatprep.subr.mxu0 0.0
        %4546 = vmatpush2.msra.mxu0 0.0
        %4547 = vmatprep.subr.mxu0 0.0
        %4548 = vmatpush2.msra.mxu0 0.0
        %4549 = vmatprep.subr.mxu0 0.0
        %4550 = vmatpush2.msra.mxu0 0.0
        %4551 = vmatprep.subr.mxu0 0.0
        %4552 = vmatpush2.msra.mxu0 0.0
        %4553 = vmatprep.subr.mxu0 0.0
        %4554 = vmatpush2.msra.mxu0 0.0
        %4555 = vmatprep.subr.mxu0 0.0
        %4556 = vmatpush2.msra.mxu0 0.0
        %4557 = vmatprep.subr.mxu0 0.0
        %4558 = vmatpush2.msra.mxu0 0.0
        %4559 = vmatprep.subr.mxu0 0.0
        %4560 = vmatpush2.msra.mxu0 0.0
        %4561 = vmatprep.subr.mxu0 0.0
        %4562 = vmatpush2.msra.mxu0 0.0
        %4563 = vmatprep.subr.mxu0 0.0
        %4564 = vmatpush2.msra.mxu0 0.0
        %4565 = vmatprep.subr.mxu0 0.0
        %4566 = vmatpush2.msra.mxu0 0.0
        %4567 = vmatprep.subr.mxu0 0.0
        %4568 = vmatpush2.msra.mxu0 0.0
        %4569 = vmatprep.subr.mxu0 0.0
        %4570 = vmatpush2.msra.mxu0 0.0
        %4571 = vmatprep.subr.mxu0 0.0
        %4572 = vmatpush2.msra.mxu0 0.0
        %4573 = vmatprep.subr.mxu0 0.0
        %4574 = vmatpush2.msra.mxu0 0.0
        %4575 = vmatprep.mubr.f32.mxu0 0.0
        %4576 = vmatmul.mubr.f32.gmra.mxu0 %v3996
        %v4577 = vpop.f32.mrf.mxu0
        %v4578 = vadd.f32 0.0, %v4577
        %v4579 = vpop.f32.mrf.mxu0
        %v4580 = vadd.f32 0.0, %v4579
        %4581 = vmatprep.mubr.f32.mxu0 0.0
        %4582 = vmatmul.mubr.f32.gmra.mxu0 %v3999
        %v4583 = vpop.f32.mrf.mxu0
        %v4584 = vadd.f32 0.0, %v4583
        %v4585 = vpop.f32.mrf.mxu0
        %v4586 = vadd.f32 0.0, %v4585
        %4587 = vdwg.mxu0
        %v4588 = vadd.f32 %v4507, %v4578
        %v4589 = vadd.f32 %v4508, %v4580
        %v4590 = vadd.f32 %v4509, %v4584
        %v4591 = vadd.f32 %v4510, %v4586
        %4592 = vmatprep.subr.mxu0 0.0
        %4593 = vmatpush1.msra.mxu0 0.0
        %4594 = vmatprep.subr.mxu0 0.0
        %4595 = vmatpush1.msra.mxu0 0.0
        %4596 = vmatprep.subr.mxu0 0.0
        %4597 = vmatpush1.msra.mxu0 0.0
        %4598 = vmatprep.subr.mxu0 0.0
        %4599 = vmatpush1.msra.mxu0 0.0
        %4600 = vmatprep.subr.mxu0 0.0
        %4601 = vmatpush1.msra.mxu0 0.0
        %4602 = vmatprep.subr.mxu0 0.0
        %4603 = vmatpush1.msra.mxu0 0.0
        %4604 = vmatprep.subr.mxu0 0.0
        %4605 = vmatpush1.msra.mxu0 0.0
        %4606 = vmatprep.subr.mxu0 0.0
        %4607 = vmatpush1.msra.mxu0 0.0
        %4608 = vmatprep.subr.mxu0 0.0
        %4609 = vmatpush1.msra.mxu0 0.0
        %4610 = vmatprep.subr.mxu0 0.0
        %4611 = vmatpush1.msra.mxu0 0.0
        %4612 = vmatprep.subr.mxu0 0.0
        %4613 = vmatpush1.msra.mxu0 0.0
        %4614 = vmatprep.subr.mxu0 0.0
        %4615 = vmatpush1.msra.mxu0 0.0
        %4616 = vmatprep.subr.mxu0 0.0
        %4617 = vmatpush1.msra.mxu0 0.0
        %4618 = vmatprep.subr.mxu0 0.0
        %4619 = vmatpush1.msra.mxu0 0.0
        %4620 = vmatprep.subr.mxu0 0.0
        %4621 = vmatpush1.msra.mxu0 0.0
        %4622 = vmatprep.subr.mxu0 %v715
        %4623 = vmatpush1.msra.mxu0 %v714
        %4624 = vmatprep.subr.mxu0 0.0
        %4625 = vmatpush2.msra.mxu0 0.0
        %4626 = vmatprep.subr.mxu0 0.0
        %4627 = vmatpush2.msra.mxu0 0.0
        %4628 = vmatprep.subr.mxu0 0.0
        %4629 = vmatpush2.msra.mxu0 0.0
        %4630 = vmatprep.subr.mxu0 0.0
        %4631 = vmatpush2.msra.mxu0 0.0
        %4632 = vmatprep.subr.mxu0 0.0
        %4633 = vmatpush2.msra.mxu0 0.0
        %4634 = vmatprep.subr.mxu0 0.0
        %4635 = vmatpush2.msra.mxu0 0.0
        %4636 = vmatprep.subr.mxu0 0.0
        %4637 = vmatpush2.msra.mxu0 0.0
        %4638 = vmatprep.subr.mxu0 0.0
        %4639 = vmatpush2.msra.mxu0 0.0
        %4640 = vmatprep.subr.mxu0 0.0
        %4641 = vmatpush2.msra.mxu0 0.0
        %4642 = vmatprep.subr.mxu0 0.0
        %4643 = vmatpush2.msra.mxu0 0.0
        %4644 = vmatprep.subr.mxu0 0.0
        %4645 = vmatpush2.msra.mxu0 0.0
        %4646 = vmatprep.subr.mxu0 0.0
        %4647 = vmatpush2.msra.mxu0 0.0
        %4648 = vmatprep.subr.mxu0 0.0
        %4649 = vmatpush2.msra.mxu0 0.0
        %4650 = vmatprep.subr.mxu0 0.0
        %4651 = vmatpush2.msra.mxu0 0.0
        %4652 = vmatprep.subr.mxu0 0.0
        %4653 = vmatpush2.msra.mxu0 0.0
        %4654 = vmatprep.subr.mxu0 0.0
        %4655 = vmatpush2.msra.mxu0 0.0
        %4656 = vmatprep.mubr.f32.mxu0 0.0
        %4657 = vmatmul.mubr.f32.gmra.mxu0 %v4085
        %v4658 = vpop.f32.mrf.mxu0
        %v4659 = vadd.f32 0.0, %v4658
        %v4660 = vpop.f32.mrf.mxu0
        %v4661 = vadd.f32 0.0, %v4660
        %4662 = vmatprep.mubr.f32.mxu0 0.0
        %4663 = vmatmul.mubr.f32.gmra.mxu0 %v4088
        %v4664 = vpop.f32.mrf.mxu0
        %v4665 = vadd.f32 0.0, %v4664
        %v4666 = vpop.f32.mrf.mxu0
        %v4667 = vadd.f32 0.0, %v4666
        %4668 = vdwg.mxu0
        %v4669 = vadd.f32 %v4588, %v4659
        %v4670 = vadd.f32 %v4589, %v4661
        %v4671 = vadd.f32 %v4590, %v4665
        %v4672 = vadd.f32 %v4591, %v4667
        %s4673 = scalar_lea.vmem %s247, 168
        %v4674 = vld [vmem:[%s4673] sm:$0xff]
        %v4675 = vld [vmem:[%s4673 + $0x8] sm:$0xff]
        %v4677 = vsel %vm267, %v4674, 0
        %v4680 = vsel %vm267, %v4675, 0
        %4682 = vmatprep.subr.mxu0 0.0
        %4683 = vmatpush1.msra.mxu0 0.0
        %4684 = vmatprep.subr.mxu0 0.0
        %4685 = vmatpush1.msra.mxu0 0.0
        %4686 = vmatprep.subr.mxu0 0.0
        %4687 = vmatpush1.msra.mxu0 0.0
        %4688 = vmatprep.subr.mxu0 0.0
        %4689 = vmatpush1.msra.mxu0 0.0
        %4690 = vmatprep.subr.mxu0 0.0
        %4691 = vmatpush1.msra.mxu0 0.0
        %4692 = vmatprep.subr.mxu0 0.0
        %4693 = vmatpush1.msra.mxu0 0.0
        %4694 = vmatprep.subr.mxu0 0.0
        %4695 = vmatpush1.msra.mxu0 0.0
        %4696 = vmatprep.subr.mxu0 0.0
        %4697 = vmatpush1.msra.mxu0 0.0
        %4698 = vmatprep.subr.mxu0 0.0
        %4699 = vmatpush1.msra.mxu0 0.0
        %4700 = vmatprep.subr.mxu0 0.0
        %4701 = vmatpush1.msra.mxu0 0.0
        %4702 = vmatprep.subr.mxu0 0.0
        %4703 = vmatpush1.msra.mxu0 0.0
        %4704 = vmatprep.subr.mxu0 0.0
        %4705 = vmatpush1.msra.mxu0 0.0
        %4706 = vmatprep.subr.mxu0 0.0
        %4707 = vmatpush1.msra.mxu0 0.0
        %4708 = vmatprep.subr.mxu0 0.0
        %4709 = vmatpush1.msra.mxu0 0.0
        %4710 = vmatprep.subr.mxu0 0.0
        %4711 = vmatpush1.msra.mxu0 0.0
        %4712 = vmatprep.subr.mxu0 %v808
        %4713 = vmatpush1.msra.mxu0 %v807
        %4714 = vmatprep.subr.mxu0 0.0
        %4715 = vmatpush2.msra.mxu0 0.0
        %4716 = vmatprep.subr.mxu0 0.0
        %4717 = vmatpush2.msra.mxu0 0.0
        %4718 = vmatprep.subr.mxu0 0.0
        %4719 = vmatpush2.msra.mxu0 0.0
        %4720 = vmatprep.subr.mxu0 0.0
        %4721 = vmatpush2.msra.mxu0 0.0
        %4722 = vmatprep.subr.mxu0 0.0
        %4723 = vmatpush2.msra.mxu0 0.0
        %4724 = vmatprep.subr.mxu0 0.0
        %4725 = vmatpush2.msra.mxu0 0.0
        %4726 = vmatprep.subr.mxu0 0.0
        %4727 = vmatpush2.msra.mxu0 0.0
        %4728 = vmatprep.subr.mxu0 0.0
        %4729 = vmatpush2.msra.mxu0 0.0
        %4730 = vmatprep.subr.mxu0 0.0
        %4731 = vmatpush2.msra.mxu0 0.0
        %4732 = vmatprep.subr.mxu0 0.0
        %4733 = vmatpush2.msra.mxu0 0.0
        %4734 = vmatprep.subr.mxu0 0.0
        %4735 = vmatpush2.msra.mxu0 0.0
        %4736 = vmatprep.subr.mxu0 0.0
        %4737 = vmatpush2.msra.mxu0 0.0
        %4738 = vmatprep.subr.mxu0 0.0
        %4739 = vmatpush2.msra.mxu0 0.0
        %4740 = vmatprep.subr.mxu0 0.0
        %4741 = vmatpush2.msra.mxu0 0.0
        %4742 = vmatprep.subr.mxu0 0.0
        %4743 = vmatpush2.msra.mxu0 0.0
        %4744 = vmatprep.subr.mxu0 0.0
        %4745 = vmatpush2.msra.mxu0 0.0
        %4746 = vmatprep.mubr.f32.mxu0 0.0
        %4747 = vmatmul.mubr.f32.gmra.mxu0 %v4677
        %v4748 = vpop.f32.mrf.mxu0
        %v4749 = vadd.f32 0.0, %v4748
        %v4750 = vpop.f32.mrf.mxu0
        %v4751 = vadd.f32 0.0, %v4750
        %4752 = vmatprep.mubr.f32.mxu0 0.0
        %4753 = vmatmul.mubr.f32.gmra.mxu0 %v4680
        %v4754 = vpop.f32.mrf.mxu0
        %v4755 = vadd.f32 0.0, %v4754
        %v4756 = vpop.f32.mrf.mxu0
        %v4757 = vadd.f32 0.0, %v4756
        %4758 = vdwg.mxu0
        %v4759 = vadd.f32 %v4669, %v4749
        %v4760 = vadd.f32 %v4670, %v4751
        %v4761 = vadd.f32 %v4671, %v4755
        %v4762 = vadd.f32 %v4672, %v4757
        %v4763 = vld [vmem:[%s4673 + $0x1] sm:$0xff]
        %v4764 = vld [vmem:[%s4673 + $0x9] sm:$0xff]
        %v4766 = vsel %vm267, %v4763, 0
        %v4769 = vsel %vm267, %v4764, 0
        %4771 = vmatprep.subr.mxu0 0.0
        %4772 = vmatpush1.msra.mxu0 0.0
        %4773 = vmatprep.subr.mxu0 0.0
        %4774 = vmatpush1.msra.mxu0 0.0
        %4775 = vmatprep.subr.mxu0 0.0
        %4776 = vmatpush1.msra.mxu0 0.0
        %4777 = vmatprep.subr.mxu0 0.0
        %4778 = vmatpush1.msra.mxu0 0.0
        %4779 = vmatprep.subr.mxu0 0.0
        %4780 = vmatpush1.msra.mxu0 0.0
        %4781 = vmatprep.subr.mxu0 0.0
        %4782 = vmatpush1.msra.mxu0 0.0
        %4783 = vmatprep.subr.mxu0 0.0
        %4784 = vmatpush1.msra.mxu0 0.0
        %4785 = vmatprep.subr.mxu0 0.0
        %4786 = vmatpush1.msra.mxu0 0.0
        %4787 = vmatprep.subr.mxu0 0.0
        %4788 = vmatpush1.msra.mxu0 0.0
        %4789 = vmatprep.subr.mxu0 0.0
        %4790 = vmatpush1.msra.mxu0 0.0
        %4791 = vmatprep.subr.mxu0 0.0
        %4792 = vmatpush1.msra.mxu0 0.0
        %4793 = vmatprep.subr.mxu0 0.0
        %4794 = vmatpush1.msra.mxu0 0.0
        %4795 = vmatprep.subr.mxu0 0.0
        %4796 = vmatpush1.msra.mxu0 0.0
        %4797 = vmatprep.subr.mxu0 0.0
        %4798 = vmatpush1.msra.mxu0 0.0
        %4799 = vmatprep.subr.mxu0 0.0
        %4800 = vmatpush1.msra.mxu0 0.0
        %4801 = vmatprep.subr.mxu0 %v900
        %4802 = vmatpush1.msra.mxu0 %v899
        %4803 = vmatprep.subr.mxu0 0.0
        %4804 = vmatpush2.msra.mxu0 0.0
        %4805 = vmatprep.subr.mxu0 0.0
        %4806 = vmatpush2.msra.mxu0 0.0
        %4807 = vmatprep.subr.mxu0 0.0
        %4808 = vmatpush2.msra.mxu0 0.0
        %4809 = vmatprep.subr.mxu0 0.0
        %4810 = vmatpush2.msra.mxu0 0.0
        %4811 = vmatprep.subr.mxu0 0.0
        %4812 = vmatpush2.msra.mxu0 0.0
        %4813 = vmatprep.subr.mxu0 0.0
        %4814 = vmatpush2.msra.mxu0 0.0
        %4815 = vmatprep.subr.mxu0 0.0
        %4816 = vmatpush2.msra.mxu0 0.0
        %4817 = vmatprep.subr.mxu0 0.0
        %4818 = vmatpush2.msra.mxu0 0.0
        %4819 = vmatprep.subr.mxu0 0.0
        %4820 = vmatpush2.msra.mxu0 0.0
        %4821 = vmatprep.subr.mxu0 0.0
        %4822 = vmatpush2.msra.mxu0 0.0
        %4823 = vmatprep.subr.mxu0 0.0
        %4824 = vmatpush2.msra.mxu0 0.0
        %4825 = vmatprep.subr.mxu0 0.0
        %4826 = vmatpush2.msra.mxu0 0.0
        %4827 = vmatprep.subr.mxu0 0.0
        %4828 = vmatpush2.msra.mxu0 0.0
        %4829 = vmatprep.subr.mxu0 0.0
        %4830 = vmatpush2.msra.mxu0 0.0
        %4831 = vmatprep.subr.mxu0 0.0
        %4832 = vmatpush2.msra.mxu0 0.0
        %4833 = vmatprep.subr.mxu0 0.0
        %4834 = vmatpush2.msra.mxu0 0.0
        %4835 = vmatprep.mubr.f32.mxu0 0.0
        %4836 = vmatmul.mubr.f32.gmra.mxu0 %v4766
        %v4837 = vpop.f32.mrf.mxu0
        %v4838 = vadd.f32 0.0, %v4837
        %v4839 = vpop.f32.mrf.mxu0
        %v4840 = vadd.f32 0.0, %v4839
        %4841 = vmatprep.mubr.f32.mxu0 0.0
        %4842 = vmatmul.mubr.f32.gmra.mxu0 %v4769
        %v4843 = vpop.f32.mrf.mxu0
        %v4844 = vadd.f32 0.0, %v4843
        %v4845 = vpop.f32.mrf.mxu0
        %v4846 = vadd.f32 0.0, %v4845
        %4847 = vdwg.mxu0
        %v4848 = vadd.f32 %v4759, %v4838
        %v4849 = vadd.f32 %v4760, %v4840
        %v4850 = vadd.f32 %v4761, %v4844
        %v4851 = vadd.f32 %v4762, %v4846
        %v4852 = vld [vmem:[%s4673 + $0x2] sm:$0xff]
        %v4853 = vld [vmem:[%s4673 + $0xa] sm:$0xff]
        %v4855 = vsel %vm267, %v4852, 0
        %v4858 = vsel %vm267, %v4853, 0
        %4860 = vmatprep.subr.mxu0 0.0
        %4861 = vmatpush1.msra.mxu0 0.0
        %4862 = vmatprep.subr.mxu0 0.0
        %4863 = vmatpush1.msra.mxu0 0.0
        %4864 = vmatprep.subr.mxu0 0.0
        %4865 = vmatpush1.msra.mxu0 0.0
        %4866 = vmatprep.subr.mxu0 0.0
        %4867 = vmatpush1.msra.mxu0 0.0
        %4868 = vmatprep.subr.mxu0 0.0
        %4869 = vmatpush1.msra.mxu0 0.0
        %4870 = vmatprep.subr.mxu0 0.0
        %4871 = vmatpush1.msra.mxu0 0.0
        %4872 = vmatprep.subr.mxu0 0.0
        %4873 = vmatpush1.msra.mxu0 0.0
        %4874 = vmatprep.subr.mxu0 0.0
        %4875 = vmatpush1.msra.mxu0 0.0
        %4876 = vmatprep.subr.mxu0 0.0
        %4877 = vmatpush1.msra.mxu0 0.0
        %4878 = vmatprep.subr.mxu0 0.0
        %4879 = vmatpush1.msra.mxu0 0.0
        %4880 = vmatprep.subr.mxu0 0.0
        %4881 = vmatpush1.msra.mxu0 0.0
        %4882 = vmatprep.subr.mxu0 0.0
        %4883 = vmatpush1.msra.mxu0 0.0
        %4884 = vmatprep.subr.mxu0 0.0
        %4885 = vmatpush1.msra.mxu0 0.0
        %4886 = vmatprep.subr.mxu0 0.0
        %4887 = vmatpush1.msra.mxu0 0.0
        %4888 = vmatprep.subr.mxu0 0.0
        %4889 = vmatpush1.msra.mxu0 0.0
        %4890 = vmatprep.subr.mxu0 %v992
        %4891 = vmatpush1.msra.mxu0 %v991
        %4892 = vmatprep.subr.mxu0 0.0
        %4893 = vmatpush2.msra.mxu0 0.0
        %4894 = vmatprep.subr.mxu0 0.0
        %4895 = vmatpush2.msra.mxu0 0.0
        %4896 = vmatprep.subr.mxu0 0.0
        %4897 = vmatpush2.msra.mxu0 0.0
        %4898 = vmatprep.subr.mxu0 0.0
        %4899 = vmatpush2.msra.mxu0 0.0
        %4900 = vmatprep.subr.mxu0 0.0
        %4901 = vmatpush2.msra.mxu0 0.0
        %4902 = vmatprep.subr.mxu0 0.0
        %4903 = vmatpush2.msra.mxu0 0.0
        %4904 = vmatprep.subr.mxu0 0.0
        %4905 = vmatpush2.msra.mxu0 0.0
        %4906 = vmatprep.subr.mxu0 0.0
        %4907 = vmatpush2.msra.mxu0 0.0
        %4908 = vmatprep.subr.mxu0 0.0
        %4909 = vmatpush2.msra.mxu0 0.0
        %4910 = vmatprep.subr.mxu0 0.0
        %4911 = vmatpush2.msra.mxu0 0.0
        %4912 = vmatprep.subr.mxu0 0.0
        %4913 = vmatpush2.msra.mxu0 0.0
        %4914 = vmatprep.subr.mxu0 0.0
        %4915 = vmatpush2.msra.mxu0 0.0
        %4916 = vmatprep.subr.mxu0 0.0
        %4917 = vmatpush2.msra.mxu0 0.0
        %4918 = vmatprep.subr.mxu0 0.0
        %4919 = vmatpush2.msra.mxu0 0.0
        %4920 = vmatprep.subr.mxu0 0.0
        %4921 = vmatpush2.msra.mxu0 0.0
        %4922 = vmatprep.subr.mxu0 0.0
        %4923 = vmatpush2.msra.mxu0 0.0
        %4924 = vmatprep.mubr.f32.mxu0 0.0
        %4925 = vmatmul.mubr.f32.gmra.mxu0 %v4855
        %v4926 = vpop.f32.mrf.mxu0
        %v4927 = vadd.f32 0.0, %v4926
        %v4928 = vpop.f32.mrf.mxu0
        %v4929 = vadd.f32 0.0, %v4928
        %4930 = vmatprep.mubr.f32.mxu0 0.0
        %4931 = vmatmul.mubr.f32.gmra.mxu0 %v4858
        %v4932 = vpop.f32.mrf.mxu0
        %v4933 = vadd.f32 0.0, %v4932
        %v4934 = vpop.f32.mrf.mxu0
        %v4935 = vadd.f32 0.0, %v4934
        %4936 = vdwg.mxu0
        %v4937 = vadd.f32 %v4848, %v4927
        %v4938 = vadd.f32 %v4849, %v4929
        %v4939 = vadd.f32 %v4850, %v4933
        %v4940 = vadd.f32 %v4851, %v4935
        %v4941 = vadd.f32 %v4937, %v1084
        %v4942 = vadd.f32 %v4938, %v1088
        %v4943 = vadd.f32 %v4939, %v1084
        %v4944 = vadd.f32 %v4940, %v1088
        %v4945 = vmax.f32 %v4941, 0.0
        %v4946 = vmax.f32 %v4942, 0.0
        %v4947 = vmax.f32 %v4943, 0.0
        %v4948 = vmax.f32 %v4944, 0.0
        %v4949 = vadd.f32 %v4945, %v4947
        %v4950 = vrot.slane %v4949, 4
        %v4951 = vadd.f32 %v4949, %v4950
        %v4952 = vrot.slane %v4951, 2
        %v4953 = vadd.f32 %v4951, %v4952
        %v4954 = vrot.slane %v4953, 1
        %v4955 = vadd.f32 %v4953, %v4954
        %v4956 = vadd.f32 %v4946, %v4948
        %v4957 = vrot.slane %v4956, 4
        %v4958 = vadd.f32 %v4956, %v4957
        %v4959 = vrot.slane %v4958, 2
        %v4960 = vadd.f32 %v4958, %v4959
        %v4961 = vrot.slane %v4960, 1
        %v4962 = vadd.f32 %v4960, %v4961
        %v4963 = vadd.f32 %v4193, %v4955
        %v4964 = vadd.f32 %v4194, %v4962
        %4965 = vmatprep.subr.mxu0 0.0
        %4966 = vmatpush1.msra.mxu0 0.0
        %4967 = vmatprep.subr.mxu0 0.0
        %4968 = vmatpush1.msra.mxu0 0.0
        %4969 = vmatprep.subr.mxu0 0.0
        %4970 = vmatpush1.msra.mxu0 0.0
        %4971 = vmatprep.subr.mxu0 0.0
        %4972 = vmatpush1.msra.mxu0 0.0
        %4973 = vmatprep.subr.mxu0 0.0
        %4974 = vmatpush1.msra.mxu0 0.0
        %4975 = vmatprep.subr.mxu0 0.0
        %4976 = vmatpush1.msra.mxu0 0.0
        %4977 = vmatprep.subr.mxu0 0.0
        %4978 = vmatpush1.msra.mxu0 0.0
        %4979 = vmatprep.subr.mxu0 0.0
        %4980 = vmatpush1.msra.mxu0 0.0
        %4981 = vmatprep.subr.mxu0 0.0
        %4982 = vmatpush1.msra.mxu0 0.0
        %4983 = vmatprep.subr.mxu0 0.0
        %4984 = vmatpush1.msra.mxu0 0.0
        %4985 = vmatprep.subr.mxu0 0.0
        %4986 = vmatpush1.msra.mxu0 0.0
        %4987 = vmatprep.subr.mxu0 0.0
        %4988 = vmatpush1.msra.mxu0 0.0
        %4989 = vmatprep.subr.mxu0 0.0
        %4990 = vmatpush1.msra.mxu0 0.0
        %4991 = vmatprep.subr.mxu0 0.0
        %4992 = vmatpush1.msra.mxu0 0.0
        %4993 = vmatprep.subr.mxu0 0.0
        %4994 = vmatpush1.msra.mxu0 0.0
        %4995 = vmatprep.subr.mxu0 %v266
        %4996 = vmatpush1.msra.mxu0 %v265
        %4997 = vmatprep.subr.mxu0 0.0
        %4998 = vmatpush2.msra.mxu0 0.0
        %4999 = vmatprep.subr.mxu0 0.0
        %5000 = vmatpush2.msra.mxu0 0.0
        %5001 = vmatprep.subr.mxu0 0.0
        %5002 = vmatpush2.msra.mxu0 0.0
        %5003 = vmatprep.subr.mxu0 0.0
        %5004 = vmatpush2.msra.mxu0 0.0
        %5005 = vmatprep.subr.mxu0 0.0
        %5006 = vmatpush2.msra.mxu0 0.0
        %5007 = vmatprep.subr.mxu0 0.0
        %5008 = vmatpush2.msra.mxu0 0.0
        %5009 = vmatprep.subr.mxu0 0.0
        %5010 = vmatpush2.msra.mxu0 0.0
        %5011 = vmatprep.subr.mxu0 0.0
        %5012 = vmatpush2.msra.mxu0 0.0
        %5013 = vmatprep.subr.mxu0 0.0
        %5014 = vmatpush2.msra.mxu0 0.0
        %5015 = vmatprep.subr.mxu0 0.0
        %5016 = vmatpush2.msra.mxu0 0.0
        %5017 = vmatprep.subr.mxu0 0.0
        %5018 = vmatpush2.msra.mxu0 0.0
        %5019 = vmatprep.subr.mxu0 0.0
        %5020 = vmatpush2.msra.mxu0 0.0
        %5021 = vmatprep.subr.mxu0 0.0
        %5022 = vmatpush2.msra.mxu0 0.0
        %5023 = vmatprep.subr.mxu0 0.0
        %5024 = vmatpush2.msra.mxu0 0.0
        %5025 = vmatprep.subr.mxu0 0.0
        %5026 = vmatpush2.msra.mxu0 0.0
        %5027 = vmatprep.subr.mxu0 0.0
        %5028 = vmatpush2.msra.mxu0 0.0
        %5029 = vmatprep.mubr.f32.mxu0 0.0
        %5030 = vmatmul.mubr.f32.gmra.mxu0 %v3996
        %v5031 = vpop.f32.mrf.mxu0
        %v5032 = vadd.f32 0.0, %v5031
        %v5033 = vpop.f32.mrf.mxu0
        %v5034 = vadd.f32 0.0, %v5033
        %5035 = vmatprep.mubr.f32.mxu0 0.0
        %5036 = vmatmul.mubr.f32.gmra.mxu0 %v3999
        %v5037 = vpop.f32.mrf.mxu0
        %v5038 = vadd.f32 0.0, %v5037
        %v5039 = vpop.f32.mrf.mxu0
        %v5040 = vadd.f32 0.0, %v5039
        %5041 = vdwg.mxu0
        %5042 = vmatprep.subr.mxu0 0.0
        %5043 = vmatpush1.msra.mxu0 0.0
        %5044 = vmatprep.subr.mxu0 0.0
        %5045 = vmatpush1.msra.mxu0 0.0
        %5046 = vmatprep.subr.mxu0 0.0
        %5047 = vmatpush1.msra.mxu0 0.0
        %5048 = vmatprep.subr.mxu0 0.0
        %5049 = vmatpush1.msra.mxu0 0.0
        %5050 = vmatprep.subr.mxu0 0.0
        %5051 = vmatpush1.msra.mxu0 0.0
        %5052 = vmatprep.subr.mxu0 0.0
        %5053 = vmatpush1.msra.mxu0 0.0
        %5054 = vmatprep.subr.mxu0 0.0
        %5055 = vmatpush1.msra.mxu0 0.0
        %5056 = vmatprep.subr.mxu0 0.0
        %5057 = vmatpush1.msra.mxu0 0.0
        %5058 = vmatprep.subr.mxu0 0.0
        %5059 = vmatpush1.msra.mxu0 0.0
        %5060 = vmatprep.subr.mxu0 0.0
        %5061 = vmatpush1.msra.mxu0 0.0
        %5062 = vmatprep.subr.mxu0 0.0
        %5063 = vmatpush1.msra.mxu0 0.0
        %5064 = vmatprep.subr.mxu0 0.0
        %5065 = vmatpush1.msra.mxu0 0.0
        %5066 = vmatprep.subr.mxu0 0.0
        %5067 = vmatpush1.msra.mxu0 0.0
        %5068 = vmatprep.subr.mxu0 0.0
        %5069 = vmatpush1.msra.mxu0 0.0
        %5070 = vmatprep.subr.mxu0 0.0
        %5071 = vmatpush1.msra.mxu0 0.0
        %5072 = vmatprep.subr.mxu0 %v261
        %5073 = vmatpush1.msra.mxu0 %v260
        %5074 = vmatprep.subr.mxu0 0.0
        %5075 = vmatpush2.msra.mxu0 0.0
        %5076 = vmatprep.subr.mxu0 0.0
        %5077 = vmatpush2.msra.mxu0 0.0
        %5078 = vmatprep.subr.mxu0 0.0
        %5079 = vmatpush2.msra.mxu0 0.0
        %5080 = vmatprep.subr.mxu0 0.0
        %5081 = vmatpush2.msra.mxu0 0.0
        %5082 = vmatprep.subr.mxu0 0.0
        %5083 = vmatpush2.msra.mxu0 0.0
        %5084 = vmatprep.subr.mxu0 0.0
        %5085 = vmatpush2.msra.mxu0 0.0
        %5086 = vmatprep.subr.mxu0 0.0
        %5087 = vmatpush2.msra.mxu0 0.0
        %5088 = vmatprep.subr.mxu0 0.0
        %5089 = vmatpush2.msra.mxu0 0.0
        %5090 = vmatprep.subr.mxu0 0.0
        %5091 = vmatpush2.msra.mxu0 0.0
        %5092 = vmatprep.subr.mxu0 0.0
        %5093 = vmatpush2.msra.mxu0 0.0
        %5094 = vmatprep.subr.mxu0 0.0
        %5095 = vmatpush2.msra.mxu0 0.0
        %5096 = vmatprep.subr.mxu0 0.0
        %5097 = vmatpush2.msra.mxu0 0.0
        %5098 = vmatprep.subr.mxu0 0.0
        %5099 = vmatpush2.msra.mxu0 0.0
        %5100 = vmatprep.subr.mxu0 0.0
        %5101 = vmatpush2.msra.mxu0 0.0
        %5102 = vmatprep.subr.mxu0 0.0
        %5103 = vmatpush2.msra.mxu0 0.0
        %5104 = vmatprep.subr.mxu0 0.0
        %5105 = vmatpush2.msra.mxu0 0.0
        %5106 = vmatprep.mubr.f32.mxu0 0.0
        %5107 = vmatmul.mubr.f32.gmra.mxu0 %v3907
        %v5108 = vpop.f32.mrf.mxu0
        %v5109 = vadd.f32 %v5032, %v5108
        %v5110 = vpop.f32.mrf.mxu0
        %v5111 = vadd.f32 %v5034, %v5110
        %5112 = vmatprep.mubr.f32.mxu0 0.0
        %5113 = vmatmul.mubr.f32.gmra.mxu0 %v3910
        %v5114 = vpop.f32.mrf.mxu0
        %v5115 = vadd.f32 %v5038, %v5114
        %v5116 = vpop.f32.mrf.mxu0
        %v5117 = vadd.f32 %v5040, %v5116
        %5118 = vdwg.mxu0
        %5119 = vmatprep.subr.mxu0 0.0
        %5120 = vmatpush1.msra.mxu0 0.0
        %5121 = vmatprep.subr.mxu0 0.0
        %5122 = vmatpush1.msra.mxu0 0.0
        %5123 = vmatprep.subr.mxu0 0.0
        %5124 = vmatpush1.msra.mxu0 0.0
        %5125 = vmatprep.subr.mxu0 0.0
        %5126 = vmatpush1.msra.mxu0 0.0
        %5127 = vmatprep.subr.mxu0 0.0
        %5128 = vmatpush1.msra.mxu0 0.0
        %5129 = vmatprep.subr.mxu0 0.0
        %5130 = vmatpush1.msra.mxu0 0.0
        %5131 = vmatprep.subr.mxu0 0.0
        %5132 = vmatpush1.msra.mxu0 0.0
        %5133 = vmatprep.subr.mxu0 0.0
        %5134 = vmatpush1.msra.mxu0 0.0
        %5135 = vmatprep.subr.mxu0 0.0
        %5136 = vmatpush1.msra.mxu0 0.0
        %5137 = vmatprep.subr.mxu0 0.0
        %5138 = vmatpush1.msra.mxu0 0.0
        %5139 = vmatprep.subr.mxu0 0.0
        %5140 = vmatpush1.msra.mxu0 0.0
        %5141 = vmatprep.subr.mxu0 0.0
        %5142 = vmatpush1.msra.mxu0 0.0
        %5143 = vmatprep.subr.mxu0 0.0
        %5144 = vmatpush1.msra.mxu0 0.0
        %5145 = vmatprep.subr.mxu0 0.0
        %5146 = vmatpush1.msra.mxu0 0.0
        %5147 = vmatprep.subr.mxu0 0.0
        %5148 = vmatpush1.msra.mxu0 0.0
        %5149 = vmatprep.subr.mxu0 %v438
        %5150 = vmatpush1.msra.mxu0 %v437
        %5151 = vmatprep.subr.mxu0 0.0
        %5152 = vmatpush2.msra.mxu0 0.0
        %5153 = vmatprep.subr.mxu0 0.0
        %5154 = vmatpush2.msra.mxu0 0.0
        %5155 = vmatprep.subr.mxu0 0.0
        %5156 = vmatpush2.msra.mxu0 0.0
        %5157 = vmatprep.subr.mxu0 0.0
        %5158 = vmatpush2.msra.mxu0 0.0
        %5159 = vmatprep.subr.mxu0 0.0
        %5160 = vmatpush2.msra.mxu0 0.0
        %5161 = vmatprep.subr.mxu0 0.0
        %5162 = vmatpush2.msra.mxu0 0.0
        %5163 = vmatprep.subr.mxu0 0.0
        %5164 = vmatpush2.msra.mxu0 0.0
        %5165 = vmatprep.subr.mxu0 0.0
        %5166 = vmatpush2.msra.mxu0 0.0
        %5167 = vmatprep.subr.mxu0 0.0
        %5168 = vmatpush2.msra.mxu0 0.0
        %5169 = vmatprep.subr.mxu0 0.0
        %5170 = vmatpush2.msra.mxu0 0.0
        %5171 = vmatprep.subr.mxu0 0.0
        %5172 = vmatpush2.msra.mxu0 0.0
        %5173 = vmatprep.subr.mxu0 0.0
        %5174 = vmatpush2.msra.mxu0 0.0
        %5175 = vmatprep.subr.mxu0 0.0
        %5176 = vmatpush2.msra.mxu0 0.0
        %5177 = vmatprep.subr.mxu0 0.0
        %5178 = vmatpush2.msra.mxu0 0.0
        %5179 = vmatprep.subr.mxu0 0.0
        %5180 = vmatpush2.msra.mxu0 0.0
        %5181 = vmatprep.subr.mxu0 0.0
        %5182 = vmatpush2.msra.mxu0 0.0
        %5183 = vmatprep.mubr.f32.mxu0 0.0
        %5184 = vmatmul.mubr.f32.gmra.mxu0 %v4085
        %v5185 = vpop.f32.mrf.mxu0
        %v5186 = vadd.f32 0.0, %v5185
        %v5187 = vpop.f32.mrf.mxu0
        %v5188 = vadd.f32 0.0, %v5187
        %5189 = vmatprep.mubr.f32.mxu0 0.0
        %5190 = vmatmul.mubr.f32.gmra.mxu0 %v4088
        %v5191 = vpop.f32.mrf.mxu0
        %v5192 = vadd.f32 0.0, %v5191
        %v5193 = vpop.f32.mrf.mxu0
        %v5194 = vadd.f32 0.0, %v5193
        %5195 = vdwg.mxu0
        %v5196 = vadd.f32 %v5109, %v5186
        %v5197 = vadd.f32 %v5111, %v5188
        %v5198 = vadd.f32 %v5115, %v5192
        %v5199 = vadd.f32 %v5117, %v5194
        %5200 = vmatprep.subr.mxu0 0.0
        %5201 = vmatpush1.msra.mxu0 0.0
        %5202 = vmatprep.subr.mxu0 0.0
        %5203 = vmatpush1.msra.mxu0 0.0
        %5204 = vmatprep.subr.mxu0 0.0
        %5205 = vmatpush1.msra.mxu0 0.0
        %5206 = vmatprep.subr.mxu0 0.0
        %5207 = vmatpush1.msra.mxu0 0.0
        %5208 = vmatprep.subr.mxu0 0.0
        %5209 = vmatpush1.msra.mxu0 0.0
        %5210 = vmatprep.subr.mxu0 0.0
        %5211 = vmatpush1.msra.mxu0 0.0
        %5212 = vmatprep.subr.mxu0 0.0
        %5213 = vmatpush1.msra.mxu0 0.0
        %5214 = vmatprep.subr.mxu0 0.0
        %5215 = vmatpush1.msra.mxu0 0.0
        %5216 = vmatprep.subr.mxu0 0.0
        %5217 = vmatpush1.msra.mxu0 0.0
        %5218 = vmatprep.subr.mxu0 0.0
        %5219 = vmatpush1.msra.mxu0 0.0
        %5220 = vmatprep.subr.mxu0 0.0
        %5221 = vmatpush1.msra.mxu0 0.0
        %5222 = vmatprep.subr.mxu0 0.0
        %5223 = vmatpush1.msra.mxu0 0.0
        %5224 = vmatprep.subr.mxu0 0.0
        %5225 = vmatpush1.msra.mxu0 0.0
        %5226 = vmatprep.subr.mxu0 0.0
        %5227 = vmatpush1.msra.mxu0 0.0
        %5228 = vmatprep.subr.mxu0 0.0
        %5229 = vmatpush1.msra.mxu0 0.0
        %5230 = vmatprep.subr.mxu0 %v531
        %5231 = vmatpush1.msra.mxu0 %v530
        %5232 = vmatprep.subr.mxu0 0.0
        %5233 = vmatpush2.msra.mxu0 0.0
        %5234 = vmatprep.subr.mxu0 0.0
        %5235 = vmatpush2.msra.mxu0 0.0
        %5236 = vmatprep.subr.mxu0 0.0
        %5237 = vmatpush2.msra.mxu0 0.0
        %5238 = vmatprep.subr.mxu0 0.0
        %5239 = vmatpush2.msra.mxu0 0.0
        %5240 = vmatprep.subr.mxu0 0.0
        %5241 = vmatpush2.msra.mxu0 0.0
        %5242 = vmatprep.subr.mxu0 0.0
        %5243 = vmatpush2.msra.mxu0 0.0
        %5244 = vmatprep.subr.mxu0 0.0
        %5245 = vmatpush2.msra.mxu0 0.0
        %5246 = vmatprep.subr.mxu0 0.0
        %5247 = vmatpush2.msra.mxu0 0.0
        %5248 = vmatprep.subr.mxu0 0.0
        %5249 = vmatpush2.msra.mxu0 0.0
        %5250 = vmatprep.subr.mxu0 0.0
        %5251 = vmatpush2.msra.mxu0 0.0
        %5252 = vmatprep.subr.mxu0 0.0
        %5253 = vmatpush2.msra.mxu0 0.0
        %5254 = vmatprep.subr.mxu0 0.0
        %5255 = vmatpush2.msra.mxu0 0.0
        %5256 = vmatprep.subr.mxu0 0.0
        %5257 = vmatpush2.msra.mxu0 0.0
        %5258 = vmatprep.subr.mxu0 0.0
        %5259 = vmatpush2.msra.mxu0 0.0
        %5260 = vmatprep.subr.mxu0 0.0
        %5261 = vmatpush2.msra.mxu0 0.0
        %5262 = vmatprep.subr.mxu0 0.0
        %5263 = vmatpush2.msra.mxu0 0.0
        %5264 = vmatprep.mubr.f32.mxu0 0.0
        %5265 = vmatmul.mubr.f32.gmra.mxu0 %v4677
        %v5266 = vpop.f32.mrf.mxu0
        %v5267 = vadd.f32 0.0, %v5266
        %v5268 = vpop.f32.mrf.mxu0
        %v5269 = vadd.f32 0.0, %v5268
        %5270 = vmatprep.mubr.f32.mxu0 0.0
        %5271 = vmatmul.mubr.f32.gmra.mxu0 %v4680
        %v5272 = vpop.f32.mrf.mxu0
        %v5273 = vadd.f32 0.0, %v5272
        %v5274 = vpop.f32.mrf.mxu0
        %v5275 = vadd.f32 0.0, %v5274
        %5276 = vdwg.mxu0
        %v5277 = vadd.f32 %v5196, %v5267
        %v5278 = vadd.f32 %v5197, %v5269
        %v5279 = vadd.f32 %v5198, %v5273
        %v5280 = vadd.f32 %v5199, %v5275
        %5281 = vmatprep.subr.mxu0 0.0
        %5282 = vmatpush1.msra.mxu0 0.0
        %5283 = vmatprep.subr.mxu0 0.0
        %5284 = vmatpush1.msra.mxu0 0.0
        %5285 = vmatprep.subr.mxu0 0.0
        %5286 = vmatpush1.msra.mxu0 0.0
        %5287 = vmatprep.subr.mxu0 0.0
        %5288 = vmatpush1.msra.mxu0 0.0
        %5289 = vmatprep.subr.mxu0 0.0
        %5290 = vmatpush1.msra.mxu0 0.0
        %5291 = vmatprep.subr.mxu0 0.0
        %5292 = vmatpush1.msra.mxu0 0.0
        %5293 = vmatprep.subr.mxu0 0.0
        %5294 = vmatpush1.msra.mxu0 0.0
        %5295 = vmatprep.subr.mxu0 0.0
        %5296 = vmatpush1.msra.mxu0 0.0
        %5297 = vmatprep.subr.mxu0 0.0
        %5298 = vmatpush1.msra.mxu0 0.0
        %5299 = vmatprep.subr.mxu0 0.0
        %5300 = vmatpush1.msra.mxu0 0.0
        %5301 = vmatprep.subr.mxu0 0.0
        %5302 = vmatpush1.msra.mxu0 0.0
        %5303 = vmatprep.subr.mxu0 0.0
        %5304 = vmatpush1.msra.mxu0 0.0
        %5305 = vmatprep.subr.mxu0 0.0
        %5306 = vmatpush1.msra.mxu0 0.0
        %5307 = vmatprep.subr.mxu0 0.0
        %5308 = vmatpush1.msra.mxu0 0.0
        %5309 = vmatprep.subr.mxu0 0.0
        %5310 = vmatpush1.msra.mxu0 0.0
        %5311 = vmatprep.subr.mxu0 %v623
        %5312 = vmatpush1.msra.mxu0 %v622
        %5313 = vmatprep.subr.mxu0 0.0
        %5314 = vmatpush2.msra.mxu0 0.0
        %5315 = vmatprep.subr.mxu0 0.0
        %5316 = vmatpush2.msra.mxu0 0.0
        %5317 = vmatprep.subr.mxu0 0.0
        %5318 = vmatpush2.msra.mxu0 0.0
        %5319 = vmatprep.subr.mxu0 0.0
        %5320 = vmatpush2.msra.mxu0 0.0
        %5321 = vmatprep.subr.mxu0 0.0
        %5322 = vmatpush2.msra.mxu0 0.0
        %5323 = vmatprep.subr.mxu0 0.0
        %5324 = vmatpush2.msra.mxu0 0.0
        %5325 = vmatprep.subr.mxu0 0.0
        %5326 = vmatpush2.msra.mxu0 0.0
        %5327 = vmatprep.subr.mxu0 0.0
        %5328 = vmatpush2.msra.mxu0 0.0
        %5329 = vmatprep.subr.mxu0 0.0
        %5330 = vmatpush2.msra.mxu0 0.0
        %5331 = vmatprep.subr.mxu0 0.0
        %5332 = vmatpush2.msra.mxu0 0.0
        %5333 = vmatprep.subr.mxu0 0.0
        %5334 = vmatpush2.msra.mxu0 0.0
        %5335 = vmatprep.subr.mxu0 0.0
        %5336 = vmatpush2.msra.mxu0 0.0
        %5337 = vmatprep.subr.mxu0 0.0
        %5338 = vmatpush2.msra.mxu0 0.0
        %5339 = vmatprep.subr.mxu0 0.0
        %5340 = vmatpush2.msra.mxu0 0.0
        %5341 = vmatprep.subr.mxu0 0.0
        %5342 = vmatpush2.msra.mxu0 0.0
        %5343 = vmatprep.subr.mxu0 0.0
        %5344 = vmatpush2.msra.mxu0 0.0
        %5345 = vmatprep.mubr.f32.mxu0 0.0
        %5346 = vmatmul.mubr.f32.gmra.mxu0 %v4766
        %v5347 = vpop.f32.mrf.mxu0
        %v5348 = vadd.f32 0.0, %v5347
        %v5349 = vpop.f32.mrf.mxu0
        %v5350 = vadd.f32 0.0, %v5349
        %5351 = vmatprep.mubr.f32.mxu0 0.0
        %5352 = vmatmul.mubr.f32.gmra.mxu0 %v4769
        %v5353 = vpop.f32.mrf.mxu0
        %v5354 = vadd.f32 0.0, %v5353
        %v5355 = vpop.f32.mrf.mxu0
        %v5356 = vadd.f32 0.0, %v5355
        %5357 = vdwg.mxu0
        %v5358 = vadd.f32 %v5277, %v5348
        %v5359 = vadd.f32 %v5278, %v5350
        %v5360 = vadd.f32 %v5279, %v5354
        %v5361 = vadd.f32 %v5280, %v5356
        %5362 = vmatprep.subr.mxu0 0.0
        %5363 = vmatpush1.msra.mxu0 0.0
        %5364 = vmatprep.subr.mxu0 0.0
        %5365 = vmatpush1.msra.mxu0 0.0
        %5366 = vmatprep.subr.mxu0 0.0
        %5367 = vmatpush1.msra.mxu0 0.0
        %5368 = vmatprep.subr.mxu0 0.0
        %5369 = vmatpush1.msra.mxu0 0.0
        %5370 = vmatprep.subr.mxu0 0.0
        %5371 = vmatpush1.msra.mxu0 0.0
        %5372 = vmatprep.subr.mxu0 0.0
        %5373 = vmatpush1.msra.mxu0 0.0
        %5374 = vmatprep.subr.mxu0 0.0
        %5375 = vmatpush1.msra.mxu0 0.0
        %5376 = vmatprep.subr.mxu0 0.0
        %5377 = vmatpush1.msra.mxu0 0.0
        %5378 = vmatprep.subr.mxu0 0.0
        %5379 = vmatpush1.msra.mxu0 0.0
        %5380 = vmatprep.subr.mxu0 0.0
        %5381 = vmatpush1.msra.mxu0 0.0
        %5382 = vmatprep.subr.mxu0 0.0
        %5383 = vmatpush1.msra.mxu0 0.0
        %5384 = vmatprep.subr.mxu0 0.0
        %5385 = vmatpush1.msra.mxu0 0.0
        %5386 = vmatprep.subr.mxu0 0.0
        %5387 = vmatpush1.msra.mxu0 0.0
        %5388 = vmatprep.subr.mxu0 0.0
        %5389 = vmatpush1.msra.mxu0 0.0
        %5390 = vmatprep.subr.mxu0 0.0
        %5391 = vmatpush1.msra.mxu0 0.0
        %5392 = vmatprep.subr.mxu0 %v715
        %5393 = vmatpush1.msra.mxu0 %v714
        %5394 = vmatprep.subr.mxu0 0.0
        %5395 = vmatpush2.msra.mxu0 0.0
        %5396 = vmatprep.subr.mxu0 0.0
        %5397 = vmatpush2.msra.mxu0 0.0
        %5398 = vmatprep.subr.mxu0 0.0
        %5399 = vmatpush2.msra.mxu0 0.0
        %5400 = vmatprep.subr.mxu0 0.0
        %5401 = vmatpush2.msra.mxu0 0.0
        %5402 = vmatprep.subr.mxu0 0.0
        %5403 = vmatpush2.msra.mxu0 0.0
        %5404 = vmatprep.subr.mxu0 0.0
        %5405 = vmatpush2.msra.mxu0 0.0
        %5406 = vmatprep.subr.mxu0 0.0
        %5407 = vmatpush2.msra.mxu0 0.0
        %5408 = vmatprep.subr.mxu0 0.0
        %5409 = vmatpush2.msra.mxu0 0.0
        %5410 = vmatprep.subr.mxu0 0.0
        %5411 = vmatpush2.msra.mxu0 0.0
        %5412 = vmatprep.subr.mxu0 0.0
        %5413 = vmatpush2.msra.mxu0 0.0
        %5414 = vmatprep.subr.mxu0 0.0
        %5415 = vmatpush2.msra.mxu0 0.0
        %5416 = vmatprep.subr.mxu0 0.0
        %5417 = vmatpush2.msra.mxu0 0.0
        %5418 = vmatprep.subr.mxu0 0.0
        %5419 = vmatpush2.msra.mxu0 0.0
        %5420 = vmatprep.subr.mxu0 0.0
        %5421 = vmatpush2.msra.mxu0 0.0
        %5422 = vmatprep.subr.mxu0 0.0
        %5423 = vmatpush2.msra.mxu0 0.0
        %5424 = vmatprep.subr.mxu0 0.0
        %5425 = vmatpush2.msra.mxu0 0.0
        %5426 = vmatprep.mubr.f32.mxu0 0.0
        %5427 = vmatmul.mubr.f32.gmra.mxu0 %v4855
        %v5428 = vpop.f32.mrf.mxu0
        %v5429 = vadd.f32 0.0, %v5428
        %v5430 = vpop.f32.mrf.mxu0
        %v5431 = vadd.f32 0.0, %v5430
        %5432 = vmatprep.mubr.f32.mxu0 0.0
        %5433 = vmatmul.mubr.f32.gmra.mxu0 %v4858
        %v5434 = vpop.f32.mrf.mxu0
        %v5435 = vadd.f32 0.0, %v5434
        %v5436 = vpop.f32.mrf.mxu0
        %v5437 = vadd.f32 0.0, %v5436
        %5438 = vdwg.mxu0
        %v5439 = vadd.f32 %v5358, %v5429
        %v5440 = vadd.f32 %v5359, %v5431
        %v5441 = vadd.f32 %v5360, %v5435
        %v5442 = vadd.f32 %v5361, %v5437
        %s5443 = scalar_lea.vmem %s247, 192
        %v5444 = vld [vmem:[%s5443] sm:$0xff]
        %v5445 = vld [vmem:[%s5443 + $0x8] sm:$0xff]
        %v5447 = vsel %vm267, %v5444, 0
        %v5450 = vsel %vm267, %v5445, 0
        %5452 = vmatprep.subr.mxu0 0.0
        %5453 = vmatpush1.msra.mxu0 0.0
        %5454 = vmatprep.subr.mxu0 0.0
        %5455 = vmatpush1.msra.mxu0 0.0
        %5456 = vmatprep.subr.mxu0 0.0
        %5457 = vmatpush1.msra.mxu0 0.0
        %5458 = vmatprep.subr.mxu0 0.0
        %5459 = vmatpush1.msra.mxu0 0.0
        %5460 = vmatprep.subr.mxu0 0.0
        %5461 = vmatpush1.msra.mxu0 0.0
        %5462 = vmatprep.subr.mxu0 0.0
        %5463 = vmatpush1.msra.mxu0 0.0
        %5464 = vmatprep.subr.mxu0 0.0
        %5465 = vmatpush1.msra.mxu0 0.0
        %5466 = vmatprep.subr.mxu0 0.0
        %5467 = vmatpush1.msra.mxu0 0.0
        %5468 = vmatprep.subr.mxu0 0.0
        %5469 = vmatpush1.msra.mxu0 0.0
        %5470 = vmatprep.subr.mxu0 0.0
        %5471 = vmatpush1.msra.mxu0 0.0
        %5472 = vmatprep.subr.mxu0 0.0
        %5473 = vmatpush1.msra.mxu0 0.0
        %5474 = vmatprep.subr.mxu0 0.0
        %5475 = vmatpush1.msra.mxu0 0.0
        %5476 = vmatprep.subr.mxu0 0.0
        %5477 = vmatpush1.msra.mxu0 0.0
        %5478 = vmatprep.subr.mxu0 0.0
        %5479 = vmatpush1.msra.mxu0 0.0
        %5480 = vmatprep.subr.mxu0 0.0
        %5481 = vmatpush1.msra.mxu0 0.0
        %5482 = vmatprep.subr.mxu0 %v808
        %5483 = vmatpush1.msra.mxu0 %v807
        %5484 = vmatprep.subr.mxu0 0.0
        %5485 = vmatpush2.msra.mxu0 0.0
        %5486 = vmatprep.subr.mxu0 0.0
        %5487 = vmatpush2.msra.mxu0 0.0
        %5488 = vmatprep.subr.mxu0 0.0
        %5489 = vmatpush2.msra.mxu0 0.0
        %5490 = vmatprep.subr.mxu0 0.0
        %5491 = vmatpush2.msra.mxu0 0.0
        %5492 = vmatprep.subr.mxu0 0.0
        %5493 = vmatpush2.msra.mxu0 0.0
        %5494 = vmatprep.subr.mxu0 0.0
        %5495 = vmatpush2.msra.mxu0 0.0
        %5496 = vmatprep.subr.mxu0 0.0
        %5497 = vmatpush2.msra.mxu0 0.0
        %5498 = vmatprep.subr.mxu0 0.0
        %5499 = vmatpush2.msra.mxu0 0.0
        %5500 = vmatprep.subr.mxu0 0.0
        %5501 = vmatpush2.msra.mxu0 0.0
        %5502 = vmatprep.subr.mxu0 0.0
        %5503 = vmatpush2.msra.mxu0 0.0
        %5504 = vmatprep.subr.mxu0 0.0
        %5505 = vmatpush2.msra.mxu0 0.0
        %5506 = vmatprep.subr.mxu0 0.0
        %5507 = vmatpush2.msra.mxu0 0.0
        %5508 = vmatprep.subr.mxu0 0.0
        %5509 = vmatpush2.msra.mxu0 0.0
        %5510 = vmatprep.subr.mxu0 0.0
        %5511 = vmatpush2.msra.mxu0 0.0
        %5512 = vmatprep.subr.mxu0 0.0
        %5513 = vmatpush2.msra.mxu0 0.0
        %5514 = vmatprep.subr.mxu0 0.0
        %5515 = vmatpush2.msra.mxu0 0.0
        %5516 = vmatprep.mubr.f32.mxu0 0.0
        %5517 = vmatmul.mubr.f32.gmra.mxu0 %v5447
        %v5518 = vpop.f32.mrf.mxu0
        %v5519 = vadd.f32 0.0, %v5518
        %v5520 = vpop.f32.mrf.mxu0
        %v5521 = vadd.f32 0.0, %v5520
        %5522 = vmatprep.mubr.f32.mxu0 0.0
        %5523 = vmatmul.mubr.f32.gmra.mxu0 %v5450
        %v5524 = vpop.f32.mrf.mxu0
        %v5525 = vadd.f32 0.0, %v5524
        %v5526 = vpop.f32.mrf.mxu0
        %v5527 = vadd.f32 0.0, %v5526
        %5528 = vdwg.mxu0
        %v5529 = vadd.f32 %v5439, %v5519
        %v5530 = vadd.f32 %v5440, %v5521
        %v5531 = vadd.f32 %v5441, %v5525
        %v5532 = vadd.f32 %v5442, %v5527
        %v5533 = vld [vmem:[%s5443 + $0x1] sm:$0xff]
        %v5534 = vld [vmem:[%s5443 + $0x9] sm:$0xff]
        %v5536 = vsel %vm267, %v5533, 0
        %v5539 = vsel %vm267, %v5534, 0
        %5541 = vmatprep.subr.mxu0 0.0
        %5542 = vmatpush1.msra.mxu0 0.0
        %5543 = vmatprep.subr.mxu0 0.0
        %5544 = vmatpush1.msra.mxu0 0.0
        %5545 = vmatprep.subr.mxu0 0.0
        %5546 = vmatpush1.msra.mxu0 0.0
        %5547 = vmatprep.subr.mxu0 0.0
        %5548 = vmatpush1.msra.mxu0 0.0
        %5549 = vmatprep.subr.mxu0 0.0
        %5550 = vmatpush1.msra.mxu0 0.0
        %5551 = vmatprep.subr.mxu0 0.0
        %5552 = vmatpush1.msra.mxu0 0.0
        %5553 = vmatprep.subr.mxu0 0.0
        %5554 = vmatpush1.msra.mxu0 0.0
        %5555 = vmatprep.subr.mxu0 0.0
        %5556 = vmatpush1.msra.mxu0 0.0
        %5557 = vmatprep.subr.mxu0 0.0
        %5558 = vmatpush1.msra.mxu0 0.0
        %5559 = vmatprep.subr.mxu0 0.0
        %5560 = vmatpush1.msra.mxu0 0.0
        %5561 = vmatprep.subr.mxu0 0.0
        %5562 = vmatpush1.msra.mxu0 0.0
        %5563 = vmatprep.subr.mxu0 0.0
        %5564 = vmatpush1.msra.mxu0 0.0
        %5565 = vmatprep.subr.mxu0 0.0
        %5566 = vmatpush1.msra.mxu0 0.0
        %5567 = vmatprep.subr.mxu0 0.0
        %5568 = vmatpush1.msra.mxu0 0.0
        %5569 = vmatprep.subr.mxu0 0.0
        %5570 = vmatpush1.msra.mxu0 0.0
        %5571 = vmatprep.subr.mxu0 %v900
        %5572 = vmatpush1.msra.mxu0 %v899
        %5573 = vmatprep.subr.mxu0 0.0
        %5574 = vmatpush2.msra.mxu0 0.0
        %5575 = vmatprep.subr.mxu0 0.0
        %5576 = vmatpush2.msra.mxu0 0.0
        %5577 = vmatprep.subr.mxu0 0.0
        %5578 = vmatpush2.msra.mxu0 0.0
        %5579 = vmatprep.subr.mxu0 0.0
        %5580 = vmatpush2.msra.mxu0 0.0
        %5581 = vmatprep.subr.mxu0 0.0
        %5582 = vmatpush2.msra.mxu0 0.0
        %5583 = vmatprep.subr.mxu0 0.0
        %5584 = vmatpush2.msra.mxu0 0.0
        %5585 = vmatprep.subr.mxu0 0.0
        %5586 = vmatpush2.msra.mxu0 0.0
        %5587 = vmatprep.subr.mxu0 0.0
        %5588 = vmatpush2.msra.mxu0 0.0
        %5589 = vmatprep.subr.mxu0 0.0
        %5590 = vmatpush2.msra.mxu0 0.0
        %5591 = vmatprep.subr.mxu0 0.0
        %5592 = vmatpush2.msra.mxu0 0.0
        %5593 = vmatprep.subr.mxu0 0.0
        %5594 = vmatpush2.msra.mxu0 0.0
        %5595 = vmatprep.subr.mxu0 0.0
        %5596 = vmatpush2.msra.mxu0 0.0
        %5597 = vmatprep.subr.mxu0 0.0
        %5598 = vmatpush2.msra.mxu0 0.0
        %5599 = vmatprep.subr.mxu0 0.0
        %5600 = vmatpush2.msra.mxu0 0.0
        %5601 = vmatprep.subr.mxu0 0.0
        %5602 = vmatpush2.msra.mxu0 0.0
        %5603 = vmatprep.subr.mxu0 0.0
        %5604 = vmatpush2.msra.mxu0 0.0
        %5605 = vmatprep.mubr.f32.mxu0 0.0
        %5606 = vmatmul.mubr.f32.gmra.mxu0 %v5536
        %v5607 = vpop.f32.mrf.mxu0
        %v5608 = vadd.f32 0.0, %v5607
        %v5609 = vpop.f32.mrf.mxu0
        %v5610 = vadd.f32 0.0, %v5609
        %5611 = vmatprep.mubr.f32.mxu0 0.0
        %5612 = vmatmul.mubr.f32.gmra.mxu0 %v5539
        %v5613 = vpop.f32.mrf.mxu0
        %v5614 = vadd.f32 0.0, %v5613
        %v5615 = vpop.f32.mrf.mxu0
        %v5616 = vadd.f32 0.0, %v5615
        %5617 = vdwg.mxu0
        %v5618 = vadd.f32 %v5529, %v5608
        %v5619 = vadd.f32 %v5530, %v5610
        %v5620 = vadd.f32 %v5531, %v5614
        %v5621 = vadd.f32 %v5532, %v5616
        %v5622 = vld [vmem:[%s5443 + $0x2] sm:$0xff]
        %v5623 = vld [vmem:[%s5443 + $0xa] sm:$0xff]
        %v5625 = vsel %vm267, %v5622, 0
        %v5628 = vsel %vm267, %v5623, 0
        %5630 = vmatprep.subr.mxu0 0.0
        %5631 = vmatpush1.msra.mxu0 0.0
        %5632 = vmatprep.subr.mxu0 0.0
        %5633 = vmatpush1.msra.mxu0 0.0
        %5634 = vmatprep.subr.mxu0 0.0
        %5635 = vmatpush1.msra.mxu0 0.0
        %5636 = vmatprep.subr.mxu0 0.0
        %5637 = vmatpush1.msra.mxu0 0.0
        %5638 = vmatprep.subr.mxu0 0.0
        %5639 = vmatpush1.msra.mxu0 0.0
        %5640 = vmatprep.subr.mxu0 0.0
        %5641 = vmatpush1.msra.mxu0 0.0
        %5642 = vmatprep.subr.mxu0 0.0
        %5643 = vmatpush1.msra.mxu0 0.0
        %5644 = vmatprep.subr.mxu0 0.0
        %5645 = vmatpush1.msra.mxu0 0.0
        %5646 = vmatprep.subr.mxu0 0.0
        %5647 = vmatpush1.msra.mxu0 0.0
        %5648 = vmatprep.subr.mxu0 0.0
        %5649 = vmatpush1.msra.mxu0 0.0
        %5650 = vmatprep.subr.mxu0 0.0
        %5651 = vmatpush1.msra.mxu0 0.0
        %5652 = vmatprep.subr.mxu0 0.0
        %5653 = vmatpush1.msra.mxu0 0.0
        %5654 = vmatprep.subr.mxu0 0.0
        %5655 = vmatpush1.msra.mxu0 0.0
        %5656 = vmatprep.subr.mxu0 0.0
        %5657 = vmatpush1.msra.mxu0 0.0
        %5658 = vmatprep.subr.mxu0 0.0
        %5659 = vmatpush1.msra.mxu0 0.0
        %5660 = vmatprep.subr.mxu0 %v992
        %5661 = vmatpush1.msra.mxu0 %v991
        %5662 = vmatprep.subr.mxu0 0.0
        %5663 = vmatpush2.msra.mxu0 0.0
        %5664 = vmatprep.subr.mxu0 0.0
        %5665 = vmatpush2.msra.mxu0 0.0
        %5666 = vmatprep.subr.mxu0 0.0
        %5667 = vmatpush2.msra.mxu0 0.0
        %5668 = vmatprep.subr.mxu0 0.0
        %5669 = vmatpush2.msra.mxu0 0.0
        %5670 = vmatprep.subr.mxu0 0.0
        %5671 = vmatpush2.msra.mxu0 0.0
        %5672 = vmatprep.subr.mxu0 0.0
        %5673 = vmatpush2.msra.mxu0 0.0
        %5674 = vmatprep.subr.mxu0 0.0
        %5675 = vmatpush2.msra.mxu0 0.0
        %5676 = vmatprep.subr.mxu0 0.0
        %5677 = vmatpush2.msra.mxu0 0.0
        %5678 = vmatprep.subr.mxu0 0.0
        %5679 = vmatpush2.msra.mxu0 0.0
        %5680 = vmatprep.subr.mxu0 0.0
        %5681 = vmatpush2.msra.mxu0 0.0
        %5682 = vmatprep.subr.mxu0 0.0
        %5683 = vmatpush2.msra.mxu0 0.0
        %5684 = vmatprep.subr.mxu0 0.0
        %5685 = vmatpush2.msra.mxu0 0.0
        %5686 = vmatprep.subr.mxu0 0.0
        %5687 = vmatpush2.msra.mxu0 0.0
        %5688 = vmatprep.subr.mxu0 0.0
        %5689 = vmatpush2.msra.mxu0 0.0
        %5690 = vmatprep.subr.mxu0 0.0
        %5691 = vmatpush2.msra.mxu0 0.0
        %5692 = vmatprep.subr.mxu0 0.0
        %5693 = vmatpush2.msra.mxu0 0.0
        %5694 = vmatprep.mubr.f32.mxu0 0.0
        %5695 = vmatmul.mubr.f32.gmra.mxu0 %v5625
        %v5696 = vpop.f32.mrf.mxu0
        %v5697 = vadd.f32 0.0, %v5696
        %v5698 = vpop.f32.mrf.mxu0
        %v5699 = vadd.f32 0.0, %v5698
        %5700 = vmatprep.mubr.f32.mxu0 0.0
        %5701 = vmatmul.mubr.f32.gmra.mxu0 %v5628
        %v5702 = vpop.f32.mrf.mxu0
        %v5703 = vadd.f32 0.0, %v5702
        %v5704 = vpop.f32.mrf.mxu0
        %v5705 = vadd.f32 0.0, %v5704
        %5706 = vdwg.mxu0
        %v5707 = vadd.f32 %v5618, %v5697
        %v5708 = vadd.f32 %v5619, %v5699
        %v5709 = vadd.f32 %v5620, %v5703
        %v5710 = vadd.f32 %v5621, %v5705
        %v5711 = vadd.f32 %v5707, %v1084
        %v5712 = vadd.f32 %v5708, %v1088
        %v5713 = vadd.f32 %v5709, %v1084
        %v5714 = vadd.f32 %v5710, %v1088
        %v5715 = vmax.f32 %v5711, 0.0
        %v5716 = vmax.f32 %v5712, 0.0
        %v5717 = vmax.f32 %v5713, 0.0
        %v5718 = vmax.f32 %v5714, 0.0
        %v5719 = vadd.f32 %v5715, %v5717
        %v5720 = vrot.slane %v5719, 4
        %v5721 = vadd.f32 %v5719, %v5720
        %v5722 = vrot.slane %v5721, 2
        %v5723 = vadd.f32 %v5721, %v5722
        %v5724 = vrot.slane %v5723, 1
        %v5725 = vadd.f32 %v5723, %v5724
        %v5726 = vadd.f32 %v5716, %v5718
        %v5727 = vrot.slane %v5726, 4
        %v5728 = vadd.f32 %v5726, %v5727
        %v5729 = vrot.slane %v5728, 2
        %v5730 = vadd.f32 %v5728, %v5729
        %v5731 = vrot.slane %v5730, 1
        %v5732 = vadd.f32 %v5730, %v5731
        %v5733 = vadd.f32 %v4963, %v5725
        %v5734 = vadd.f32 %v4964, %v5732
        %5735 = vmatprep.subr.mxu0 0.0
        %5736 = vmatpush1.msra.mxu0 0.0
        %5737 = vmatprep.subr.mxu0 0.0
        %5738 = vmatpush1.msra.mxu0 0.0
        %5739 = vmatprep.subr.mxu0 0.0
        %5740 = vmatpush1.msra.mxu0 0.0
        %5741 = vmatprep.subr.mxu0 0.0
        %5742 = vmatpush1.msra.mxu0 0.0
        %5743 = vmatprep.subr.mxu0 0.0
        %5744 = vmatpush1.msra.mxu0 0.0
        %5745 = vmatprep.subr.mxu0 0.0
        %5746 = vmatpush1.msra.mxu0 0.0
        %5747 = vmatprep.subr.mxu0 0.0
        %5748 = vmatpush1.msra.mxu0 0.0
        %5749 = vmatprep.subr.mxu0 0.0
        %5750 = vmatpush1.msra.mxu0 0.0
        %5751 = vmatprep.subr.mxu0 0.0
        %5752 = vmatpush1.msra.mxu0 0.0
        %5753 = vmatprep.subr.mxu0 0.0
        %5754 = vmatpush1.msra.mxu0 0.0
        %5755 = vmatprep.subr.mxu0 0.0
        %5756 = vmatpush1.msra.mxu0 0.0
        %5757 = vmatprep.subr.mxu0 0.0
        %5758 = vmatpush1.msra.mxu0 0.0
        %5759 = vmatprep.subr.mxu0 0.0
        %5760 = vmatpush1.msra.mxu0 0.0
        %5761 = vmatprep.subr.mxu0 0.0
        %5762 = vmatpush1.msra.mxu0 0.0
        %5763 = vmatprep.subr.mxu0 0.0
        %5764 = vmatpush1.msra.mxu0 0.0
        %5765 = vmatprep.subr.mxu0 %v266
        %5766 = vmatpush1.msra.mxu0 %v265
        %5767 = vmatprep.subr.mxu0 0.0
        %5768 = vmatpush2.msra.mxu0 0.0
        %5769 = vmatprep.subr.mxu0 0.0
        %5770 = vmatpush2.msra.mxu0 0.0
        %5771 = vmatprep.subr.mxu0 0.0
        %5772 = vmatpush2.msra.mxu0 0.0
        %5773 = vmatprep.subr.mxu0 0.0
        %5774 = vmatpush2.msra.mxu0 0.0
        %5775 = vmatprep.subr.mxu0 0.0
        %5776 = vmatpush2.msra.mxu0 0.0
        %5777 = vmatprep.subr.mxu0 0.0
        %5778 = vmatpush2.msra.mxu0 0.0
        %5779 = vmatprep.subr.mxu0 0.0
        %5780 = vmatpush2.msra.mxu0 0.0
        %5781 = vmatprep.subr.mxu0 0.0
        %5782 = vmatpush2.msra.mxu0 0.0
        %5783 = vmatprep.subr.mxu0 0.0
        %5784 = vmatpush2.msra.mxu0 0.0
        %5785 = vmatprep.subr.mxu0 0.0
        %5786 = vmatpush2.msra.mxu0 0.0
        %5787 = vmatprep.subr.mxu0 0.0
        %5788 = vmatpush2.msra.mxu0 0.0
        %5789 = vmatprep.subr.mxu0 0.0
        %5790 = vmatpush2.msra.mxu0 0.0
        %5791 = vmatprep.subr.mxu0 0.0
        %5792 = vmatpush2.msra.mxu0 0.0
        %5793 = vmatprep.subr.mxu0 0.0
        %5794 = vmatpush2.msra.mxu0 0.0
        %5795 = vmatprep.subr.mxu0 0.0
        %5796 = vmatpush2.msra.mxu0 0.0
        %5797 = vmatprep.subr.mxu0 0.0
        %5798 = vmatpush2.msra.mxu0 0.0
        %5799 = vmatprep.mubr.f32.mxu0 0.0
        %5800 = vmatmul.mubr.f32.gmra.mxu0 %v4766
        %v5801 = vpop.f32.mrf.mxu0
        %v5802 = vadd.f32 0.0, %v5801
        %v5803 = vpop.f32.mrf.mxu0
        %v5804 = vadd.f32 0.0, %v5803
        %5805 = vmatprep.mubr.f32.mxu0 0.0
        %5806 = vmatmul.mubr.f32.gmra.mxu0 %v4769
        %v5807 = vpop.f32.mrf.mxu0
        %v5808 = vadd.f32 0.0, %v5807
        %v5809 = vpop.f32.mrf.mxu0
        %v5810 = vadd.f32 0.0, %v5809
        %5811 = vdwg.mxu0
        %5812 = vmatprep.subr.mxu0 0.0
        %5813 = vmatpush1.msra.mxu0 0.0
        %5814 = vmatprep.subr.mxu0 0.0
        %5815 = vmatpush1.msra.mxu0 0.0
        %5816 = vmatprep.subr.mxu0 0.0
        %5817 = vmatpush1.msra.mxu0 0.0
        %5818 = vmatprep.subr.mxu0 0.0
        %5819 = vmatpush1.msra.mxu0 0.0
        %5820 = vmatprep.subr.mxu0 0.0
        %5821 = vmatpush1.msra.mxu0 0.0
        %5822 = vmatprep.subr.mxu0 0.0
        %5823 = vmatpush1.msra.mxu0 0.0
        %5824 = vmatprep.subr.mxu0 0.0
        %5825 = vmatpush1.msra.mxu0 0.0
        %5826 = vmatprep.subr.mxu0 0.0
        %5827 = vmatpush1.msra.mxu0 0.0
        %5828 = vmatprep.subr.mxu0 0.0
        %5829 = vmatpush1.msra.mxu0 0.0
        %5830 = vmatprep.subr.mxu0 0.0
        %5831 = vmatpush1.msra.mxu0 0.0
        %5832 = vmatprep.subr.mxu0 0.0
        %5833 = vmatpush1.msra.mxu0 0.0
        %5834 = vmatprep.subr.mxu0 0.0
        %5835 = vmatpush1.msra.mxu0 0.0
        %5836 = vmatprep.subr.mxu0 0.0
        %5837 = vmatpush1.msra.mxu0 0.0
        %5838 = vmatprep.subr.mxu0 0.0
        %5839 = vmatpush1.msra.mxu0 0.0
        %5840 = vmatprep.subr.mxu0 0.0
        %5841 = vmatpush1.msra.mxu0 0.0
        %5842 = vmatprep.subr.mxu0 %v261
        %5843 = vmatpush1.msra.mxu0 %v260
        %5844 = vmatprep.subr.mxu0 0.0
        %5845 = vmatpush2.msra.mxu0 0.0
        %5846 = vmatprep.subr.mxu0 0.0
        %5847 = vmatpush2.msra.mxu0 0.0
        %5848 = vmatprep.subr.mxu0 0.0
        %5849 = vmatpush2.msra.mxu0 0.0
        %5850 = vmatprep.subr.mxu0 0.0
        %5851 = vmatpush2.msra.mxu0 0.0
        %5852 = vmatprep.subr.mxu0 0.0
        %5853 = vmatpush2.msra.mxu0 0.0
        %5854 = vmatprep.subr.mxu0 0.0
        %5855 = vmatpush2.msra.mxu0 0.0
        %5856 = vmatprep.subr.mxu0 0.0
        %5857 = vmatpush2.msra.mxu0 0.0
        %5858 = vmatprep.subr.mxu0 0.0
        %5859 = vmatpush2.msra.mxu0 0.0
        %5860 = vmatprep.subr.mxu0 0.0
        %5861 = vmatpush2.msra.mxu0 0.0
        %5862 = vmatprep.subr.mxu0 0.0
        %5863 = vmatpush2.msra.mxu0 0.0
        %5864 = vmatprep.subr.mxu0 0.0
        %5865 = vmatpush2.msra.mxu0 0.0
        %5866 = vmatprep.subr.mxu0 0.0
        %5867 = vmatpush2.msra.mxu0 0.0
        %5868 = vmatprep.subr.mxu0 0.0
        %5869 = vmatpush2.msra.mxu0 0.0
        %5870 = vmatprep.subr.mxu0 0.0
        %5871 = vmatpush2.msra.mxu0 0.0
        %5872 = vmatprep.subr.mxu0 0.0
        %5873 = vmatpush2.msra.mxu0 0.0
        %5874 = vmatprep.subr.mxu0 0.0
        %5875 = vmatpush2.msra.mxu0 0.0
        %5876 = vmatprep.mubr.f32.mxu0 0.0
        %5877 = vmatmul.mubr.f32.gmra.mxu0 %v4677
        %v5878 = vpop.f32.mrf.mxu0
        %v5879 = vadd.f32 %v5802, %v5878
        %v5880 = vpop.f32.mrf.mxu0
        %v5881 = vadd.f32 %v5804, %v5880
        %5882 = vmatprep.mubr.f32.mxu0 0.0
        %5883 = vmatmul.mubr.f32.gmra.mxu0 %v4680
        %v5884 = vpop.f32.mrf.mxu0
        %v5885 = vadd.f32 %v5808, %v5884
        %v5886 = vpop.f32.mrf.mxu0
        %v5887 = vadd.f32 %v5810, %v5886
        %5888 = vdwg.mxu0
        %5889 = vmatprep.subr.mxu0 0.0
        %5890 = vmatpush1.msra.mxu0 0.0
        %5891 = vmatprep.subr.mxu0 0.0
        %5892 = vmatpush1.msra.mxu0 0.0
        %5893 = vmatprep.subr.mxu0 0.0
        %5894 = vmatpush1.msra.mxu0 0.0
        %5895 = vmatprep.subr.mxu0 0.0
        %5896 = vmatpush1.msra.mxu0 0.0
        %5897 = vmatprep.subr.mxu0 0.0
        %5898 = vmatpush1.msra.mxu0 0.0
        %5899 = vmatprep.subr.mxu0 0.0
        %5900 = vmatpush1.msra.mxu0 0.0
        %5901 = vmatprep.subr.mxu0 0.0
        %5902 = vmatpush1.msra.mxu0 0.0
        %5903 = vmatprep.subr.mxu0 0.0
        %5904 = vmatpush1.msra.mxu0 0.0
        %5905 = vmatprep.subr.mxu0 0.0
        %5906 = vmatpush1.msra.mxu0 0.0
        %5907 = vmatprep.subr.mxu0 0.0
        %5908 = vmatpush1.msra.mxu0 0.0
        %5909 = vmatprep.subr.mxu0 0.0
        %5910 = vmatpush1.msra.mxu0 0.0
        %5911 = vmatprep.subr.mxu0 0.0
        %5912 = vmatpush1.msra.mxu0 0.0
        %5913 = vmatprep.subr.mxu0 0.0
        %5914 = vmatpush1.msra.mxu0 0.0
        %5915 = vmatprep.subr.mxu0 0.0
        %5916 = vmatpush1.msra.mxu0 0.0
        %5917 = vmatprep.subr.mxu0 0.0
        %5918 = vmatpush1.msra.mxu0 0.0
        %5919 = vmatprep.subr.mxu0 %v438
        %5920 = vmatpush1.msra.mxu0 %v437
        %5921 = vmatprep.subr.mxu0 0.0
        %5922 = vmatpush2.msra.mxu0 0.0
        %5923 = vmatprep.subr.mxu0 0.0
        %5924 = vmatpush2.msra.mxu0 0.0
        %5925 = vmatprep.subr.mxu0 0.0
        %5926 = vmatpush2.msra.mxu0 0.0
        %5927 = vmatprep.subr.mxu0 0.0
        %5928 = vmatpush2.msra.mxu0 0.0
        %5929 = vmatprep.subr.mxu0 0.0
        %5930 = vmatpush2.msra.mxu0 0.0
        %5931 = vmatprep.subr.mxu0 0.0
        %5932 = vmatpush2.msra.mxu0 0.0
        %5933 = vmatprep.subr.mxu0 0.0
        %5934 = vmatpush2.msra.mxu0 0.0
        %5935 = vmatprep.subr.mxu0 0.0
        %5936 = vmatpush2.msra.mxu0 0.0
        %5937 = vmatprep.subr.mxu0 0.0
        %5938 = vmatpush2.msra.mxu0 0.0
        %5939 = vmatprep.subr.mxu0 0.0
        %5940 = vmatpush2.msra.mxu0 0.0
        %5941 = vmatprep.subr.mxu0 0.0
        %5942 = vmatpush2.msra.mxu0 0.0
        %5943 = vmatprep.subr.mxu0 0.0
        %5944 = vmatpush2.msra.mxu0 0.0
        %5945 = vmatprep.subr.mxu0 0.0
        %5946 = vmatpush2.msra.mxu0 0.0
        %5947 = vmatprep.subr.mxu0 0.0
        %5948 = vmatpush2.msra.mxu0 0.0
        %5949 = vmatprep.subr.mxu0 0.0
        %5950 = vmatpush2.msra.mxu0 0.0
        %5951 = vmatprep.subr.mxu0 0.0
        %5952 = vmatpush2.msra.mxu0 0.0
        %5953 = vmatprep.mubr.f32.mxu0 0.0
        %5954 = vmatmul.mubr.f32.gmra.mxu0 %v4855
        %v5955 = vpop.f32.mrf.mxu0
        %v5956 = vadd.f32 0.0, %v5955
        %v5957 = vpop.f32.mrf.mxu0
        %v5958 = vadd.f32 0.0, %v5957
        %5959 = vmatprep.mubr.f32.mxu0 0.0
        %5960 = vmatmul.mubr.f32.gmra.mxu0 %v4858
        %v5961 = vpop.f32.mrf.mxu0
        %v5962 = vadd.f32 0.0, %v5961
        %v5963 = vpop.f32.mrf.mxu0
        %v5964 = vadd.f32 0.0, %v5963
        %5965 = vdwg.mxu0
        %v5966 = vadd.f32 %v5879, %v5956
        %v5967 = vadd.f32 %v5881, %v5958
        %v5968 = vadd.f32 %v5885, %v5962
        %v5969 = vadd.f32 %v5887, %v5964
        %5970 = vmatprep.subr.mxu0 0.0
        %5971 = vmatpush1.msra.mxu0 0.0
        %5972 = vmatprep.subr.mxu0 0.0
        %5973 = vmatpush1.msra.mxu0 0.0
        %5974 = vmatprep.subr.mxu0 0.0
        %5975 = vmatpush1.msra.mxu0 0.0
        %5976 = vmatprep.subr.mxu0 0.0
        %5977 = vmatpush1.msra.mxu0 0.0
        %5978 = vmatprep.subr.mxu0 0.0
        %5979 = vmatpush1.msra.mxu0 0.0
        %5980 = vmatprep.subr.mxu0 0.0
        %5981 = vmatpush1.msra.mxu0 0.0
        %5982 = vmatprep.subr.mxu0 0.0
        %5983 = vmatpush1.msra.mxu0 0.0
        %5984 = vmatprep.subr.mxu0 0.0
        %5985 = vmatpush1.msra.mxu0 0.0
        %5986 = vmatprep.subr.mxu0 0.0
        %5987 = vmatpush1.msra.mxu0 0.0
        %5988 = vmatprep.subr.mxu0 0.0
        %5989 = vmatpush1.msra.mxu0 0.0
        %5990 = vmatprep.subr.mxu0 0.0
        %5991 = vmatpush1.msra.mxu0 0.0
        %5992 = vmatprep.subr.mxu0 0.0
        %5993 = vmatpush1.msra.mxu0 0.0
        %5994 = vmatprep.subr.mxu0 0.0
        %5995 = vmatpush1.msra.mxu0 0.0
        %5996 = vmatprep.subr.mxu0 0.0
        %5997 = vmatpush1.msra.mxu0 0.0
        %5998 = vmatprep.subr.mxu0 0.0
        %5999 = vmatpush1.msra.mxu0 0.0
        %6000 = vmatprep.subr.mxu0 %v531
        %6001 = vmatpush1.msra.mxu0 %v530
        %6002 = vmatprep.subr.mxu0 0.0
        %6003 = vmatpush2.msra.mxu0 0.0
        %6004 = vmatprep.subr.mxu0 0.0
        %6005 = vmatpush2.msra.mxu0 0.0
        %6006 = vmatprep.subr.mxu0 0.0
        %6007 = vmatpush2.msra.mxu0 0.0
        %6008 = vmatprep.subr.mxu0 0.0
        %6009 = vmatpush2.msra.mxu0 0.0
        %6010 = vmatprep.subr.mxu0 0.0
        %6011 = vmatpush2.msra.mxu0 0.0
        %6012 = vmatprep.subr.mxu0 0.0
        %6013 = vmatpush2.msra.mxu0 0.0
        %6014 = vmatprep.subr.mxu0 0.0
        %6015 = vmatpush2.msra.mxu0 0.0
        %6016 = vmatprep.subr.mxu0 0.0
        %6017 = vmatpush2.msra.mxu0 0.0
        %6018 = vmatprep.subr.mxu0 0.0
        %6019 = vmatpush2.msra.mxu0 0.0
        %6020 = vmatprep.subr.mxu0 0.0
        %6021 = vmatpush2.msra.mxu0 0.0
        %6022 = vmatprep.subr.mxu0 0.0
        %6023 = vmatpush2.msra.mxu0 0.0
        %6024 = vmatprep.subr.mxu0 0.0
        %6025 = vmatpush2.msra.mxu0 0.0
        %6026 = vmatprep.subr.mxu0 0.0
        %6027 = vmatpush2.msra.mxu0 0.0
        %6028 = vmatprep.subr.mxu0 0.0
        %6029 = vmatpush2.msra.mxu0 0.0
        %6030 = vmatprep.subr.mxu0 0.0
        %6031 = vmatpush2.msra.mxu0 0.0
        %6032 = vmatprep.subr.mxu0 0.0
        %6033 = vmatpush2.msra.mxu0 0.0
        %6034 = vmatprep.mubr.f32.mxu0 0.0
        %6035 = vmatmul.mubr.f32.gmra.mxu0 %v5447
        %v6036 = vpop.f32.mrf.mxu0
        %v6037 = vadd.f32 0.0, %v6036
        %v6038 = vpop.f32.mrf.mxu0
        %v6039 = vadd.f32 0.0, %v6038
        %6040 = vmatprep.mubr.f32.mxu0 0.0
        %6041 = vmatmul.mubr.f32.gmra.mxu0 %v5450
        %v6042 = vpop.f32.mrf.mxu0
        %v6043 = vadd.f32 0.0, %v6042
        %v6044 = vpop.f32.mrf.mxu0
        %v6045 = vadd.f32 0.0, %v6044
        %6046 = vdwg.mxu0
        %v6047 = vadd.f32 %v5966, %v6037
        %v6048 = vadd.f32 %v5967, %v6039
        %v6049 = vadd.f32 %v5968, %v6043
        %v6050 = vadd.f32 %v5969, %v6045
        %6051 = vmatprep.subr.mxu0 0.0
        %6052 = vmatpush1.msra.mxu0 0.0
        %6053 = vmatprep.subr.mxu0 0.0
        %6054 = vmatpush1.msra.mxu0 0.0
        %6055 = vmatprep.subr.mxu0 0.0
        %6056 = vmatpush1.msra.mxu0 0.0
        %6057 = vmatprep.subr.mxu0 0.0
        %6058 = vmatpush1.msra.mxu0 0.0
        %6059 = vmatprep.subr.mxu0 0.0
        %6060 = vmatpush1.msra.mxu0 0.0
        %6061 = vmatprep.subr.mxu0 0.0
        %6062 = vmatpush1.msra.mxu0 0.0
        %6063 = vmatprep.subr.mxu0 0.0
        %6064 = vmatpush1.msra.mxu0 0.0
        %6065 = vmatprep.subr.mxu0 0.0
        %6066 = vmatpush1.msra.mxu0 0.0
        %6067 = vmatprep.subr.mxu0 0.0
        %6068 = vmatpush1.msra.mxu0 0.0
        %6069 = vmatprep.subr.mxu0 0.0
        %6070 = vmatpush1.msra.mxu0 0.0
        %6071 = vmatprep.subr.mxu0 0.0
        %6072 = vmatpush1.msra.mxu0 0.0
        %6073 = vmatprep.subr.mxu0 0.0
        %6074 = vmatpush1.msra.mxu0 0.0
        %6075 = vmatprep.subr.mxu0 0.0
        %6076 = vmatpush1.msra.mxu0 0.0
        %6077 = vmatprep.subr.mxu0 0.0
        %6078 = vmatpush1.msra.mxu0 0.0
        %6079 = vmatprep.subr.mxu0 0.0
        %6080 = vmatpush1.msra.mxu0 0.0
        %6081 = vmatprep.subr.mxu0 %v623
        %6082 = vmatpush1.msra.mxu0 %v622
        %6083 = vmatprep.subr.mxu0 0.0
        %6084 = vmatpush2.msra.mxu0 0.0
        %6085 = vmatprep.subr.mxu0 0.0
        %6086 = vmatpush2.msra.mxu0 0.0
        %6087 = vmatprep.subr.mxu0 0.0
        %6088 = vmatpush2.msra.mxu0 0.0
        %6089 = vmatprep.subr.mxu0 0.0
        %6090 = vmatpush2.msra.mxu0 0.0
        %6091 = vmatprep.subr.mxu0 0.0
        %6092 = vmatpush2.msra.mxu0 0.0
        %6093 = vmatprep.subr.mxu0 0.0
        %6094 = vmatpush2.msra.mxu0 0.0
        %6095 = vmatprep.subr.mxu0 0.0
        %6096 = vmatpush2.msra.mxu0 0.0
        %6097 = vmatprep.subr.mxu0 0.0
        %6098 = vmatpush2.msra.mxu0 0.0
        %6099 = vmatprep.subr.mxu0 0.0
        %6100 = vmatpush2.msra.mxu0 0.0
        %6101 = vmatprep.subr.mxu0 0.0
        %6102 = vmatpush2.msra.mxu0 0.0
        %6103 = vmatprep.subr.mxu0 0.0
        %6104 = vmatpush2.msra.mxu0 0.0
        %6105 = vmatprep.subr.mxu0 0.0
        %6106 = vmatpush2.msra.mxu0 0.0
        %6107 = vmatprep.subr.mxu0 0.0
        %6108 = vmatpush2.msra.mxu0 0.0
        %6109 = vmatprep.subr.mxu0 0.0
        %6110 = vmatpush2.msra.mxu0 0.0
        %6111 = vmatprep.subr.mxu0 0.0
        %6112 = vmatpush2.msra.mxu0 0.0
        %6113 = vmatprep.subr.mxu0 0.0
        %6114 = vmatpush2.msra.mxu0 0.0
        %6115 = vmatprep.mubr.f32.mxu0 0.0
        %6116 = vmatmul.mubr.f32.gmra.mxu0 %v5536
        %v6117 = vpop.f32.mrf.mxu0
        %v6118 = vadd.f32 0.0, %v6117
        %v6119 = vpop.f32.mrf.mxu0
        %v6120 = vadd.f32 0.0, %v6119
        %6121 = vmatprep.mubr.f32.mxu0 0.0
        %6122 = vmatmul.mubr.f32.gmra.mxu0 %v5539
        %v6123 = vpop.f32.mrf.mxu0
        %v6124 = vadd.f32 0.0, %v6123
        %v6125 = vpop.f32.mrf.mxu0
        %v6126 = vadd.f32 0.0, %v6125
        %6127 = vdwg.mxu0
        %v6128 = vadd.f32 %v6047, %v6118
        %v6129 = vadd.f32 %v6048, %v6120
        %v6130 = vadd.f32 %v6049, %v6124
        %v6131 = vadd.f32 %v6050, %v6126
        %6132 = vmatprep.subr.mxu0 0.0
        %6133 = vmatpush1.msra.mxu0 0.0
        %6134 = vmatprep.subr.mxu0 0.0
        %6135 = vmatpush1.msra.mxu0 0.0
        %6136 = vmatprep.subr.mxu0 0.0
        %6137 = vmatpush1.msra.mxu0 0.0
        %6138 = vmatprep.subr.mxu0 0.0
        %6139 = vmatpush1.msra.mxu0 0.0
        %6140 = vmatprep.subr.mxu0 0.0
        %6141 = vmatpush1.msra.mxu0 0.0
        %6142 = vmatprep.subr.mxu0 0.0
        %6143 = vmatpush1.msra.mxu0 0.0
        %6144 = vmatprep.subr.mxu0 0.0
        %6145 = vmatpush1.msra.mxu0 0.0
        %6146 = vmatprep.subr.mxu0 0.0
        %6147 = vmatpush1.msra.mxu0 0.0
        %6148 = vmatprep.subr.mxu0 0.0
        %6149 = vmatpush1.msra.mxu0 0.0
        %6150 = vmatprep.subr.mxu0 0.0
        %6151 = vmatpush1.msra.mxu0 0.0
        %6152 = vmatprep.subr.mxu0 0.0
        %6153 = vmatpush1.msra.mxu0 0.0
        %6154 = vmatprep.subr.mxu0 0.0
        %6155 = vmatpush1.msra.mxu0 0.0
        %6156 = vmatprep.subr.mxu0 0.0
        %6157 = vmatpush1.msra.mxu0 0.0
        %6158 = vmatprep.subr.mxu0 0.0
        %6159 = vmatpush1.msra.mxu0 0.0
        %6160 = vmatprep.subr.mxu0 0.0
        %6161 = vmatpush1.msra.mxu0 0.0
        %6162 = vmatprep.subr.mxu0 %v715
        %6163 = vmatpush1.msra.mxu0 %v714
        %6164 = vmatprep.subr.mxu0 0.0
        %6165 = vmatpush2.msra.mxu0 0.0
        %6166 = vmatprep.subr.mxu0 0.0
        %6167 = vmatpush2.msra.mxu0 0.0
        %6168 = vmatprep.subr.mxu0 0.0
        %6169 = vmatpush2.msra.mxu0 0.0
        %6170 = vmatprep.subr.mxu0 0.0
        %6171 = vmatpush2.msra.mxu0 0.0
        %6172 = vmatprep.subr.mxu0 0.0
        %6173 = vmatpush2.msra.mxu0 0.0
        %6174 = vmatprep.subr.mxu0 0.0
        %6175 = vmatpush2.msra.mxu0 0.0
        %6176 = vmatprep.subr.mxu0 0.0
        %6177 = vmatpush2.msra.mxu0 0.0
        %6178 = vmatprep.subr.mxu0 0.0
        %6179 = vmatpush2.msra.mxu0 0.0
        %6180 = vmatprep.subr.mxu0 0.0
        %6181 = vmatpush2.msra.mxu0 0.0
        %6182 = vmatprep.subr.mxu0 0.0
        %6183 = vmatpush2.msra.mxu0 0.0
        %6184 = vmatprep.subr.mxu0 0.0
        %6185 = vmatpush2.msra.mxu0 0.0
        %6186 = vmatprep.subr.mxu0 0.0
        %6187 = vmatpush2.msra.mxu0 0.0
        %6188 = vmatprep.subr.mxu0 0.0
        %6189 = vmatpush2.msra.mxu0 0.0
        %6190 = vmatprep.subr.mxu0 0.0
        %6191 = vmatpush2.msra.mxu0 0.0
        %6192 = vmatprep.subr.mxu0 0.0
        %6193 = vmatpush2.msra.mxu0 0.0
        %6194 = vmatprep.subr.mxu0 0.0
        %6195 = vmatpush2.msra.mxu0 0.0
        %6196 = vmatprep.mubr.f32.mxu0 0.0
        %6197 = vmatmul.mubr.f32.gmra.mxu0 %v5625
        %v6198 = vpop.f32.mrf.mxu0
        %v6199 = vadd.f32 0.0, %v6198
        %v6200 = vpop.f32.mrf.mxu0
        %v6201 = vadd.f32 0.0, %v6200
        %6202 = vmatprep.mubr.f32.mxu0 0.0
        %6203 = vmatmul.mubr.f32.gmra.mxu0 %v5628
        %v6204 = vpop.f32.mrf.mxu0
        %v6205 = vadd.f32 0.0, %v6204
        %v6206 = vpop.f32.mrf.mxu0
        %v6207 = vadd.f32 0.0, %v6206
        %6208 = vdwg.mxu0
        %v6209 = vadd.f32 %v6128, %v6199
        %v6210 = vadd.f32 %v6129, %v6201
        %v6211 = vadd.f32 %v6130, %v6205
        %v6212 = vadd.f32 %v6131, %v6207
        %s6213 = scalar_lea.vmem %s247, 216
        %v6214 = vld [vmem:[%s6213] sm:$0xff]
        %v6215 = vld [vmem:[%s6213 + $0x8] sm:$0xff]
        %v6217 = vsel %vm267, %v6214, 0
        %v6220 = vsel %vm267, %v6215, 0
        %6222 = vmatprep.subr.mxu0 0.0
        %6223 = vmatpush1.msra.mxu0 0.0
        %6224 = vmatprep.subr.mxu0 0.0
        %6225 = vmatpush1.msra.mxu0 0.0
        %6226 = vmatprep.subr.mxu0 0.0
        %6227 = vmatpush1.msra.mxu0 0.0
        %6228 = vmatprep.subr.mxu0 0.0
        %6229 = vmatpush1.msra.mxu0 0.0
        %6230 = vmatprep.subr.mxu0 0.0
        %6231 = vmatpush1.msra.mxu0 0.0
        %6232 = vmatprep.subr.mxu0 0.0
        %6233 = vmatpush1.msra.mxu0 0.0
        %6234 = vmatprep.subr.mxu0 0.0
        %6235 = vmatpush1.msra.mxu0 0.0
        %6236 = vmatprep.subr.mxu0 0.0
        %6237 = vmatpush1.msra.mxu0 0.0
        %6238 = vmatprep.subr.mxu0 0.0
        %6239 = vmatpush1.msra.mxu0 0.0
        %6240 = vmatprep.subr.mxu0 0.0
        %6241 = vmatpush1.msra.mxu0 0.0
        %6242 = vmatprep.subr.mxu0 0.0
        %6243 = vmatpush1.msra.mxu0 0.0
        %6244 = vmatprep.subr.mxu0 0.0
        %6245 = vmatpush1.msra.mxu0 0.0
        %6246 = vmatprep.subr.mxu0 0.0
        %6247 = vmatpush1.msra.mxu0 0.0
        %6248 = vmatprep.subr.mxu0 0.0
        %6249 = vmatpush1.msra.mxu0 0.0
        %6250 = vmatprep.subr.mxu0 0.0
        %6251 = vmatpush1.msra.mxu0 0.0
        %6252 = vmatprep.subr.mxu0 %v808
        %6253 = vmatpush1.msra.mxu0 %v807
        %6254 = vmatprep.subr.mxu0 0.0
        %6255 = vmatpush2.msra.mxu0 0.0
        %6256 = vmatprep.subr.mxu0 0.0
        %6257 = vmatpush2.msra.mxu0 0.0
        %6258 = vmatprep.subr.mxu0 0.0
        %6259 = vmatpush2.msra.mxu0 0.0
        %6260 = vmatprep.subr.mxu0 0.0
        %6261 = vmatpush2.msra.mxu0 0.0
        %6262 = vmatprep.subr.mxu0 0.0
        %6263 = vmatpush2.msra.mxu0 0.0
        %6264 = vmatprep.subr.mxu0 0.0
        %6265 = vmatpush2.msra.mxu0 0.0
        %6266 = vmatprep.subr.mxu0 0.0
        %6267 = vmatpush2.msra.mxu0 0.0
        %6268 = vmatprep.subr.mxu0 0.0
        %6269 = vmatpush2.msra.mxu0 0.0
        %6270 = vmatprep.subr.mxu0 0.0
        %6271 = vmatpush2.msra.mxu0 0.0
        %6272 = vmatprep.subr.mxu0 0.0
        %6273 = vmatpush2.msra.mxu0 0.0
        %6274 = vmatprep.subr.mxu0 0.0
        %6275 = vmatpush2.msra.mxu0 0.0
        %6276 = vmatprep.subr.mxu0 0.0
        %6277 = vmatpush2.msra.mxu0 0.0
        %6278 = vmatprep.subr.mxu0 0.0
        %6279 = vmatpush2.msra.mxu0 0.0
        %6280 = vmatprep.subr.mxu0 0.0
        %6281 = vmatpush2.msra.mxu0 0.0
        %6282 = vmatprep.subr.mxu0 0.0
        %6283 = vmatpush2.msra.mxu0 0.0
        %6284 = vmatprep.subr.mxu0 0.0
        %6285 = vmatpush2.msra.mxu0 0.0
        %6286 = vmatprep.mubr.f32.mxu0 0.0
        %6287 = vmatmul.mubr.f32.gmra.mxu0 %v6217
        %v6288 = vpop.f32.mrf.mxu0
        %v6289 = vadd.f32 0.0, %v6288
        %v6290 = vpop.f32.mrf.mxu0
        %v6291 = vadd.f32 0.0, %v6290
        %6292 = vmatprep.mubr.f32.mxu0 0.0
        %6293 = vmatmul.mubr.f32.gmra.mxu0 %v6220
        %v6294 = vpop.f32.mrf.mxu0
        %v6295 = vadd.f32 0.0, %v6294
        %v6296 = vpop.f32.mrf.mxu0
        %v6297 = vadd.f32 0.0, %v6296
        %6298 = vdwg.mxu0
        %v6299 = vadd.f32 %v6209, %v6289
        %v6300 = vadd.f32 %v6210, %v6291
        %v6301 = vadd.f32 %v6211, %v6295
        %v6302 = vadd.f32 %v6212, %v6297
        %v6303 = vld [vmem:[%s6213 + $0x1] sm:$0xff]
        %v6304 = vld [vmem:[%s6213 + $0x9] sm:$0xff]
        %v6306 = vsel %vm267, %v6303, 0
        %v6309 = vsel %vm267, %v6304, 0
        %6311 = vmatprep.subr.mxu0 0.0
        %6312 = vmatpush1.msra.mxu0 0.0
        %6313 = vmatprep.subr.mxu0 0.0
        %6314 = vmatpush1.msra.mxu0 0.0
        %6315 = vmatprep.subr.mxu0 0.0
        %6316 = vmatpush1.msra.mxu0 0.0
        %6317 = vmatprep.subr.mxu0 0.0
        %6318 = vmatpush1.msra.mxu0 0.0
        %6319 = vmatprep.subr.mxu0 0.0
        %6320 = vmatpush1.msra.mxu0 0.0
        %6321 = vmatprep.subr.mxu0 0.0
        %6322 = vmatpush1.msra.mxu0 0.0
        %6323 = vmatprep.subr.mxu0 0.0
        %6324 = vmatpush1.msra.mxu0 0.0
        %6325 = vmatprep.subr.mxu0 0.0
        %6326 = vmatpush1.msra.mxu0 0.0
        %6327 = vmatprep.subr.mxu0 0.0
        %6328 = vmatpush1.msra.mxu0 0.0
        %6329 = vmatprep.subr.mxu0 0.0
        %6330 = vmatpush1.msra.mxu0 0.0
        %6331 = vmatprep.subr.mxu0 0.0
        %6332 = vmatpush1.msra.mxu0 0.0
        %6333 = vmatprep.subr.mxu0 0.0
        %6334 = vmatpush1.msra.mxu0 0.0
        %6335 = vmatprep.subr.mxu0 0.0
        %6336 = vmatpush1.msra.mxu0 0.0
        %6337 = vmatprep.subr.mxu0 0.0
        %6338 = vmatpush1.msra.mxu0 0.0
        %6339 = vmatprep.subr.mxu0 0.0
        %6340 = vmatpush1.msra.mxu0 0.0
        %6341 = vmatprep.subr.mxu0 %v900
        %6342 = vmatpush1.msra.mxu0 %v899
        %6343 = vmatprep.subr.mxu0 0.0
        %6344 = vmatpush2.msra.mxu0 0.0
        %6345 = vmatprep.subr.mxu0 0.0
        %6346 = vmatpush2.msra.mxu0 0.0
        %6347 = vmatprep.subr.mxu0 0.0
        %6348 = vmatpush2.msra.mxu0 0.0
        %6349 = vmatprep.subr.mxu0 0.0
        %6350 = vmatpush2.msra.mxu0 0.0
        %6351 = vmatprep.subr.mxu0 0.0
        %6352 = vmatpush2.msra.mxu0 0.0
        %6353 = vmatprep.subr.mxu0 0.0
        %6354 = vmatpush2.msra.mxu0 0.0
        %6355 = vmatprep.subr.mxu0 0.0
        %6356 = vmatpush2.msra.mxu0 0.0
        %6357 = vmatprep.subr.mxu0 0.0
        %6358 = vmatpush2.msra.mxu0 0.0
        %6359 = vmatprep.subr.mxu0 0.0
        %6360 = vmatpush2.msra.mxu0 0.0
        %6361 = vmatprep.subr.mxu0 0.0
        %6362 = vmatpush2.msra.mxu0 0.0
        %6363 = vmatprep.subr.mxu0 0.0
        %6364 = vmatpush2.msra.mxu0 0.0
        %6365 = vmatprep.subr.mxu0 0.0
        %6366 = vmatpush2.msra.mxu0 0.0
        %6367 = vmatprep.subr.mxu0 0.0
        %6368 = vmatpush2.msra.mxu0 0.0
        %6369 = vmatprep.subr.mxu0 0.0
        %6370 = vmatpush2.msra.mxu0 0.0
        %6371 = vmatprep.subr.mxu0 0.0
        %6372 = vmatpush2.msra.mxu0 0.0
        %6373 = vmatprep.subr.mxu0 0.0
        %6374 = vmatpush2.msra.mxu0 0.0
        %6375 = vmatprep.mubr.f32.mxu0 0.0
        %6376 = vmatmul.mubr.f32.gmra.mxu0 %v6306
        %v6377 = vpop.f32.mrf.mxu0
        %v6378 = vadd.f32 0.0, %v6377
        %v6379 = vpop.f32.mrf.mxu0
        %v6380 = vadd.f32 0.0, %v6379
        %6381 = vmatprep.mubr.f32.mxu0 0.0
        %6382 = vmatmul.mubr.f32.gmra.mxu0 %v6309
        %v6383 = vpop.f32.mrf.mxu0
        %v6384 = vadd.f32 0.0, %v6383
        %v6385 = vpop.f32.mrf.mxu0
        %v6386 = vadd.f32 0.0, %v6385
        %6387 = vdwg.mxu0
        %v6388 = vadd.f32 %v6299, %v6378
        %v6389 = vadd.f32 %v6300, %v6380
        %v6390 = vadd.f32 %v6301, %v6384
        %v6391 = vadd.f32 %v6302, %v6386
        %v6392 = vld [vmem:[%s6213 + $0x2] sm:$0xff]
        %v6393 = vld [vmem:[%s6213 + $0xa] sm:$0xff]
        %v6395 = vsel %vm267, %v6392, 0
        %v6398 = vsel %vm267, %v6393, 0
        %6400 = vmatprep.subr.mxu0 0.0
        %6401 = vmatpush1.msra.mxu0 0.0
        %6402 = vmatprep.subr.mxu0 0.0
        %6403 = vmatpush1.msra.mxu0 0.0
        %6404 = vmatprep.subr.mxu0 0.0
        %6405 = vmatpush1.msra.mxu0 0.0
        %6406 = vmatprep.subr.mxu0 0.0
        %6407 = vmatpush1.msra.mxu0 0.0
        %6408 = vmatprep.subr.mxu0 0.0
        %6409 = vmatpush1.msra.mxu0 0.0
        %6410 = vmatprep.subr.mxu0 0.0
        %6411 = vmatpush1.msra.mxu0 0.0
        %6412 = vmatprep.subr.mxu0 0.0
        %6413 = vmatpush1.msra.mxu0 0.0
        %6414 = vmatprep.subr.mxu0 0.0
        %6415 = vmatpush1.msra.mxu0 0.0
        %6416 = vmatprep.subr.mxu0 0.0
        %6417 = vmatpush1.msra.mxu0 0.0
        %6418 = vmatprep.subr.mxu0 0.0
        %6419 = vmatpush1.msra.mxu0 0.0
        %6420 = vmatprep.subr.mxu0 0.0
        %6421 = vmatpush1.msra.mxu0 0.0
        %6422 = vmatprep.subr.mxu0 0.0
        %6423 = vmatpush1.msra.mxu0 0.0
        %6424 = vmatprep.subr.mxu0 0.0
        %6425 = vmatpush1.msra.mxu0 0.0
        %6426 = vmatprep.subr.mxu0 0.0
        %6427 = vmatpush1.msra.mxu0 0.0
        %6428 = vmatprep.subr.mxu0 0.0
        %6429 = vmatpush1.msra.mxu0 0.0
        %6430 = vmatprep.subr.mxu0 %v992
        %6431 = vmatpush1.msra.mxu0 %v991
        %6432 = vmatprep.subr.mxu0 0.0
        %6433 = vmatpush2.msra.mxu0 0.0
        %6434 = vmatprep.subr.mxu0 0.0
        %6435 = vmatpush2.msra.mxu0 0.0
        %6436 = vmatprep.subr.mxu0 0.0
        %6437 = vmatpush2.msra.mxu0 0.0
        %6438 = vmatprep.subr.mxu0 0.0
        %6439 = vmatpush2.msra.mxu0 0.0
        %6440 = vmatprep.subr.mxu0 0.0
        %6441 = vmatpush2.msra.mxu0 0.0
        %6442 = vmatprep.subr.mxu0 0.0
        %6443 = vmatpush2.msra.mxu0 0.0
        %6444 = vmatprep.subr.mxu0 0.0
        %6445 = vmatpush2.msra.mxu0 0.0
        %6446 = vmatprep.subr.mxu0 0.0
        %6447 = vmatpush2.msra.mxu0 0.0
        %6448 = vmatprep.subr.mxu0 0.0
        %6449 = vmatpush2.msra.mxu0 0.0
        %6450 = vmatprep.subr.mxu0 0.0
        %6451 = vmatpush2.msra.mxu0 0.0
        %6452 = vmatprep.subr.mxu0 0.0
        %6453 = vmatpush2.msra.mxu0 0.0
        %6454 = vmatprep.subr.mxu0 0.0
        %6455 = vmatpush2.msra.mxu0 0.0
        %6456 = vmatprep.subr.mxu0 0.0
        %6457 = vmatpush2.msra.mxu0 0.0
        %6458 = vmatprep.subr.mxu0 0.0
        %6459 = vmatpush2.msra.mxu0 0.0
        %6460 = vmatprep.subr.mxu0 0.0
        %6461 = vmatpush2.msra.mxu0 0.0
        %6462 = vmatprep.subr.mxu0 0.0
        %6463 = vmatpush2.msra.mxu0 0.0
        %6464 = vmatprep.mubr.f32.mxu0 0.0
        %6465 = vmatmul.mubr.f32.gmra.mxu0 %v6395
        %v6466 = vpop.f32.mrf.mxu0
        %v6467 = vadd.f32 0.0, %v6466
        %v6468 = vpop.f32.mrf.mxu0
        %v6469 = vadd.f32 0.0, %v6468
        %6470 = vmatprep.mubr.f32.mxu0 0.0
        %6471 = vmatmul.mubr.f32.gmra.mxu0 %v6398
        %v6472 = vpop.f32.mrf.mxu0
        %v6473 = vadd.f32 0.0, %v6472
        %v6474 = vpop.f32.mrf.mxu0
        %v6475 = vadd.f32 0.0, %v6474
        %6476 = vdwg.mxu0
        %v6477 = vadd.f32 %v6388, %v6467
        %v6478 = vadd.f32 %v6389, %v6469
        %v6479 = vadd.f32 %v6390, %v6473
        %v6480 = vadd.f32 %v6391, %v6475
        %v6481 = vadd.f32 %v6477, %v1084
        %v6482 = vadd.f32 %v6478, %v1088
        %v6483 = vadd.f32 %v6479, %v1084
        %v6484 = vadd.f32 %v6480, %v1088
        %v6485 = vmax.f32 %v6481, 0.0
        %v6486 = vmax.f32 %v6482, 0.0
        %v6487 = vmax.f32 %v6483, 0.0
        %v6488 = vmax.f32 %v6484, 0.0
        %v6489 = vadd.f32 %v6485, %v6487
        %v6490 = vrot.slane %v6489, 4
        %v6491 = vadd.f32 %v6489, %v6490
        %v6492 = vrot.slane %v6491, 2
        %v6493 = vadd.f32 %v6491, %v6492
        %v6494 = vrot.slane %v6493, 1
        %v6495 = vadd.f32 %v6493, %v6494
        %v6496 = vadd.f32 %v6486, %v6488
        %v6497 = vrot.slane %v6496, 4
        %v6498 = vadd.f32 %v6496, %v6497
        %v6499 = vrot.slane %v6498, 2
        %v6500 = vadd.f32 %v6498, %v6499
        %v6501 = vrot.slane %v6500, 1
        %v6502 = vadd.f32 %v6500, %v6501
        %v6503 = vadd.f32 %v5733, %v6495
        %v6504 = vadd.f32 %v5734, %v6502
        %v6505 = vld [vmem:[#allocation2] sm:$0x3]
        %v6508 = vcombine.low %v6503, %v6504
        %v6510 = vunpack.c.l.s4 1966171168
        %v6511 = vunpack.c.0.s8 %v6510
        %v6512 = vlaneseq
        %v6513 = vshrl.u32 %v6512, 7
        %v6514 = vsub.s32 %v6511, %v6513
        %v6515 = vrot.slane %v6508, %v6514
        %v6517 = vunpack.c.l.s4 1966171168
        %v6518 = vunpack.c.0.s8 %v6517
        %v6519 = vlaneseq
        %v6520 = vshrl.u32 %v6519, 7
        %v6521 = vsub.s32 %v6518, %v6520
        %v6522 = vrot.slane %v6515, %v6521
        %v6524 = vadd.f32 %v6505, %v6522
        %v6525 = vlaneseq
        %vm6526 = vcmp.ge.s32.totalorder %v6525, 0
        %vm6527 = vcmp.lt.s32.totalorder %v6525, 256
        %vm6528 = vmand %vm6526, %vm6527
        %6529 = vst.msk [vmem:[#allocation2] sm:$0x3] %vm6528, %v6524
        %p6530 = scmp.eq.s32.totalorder %s24, 1
        // Predicated region
        $region45: #{tpu_custom_call.1} parent=39 // pred_check
          %p6531 = pneg %p6530
        $region46: #{tpu_custom_call.1} parent=39 // pred_check_branch
          %6533 = sbr.rel (%p6531) target = $region48
        $region47: #{tpu_custom_call.1} parent=39 // pred_region
          %v6534 = vld [vmem:[#allocation2] sm:$0x3]
          %v6535 = vmul.f32 %v6534, 0.00390625
          %v6536 = vld [vmem:[%s3] sm:$0xff]
          %v6537 = vld [vmem:[%s3 + $0x8] sm:$0xff]
          %v6538 = vld [vmem:[%s3 + $0x10] sm:$0xff]
          %v6539 = vld [vmem:[%s3 + $0x18] sm:$0xff]
          %v6540 = vld [vmem:[%s3 + $0x20] sm:$0xff]
          %v6541 = vld [vmem:[%s3 + $0x28] sm:$0xff]
          %v6542 = vld [vmem:[%s3 + $0x30] sm:$0xff]
          %v6543 = vld [vmem:[%s3 + $0x38] sm:$0xff]
          %v6544 = vld [vmem:[%s3 + $0x40] sm:$0xff]
          %v6545 = vld [vmem:[%s3 + $0x48] sm:$0xff]
          %v6546 = vld [vmem:[%s3 + $0x50] sm:$0xff]
          %v6547 = vld [vmem:[%s3 + $0x58] sm:$0xff]
          %v6548 = vld [vmem:[%s3 + $0x60] sm:$0xff]
          %v6549 = vld [vmem:[%s3 + $0x68] sm:$0xff]
          %v6550 = vld [vmem:[%s3 + $0x70] sm:$0xff]
          %v6551 = vld [vmem:[%s3 + $0x78] sm:$0xff]
          %v6552 = vld [vmem:[%s3 + $0x80] sm:$0xff]
          %v6553 = vld [vmem:[%s3 + $0x88] sm:$0xff]
          %v6554 = vld [vmem:[%s3 + $0x90] sm:$0xff]
          %v6555 = vld [vmem:[%s3 + $0x98] sm:$0xff]
          %v6556 = vld [vmem:[%s3 + $0xa0] sm:$0xff]
          %v6557 = vld [vmem:[%s3 + $0xa8] sm:$0xff]
          %v6558 = vld [vmem:[%s3 + $0xb0] sm:$0xff]
          %v6559 = vld [vmem:[%s3 + $0xb8] sm:$0xff]
          %v6560 = vld [vmem:[%s3 + $0xc0] sm:$0xff]
          %v6561 = vld [vmem:[%s3 + $0xc8] sm:$0xff]
          %v6562 = vld [vmem:[%s3 + $0xd0] sm:$0xff]
          %v6563 = vld [vmem:[%s3 + $0xd8] sm:$0xff]
          %v6564 = vld [vmem:[%s3 + $0xe0] sm:$0xff]
          %v6565 = vld [vmem:[%s3 + $0xe8] sm:$0xff]
          %v6566 = vld [vmem:[%s3 + $0xf0] sm:$0xff]
          %v6567 = vld [vmem:[%s3 + $0xf8] sm:$0xff]
          %v6568 = vld [vmem:[%s4] sm:$0x1]
          %v6570 = vlaneseq
          %v6571 = vshrl.u32 %v6570, 7
          %v6572 = vsub.s32 0, %v6571
          %v6573 = vrot.slane %v6535, %v6572
          %v6574 = vlaneseq
          %v6575 = vshrl.u32 %v6574, 7
          %v6576 = vsub.s32 1, %v6575
          %v6577 = vrot.slane %v6535, %v6576
          %6580 = vmatprep.subr.mxu0 0.0
          %6581 = vmatpush1.msra.mxu0 %v6551
          %6582 = vmatprep.subr.mxu0 0.0
          %6583 = vmatpush1.msra.mxu0 %v6550
          %6584 = vmatprep.subr.mxu0 0.0
          %6585 = vmatpush1.msra.mxu0 %v6549
          %6586 = vmatprep.subr.mxu0 0.0
          %6587 = vmatpush1.msra.mxu0 %v6548
          %6588 = vmatprep.subr.mxu0 0.0
          %6589 = vmatpush1.msra.mxu0 %v6547
          %6590 = vmatprep.subr.mxu0 0.0
          %6591 = vmatpush1.msra.mxu0 %v6546
          %6592 = vmatprep.subr.mxu0 0.0
          %6593 = vmatpush1.msra.mxu0 %v6545
          %6594 = vmatprep.subr.mxu0 0.0
          %6595 = vmatpush1.msra.mxu0 %v6544
          %6596 = vmatprep.subr.mxu0 0.0
          %6597 = vmatpush1.msra.mxu0 %v6543
          %6598 = vmatprep.subr.mxu0 0.0
          %6599 = vmatpush1.msra.mxu0 %v6542
          %6600 = vmatprep.subr.mxu0 0.0
          %6601 = vmatpush1.msra.mxu0 %v6541
          %6602 = vmatprep.subr.mxu0 0.0
          %6603 = vmatpush1.msra.mxu0 %v6540
          %6604 = vmatprep.subr.mxu0 0.0
          %6605 = vmatpush1.msra.mxu0 %v6539
          %6606 = vmatprep.subr.mxu0 0.0
          %6607 = vmatpush1.msra.mxu0 %v6538
          %6608 = vmatprep.subr.mxu0 0.0
          %6609 = vmatpush1.msra.mxu0 %v6537
          %6610 = vmatprep.subr.mxu0 0.0
          %6611 = vmatpush1.msra.mxu0 %v6536
          %6612 = vmatprep.subr.mxu0 0.0
          %6613 = vmatpush2.msra.mxu0 %v6567
          %6614 = vmatprep.subr.mxu0 0.0
          %6615 = vmatpush2.msra.mxu0 %v6566
          %6616 = vmatprep.subr.mxu0 0.0
          %6617 = vmatpush2.msra.mxu0 %v6565
          %6618 = vmatprep.subr.mxu0 0.0
          %6619 = vmatpush2.msra.mxu0 %v6564
          %6620 = vmatprep.subr.mxu0 0.0
          %6621 = vmatpush2.msra.mxu0 %v6563
          %6622 = vmatprep.subr.mxu0 0.0
          %6623 = vmatpush2.msra.mxu0 %v6562
          %6624 = vmatprep.subr.mxu0 0.0
          %6625 = vmatpush2.msra.mxu0 %v6561
          %6626 = vmatprep.subr.mxu0 0.0
          %6627 = vmatpush2.msra.mxu0 %v6560
          %6628 = vmatprep.subr.mxu0 0.0
          %6629 = vmatpush2.msra.mxu0 %v6559
          %6630 = vmatprep.subr.mxu0 0.0
          %6631 = vmatpush2.msra.mxu0 %v6558
          %6632 = vmatprep.subr.mxu0 0.0
          %6633 = vmatpush2.msra.mxu0 %v6557
          %6634 = vmatprep.subr.mxu0 0.0
          %6635 = vmatpush2.msra.mxu0 %v6556
          %6636 = vmatprep.subr.mxu0 0.0
          %6637 = vmatpush2.msra.mxu0 %v6555
          %6638 = vmatprep.subr.mxu0 0.0
          %6639 = vmatpush2.msra.mxu0 %v6554
          %6640 = vmatprep.subr.mxu0 0.0
          %6641 = vmatpush2.msra.mxu0 %v6553
          %6642 = vmatprep.subr.mxu0 0.0
          %6643 = vmatpush2.msra.mxu0 %v6552
          %6644 = vmatprep.mubr.f32.mxu0 %v6577
          %6645 = vmatmul.mubr.f32.gmra.mxu0 %v6573
          %v6646 = vpop.f32.mrf.mxu0
          %v6647 = vadd.f32 %v6568, %v6646
          %v6648 = vpop.f32.mrf.mxu0
          %6649 = vdwg.mxu0
          %6650 = vst [vmem:[%s238] sm:$0x1] %v6647
        $region48: #{tpu_custom_call.1} parent=39 // pred_fallthru
          _
        %s6651 = sand.u32 %s151, 1
        %s6652 = scalar_lea.sflag [#allocation4], %s6651
        %s6653 = sand.u32 %s151, 1
        %s6654 = scalar_lea.vmem [#allocation3], %s6653
        // Predicated region
        $region49: #{tpu_custom_call.1} parent=39 // pred_check
          %p6655 = pneg %p161
        $region50: #{tpu_custom_call.1} parent=39 // pred_check_branch
          %6657 = sbr.rel (%p6655) target = $region52
        $region51: #{tpu_custom_call.1} parent=39 // pred_region
          %s6659 = ssub.s32 16, 16
          %6660 = vsyncadd %s6652, %s6659
          %s6661 = smul.addr %s23, 16
          %s6662 = scalar_lea.hbm %s5, %s6661
          %s6664 = sshll.u32 %s6654, 4
          %s6665 = int_to_ptr.vmem [resolvable:$true] %s6664
          %6667 = dma.vmem_to_hbm [thread:$0]  %s6665, 16, %s6662, %s6652
        $region52: #{tpu_custom_call.1} parent=39 // pred_fallthru
          _
      $region40: #{tpu_custom_call.1} parent=5 // pred_fallthru
        _
      %p6668 = scmp.le.s32.totalorder 2, %s14
      // Predicated region
      $region53: #{tpu_custom_call.1} parent=5 // pred_check
        %p6669 = pneg %p6668
      $region54: #{tpu_custom_call.1} parent=5 // pred_check_branch
        %6671 = sbr.rel (%p6669) target = $region56
      $region55: #{tpu_custom_call.1} parent=5 // pred_region
        %s6672 = ssub.s32 %s14, 2
        // Predicated region
        $region57: #{tpu_custom_call.1} parent=55 // pred_check
          %p6673 = pneg %p167
        $region58: #{tpu_custom_call.1} parent=55 // pred_check_branch
          %6675 = sbr.rel (%p6673) target = $region60
        $region59: #{tpu_custom_call.1} parent=55 // pred_region
          %s6676 = sand.u32 %s152, 1
          %s6677 = scalar_lea.sflag [#allocation4], %s6676
          %s6678 = sand.u32 %s152, 1
          %s6679 = scalar_lea.vmem [#allocation3], %s6678
          %6680 = dma.done %s6677, 16
        $region60: #{tpu_custom_call.1} parent=55 // pred_fallthru
          _
      $region56: #{tpu_custom_call.1} parent=5 // pred_fallthru
        _
    $region6: #{tpu_custom_call.1} parent=1 // loop_footer
      %s18 = sadd.s32 1, %s14
    $region7: #{tpu_custom_call.1} parent=1 // loop_footer_branch
      %13 = sbr.rel target = $region3
    $region8: #{tpu_custom_call.1} parent=1 // loop_exit
      _
    %6681 = vsyncpa [#allocation4], 1
    %s6682 = scalar_lea.sflag [#allocation4], 1
    %6683 = vsyncpa %s6682, 1

</llo_original>
